<compile_context>
chip_gen: v6e
topology: v6e:2x2x1
jax: 0.10.0
libtpu: 0.0.40
codegen_flags: <defaults>
</compile_context>

<pallas_src>
import functools

import jax
import jax.numpy as jnp
from jax.experimental import pallas as pl
from jax.experimental.pallas import tpu as pltpu

INPUT_DIM = 16      # src vocab size
OUTPUT_DIM = 16     # trg vocab size
EMB_DIM = 32
ENC_HID = 32
DEC_HID = 32
SRC_LEN = 8
TRG_LEN = 8
BATCH = 2
B_PAD = 8           # pad batch rows to the f32 sublane granule
DROPOUT_P = 0.0

_VMEM = functools.partial(pl.BlockSpec, memory_space=pltpu.MemorySpace.VMEM)


# ----------------------------------------------------------------------------
# Fused encoder kernel: bi-directional GRU + tanh(fc(cat(h_fwd, h_bwd)))
# ----------------------------------------------------------------------------
def _encoder_kernel(emb_ref,                                   # [S*B, EMB] (time-major flat)
                    wih_f_ref, whh_f_ref, bih_f_ref, bhh_f_ref,  # fwd GRU (pre-transposed)
                    wih_b_ref, whh_b_ref, bih_b_ref, bhh_b_ref,  # bwd GRU
                    fc_wf_ref, fc_wb_ref, fc_b_ref,              # enc fc, split by concat half
                    enc_f_ref, enc_b_ref, hid_ref,               # outputs
                    gi_f_ref, gi_b_ref):                         # scratch [S, B, 3H]
    S, B, H3 = gi_f_ref.shape
    H = H3 // 3

    # Hoist the input projection for all time steps and both directions:
    # one well-shaped [S*B, EMB] x [EMB, 3H] matmul per direction.
    emb = emb_ref[...]
    gi_f = jnp.dot(emb, wih_f_ref[...], preferred_element_type=jnp.float32) + bih_f_ref[...]
    gi_b = jnp.dot(emb, wih_b_ref[...], preferred_element_type=jnp.float32) + bih_b_ref[...]
    for s in range(S):                       # static, 8-row-aligned slices (B == 8)
        gi_f_ref[s] = gi_f[s * B:(s + 1) * B, :]
        gi_b_ref[s] = gi_b[s * B:(s + 1) * B, :]

    # Hoist loop-invariant weight/bias loads out of the recurrence.
    whh_f = whh_f_ref[...]
    bhh_f = bhh_f_ref[...]
    whh_b = whh_b_ref[...]
    bhh_b = bhh_b_ref[...]

    def cell(gi, h, whh, bhh):
        # torch.nn.GRU gate order (r, z, n); h_new = (1 - z) * n + z * h
        gh = jnp.dot(h, whh, preferred_element_type=jnp.float32) + bhh
        r = jax.nn.sigmoid(gi[:, 0:H] + gh[:, 0:H])
        z = jax.nn.sigmoid(gi[:, H:2 * H] + gh[:, H:2 * H])
        n = jnp.tanh(gi[:, 2 * H:3 * H] + r * gh[:, 2 * H:3 * H])
        return (1.0 - z) * n + z * h

    def body(t, carry):
        h_f, h_b = carry
        tb = S - 1 - t
        h_f = cell(gi_f_ref[t], h_f, whh_f, bhh_f)     # forward direction at time t
        h_b = cell(gi_b_ref[tb], h_b, whh_b, bhh_b)    # backward direction at time S-1-t
        enc_f_ref[t] = h_f
        enc_b_ref[tb] = h_b
        return (h_f, h_b)

    h0 = jnp.zeros((B, H), jnp.float32)
    h_f, h_b = jax.lax.fori_loop(0, S, body, (h0, h0), unroll=True)

    # hidden = tanh(fc(cat(h_fwd_final, h_bwd_final)))  (concat replaced by split matmuls)
    hid_ref[...] = jnp.tanh(
        jnp.dot(h_f, fc_wf_ref[...], preferred_element_type=jnp.float32)
        + jnp.dot(h_b, fc_wb_ref[...], preferred_element_type=jnp.float32)
        + fc_b_ref[...])


def run_encoder(emb_flat, p):
    S, B = SRC_LEN, B_PAD
    out_shapes = (
        jax.ShapeDtypeStruct((S, B, ENC_HID), jnp.float32),   # forward outputs
        jax.ShapeDtypeStruct((S, B, ENC_HID), jnp.float32),   # backward outputs
        jax.ShapeDtypeStruct((B, DEC_HID), jnp.float32),      # decoder initial hidden
    )
    return pl.pallas_call(
        _encoder_kernel,
        out_shape=out_shapes,
        in_specs=[_VMEM()] * 12,
        out_specs=(_VMEM(), _VMEM(), _VMEM()),
        scratch_shapes=[
            pltpu.VMEM((S, B, 3 * ENC_HID), jnp.float32),
            pltpu.VMEM((S, B, 3 * ENC_HID), jnp.float32),
        ],
    )(emb_flat,
      *p["enc_gru_fwd"], *p["enc_gru_bwd"],
      p["enc_fc_wf"], p["enc_fc_wb"], p["enc_fc_b"])


# ----------------------------------------------------------------------------
# Fused decoder kernel: full greedy decode loop in one pallas_call
# ----------------------------------------------------------------------------
def _decoder_kernel(tok0_ref, hid0_ref, enc_ref,               # [B,1] i32, [B,Hd], [S,B,2He]
                    dec_emb_ref,                               # [V, EMB]
                    awh_ref, awe_ref, ab_ref, av_ref,          # attention (Wh, We, b, v)
                    wih_e_ref, wih_w_ref, whh_ref, bih_ref, bhh_ref,   # decoder GRU
                    fco_ref, fcw_ref, fce_ref, fcb_ref,        # fc_out split (output, weighted, embedded)
                    out_ref,                                   # [T, B, V]
                    ee_ref):                                   # scratch [S, B, Hd]
    S, B, _ = enc_ref.shape
    Hd = hid0_ref.shape[1]
    T, _, V = out_ref.shape

    # Hoist the h-independent half of the attention energy out of the recurrence:
    # ee[s] = enc[s] @ W_e + b   (computed once).
    for s in range(S):                       # static unroll, once at kernel start
        ee_ref[s] = (jnp.dot(enc_ref[s], awe_ref[...],
                             preferred_element_type=jnp.float32) + ab_ref[...])

    # outputs[0] stays zero (matches torch.zeros + loop starting at t=1)
    out_ref[0] = jnp.zeros((B, V), jnp.float32)

    iota_v = jax.lax.broadcasted_iota(jnp.int32, (B, V), 1)
    iota_f = iota_v.astype(jnp.float32)

    def body(t, carry):
        hidden, tok = carry                                    # [B,Hd] f32, [B,1] i32

        # Embedding lookup in-kernel via one-hot matmul (keeps decode on-chip).
        onehot = (iota_v == tok).astype(jnp.float32)           # [B, V]
        emb = jnp.dot(onehot, dec_emb_ref[...], preferred_element_type=jnp.float32)  # [B, EMB]

        # --- attention, vectorized over the batch -----------------------------
        hh = jnp.dot(hidden, awh_ref[...], preferred_element_type=jnp.float32)       # [B, Hd]
        energy = jnp.tanh(ee_ref[...] + hh)                    # [S, B, Hd]
        score = jnp.sum(energy * av_ref[...], axis=-1, keepdims=True)                # [S, B, 1]
        score = score - jnp.max(score, axis=0, keepdims=True)
        es = jnp.exp(score)
        attn = es / jnp.sum(es, axis=0, keepdims=True)         # softmax over src positions
        ctx = jnp.sum(attn * enc_ref[...], axis=0)             # [B, 2He] (== bmm(a, enc))

        # --- GRU cell (concat replaced by split matmuls) ----------------------
        gi = (jnp.dot(emb, wih_e_ref[...], preferred_element_type=jnp.float32)
              + jnp.dot(ctx, wih_w_ref[...], preferred_element_type=jnp.float32)
              + bih_ref[...])
        gh = jnp.dot(hidden, whh_ref[...], preferred_element_type=jnp.float32) + bhh_ref[...]
        r = jax.nn.sigmoid(gi[:, 0:Hd] + gh[:, 0:Hd])
        z = jax.nn.sigmoid(gi[:, Hd:2 * Hd] + gh[:, Hd:2 * Hd])
        n = jnp.tanh(gi[:, 2 * Hd:3 * Hd] + r * gh[:, 2 * Hd:3 * Hd])
        h_new = (1.0 - z) * n + z * hidden

        # --- fc_out(cat(output, weighted, embedded)) --------------------------
        pred = (jnp.dot(h_new, fco_ref[...], preferred_element_type=jnp.float32)
                + jnp.dot(ctx, fcw_ref[...], preferred_element_type=jnp.float32)
                + jnp.dot(emb, fce_ref[...], preferred_element_type=jnp.float32)
                + fcb_ref[...])                                # [B, V]
        out_ref[t] = pred

        # Greedy next token = first index attaining the row max (== argmax).
        m = jnp.max(pred, axis=1, keepdims=True)
        tok_f = jnp.min(jnp.where(pred == m, iota_f, float(V)), axis=1, keepdims=True)
        tok_new = tok_f.astype(jnp.int32)                      # [B, 1]
        return (h_new, tok_new)

    jax.lax.fori_loop(1, T, body, (hid0_ref[...], tok0_ref[...]), unroll=True)


def run_decoder(tok0, hid0, enc_cat, p, trg_len):
    S, B, _ = enc_cat.shape
    return pl.pallas_call(
        _decoder_kernel,
        out_shape=jax.ShapeDtypeStruct((trg_len, B, OUTPUT_DIM), jnp.float32),
        in_specs=[_VMEM()] * 17,
        out_specs=_VMEM(),
        scratch_shapes=[pltpu.VMEM((S, B, DEC_HID), jnp.float32)],
    )(tok0, hid0, enc_cat,
      p["dec_emb"],
      p["attn_wh_t"], p["attn_we_t"], p["attn_b"], p["attn_v"],
      p["dec_wih_e"], p["dec_wih_w"], p["dec_whh"], p["dec_bih"], p["dec_bhh"],
      p["fc_o"], p["fc_w"], p["fc_e"], p["fc_b"])


# ----------------------------------------------------------------------------
# Parameters (deterministic; weights pre-transposed to [in, out] and pre-split
# along the concat boundaries so kernels never concatenate activations)
# ----------------------------------------------------------------------------
def init_params(key):
    def uniform(k, shape, fan_in):
        bound = 1.0 / jnp.sqrt(jnp.float32(fan_in))
        return jax.random.uniform(k, shape, jnp.float32, -bound, bound)

    keys = iter(jax.random.split(key, 32))
    p = {}
    # Encoder
    p["enc_emb"] = jax.random.normal(next(keys), (INPUT_DIM, EMB_DIM), jnp.float32) * 0.1
    for d in ("fwd", "bwd"):
        p[f"enc_gru_{d}"] = (
            uniform(next(keys), (EMB_DIM, 3 * ENC_HID), ENC_HID),     # W_ih^T
            uniform(next(keys), (ENC_HID, 3 * ENC_HID), ENC_HID),     # W_hh^T
            uniform(next(keys), (1, 3 * ENC_HID), ENC_HID),           # b_ih
            uniform(next(keys), (1, 3 * ENC_HID), ENC_HID),           # b_hh
        )
    # enc fc: Linear(2He -> Hd), split by the cat(h_fwd, h_bwd) halves
    p["enc_fc_wf"] = uniform(next(keys), (ENC_HID, DEC_HID), 2 * ENC_HID)
    p["enc_fc_wb"] = uniform(next(keys), (ENC_HID, DEC_HID), 2 * ENC_HID)
    p["enc_fc_b"] = uniform(next(keys), (1, DEC_HID), 2 * ENC_HID)
    # Attention: Linear(2He + Hd -> Hd), split by cat(hidden, enc_outputs); v: Linear(Hd->1, no bias)
    attn_in = 2 * ENC_HID + DEC_HID
    p["attn_wh_t"] = uniform(next(keys), (DEC_HID, DEC_HID), attn_in)
    p["attn_we_t"] = uniform(next(keys), (2 * ENC_HID, DEC_HID), attn_in)
    p["attn_b"] = uniform(next(keys), (1, DEC_HID), attn_in)
    p["attn_v"] = uniform(next(keys), (1, DEC_HID), DEC_HID)
    # Decoder
    p["dec_emb"] = jax.random.normal(next(keys), (OUTPUT_DIM, EMB_DIM), jnp.float32) * 0.1
    # GRU(2He + EMB -> Hd), W_ih split by cat(embedded, weighted)
    p["dec_wih_e"] = uniform(next(keys), (EMB_DIM, 3 * DEC_HID), DEC_HID)
    p["dec_wih_w"] = uniform(next(keys), (2 * ENC_HID, 3 * DEC_HID), DEC_HID)
    p["dec_whh"] = uniform(next(keys), (DEC_HID, 3 * DEC_HID), DEC_HID)
    p["dec_bih"] = uniform(next(keys), (1, 3 * DEC_HID), DEC_HID)
    p["dec_bhh"] = uniform(next(keys), (1, 3 * DEC_HID), DEC_HID)
    # fc_out: Linear(2He + EMB + Hd -> V), split by cat(output, weighted, embedded)
    fc_in = 2 * ENC_HID + EMB_DIM + DEC_HID
    p["fc_o"] = uniform(next(keys), (DEC_HID, OUTPUT_DIM), fc_in)
    p["fc_w"] = uniform(next(keys), (2 * ENC_HID, OUTPUT_DIM), fc_in)
    p["fc_e"] = uniform(next(keys), (EMB_DIM, OUTPUT_DIM), fc_in)
    p["fc_b"] = uniform(next(keys), (1, OUTPUT_DIM), fc_in)
    return p


# ----------------------------------------------------------------------------
# Forward pass: two pallas_calls + a handful of tiny one-time XLA glue ops
# ----------------------------------------------------------------------------
def seq2seq_forward(src, trg, p, teacher_forcing_ratio=0.0):
    # ratio=0.0 -> `random.random() < 0.0` is never true: pure greedy decode.
    assert teacher_forcing_ratio == 0.0
    trg_len = trg.shape[0]
    B = src.shape[1]

    # Pad the batch to 8 rows (f32 sublane granule); padded rows are independent
    # and sliced off at the end, so valid rows are bit-identical to unpadded.
    src_p = jnp.pad(src, ((0, 0), (0, B_PAD - B)))                       # pad token = 0
    # Encoder embedding lookup: one gather for the whole sequence (dropout p=0 -> identity).
    emb_flat = jnp.take(p["enc_emb"], src_p.reshape(-1), axis=0)         # [S*B_PAD, EMB]

    enc_f, enc_b, hidden = run_encoder(emb_flat, p)                      # [S,B,He] x2, [B,Hd]
    enc_cat = jnp.concatenate([enc_f, enc_b], axis=-1)                   # [S, B_PAD, 2He] (once)

    tok0 = src_p[0, :].reshape(B_PAD, 1).astype(jnp.int32)               # initial decoder input
    out_pad = run_decoder(tok0, hidden, enc_cat, p, trg_len)             # [trg_len, B_PAD, V]
    return out_pad[:, :B, :]                                             # [trg_len, B, V]


if __name__ == "__main__":
    key = jax.random.PRNGKey(0)
    k_param, k_src, k_trg = jax.random.split(key, 3)
    params = init_params(k_param)
    src = jax.random.randint(k_src, (SRC_LEN, BATCH), 0, INPUT_DIM, dtype=jnp.int32)
    trg = jax.random.randint(k_trg, (TRG_LEN, BATCH), 0, OUTPUT_DIM, dtype=jnp.int32)

    fwd = jax.jit(functools.partial(seq2seq_forward, teacher_forcing_ratio=0.0))
    out = fwd(src, trg, params)
    out = jax.block_until_ready(out)
    assert out.shape == (TRG_LEN, BATCH, OUTPUT_DIM)
    assert bool(jnp.all(jnp.isfinite(out)))
    print("KERNEL_OK")
</pallas_src>

<mosaic_0001>
module attributes {stable_mosaic.version = 11 : i64} {
  func.func @_encoder_kernel(%arg0: memref<64x32xf32, #tpu.memory_space<vmem>>, %arg1: memref<32x96xf32, #tpu.memory_space<vmem>>, %arg2: memref<32x96xf32, #tpu.memory_space<vmem>>, %arg3: memref<1x96xf32, #tpu.memory_space<vmem>>, %arg4: memref<1x96xf32, #tpu.memory_space<vmem>>, %arg5: memref<32x96xf32, #tpu.memory_space<vmem>>, %arg6: memref<32x96xf32, #tpu.memory_space<vmem>>, %arg7: memref<1x96xf32, #tpu.memory_space<vmem>>, %arg8: memref<1x96xf32, #tpu.memory_space<vmem>>, %arg9: memref<32x32xf32, #tpu.memory_space<vmem>>, %arg10: memref<32x32xf32, #tpu.memory_space<vmem>>, %arg11: memref<1x32xf32, #tpu.memory_space<vmem>>, %arg12: memref<8x8x32xf32, #tpu.memory_space<vmem>>, %arg13: memref<8x8x32xf32, #tpu.memory_space<vmem>>, %arg14: memref<8x32xf32, #tpu.memory_space<vmem>>, %arg15: memref<8x8x96xf32, #tpu.memory_space<vmem>>, %arg16: memref<8x8x96xf32, #tpu.memory_space<vmem>>) attributes {dimension_semantics = [], scalar_prefetch = 0 : i64, scratch_operands = 2 : i64, tpu.core_type = #tpu.core_type<tc>} {
    %c0 = arith.constant 0 : index
    %c0_0 = arith.constant 0 : index
    %0 = vector.load %arg0[%c0, %c0_0] : memref<64x32xf32, #tpu.memory_space<vmem>>, vector<64x32xf32>
    %c0_1 = arith.constant 0 : index
    %c0_2 = arith.constant 0 : index
    %1 = vector.load %arg1[%c0_1, %c0_2] : memref<32x96xf32, #tpu.memory_space<vmem>>, vector<32x96xf32>
    %cst = arith.constant dense<0.000000e+00> : vector<64x96xf32>
    %2 = tpu.matmul %0, %1, %cst {dimension_numbers = #tpu.dot_dimension_numbers<[1], [0], [0], [1], [0, 0, 1, 1], [], []>} : vector<64x32xf32>, vector<32x96xf32>, vector<64x96xf32> -> vector<64x96xf32>
    %c0_3 = arith.constant 0 : index
    %c0_4 = arith.constant 0 : index
    %3 = vector.load %arg3[%c0_3, %c0_4] : memref<1x96xf32, #tpu.memory_space<vmem>>, vector<1x96xf32>
    %4 = vector.broadcast %3 : vector<1x96xf32> to vector<64x96xf32>
    %5 = arith.addf %2, %4 : vector<64x96xf32>
    %c0_5 = arith.constant 0 : index
    %c0_6 = arith.constant 0 : index
    %6 = vector.load %arg5[%c0_5, %c0_6] : memref<32x96xf32, #tpu.memory_space<vmem>>, vector<32x96xf32>
    %cst_7 = arith.constant dense<0.000000e+00> : vector<64x96xf32>
    %7 = tpu.matmul %0, %6, %cst_7 {dimension_numbers = #tpu.dot_dimension_numbers<[1], [0], [0], [1], [0, 0, 1, 1], [], []>} : vector<64x32xf32>, vector<32x96xf32>, vector<64x96xf32> -> vector<64x96xf32>
    %c0_8 = arith.constant 0 : index
    %c0_9 = arith.constant 0 : index
    %8 = vector.load %arg7[%c0_8, %c0_9] : memref<1x96xf32, #tpu.memory_space<vmem>>, vector<1x96xf32>
    %9 = vector.broadcast %8 : vector<1x96xf32> to vector<64x96xf32>
    %10 = arith.addf %7, %9 : vector<64x96xf32>
    %11 = vector.extract_strided_slice %5 {offsets = [0, 0], sizes = [8, 96], strides = [1, 1]} : vector<64x96xf32> to vector<8x96xf32>
    %c0_10 = arith.constant 0 : index
    %c0_11 = arith.constant 0 : index
    %c0_12 = arith.constant 0 : index
    %12 = vector.load %arg15[%c0_10, %c0_11, %c0_12] : memref<8x8x96xf32, #tpu.memory_space<vmem>>, vector<1x8x96xf32>
    %13 = vector.shape_cast %12 : vector<1x8x96xf32> to vector<8x96xf32>
    %14 = vector.shape_cast %11 : vector<8x96xf32> to vector<1x8x96xf32>
    tpu.vector_store %arg15[%c0_10, %c0_11, %c0_12], %14 {strides = array<i32>} : memref<8x8x96xf32, #tpu.memory_space<vmem>>, vector<1x8x96xf32>,
    %15 = vector.extract_strided_slice %10 {offsets = [0, 0], sizes = [8, 96], strides = [1, 1]} : vector<64x96xf32> to vector<8x96xf32>
    %c0_13 = arith.constant 0 : index
    %c0_14 = arith.constant 0 : index
    %c0_15 = arith.constant 0 : index
    %16 = vector.load %arg16[%c0_13, %c0_14, %c0_15] : memref<8x8x96xf32, #tpu.memory_space<vmem>>, vector<1x8x96xf32>
    %17 = vector.shape_cast %16 : vector<1x8x96xf32> to vector<8x96xf32>
    %18 = vector.shape_cast %15 : vector<8x96xf32> to vector<1x8x96xf32>
    tpu.vector_store %arg16[%c0_13, %c0_14, %c0_15], %18 {strides = array<i32>} : memref<8x8x96xf32, #tpu.memory_space<vmem>>, vector<1x8x96xf32>,
    %19 = vector.extract_strided_slice %5 {offsets = [8, 0], sizes = [8, 96], strides = [1, 1]} : vector<64x96xf32> to vector<8x96xf32>
    %c1 = arith.constant 1 : index
    %c0_16 = arith.constant 0 : index
    %c0_17 = arith.constant 0 : index
    %20 = vector.load %arg15[%c1, %c0_16, %c0_17] : memref<8x8x96xf32, #tpu.memory_space<vmem>>, vector<1x8x96xf32>
    %21 = vector.shape_cast %20 : vector<1x8x96xf32> to vector<8x96xf32>
    %22 = vector.shape_cast %19 : vector<8x96xf32> to vector<1x8x96xf32>
    tpu.vector_store %arg15[%c1, %c0_16, %c0_17], %22 {strides = array<i32>} : memref<8x8x96xf32, #tpu.memory_space<vmem>>, vector<1x8x96xf32>,
    %23 = vector.extract_strided_slice %10 {offsets = [8, 0], sizes = [8, 96], strides = [1, 1]} : vector<64x96xf32> to vector<8x96xf32>
    %c1_18 = arith.constant 1 : index
    %c0_19 = arith.constant 0 : index
    %c0_20 = arith.constant 0 : index
    %24 = vector.load %arg16[%c1_18, %c0_19, %c0_20] : memref<8x8x96xf32, #tpu.memory_space<vmem>>, vector<1x8x96xf32>
    %25 = vector.shape_cast %24 : vector<1x8x96xf32> to vector<8x96xf32>
    %26 = vector.shape_cast %23 : vector<8x96xf32> to vector<1x8x96xf32>
    tpu.vector_store %arg16[%c1_18, %c0_19, %c0_20], %26 {strides = array<i32>} : memref<8x8x96xf32, #tpu.memory_space<vmem>>, vector<1x8x96xf32>,
    %27 = vector.extract_strided_slice %5 {offsets = [16, 0], sizes = [8, 96], strides = [1, 1]} : vector<64x96xf32> to vector<8x96xf32>
    %c2 = arith.constant 2 : index
    %c0_21 = arith.constant 0 : index
    %c0_22 = arith.constant 0 : index
    %28 = vector.load %arg15[%c2, %c0_21, %c0_22] : memref<8x8x96xf32, #tpu.memory_space<vmem>>, vector<1x8x96xf32>
    %29 = vector.shape_cast %28 : vector<1x8x96xf32> to vector<8x96xf32>
    %30 = vector.shape_cast %27 : vector<8x96xf32> to vector<1x8x96xf32>
    tpu.vector_store %arg15[%c2, %c0_21, %c0_22], %30 {strides = array<i32>} : memref<8x8x96xf32, #tpu.memory_space<vmem>>, vector<1x8x96xf32>,
    %31 = vector.extract_strided_slice %10 {offsets = [16, 0], sizes = [8, 96], strides = [1, 1]} : vector<64x96xf32> to vector<8x96xf32>
    %c2_23 = arith.constant 2 : index
    %c0_24 = arith.constant 0 : index
    %c0_25 = arith.constant 0 : index
    %32 = vector.load %arg16[%c2_23, %c0_24, %c0_25] : memref<8x8x96xf32, #tpu.memory_space<vmem>>, vector<1x8x96xf32>
    %33 = vector.shape_cast %32 : vector<1x8x96xf32> to vector<8x96xf32>
    %34 = vector.shape_cast %31 : vector<8x96xf32> to vector<1x8x96xf32>
    tpu.vector_store %arg16[%c2_23, %c0_24, %c0_25], %34 {strides = array<i32>} : memref<8x8x96xf32, #tpu.memory_space<vmem>>, vector<1x8x96xf32>,
    %35 = vector.extract_strided_slice %5 {offsets = [24, 0], sizes = [8, 96], strides = [1, 1]} : vector<64x96xf32> to vector<8x96xf32>
    %c3 = arith.constant 3 : index
    %c0_26 = arith.constant 0 : index
    %c0_27 = arith.constant 0 : index
    %36 = vector.load %arg15[%c3, %c0_26, %c0_27] : memref<8x8x96xf32, #tpu.memory_space<vmem>>, vector<1x8x96xf32>
    %37 = vector.shape_cast %36 : vector<1x8x96xf32> to vector<8x96xf32>
    %38 = vector.shape_cast %35 : vector<8x96xf32> to vector<1x8x96xf32>
    tpu.vector_store %arg15[%c3, %c0_26, %c0_27], %38 {strides = array<i32>} : memref<8x8x96xf32, #tpu.memory_space<vmem>>, vector<1x8x96xf32>,
    %39 = vector.extract_strided_slice %10 {offsets = [24, 0], sizes = [8, 96], strides = [1, 1]} : vector<64x96xf32> to vector<8x96xf32>
    %c3_28 = arith.constant 3 : index
    %c0_29 = arith.constant 0 : index
    %c0_30 = arith.constant 0 : index
    %40 = vector.load %arg16[%c3_28, %c0_29, %c0_30] : memref<8x8x96xf32, #tpu.memory_space<vmem>>, vector<1x8x96xf32>
    %41 = vector.shape_cast %40 : vector<1x8x96xf32> to vector<8x96xf32>
    %42 = vector.shape_cast %39 : vector<8x96xf32> to vector<1x8x96xf32>
    tpu.vector_store %arg16[%c3_28, %c0_29, %c0_30], %42 {strides = array<i32>} : memref<8x8x96xf32, #tpu.memory_space<vmem>>, vector<1x8x96xf32>,
    %43 = vector.extract_strided_slice %5 {offsets = [32, 0], sizes = [8, 96], strides = [1, 1]} : vector<64x96xf32> to vector<8x96xf32>
    %c4 = arith.constant 4 : index
    %c0_31 = arith.constant 0 : index
    %c0_32 = arith.constant 0 : index
    %44 = vector.load %arg15[%c4, %c0_31, %c0_32] : memref<8x8x96xf32, #tpu.memory_space<vmem>>, vector<1x8x96xf32>
    %45 = vector.shape_cast %44 : vector<1x8x96xf32> to vector<8x96xf32>
    %46 = vector.shape_cast %43 : vector<8x96xf32> to vector<1x8x96xf32>
    tpu.vector_store %arg15[%c4, %c0_31, %c0_32], %46 {strides = array<i32>} : memref<8x8x96xf32, #tpu.memory_space<vmem>>, vector<1x8x96xf32>,
    %47 = vector.extract_strided_slice %10 {offsets = [32, 0], sizes = [8, 96], strides = [1, 1]} : vector<64x96xf32> to vector<8x96xf32>
    %c4_33 = arith.constant 4 : index
    %c0_34 = arith.constant 0 : index
    %c0_35 = arith.constant 0 : index
    %48 = vector.load %arg16[%c4_33, %c0_34, %c0_35] : memref<8x8x96xf32, #tpu.memory_space<vmem>>, vector<1x8x96xf32>
    %49 = vector.shape_cast %48 : vector<1x8x96xf32> to vector<8x96xf32>
    %50 = vector.shape_cast %47 : vector<8x96xf32> to vector<1x8x96xf32>
    tpu.vector_store %arg16[%c4_33, %c0_34, %c0_35], %50 {strides = array<i32>} : memref<8x8x96xf32, #tpu.memory_space<vmem>>, vector<1x8x96xf32>,
    %51 = vector.extract_strided_slice %5 {offsets = [40, 0], sizes = [8, 96], strides = [1, 1]} : vector<64x96xf32> to vector<8x96xf32>
    %c5 = arith.constant 5 : index
    %c0_36 = arith.constant 0 : index
    %c0_37 = arith.constant 0 : index
    %52 = vector.load %arg15[%c5, %c0_36, %c0_37] : memref<8x8x96xf32, #tpu.memory_space<vmem>>, vector<1x8x96xf32>
    %53 = vector.shape_cast %52 : vector<1x8x96xf32> to vector<8x96xf32>
    %54 = vector.shape_cast %51 : vector<8x96xf32> to vector<1x8x96xf32>
    tpu.vector_store %arg15[%c5, %c0_36, %c0_37], %54 {strides = array<i32>} : memref<8x8x96xf32, #tpu.memory_space<vmem>>, vector<1x8x96xf32>,
    %55 = vector.extract_strided_slice %10 {offsets = [40, 0], sizes = [8, 96], strides = [1, 1]} : vector<64x96xf32> to vector<8x96xf32>
    %c5_38 = arith.constant 5 : index
    %c0_39 = arith.constant 0 : index
    %c0_40 = arith.constant 0 : index
    %56 = vector.load %arg16[%c5_38, %c0_39, %c0_40] : memref<8x8x96xf32, #tpu.memory_space<vmem>>, vector<1x8x96xf32>
    %57 = vector.shape_cast %56 : vector<1x8x96xf32> to vector<8x96xf32>
    %58 = vector.shape_cast %55 : vector<8x96xf32> to vector<1x8x96xf32>
    tpu.vector_store %arg16[%c5_38, %c0_39, %c0_40], %58 {strides = array<i32>} : memref<8x8x96xf32, #tpu.memory_space<vmem>>, vector<1x8x96xf32>,
    %59 = vector.extract_strided_slice %5 {offsets = [48, 0], sizes = [8, 96], strides = [1, 1]} : vector<64x96xf32> to vector<8x96xf32>
    %c6 = arith.constant 6 : index
    %c0_41 = arith.constant 0 : index
    %c0_42 = arith.constant 0 : index
    %60 = vector.load %arg15[%c6, %c0_41, %c0_42] : memref<8x8x96xf32, #tpu.memory_space<vmem>>, vector<1x8x96xf32>
    %61 = vector.shape_cast %60 : vector<1x8x96xf32> to vector<8x96xf32>
    %62 = vector.shape_cast %59 : vector<8x96xf32> to vector<1x8x96xf32>
    tpu.vector_store %arg15[%c6, %c0_41, %c0_42], %62 {strides = array<i32>} : memref<8x8x96xf32, #tpu.memory_space<vmem>>, vector<1x8x96xf32>,
    %63 = vector.extract_strided_slice %10 {offsets = [48, 0], sizes = [8, 96], strides = [1, 1]} : vector<64x96xf32> to vector<8x96xf32>
    %c6_43 = arith.constant 6 : index
    %c0_44 = arith.constant 0 : index
    %c0_45 = arith.constant 0 : index
    %64 = vector.load %arg16[%c6_43, %c0_44, %c0_45] : memref<8x8x96xf32, #tpu.memory_space<vmem>>, vector<1x8x96xf32>
    %65 = vector.shape_cast %64 : vector<1x8x96xf32> to vector<8x96xf32>
    %66 = vector.shape_cast %63 : vector<8x96xf32> to vector<1x8x96xf32>
    tpu.vector_store %arg16[%c6_43, %c0_44, %c0_45], %66 {strides = array<i32>} : memref<8x8x96xf32, #tpu.memory_space<vmem>>, vector<1x8x96xf32>,
    %67 = vector.extract_strided_slice %5 {offsets = [56, 0], sizes = [8, 96], strides = [1, 1]} : vector<64x96xf32> to vector<8x96xf32>
    %c7 = arith.constant 7 : index
    %c0_46 = arith.constant 0 : index
    %c0_47 = arith.constant 0 : index
    %68 = vector.load %arg15[%c7, %c0_46, %c0_47] : memref<8x8x96xf32, #tpu.memory_space<vmem>>, vector<1x8x96xf32>
    %69 = vector.shape_cast %68 : vector<1x8x96xf32> to vector<8x96xf32>
    %70 = vector.shape_cast %67 : vector<8x96xf32> to vector<1x8x96xf32>
    tpu.vector_store %arg15[%c7, %c0_46, %c0_47], %70 {strides = array<i32>} : memref<8x8x96xf32, #tpu.memory_space<vmem>>, vector<1x8x96xf32>,
    %71 = vector.extract_strided_slice %10 {offsets = [56, 0], sizes = [8, 96], strides = [1, 1]} : vector<64x96xf32> to vector<8x96xf32>
    %c7_48 = arith.constant 7 : index
    %c0_49 = arith.constant 0 : index
    %c0_50 = arith.constant 0 : index
    %72 = vector.load %arg16[%c7_48, %c0_49, %c0_50] : memref<8x8x96xf32, #tpu.memory_space<vmem>>, vector<1x8x96xf32>
    %73 = vector.shape_cast %72 : vector<1x8x96xf32> to vector<8x96xf32>
    %74 = vector.shape_cast %71 : vector<8x96xf32> to vector<1x8x96xf32>
    tpu.vector_store %arg16[%c7_48, %c0_49, %c0_50], %74 {strides = array<i32>} : memref<8x8x96xf32, #tpu.memory_space<vmem>>, vector<1x8x96xf32>,
    %c0_51 = arith.constant 0 : index
    %c0_52 = arith.constant 0 : index
    %75 = vector.load %arg2[%c0_51, %c0_52] : memref<32x96xf32, #tpu.memory_space<vmem>>, vector<32x96xf32>
    %c0_53 = arith.constant 0 : index
    %c0_54 = arith.constant 0 : index
    %76 = vector.load %arg4[%c0_53, %c0_54] : memref<1x96xf32, #tpu.memory_space<vmem>>, vector<1x96xf32>
    %c0_55 = arith.constant 0 : index
    %c0_56 = arith.constant 0 : index
    %77 = vector.load %arg6[%c0_55, %c0_56] : memref<32x96xf32, #tpu.memory_space<vmem>>, vector<32x96xf32>
    %c0_57 = arith.constant 0 : index
    %c0_58 = arith.constant 0 : index
    %78 = vector.load %arg8[%c0_57, %c0_58] : memref<1x96xf32, #tpu.memory_space<vmem>>, vector<1x96xf32>
    %cst_59 = arith.constant 0.000000e+00 : f32
    %79 = vector.broadcast %cst_59 : f32 to vector<8x32xf32>
    %c0_i32 = arith.constant 0 : i32
    %c7_i32 = arith.constant 7 : i32
    %80 = arith.subi %c7_i32, %c0_i32 : i32
    %81 = arith.index_cast %c0_i32 : i32 to index
    %c0_60 = arith.constant 0 : index
    %c0_61 = arith.constant 0 : index
    %82 = vector.load %arg15[%81, %c0_60, %c0_61] : memref<8x8x96xf32, #tpu.memory_space<vmem>>, vector<1x8x96xf32>
    %83 = vector.shape_cast %82 : vector<1x8x96xf32> to vector<8x96xf32>
    %cst_62 = arith.constant dense<0.000000e+00> : vector<8x96xf32>
    %84 = tpu.matmul %79, %75, %cst_62 {dimension_numbers = #tpu.dot_dimension_numbers<[1], [0], [0], [1], [0, 0, 1, 1], [], []>} : vector<8x32xf32>, vector<32x96xf32>, vector<8x96xf32> -> vector<8x96xf32>
    %85 = vector.broadcast %76 : vector<1x96xf32> to vector<8x96xf32>
    %86 = arith.addf %84, %85 : vector<8x96xf32>
    %87 = vector.extract_strided_slice %83 {offsets = [0, 0], sizes = [8, 32], strides = [1, 1]} : vector<8x96xf32> to vector<8x32xf32>
    %88 = vector.extract_strided_slice %86 {offsets = [0, 0], sizes = [8, 32], strides = [1, 1]} : vector<8x96xf32> to vector<8x32xf32>
    %89 = arith.addf %87, %88 : vector<8x32xf32>
    %90 = arith.negf %89 : vector<8x32xf32>
    %91 = math.exp %90 : vector<8x32xf32>
    %cst_63 = arith.constant 1.000000e+00 : f32
    %92 = vector.broadcast %cst_63 : f32 to vector<8x32xf32>
    %93 = arith.addf %92, %91 : vector<8x32xf32>
    %94 = arith.divf %92, %93 : vector<8x32xf32>
    %95 = vector.extract_strided_slice %83 {offsets = [0, 32], sizes = [8, 32], strides = [1, 1]} : vector<8x96xf32> to vector<8x32xf32>
    %96 = vector.extract_strided_slice %86 {offsets = [0, 32], sizes = [8, 32], strides = [1, 1]} : vector<8x96xf32> to vector<8x32xf32>
    %97 = arith.addf %95, %96 : vector<8x32xf32>
    %98 = arith.negf %97 : vector<8x32xf32>
    %99 = math.exp %98 : vector<8x32xf32>
    %cst_64 = arith.constant 1.000000e+00 : f32
    %100 = vector.broadcast %cst_64 : f32 to vector<8x32xf32>
    %101 = arith.addf %100, %99 : vector<8x32xf32>
    %102 = arith.divf %100, %101 : vector<8x32xf32>
    %103 = vector.extract_strided_slice %83 {offsets = [0, 64], sizes = [8, 32], strides = [1, 1]} : vector<8x96xf32> to vector<8x32xf32>
    %104 = vector.extract_strided_slice %86 {offsets = [0, 64], sizes = [8, 32], strides = [1, 1]} : vector<8x96xf32> to vector<8x32xf32>
    %105 = arith.mulf %94, %104 : vector<8x32xf32>
    %106 = arith.addf %103, %105 : vector<8x32xf32>
    %107 = math.tanh %106 : vector<8x32xf32>
    %cst_65 = arith.constant 1.000000e+00 : f32
    %108 = vector.broadcast %cst_65 : f32 to vector<8x32xf32>
    %109 = arith.subf %108, %102 : vector<8x32xf32>
    %110 = arith.mulf %109, %107 : vector<8x32xf32>
    %111 = arith.mulf %102, %79 : vector<8x32xf32>
    %112 = arith.addf %110, %111 : vector<8x32xf32>
    %113 = arith.index_cast %80 : i32 to index
    %c0_66 = arith.constant 0 : index
    %c0_67 = arith.constant 0 : index
    %114 = vector.load %arg16[%113, %c0_66, %c0_67] : memref<8x8x96xf32, #tpu.memory_space<vmem>>, vector<1x8x96xf32>
    %115 = vector.shape_cast %114 : vector<1x8x96xf32> to vector<8x96xf32>
    %cst_68 = arith.constant dense<0.000000e+00> : vector<8x96xf32>
    %116 = tpu.matmul %79, %77, %cst_68 {dimension_numbers = #tpu.dot_dimension_numbers<[1], [0], [0], [1], [0, 0, 1, 1], [], []>} : vector<8x32xf32>, vector<32x96xf32>, vector<8x96xf32> -> vector<8x96xf32>
    %117 = vector.broadcast %78 : vector<1x96xf32> to vector<8x96xf32>
    %118 = arith.addf %116, %117 : vector<8x96xf32>
    %119 = vector.extract_strided_slice %115 {offsets = [0, 0], sizes = [8, 32], strides = [1, 1]} : vector<8x96xf32> to vector<8x32xf32>
    %120 = vector.extract_strided_slice %118 {offsets = [0, 0], sizes = [8, 32], strides = [1, 1]} : vector<8x96xf32> to vector<8x32xf32>
    %121 = arith.addf %119, %120 : vector<8x32xf32>
    %122 = arith.negf %121 : vector<8x32xf32>
    %123 = math.exp %122 : vector<8x32xf32>
    %cst_69 = arith.constant 1.000000e+00 : f32
    %124 = vector.broadcast %cst_69 : f32 to vector<8x32xf32>
    %125 = arith.addf %124, %123 : vector<8x32xf32>
    %126 = arith.divf %124, %125 : vector<8x32xf32>
    %127 = vector.extract_strided_slice %115 {offsets = [0, 32], sizes = [8, 32], strides = [1, 1]} : vector<8x96xf32> to vector<8x32xf32>
    %128 = vector.extract_strided_slice %118 {offsets = [0, 32], sizes = [8, 32], strides = [1, 1]} : vector<8x96xf32> to vector<8x32xf32>
    %129 = arith.addf %127, %128 : vector<8x32xf32>
    %130 = arith.negf %129 : vector<8x32xf32>
    %131 = math.exp %130 : vector<8x32xf32>
    %cst_70 = arith.constant 1.000000e+00 : f32
    %132 = vector.broadcast %cst_70 : f32 to vector<8x32xf32>
    %133 = arith.addf %132, %131 : vector<8x32xf32>
    %134 = arith.divf %132, %133 : vector<8x32xf32>
    %135 = vector.extract_strided_slice %115 {offsets = [0, 64], sizes = [8, 32], strides = [1, 1]} : vector<8x96xf32> to vector<8x32xf32>
    %136 = vector.extract_strided_slice %118 {offsets = [0, 64], sizes = [8, 32], strides = [1, 1]} : vector<8x96xf32> to vector<8x32xf32>
    %137 = arith.mulf %126, %136 : vector<8x32xf32>
    %138 = arith.addf %135, %137 : vector<8x32xf32>
    %139 = math.tanh %138 : vector<8x32xf32>
    %cst_71 = arith.constant 1.000000e+00 : f32
    %140 = vector.broadcast %cst_71 : f32 to vector<8x32xf32>
    %141 = arith.subf %140, %134 : vector<8x32xf32>
    %142 = arith.mulf %141, %139 : vector<8x32xf32>
    %143 = arith.mulf %134, %79 : vector<8x32xf32>
    %144 = arith.addf %142, %143 : vector<8x32xf32>
    %145 = arith.index_cast %c0_i32 : i32 to index
    %c0_72 = arith.constant 0 : index
    %c0_73 = arith.constant 0 : index
    %146 = vector.load %arg12[%145, %c0_72, %c0_73] : memref<8x8x32xf32, #tpu.memory_space<vmem>>, vector<1x8x32xf32>
    %147 = vector.shape_cast %146 : vector<1x8x32xf32> to vector<8x32xf32>
    %148 = vector.shape_cast %112 : vector<8x32xf32> to vector<1x8x32xf32>
    tpu.vector_store %arg12[%145, %c0_72, %c0_73], %148 {strides = array<i32>} : memref<8x8x32xf32, #tpu.memory_space<vmem>>, vector<1x8x32xf32>,
    %149 = arith.index_cast %80 : i32 to index
    %c0_74 = arith.constant 0 : index
    %c0_75 = arith.constant 0 : index
    %150 = vector.load %arg13[%149, %c0_74, %c0_75] : memref<8x8x32xf32, #tpu.memory_space<vmem>>, vector<1x8x32xf32>
    %151 = vector.shape_cast %150 : vector<1x8x32xf32> to vector<8x32xf32>
    %152 = vector.shape_cast %144 : vector<8x32xf32> to vector<1x8x32xf32>
    tpu.vector_store %arg13[%149, %c0_74, %c0_75], %152 {strides = array<i32>} : memref<8x8x32xf32, #tpu.memory_space<vmem>>, vector<1x8x32xf32>,
    %c1_i32 = arith.constant 1 : i32
    %c7_i32_76 = arith.constant 7 : i32
    %153 = arith.subi %c7_i32_76, %c1_i32 : i32
    %154 = arith.index_cast %c1_i32 : i32 to index
    %c0_77 = arith.constant 0 : index
    %c0_78 = arith.constant 0 : index
    %155 = vector.load %arg15[%154, %c0_77, %c0_78] : memref<8x8x96xf32, #tpu.memory_space<vmem>>, vector<1x8x96xf32>
    %156 = vector.shape_cast %155 : vector<1x8x96xf32> to vector<8x96xf32>
    %cst_79 = arith.constant dense<0.000000e+00> : vector<8x96xf32>
    %157 = tpu.matmul %112, %75, %cst_79 {dimension_numbers = #tpu.dot_dimension_numbers<[1], [0], [0], [1], [0, 0, 1, 1], [], []>} : vector<8x32xf32>, vector<32x96xf32>, vector<8x96xf32> -> vector<8x96xf32>
    %158 = vector.broadcast %76 : vector<1x96xf32> to vector<8x96xf32>
    %159 = arith.addf %157, %158 : vector<8x96xf32>
    %160 = vector.extract_strided_slice %156 {offsets = [0, 0], sizes = [8, 32], strides = [1, 1]} : vector<8x96xf32> to vector<8x32xf32>
    %161 = vector.extract_strided_slice %159 {offsets = [0, 0], sizes = [8, 32], strides = [1, 1]} : vector<8x96xf32> to vector<8x32xf32>
    %162 = arith.addf %160, %161 : vector<8x32xf32>
    %163 = arith.negf %162 : vector<8x32xf32>
    %164 = math.exp %163 : vector<8x32xf32>
    %cst_80 = arith.constant 1.000000e+00 : f32
    %165 = vector.broadcast %cst_80 : f32 to vector<8x32xf32>
    %166 = arith.addf %165, %164 : vector<8x32xf32>
    %167 = arith.divf %165, %166 : vector<8x32xf32>
    %168 = vector.extract_strided_slice %156 {offsets = [0, 32], sizes = [8, 32], strides = [1, 1]} : vector<8x96xf32> to vector<8x32xf32>
    %169 = vector.extract_strided_slice %159 {offsets = [0, 32], sizes = [8, 32], strides = [1, 1]} : vector<8x96xf32> to vector<8x32xf32>
    %170 = arith.addf %168, %169 : vector<8x32xf32>
    %171 = arith.negf %170 : vector<8x32xf32>
    %172 = math.exp %171 : vector<8x32xf32>
    %cst_81 = arith.constant 1.000000e+00 : f32
    %173 = vector.broadcast %cst_81 : f32 to vector<8x32xf32>
    %174 = arith.addf %173, %172 : vector<8x32xf32>
    %175 = arith.divf %173, %174 : vector<8x32xf32>
    %176 = vector.extract_strided_slice %156 {offsets = [0, 64], sizes = [8, 32], strides = [1, 1]} : vector<8x96xf32> to vector<8x32xf32>
    %177 = vector.extract_strided_slice %159 {offsets = [0, 64], sizes = [8, 32], strides = [1, 1]} : vector<8x96xf32> to vector<8x32xf32>
    %178 = arith.mulf %167, %177 : vector<8x32xf32>
    %179 = arith.addf %176, %178 : vector<8x32xf32>
    %180 = math.tanh %179 : vector<8x32xf32>
    %cst_82 = arith.constant 1.000000e+00 : f32
    %181 = vector.broadcast %cst_82 : f32 to vector<8x32xf32>
    %182 = arith.subf %181, %175 : vector<8x32xf32>
    %183 = arith.mulf %182, %180 : vector<8x32xf32>
    %184 = arith.mulf %175, %112 : vector<8x32xf32>
    %185 = arith.addf %183, %184 : vector<8x32xf32>
    %186 = arith.index_cast %153 : i32 to index
    %c0_83 = arith.constant 0 : index
    %c0_84 = arith.constant 0 : index
    %187 = vector.load %arg16[%186, %c0_83, %c0_84] : memref<8x8x96xf32, #tpu.memory_space<vmem>>, vector<1x8x96xf32>
    %188 = vector.shape_cast %187 : vector<1x8x96xf32> to vector<8x96xf32>
    %cst_85 = arith.constant dense<0.000000e+00> : vector<8x96xf32>
    %189 = tpu.matmul %144, %77, %cst_85 {dimension_numbers = #tpu.dot_dimension_numbers<[1], [0], [0], [1], [0, 0, 1, 1], [], []>} : vector<8x32xf32>, vector<32x96xf32>, vector<8x96xf32> -> vector<8x96xf32>
    %190 = vector.broadcast %78 : vector<1x96xf32> to vector<8x96xf32>
    %191 = arith.addf %189, %190 : vector<8x96xf32>
    %192 = vector.extract_strided_slice %188 {offsets = [0, 0], sizes = [8, 32], strides = [1, 1]} : vector<8x96xf32> to vector<8x32xf32>
    %193 = vector.extract_strided_slice %191 {offsets = [0, 0], sizes = [8, 32], strides = [1, 1]} : vector<8x96xf32> to vector<8x32xf32>
    %194 = arith.addf %192, %193 : vector<8x32xf32>
    %195 = arith.negf %194 : vector<8x32xf32>
    %196 = math.exp %195 : vector<8x32xf32>
    %cst_86 = arith.constant 1.000000e+00 : f32
    %197 = vector.broadcast %cst_86 : f32 to vector<8x32xf32>
    %198 = arith.addf %197, %196 : vector<8x32xf32>
    %199 = arith.divf %197, %198 : vector<8x32xf32>
    %200 = vector.extract_strided_slice %188 {offsets = [0, 32], sizes = [8, 32], strides = [1, 1]} : vector<8x96xf32> to vector<8x32xf32>
    %201 = vector.extract_strided_slice %191 {offsets = [0, 32], sizes = [8, 32], strides = [1, 1]} : vector<8x96xf32> to vector<8x32xf32>
    %202 = arith.addf %200, %201 : vector<8x32xf32>
    %203 = arith.negf %202 : vector<8x32xf32>
    %204 = math.exp %203 : vector<8x32xf32>
    %cst_87 = arith.constant 1.000000e+00 : f32
    %205 = vector.broadcast %cst_87 : f32 to vector<8x32xf32>
    %206 = arith.addf %205, %204 : vector<8x32xf32>
    %207 = arith.divf %205, %206 : vector<8x32xf32>
    %208 = vector.extract_strided_slice %188 {offsets = [0, 64], sizes = [8, 32], strides = [1, 1]} : vector<8x96xf32> to vector<8x32xf32>
    %209 = vector.extract_strided_slice %191 {offsets = [0, 64], sizes = [8, 32], strides = [1, 1]} : vector<8x96xf32> to vector<8x32xf32>
    %210 = arith.mulf %199, %209 : vector<8x32xf32>
    %211 = arith.addf %208, %210 : vector<8x32xf32>
    %212 = math.tanh %211 : vector<8x32xf32>
    %cst_88 = arith.constant 1.000000e+00 : f32
    %213 = vector.broadcast %cst_88 : f32 to vector<8x32xf32>
    %214 = arith.subf %213, %207 : vector<8x32xf32>
    %215 = arith.mulf %214, %212 : vector<8x32xf32>
    %216 = arith.mulf %207, %144 : vector<8x32xf32>
    %217 = arith.addf %215, %216 : vector<8x32xf32>
    %218 = arith.index_cast %c1_i32 : i32 to index
    %c0_89 = arith.constant 0 : index
    %c0_90 = arith.constant 0 : index
    %219 = vector.load %arg12[%218, %c0_89, %c0_90] : memref<8x8x32xf32, #tpu.memory_space<vmem>>, vector<1x8x32xf32>
    %220 = vector.shape_cast %219 : vector<1x8x32xf32> to vector<8x32xf32>
    %221 = vector.shape_cast %185 : vector<8x32xf32> to vector<1x8x32xf32>
    tpu.vector_store %arg12[%218, %c0_89, %c0_90], %221 {strides = array<i32>} : memref<8x8x32xf32, #tpu.memory_space<vmem>>, vector<1x8x32xf32>,
    %222 = arith.index_cast %153 : i32 to index
    %c0_91 = arith.constant 0 : index
    %c0_92 = arith.constant 0 : index
    %223 = vector.load %arg13[%222, %c0_91, %c0_92] : memref<8x8x32xf32, #tpu.memory_space<vmem>>, vector<1x8x32xf32>
    %224 = vector.shape_cast %223 : vector<1x8x32xf32> to vector<8x32xf32>
    %225 = vector.shape_cast %217 : vector<8x32xf32> to vector<1x8x32xf32>
    tpu.vector_store %arg13[%222, %c0_91, %c0_92], %225 {strides = array<i32>} : memref<8x8x32xf32, #tpu.memory_space<vmem>>, vector<1x8x32xf32>,
    %c2_i32 = arith.constant 2 : i32
    %c7_i32_93 = arith.constant 7 : i32
    %226 = arith.subi %c7_i32_93, %c2_i32 : i32
    %227 = arith.index_cast %c2_i32 : i32 to index
    %c0_94 = arith.constant 0 : index
    %c0_95 = arith.constant 0 : index
    %228 = vector.load %arg15[%227, %c0_94, %c0_95] : memref<8x8x96xf32, #tpu.memory_space<vmem>>, vector<1x8x96xf32>
    %229 = vector.shape_cast %228 : vector<1x8x96xf32> to vector<8x96xf32>
    %cst_96 = arith.constant dense<0.000000e+00> : vector<8x96xf32>
    %230 = tpu.matmul %185, %75, %cst_96 {dimension_numbers = #tpu.dot_dimension_numbers<[1], [0], [0], [1], [0, 0, 1, 1], [], []>} : vector<8x32xf32>, vector<32x96xf32>, vector<8x96xf32> -> vector<8x96xf32>
    %231 = vector.broadcast %76 : vector<1x96xf32> to vector<8x96xf32>
    %232 = arith.addf %230, %231 : vector<8x96xf32>
    %233 = vector.extract_strided_slice %229 {offsets = [0, 0], sizes = [8, 32], strides = [1, 1]} : vector<8x96xf32> to vector<8x32xf32>
    %234 = vector.extract_strided_slice %232 {offsets = [0, 0], sizes = [8, 32], strides = [1, 1]} : vector<8x96xf32> to vector<8x32xf32>
    %235 = arith.addf %233, %234 : vector<8x32xf32>
    %236 = arith.negf %235 : vector<8x32xf32>
    %237 = math.exp %236 : vector<8x32xf32>
    %cst_97 = arith.constant 1.000000e+00 : f32
    %238 = vector.broadcast %cst_97 : f32 to vector<8x32xf32>
    %239 = arith.addf %238, %237 : vector<8x32xf32>
    %240 = arith.divf %238, %239 : vector<8x32xf32>
    %241 = vector.extract_strided_slice %229 {offsets = [0, 32], sizes = [8, 32], strides = [1, 1]} : vector<8x96xf32> to vector<8x32xf32>
    %242 = vector.extract_strided_slice %232 {offsets = [0, 32], sizes = [8, 32], strides = [1, 1]} : vector<8x96xf32> to vector<8x32xf32>
    %243 = arith.addf %241, %242 : vector<8x32xf32>
    %244 = arith.negf %243 : vector<8x32xf32>
    %245 = math.exp %244 : vector<8x32xf32>
    %cst_98 = arith.constant 1.000000e+00 : f32
    %246 = vector.broadcast %cst_98 : f32 to vector<8x32xf32>
    %247 = arith.addf %246, %245 : vector<8x32xf32>
    %248 = arith.divf %246, %247 : vector<8x32xf32>
    %249 = vector.extract_strided_slice %229 {offsets = [0, 64], sizes = [8, 32], strides = [1, 1]} : vector<8x96xf32> to vector<8x32xf32>
    %250 = vector.extract_strided_slice %232 {offsets = [0, 64], sizes = [8, 32], strides = [1, 1]} : vector<8x96xf32> to vector<8x32xf32>
    %251 = arith.mulf %240, %250 : vector<8x32xf32>
    %252 = arith.addf %249, %251 : vector<8x32xf32>
    %253 = math.tanh %252 : vector<8x32xf32>
    %cst_99 = arith.constant 1.000000e+00 : f32
    %254 = vector.broadcast %cst_99 : f32 to vector<8x32xf32>
    %255 = arith.subf %254, %248 : vector<8x32xf32>
    %256 = arith.mulf %255, %253 : vector<8x32xf32>
    %257 = arith.mulf %248, %185 : vector<8x32xf32>
    %258 = arith.addf %256, %257 : vector<8x32xf32>
    %259 = arith.index_cast %226 : i32 to index
    %c0_100 = arith.constant 0 : index
    %c0_101 = arith.constant 0 : index
    %260 = vector.load %arg16[%259, %c0_100, %c0_101] : memref<8x8x96xf32, #tpu.memory_space<vmem>>, vector<1x8x96xf32>
    %261 = vector.shape_cast %260 : vector<1x8x96xf32> to vector<8x96xf32>
    %cst_102 = arith.constant dense<0.000000e+00> : vector<8x96xf32>
    %262 = tpu.matmul %217, %77, %cst_102 {dimension_numbers = #tpu.dot_dimension_numbers<[1], [0], [0], [1], [0, 0, 1, 1], [], []>} : vector<8x32xf32>, vector<32x96xf32>, vector<8x96xf32> -> vector<8x96xf32>
    %263 = vector.broadcast %78 : vector<1x96xf32> to vector<8x96xf32>
    %264 = arith.addf %262, %263 : vector<8x96xf32>
    %265 = vector.extract_strided_slice %261 {offsets = [0, 0], sizes = [8, 32], strides = [1, 1]} : vector<8x96xf32> to vector<8x32xf32>
    %266 = vector.extract_strided_slice %264 {offsets = [0, 0], sizes = [8, 32], strides = [1, 1]} : vector<8x96xf32> to vector<8x32xf32>
    %267 = arith.addf %265, %266 : vector<8x32xf32>
    %268 = arith.negf %267 : vector<8x32xf32>
    %269 = math.exp %268 : vector<8x32xf32>
    %cst_103 = arith.constant 1.000000e+00 : f32
    %270 = vector.broadcast %cst_103 : f32 to vector<8x32xf32>
    %271 = arith.addf %270, %269 : vector<8x32xf32>
    %272 = arith.divf %270, %271 : vector<8x32xf32>
    %273 = vector.extract_strided_slice %261 {offsets = [0, 32], sizes = [8, 32], strides = [1, 1]} : vector<8x96xf32> to vector<8x32xf32>
    %274 = vector.extract_strided_slice %264 {offsets = [0, 32], sizes = [8, 32], strides = [1, 1]} : vector<8x96xf32> to vector<8x32xf32>
    %275 = arith.addf %273, %274 : vector<8x32xf32>
    %276 = arith.negf %275 : vector<8x32xf32>
    %277 = math.exp %276 : vector<8x32xf32>
    %cst_104 = arith.constant 1.000000e+00 : f32
    %278 = vector.broadcast %cst_104 : f32 to vector<8x32xf32>
    %279 = arith.addf %278, %277 : vector<8x32xf32>
    %280 = arith.divf %278, %279 : vector<8x32xf32>
    %281 = vector.extract_strided_slice %261 {offsets = [0, 64], sizes = [8, 32], strides = [1, 1]} : vector<8x96xf32> to vector<8x32xf32>
    %282 = vector.extract_strided_slice %264 {offsets = [0, 64], sizes = [8, 32], strides = [1, 1]} : vector<8x96xf32> to vector<8x32xf32>
    %283 = arith.mulf %272, %282 : vector<8x32xf32>
    %284 = arith.addf %281, %283 : vector<8x32xf32>
    %285 = math.tanh %284 : vector<8x32xf32>
    %cst_105 = arith.constant 1.000000e+00 : f32
    %286 = vector.broadcast %cst_105 : f32 to vector<8x32xf32>
    %287 = arith.subf %286, %280 : vector<8x32xf32>
    %288 = arith.mulf %287, %285 : vector<8x32xf32>
    %289 = arith.mulf %280, %217 : vector<8x32xf32>
    %290 = arith.addf %288, %289 : vector<8x32xf32>
    %291 = arith.index_cast %c2_i32 : i32 to index
    %c0_106 = arith.constant 0 : index
    %c0_107 = arith.constant 0 : index
    %292 = vector.load %arg12[%291, %c0_106, %c0_107] : memref<8x8x32xf32, #tpu.memory_space<vmem>>, vector<1x8x32xf32>
    %293 = vector.shape_cast %292 : vector<1x8x32xf32> to vector<8x32xf32>
    %294 = vector.shape_cast %258 : vector<8x32xf32> to vector<1x8x32xf32>
    tpu.vector_store %arg12[%291, %c0_106, %c0_107], %294 {strides = array<i32>} : memref<8x8x32xf32, #tpu.memory_space<vmem>>, vector<1x8x32xf32>,
    %295 = arith.index_cast %226 : i32 to index
    %c0_108 = arith.constant 0 : index
    %c0_109 = arith.constant 0 : index
    %296 = vector.load %arg13[%295, %c0_108, %c0_109] : memref<8x8x32xf32, #tpu.memory_space<vmem>>, vector<1x8x32xf32>
    %297 = vector.shape_cast %296 : vector<1x8x32xf32> to vector<8x32xf32>
    %298 = vector.shape_cast %290 : vector<8x32xf32> to vector<1x8x32xf32>
    tpu.vector_store %arg13[%295, %c0_108, %c0_109], %298 {strides = array<i32>} : memref<8x8x32xf32, #tpu.memory_space<vmem>>, vector<1x8x32xf32>,
    %c3_i32 = arith.constant 3 : i32
    %c7_i32_110 = arith.constant 7 : i32
    %299 = arith.subi %c7_i32_110, %c3_i32 : i32
    %300 = arith.index_cast %c3_i32 : i32 to index
    %c0_111 = arith.constant 0 : index
    %c0_112 = arith.constant 0 : index
    %301 = vector.load %arg15[%300, %c0_111, %c0_112] : memref<8x8x96xf32, #tpu.memory_space<vmem>>, vector<1x8x96xf32>
    %302 = vector.shape_cast %301 : vector<1x8x96xf32> to vector<8x96xf32>
    %cst_113 = arith.constant dense<0.000000e+00> : vector<8x96xf32>
    %303 = tpu.matmul %258, %75, %cst_113 {dimension_numbers = #tpu.dot_dimension_numbers<[1], [0], [0], [1], [0, 0, 1, 1], [], []>} : vector<8x32xf32>, vector<32x96xf32>, vector<8x96xf32> -> vector<8x96xf32>
    %304 = vector.broadcast %76 : vector<1x96xf32> to vector<8x96xf32>
    %305 = arith.addf %303, %304 : vector<8x96xf32>
    %306 = vector.extract_strided_slice %302 {offsets = [0, 0], sizes = [8, 32], strides = [1, 1]} : vector<8x96xf32> to vector<8x32xf32>
    %307 = vector.extract_strided_slice %305 {offsets = [0, 0], sizes = [8, 32], strides = [1, 1]} : vector<8x96xf32> to vector<8x32xf32>
    %308 = arith.addf %306, %307 : vector<8x32xf32>
    %309 = arith.negf %308 : vector<8x32xf32>
    %310 = math.exp %309 : vector<8x32xf32>
    %cst_114 = arith.constant 1.000000e+00 : f32
    %311 = vector.broadcast %cst_114 : f32 to vector<8x32xf32>
    %312 = arith.addf %311, %310 : vector<8x32xf32>
    %313 = arith.divf %311, %312 : vector<8x32xf32>
    %314 = vector.extract_strided_slice %302 {offsets = [0, 32], sizes = [8, 32], strides = [1, 1]} : vector<8x96xf32> to vector<8x32xf32>
    %315 = vector.extract_strided_slice %305 {offsets = [0, 32], sizes = [8, 32], strides = [1, 1]} : vector<8x96xf32> to vector<8x32xf32>
    %316 = arith.addf %314, %315 : vector<8x32xf32>
    %317 = arith.negf %316 : vector<8x32xf32>
    %318 = math.exp %317 : vector<8x32xf32>
    %cst_115 = arith.constant 1.000000e+00 : f32
    %319 = vector.broadcast %cst_115 : f32 to vector<8x32xf32>
    %320 = arith.addf %319, %318 : vector<8x32xf32>
    %321 = arith.divf %319, %320 : vector<8x32xf32>
    %322 = vector.extract_strided_slice %302 {offsets = [0, 64], sizes = [8, 32], strides = [1, 1]} : vector<8x96xf32> to vector<8x32xf32>
    %323 = vector.extract_strided_slice %305 {offsets = [0, 64], sizes = [8, 32], strides = [1, 1]} : vector<8x96xf32> to vector<8x32xf32>
    %324 = arith.mulf %313, %323 : vector<8x32xf32>
    %325 = arith.addf %322, %324 : vector<8x32xf32>
    %326 = math.tanh %325 : vector<8x32xf32>
    %cst_116 = arith.constant 1.000000e+00 : f32
    %327 = vector.broadcast %cst_116 : f32 to vector<8x32xf32>
    %328 = arith.subf %327, %321 : vector<8x32xf32>
    %329 = arith.mulf %328, %326 : vector<8x32xf32>
    %330 = arith.mulf %321, %258 : vector<8x32xf32>
    %331 = arith.addf %329, %330 : vector<8x32xf32>
    %332 = arith.index_cast %299 : i32 to index
    %c0_117 = arith.constant 0 : index
    %c0_118 = arith.constant 0 : index
    %333 = vector.load %arg16[%332, %c0_117, %c0_118] : memref<8x8x96xf32, #tpu.memory_space<vmem>>, vector<1x8x96xf32>
    %334 = vector.shape_cast %333 : vector<1x8x96xf32> to vector<8x96xf32>
    %cst_119 = arith.constant dense<0.000000e+00> : vector<8x96xf32>
    %335 = tpu.matmul %290, %77, %cst_119 {dimension_numbers = #tpu.dot_dimension_numbers<[1], [0], [0], [1], [0, 0, 1, 1], [], []>} : vector<8x32xf32>, vector<32x96xf32>, vector<8x96xf32> -> vector<8x96xf32>
    %336 = vector.broadcast %78 : vector<1x96xf32> to vector<8x96xf32>
    %337 = arith.addf %335, %336 : vector<8x96xf32>
    %338 = vector.extract_strided_slice %334 {offsets = [0, 0], sizes = [8, 32], strides = [1, 1]} : vector<8x96xf32> to vector<8x32xf32>
    %339 = vector.extract_strided_slice %337 {offsets = [0, 0], sizes = [8, 32], strides = [1, 1]} : vector<8x96xf32> to vector<8x32xf32>
    %340 = arith.addf %338, %339 : vector<8x32xf32>
    %341 = arith.negf %340 : vector<8x32xf32>
    %342 = math.exp %341 : vector<8x32xf32>
    %cst_120 = arith.constant 1.000000e+00 : f32
    %343 = vector.broadcast %cst_120 : f32 to vector<8x32xf32>
    %344 = arith.addf %343, %342 : vector<8x32xf32>
    %345 = arith.divf %343, %344 : vector<8x32xf32>
    %346 = vector.extract_strided_slice %334 {offsets = [0, 32], sizes = [8, 32], strides = [1, 1]} : vector<8x96xf32> to vector<8x32xf32>
    %347 = vector.extract_strided_slice %337 {offsets = [0, 32], sizes = [8, 32], strides = [1, 1]} : vector<8x96xf32> to vector<8x32xf32>
    %348 = arith.addf %346, %347 : vector<8x32xf32>
    %349 = arith.negf %348 : vector<8x32xf32>
    %350 = math.exp %349 : vector<8x32xf32>
    %cst_121 = arith.constant 1.000000e+00 : f32
    %351 = vector.broadcast %cst_121 : f32 to vector<8x32xf32>
    %352 = arith.addf %351, %350 : vector<8x32xf32>
    %353 = arith.divf %351, %352 : vector<8x32xf32>
    %354 = vector.extract_strided_slice %334 {offsets = [0, 64], sizes = [8, 32], strides = [1, 1]} : vector<8x96xf32> to vector<8x32xf32>
    %355 = vector.extract_strided_slice %337 {offsets = [0, 64], sizes = [8, 32], strides = [1, 1]} : vector<8x96xf32> to vector<8x32xf32>
    %356 = arith.mulf %345, %355 : vector<8x32xf32>
    %357 = arith.addf %354, %356 : vector<8x32xf32>
    %358 = math.tanh %357 : vector<8x32xf32>
    %cst_122 = arith.constant 1.000000e+00 : f32
    %359 = vector.broadcast %cst_122 : f32 to vector<8x32xf32>
    %360 = arith.subf %359, %353 : vector<8x32xf32>
    %361 = arith.mulf %360, %358 : vector<8x32xf32>
    %362 = arith.mulf %353, %290 : vector<8x32xf32>
    %363 = arith.addf %361, %362 : vector<8x32xf32>
    %364 = arith.index_cast %c3_i32 : i32 to index
    %c0_123 = arith.constant 0 : index
    %c0_124 = arith.constant 0 : index
    %365 = vector.load %arg12[%364, %c0_123, %c0_124] : memref<8x8x32xf32, #tpu.memory_space<vmem>>, vector<1x8x32xf32>
    %366 = vector.shape_cast %365 : vector<1x8x32xf32> to vector<8x32xf32>
    %367 = vector.shape_cast %331 : vector<8x32xf32> to vector<1x8x32xf32>
    tpu.vector_store %arg12[%364, %c0_123, %c0_124], %367 {strides = array<i32>} : memref<8x8x32xf32, #tpu.memory_space<vmem>>, vector<1x8x32xf32>,
    %368 = arith.index_cast %299 : i32 to index
    %c0_125 = arith.constant 0 : index
    %c0_126 = arith.constant 0 : index
    %369 = vector.load %arg13[%368, %c0_125, %c0_126] : memref<8x8x32xf32, #tpu.memory_space<vmem>>, vector<1x8x32xf32>
    %370 = vector.shape_cast %369 : vector<1x8x32xf32> to vector<8x32xf32>
    %371 = vector.shape_cast %363 : vector<8x32xf32> to vector<1x8x32xf32>
    tpu.vector_store %arg13[%368, %c0_125, %c0_126], %371 {strides = array<i32>} : memref<8x8x32xf32, #tpu.memory_space<vmem>>, vector<1x8x32xf32>,
    %c4_i32 = arith.constant 4 : i32
    %c7_i32_127 = arith.constant 7 : i32
    %372 = arith.subi %c7_i32_127, %c4_i32 : i32
    %373 = arith.index_cast %c4_i32 : i32 to index
    %c0_128 = arith.constant 0 : index
    %c0_129 = arith.constant 0 : index
    %374 = vector.load %arg15[%373, %c0_128, %c0_129] : memref<8x8x96xf32, #tpu.memory_space<vmem>>, vector<1x8x96xf32>
    %375 = vector.shape_cast %374 : vector<1x8x96xf32> to vector<8x96xf32>
    %cst_130 = arith.constant dense<0.000000e+00> : vector<8x96xf32>
    %376 = tpu.matmul %331, %75, %cst_130 {dimension_numbers = #tpu.dot_dimension_numbers<[1], [0], [0], [1], [0, 0, 1, 1], [], []>} : vector<8x32xf32>, vector<32x96xf32>, vector<8x96xf32> -> vector<8x96xf32>
    %377 = vector.broadcast %76 : vector<1x96xf32> to vector<8x96xf32>
    %378 = arith.addf %376, %377 : vector<8x96xf32>
    %379 = vector.extract_strided_slice %375 {offsets = [0, 0], sizes = [8, 32], strides = [1, 1]} : vector<8x96xf32> to vector<8x32xf32>
    %380 = vector.extract_strided_slice %378 {offsets = [0, 0], sizes = [8, 32], strides = [1, 1]} : vector<8x96xf32> to vector<8x32xf32>
    %381 = arith.addf %379, %380 : vector<8x32xf32>
    %382 = arith.negf %381 : vector<8x32xf32>
    %383 = math.exp %382 : vector<8x32xf32>
    %cst_131 = arith.constant 1.000000e+00 : f32
    %384 = vector.broadcast %cst_131 : f32 to vector<8x32xf32>
    %385 = arith.addf %384, %383 : vector<8x32xf32>
    %386 = arith.divf %384, %385 : vector<8x32xf32>
    %387 = vector.extract_strided_slice %375 {offsets = [0, 32], sizes = [8, 32], strides = [1, 1]} : vector<8x96xf32> to vector<8x32xf32>
    %388 = vector.extract_strided_slice %378 {offsets = [0, 32], sizes = [8, 32], strides = [1, 1]} : vector<8x96xf32> to vector<8x32xf32>
    %389 = arith.addf %387, %388 : vector<8x32xf32>
    %390 = arith.negf %389 : vector<8x32xf32>
    %391 = math.exp %390 : vector<8x32xf32>
    %cst_132 = arith.constant 1.000000e+00 : f32
    %392 = vector.broadcast %cst_132 : f32 to vector<8x32xf32>
    %393 = arith.addf %392, %391 : vector<8x32xf32>
    %394 = arith.divf %392, %393 : vector<8x32xf32>
    %395 = vector.extract_strided_slice %375 {offsets = [0, 64], sizes = [8, 32], strides = [1, 1]} : vector<8x96xf32> to vector<8x32xf32>
    %396 = vector.extract_strided_slice %378 {offsets = [0, 64], sizes = [8, 32], strides = [1, 1]} : vector<8x96xf32> to vector<8x32xf32>
    %397 = arith.mulf %386, %396 : vector<8x32xf32>
    %398 = arith.addf %395, %397 : vector<8x32xf32>
    %399 = math.tanh %398 : vector<8x32xf32>
    %cst_133 = arith.constant 1.000000e+00 : f32
    %400 = vector.broadcast %cst_133 : f32 to vector<8x32xf32>
    %401 = arith.subf %400, %394 : vector<8x32xf32>
    %402 = arith.mulf %401, %399 : vector<8x32xf32>
    %403 = arith.mulf %394, %331 : vector<8x32xf32>
    %404 = arith.addf %402, %403 : vector<8x32xf32>
    %405 = arith.index_cast %372 : i32 to index
    %c0_134 = arith.constant 0 : index
    %c0_135 = arith.constant 0 : index
    %406 = vector.load %arg16[%405, %c0_134, %c0_135] : memref<8x8x96xf32, #tpu.memory_space<vmem>>, vector<1x8x96xf32>
    %407 = vector.shape_cast %406 : vector<1x8x96xf32> to vector<8x96xf32>
    %cst_136 = arith.constant dense<0.000000e+00> : vector<8x96xf32>
    %408 = tpu.matmul %363, %77, %cst_136 {dimension_numbers = #tpu.dot_dimension_numbers<[1], [0], [0], [1], [0, 0, 1, 1], [], []>} : vector<8x32xf32>, vector<32x96xf32>, vector<8x96xf32> -> vector<8x96xf32>
    %409 = vector.broadcast %78 : vector<1x96xf32> to vector<8x96xf32>
    %410 = arith.addf %408, %409 : vector<8x96xf32>
    %411 = vector.extract_strided_slice %407 {offsets = [0, 0], sizes = [8, 32], strides = [1, 1]} : vector<8x96xf32> to vector<8x32xf32>
    %412 = vector.extract_strided_slice %410 {offsets = [0, 0], sizes = [8, 32], strides = [1, 1]} : vector<8x96xf32> to vector<8x32xf32>
    %413 = arith.addf %411, %412 : vector<8x32xf32>
    %414 = arith.negf %413 : vector<8x32xf32>
    %415 = math.exp %414 : vector<8x32xf32>
    %cst_137 = arith.constant 1.000000e+00 : f32
    %416 = vector.broadcast %cst_137 : f32 to vector<8x32xf32>
    %417 = arith.addf %416, %415 : vector<8x32xf32>
    %418 = arith.divf %416, %417 : vector<8x32xf32>
    %419 = vector.extract_strided_slice %407 {offsets = [0, 32], sizes = [8, 32], strides = [1, 1]} : vector<8x96xf32> to vector<8x32xf32>
    %420 = vector.extract_strided_slice %410 {offsets = [0, 32], sizes = [8, 32], strides = [1, 1]} : vector<8x96xf32> to vector<8x32xf32>
    %421 = arith.addf %419, %420 : vector<8x32xf32>
    %422 = arith.negf %421 : vector<8x32xf32>
    %423 = math.exp %422 : vector<8x32xf32>
    %cst_138 = arith.constant 1.000000e+00 : f32
    %424 = vector.broadcast %cst_138 : f32 to vector<8x32xf32>
    %425 = arith.addf %424, %423 : vector<8x32xf32>
    %426 = arith.divf %424, %425 : vector<8x32xf32>
    %427 = vector.extract_strided_slice %407 {offsets = [0, 64], sizes = [8, 32], strides = [1, 1]} : vector<8x96xf32> to vector<8x32xf32>
    %428 = vector.extract_strided_slice %410 {offsets = [0, 64], sizes = [8, 32], strides = [1, 1]} : vector<8x96xf32> to vector<8x32xf32>
    %429 = arith.mulf %418, %428 : vector<8x32xf32>
    %430 = arith.addf %427, %429 : vector<8x32xf32>
    %431 = math.tanh %430 : vector<8x32xf32>
    %cst_139 = arith.constant 1.000000e+00 : f32
    %432 = vector.broadcast %cst_139 : f32 to vector<8x32xf32>
    %433 = arith.subf %432, %426 : vector<8x32xf32>
    %434 = arith.mulf %433, %431 : vector<8x32xf32>
    %435 = arith.mulf %426, %363 : vector<8x32xf32>
    %436 = arith.addf %434, %435 : vector<8x32xf32>
    %437 = arith.index_cast %c4_i32 : i32 to index
    %c0_140 = arith.constant 0 : index
    %c0_141 = arith.constant 0 : index
    %438 = vector.load %arg12[%437, %c0_140, %c0_141] : memref<8x8x32xf32, #tpu.memory_space<vmem>>, vector<1x8x32xf32>
    %439 = vector.shape_cast %438 : vector<1x8x32xf32> to vector<8x32xf32>
    %440 = vector.shape_cast %404 : vector<8x32xf32> to vector<1x8x32xf32>
    tpu.vector_store %arg12[%437, %c0_140, %c0_141], %440 {strides = array<i32>} : memref<8x8x32xf32, #tpu.memory_space<vmem>>, vector<1x8x32xf32>,
    %441 = arith.index_cast %372 : i32 to index
    %c0_142 = arith.constant 0 : index
    %c0_143 = arith.constant 0 : index
    %442 = vector.load %arg13[%441, %c0_142, %c0_143] : memref<8x8x32xf32, #tpu.memory_space<vmem>>, vector<1x8x32xf32>
    %443 = vector.shape_cast %442 : vector<1x8x32xf32> to vector<8x32xf32>
    %444 = vector.shape_cast %436 : vector<8x32xf32> to vector<1x8x32xf32>
    tpu.vector_store %arg13[%441, %c0_142, %c0_143], %444 {strides = array<i32>} : memref<8x8x32xf32, #tpu.memory_space<vmem>>, vector<1x8x32xf32>,
    %c5_i32 = arith.constant 5 : i32
    %c7_i32_144 = arith.constant 7 : i32
    %445 = arith.subi %c7_i32_144, %c5_i32 : i32
    %446 = arith.index_cast %c5_i32 : i32 to index
    %c0_145 = arith.constant 0 : index
    %c0_146 = arith.constant 0 : index
    %447 = vector.load %arg15[%446, %c0_145, %c0_146] : memref<8x8x96xf32, #tpu.memory_space<vmem>>, vector<1x8x96xf32>
    %448 = vector.shape_cast %447 : vector<1x8x96xf32> to vector<8x96xf32>
    %cst_147 = arith.constant dense<0.000000e+00> : vector<8x96xf32>
    %449 = tpu.matmul %404, %75, %cst_147 {dimension_numbers = #tpu.dot_dimension_numbers<[1], [0], [0], [1], [0, 0, 1, 1], [], []>} : vector<8x32xf32>, vector<32x96xf32>, vector<8x96xf32> -> vector<8x96xf32>
    %450 = vector.broadcast %76 : vector<1x96xf32> to vector<8x96xf32>
    %451 = arith.addf %449, %450 : vector<8x96xf32>
    %452 = vector.extract_strided_slice %448 {offsets = [0, 0], sizes = [8, 32], strides = [1, 1]} : vector<8x96xf32> to vector<8x32xf32>
    %453 = vector.extract_strided_slice %451 {offsets = [0, 0], sizes = [8, 32], strides = [1, 1]} : vector<8x96xf32> to vector<8x32xf32>
    %454 = arith.addf %452, %453 : vector<8x32xf32>
    %455 = arith.negf %454 : vector<8x32xf32>
    %456 = math.exp %455 : vector<8x32xf32>
    %cst_148 = arith.constant 1.000000e+00 : f32
    %457 = vector.broadcast %cst_148 : f32 to vector<8x32xf32>
    %458 = arith.addf %457, %456 : vector<8x32xf32>
    %459 = arith.divf %457, %458 : vector<8x32xf32>
    %460 = vector.extract_strided_slice %448 {offsets = [0, 32], sizes = [8, 32], strides = [1, 1]} : vector<8x96xf32> to vector<8x32xf32>
    %461 = vector.extract_strided_slice %451 {offsets = [0, 32], sizes = [8, 32], strides = [1, 1]} : vector<8x96xf32> to vector<8x32xf32>
    %462 = arith.addf %460, %461 : vector<8x32xf32>
    %463 = arith.negf %462 : vector<8x32xf32>
    %464 = math.exp %463 : vector<8x32xf32>
    %cst_149 = arith.constant 1.000000e+00 : f32
    %465 = vector.broadcast %cst_149 : f32 to vector<8x32xf32>
    %466 = arith.addf %465, %464 : vector<8x32xf32>
    %467 = arith.divf %465, %466 : vector<8x32xf32>
    %468 = vector.extract_strided_slice %448 {offsets = [0, 64], sizes = [8, 32], strides = [1, 1]} : vector<8x96xf32> to vector<8x32xf32>
    %469 = vector.extract_strided_slice %451 {offsets = [0, 64], sizes = [8, 32], strides = [1, 1]} : vector<8x96xf32> to vector<8x32xf32>
    %470 = arith.mulf %459, %469 : vector<8x32xf32>
    %471 = arith.addf %468, %470 : vector<8x32xf32>
    %472 = math.tanh %471 : vector<8x32xf32>
    %cst_150 = arith.constant 1.000000e+00 : f32
    %473 = vector.broadcast %cst_150 : f32 to vector<8x32xf32>
    %474 = arith.subf %473, %467 : vector<8x32xf32>
    %475 = arith.mulf %474, %472 : vector<8x32xf32>
    %476 = arith.mulf %467, %404 : vector<8x32xf32>
    %477 = arith.addf %475, %476 : vector<8x32xf32>
    %478 = arith.index_cast %445 : i32 to index
    %c0_151 = arith.constant 0 : index
    %c0_152 = arith.constant 0 : index
    %479 = vector.load %arg16[%478, %c0_151, %c0_152] : memref<8x8x96xf32, #tpu.memory_space<vmem>>, vector<1x8x96xf32>
    %480 = vector.shape_cast %479 : vector<1x8x96xf32> to vector<8x96xf32>
    %cst_153 = arith.constant dense<0.000000e+00> : vector<8x96xf32>
    %481 = tpu.matmul %436, %77, %cst_153 {dimension_numbers = #tpu.dot_dimension_numbers<[1], [0], [0], [1], [0, 0, 1, 1], [], []>} : vector<8x32xf32>, vector<32x96xf32>, vector<8x96xf32> -> vector<8x96xf32>
    %482 = vector.broadcast %78 : vector<1x96xf32> to vector<8x96xf32>
    %483 = arith.addf %481, %482 : vector<8x96xf32>
    %484 = vector.extract_strided_slice %480 {offsets = [0, 0], sizes = [8, 32], strides = [1, 1]} : vector<8x96xf32> to vector<8x32xf32>
    %485 = vector.extract_strided_slice %483 {offsets = [0, 0], sizes = [8, 32], strides = [1, 1]} : vector<8x96xf32> to vector<8x32xf32>
    %486 = arith.addf %484, %485 : vector<8x32xf32>
    %487 = arith.negf %486 : vector<8x32xf32>
    %488 = math.exp %487 : vector<8x32xf32>
    %cst_154 = arith.constant 1.000000e+00 : f32
    %489 = vector.broadcast %cst_154 : f32 to vector<8x32xf32>
    %490 = arith.addf %489, %488 : vector<8x32xf32>
    %491 = arith.divf %489, %490 : vector<8x32xf32>
    %492 = vector.extract_strided_slice %480 {offsets = [0, 32], sizes = [8, 32], strides = [1, 1]} : vector<8x96xf32> to vector<8x32xf32>
    %493 = vector.extract_strided_slice %483 {offsets = [0, 32], sizes = [8, 32], strides = [1, 1]} : vector<8x96xf32> to vector<8x32xf32>
    %494 = arith.addf %492, %493 : vector<8x32xf32>
    %495 = arith.negf %494 : vector<8x32xf32>
    %496 = math.exp %495 : vector<8x32xf32>
    %cst_155 = arith.constant 1.000000e+00 : f32
    %497 = vector.broadcast %cst_155 : f32 to vector<8x32xf32>
    %498 = arith.addf %497, %496 : vector<8x32xf32>
    %499 = arith.divf %497, %498 : vector<8x32xf32>
    %500 = vector.extract_strided_slice %480 {offsets = [0, 64], sizes = [8, 32], strides = [1, 1]} : vector<8x96xf32> to vector<8x32xf32>
    %501 = vector.extract_strided_slice %483 {offsets = [0, 64], sizes = [8, 32], strides = [1, 1]} : vector<8x96xf32> to vector<8x32xf32>
    %502 = arith.mulf %491, %501 : vector<8x32xf32>
    %503 = arith.addf %500, %502 : vector<8x32xf32>
    %504 = math.tanh %503 : vector<8x32xf32>
    %cst_156 = arith.constant 1.000000e+00 : f32
    %505 = vector.broadcast %cst_156 : f32 to vector<8x32xf32>
    %506 = arith.subf %505, %499 : vector<8x32xf32>
    %507 = arith.mulf %506, %504 : vector<8x32xf32>
    %508 = arith.mulf %499, %436 : vector<8x32xf32>
    %509 = arith.addf %507, %508 : vector<8x32xf32>
    %510 = arith.index_cast %c5_i32 : i32 to index
    %c0_157 = arith.constant 0 : index
    %c0_158 = arith.constant 0 : index
    %511 = vector.load %arg12[%510, %c0_157, %c0_158] : memref<8x8x32xf32, #tpu.memory_space<vmem>>, vector<1x8x32xf32>
    %512 = vector.shape_cast %511 : vector<1x8x32xf32> to vector<8x32xf32>
    %513 = vector.shape_cast %477 : vector<8x32xf32> to vector<1x8x32xf32>
    tpu.vector_store %arg12[%510, %c0_157, %c0_158], %513 {strides = array<i32>} : memref<8x8x32xf32, #tpu.memory_space<vmem>>, vector<1x8x32xf32>,
    %514 = arith.index_cast %445 : i32 to index
    %c0_159 = arith.constant 0 : index
    %c0_160 = arith.constant 0 : index
    %515 = vector.load %arg13[%514, %c0_159, %c0_160] : memref<8x8x32xf32, #tpu.memory_space<vmem>>, vector<1x8x32xf32>
    %516 = vector.shape_cast %515 : vector<1x8x32xf32> to vector<8x32xf32>
    %517 = vector.shape_cast %509 : vector<8x32xf32> to vector<1x8x32xf32>
    tpu.vector_store %arg13[%514, %c0_159, %c0_160], %517 {strides = array<i32>} : memref<8x8x32xf32, #tpu.memory_space<vmem>>, vector<1x8x32xf32>,
    %c6_i32 = arith.constant 6 : i32
    %c7_i32_161 = arith.constant 7 : i32
    %518 = arith.subi %c7_i32_161, %c6_i32 : i32
    %519 = arith.index_cast %c6_i32 : i32 to index
    %c0_162 = arith.constant 0 : index
    %c0_163 = arith.constant 0 : index
    %520 = vector.load %arg15[%519, %c0_162, %c0_163] : memref<8x8x96xf32, #tpu.memory_space<vmem>>, vector<1x8x96xf32>
    %521 = vector.shape_cast %520 : vector<1x8x96xf32> to vector<8x96xf32>
    %cst_164 = arith.constant dense<0.000000e+00> : vector<8x96xf32>
    %522 = tpu.matmul %477, %75, %cst_164 {dimension_numbers = #tpu.dot_dimension_numbers<[1], [0], [0], [1], [0, 0, 1, 1], [], []>} : vector<8x32xf32>, vector<32x96xf32>, vector<8x96xf32> -> vector<8x96xf32>
    %523 = vector.broadcast %76 : vector<1x96xf32> to vector<8x96xf32>
    %524 = arith.addf %522, %523 : vector<8x96xf32>
    %525 = vector.extract_strided_slice %521 {offsets = [0, 0], sizes = [8, 32], strides = [1, 1]} : vector<8x96xf32> to vector<8x32xf32>
    %526 = vector.extract_strided_slice %524 {offsets = [0, 0], sizes = [8, 32], strides = [1, 1]} : vector<8x96xf32> to vector<8x32xf32>
    %527 = arith.addf %525, %526 : vector<8x32xf32>
    %528 = arith.negf %527 : vector<8x32xf32>
    %529 = math.exp %528 : vector<8x32xf32>
    %cst_165 = arith.constant 1.000000e+00 : f32
    %530 = vector.broadcast %cst_165 : f32 to vector<8x32xf32>
    %531 = arith.addf %530, %529 : vector<8x32xf32>
    %532 = arith.divf %530, %531 : vector<8x32xf32>
    %533 = vector.extract_strided_slice %521 {offsets = [0, 32], sizes = [8, 32], strides = [1, 1]} : vector<8x96xf32> to vector<8x32xf32>
    %534 = vector.extract_strided_slice %524 {offsets = [0, 32], sizes = [8, 32], strides = [1, 1]} : vector<8x96xf32> to vector<8x32xf32>
    %535 = arith.addf %533, %534 : vector<8x32xf32>
    %536 = arith.negf %535 : vector<8x32xf32>
    %537 = math.exp %536 : vector<8x32xf32>
    %cst_166 = arith.constant 1.000000e+00 : f32
    %538 = vector.broadcast %cst_166 : f32 to vector<8x32xf32>
    %539 = arith.addf %538, %537 : vector<8x32xf32>
    %540 = arith.divf %538, %539 : vector<8x32xf32>
    %541 = vector.extract_strided_slice %521 {offsets = [0, 64], sizes = [8, 32], strides = [1, 1]} : vector<8x96xf32> to vector<8x32xf32>
    %542 = vector.extract_strided_slice %524 {offsets = [0, 64], sizes = [8, 32], strides = [1, 1]} : vector<8x96xf32> to vector<8x32xf32>
    %543 = arith.mulf %532, %542 : vector<8x32xf32>
    %544 = arith.addf %541, %543 : vector<8x32xf32>
    %545 = math.tanh %544 : vector<8x32xf32>
    %cst_167 = arith.constant 1.000000e+00 : f32
    %546 = vector.broadcast %cst_167 : f32 to vector<8x32xf32>
    %547 = arith.subf %546, %540 : vector<8x32xf32>
    %548 = arith.mulf %547, %545 : vector<8x32xf32>
    %549 = arith.mulf %540, %477 : vector<8x32xf32>
    %550 = arith.addf %548, %549 : vector<8x32xf32>
    %551 = arith.index_cast %518 : i32 to index
    %c0_168 = arith.constant 0 : index
    %c0_169 = arith.constant 0 : index
    %552 = vector.load %arg16[%551, %c0_168, %c0_169] : memref<8x8x96xf32, #tpu.memory_space<vmem>>, vector<1x8x96xf32>
    %553 = vector.shape_cast %552 : vector<1x8x96xf32> to vector<8x96xf32>
    %cst_170 = arith.constant dense<0.000000e+00> : vector<8x96xf32>
    %554 = tpu.matmul %509, %77, %cst_170 {dimension_numbers = #tpu.dot_dimension_numbers<[1], [0], [0], [1], [0, 0, 1, 1], [], []>} : vector<8x32xf32>, vector<32x96xf32>, vector<8x96xf32> -> vector<8x96xf32>
    %555 = vector.broadcast %78 : vector<1x96xf32> to vector<8x96xf32>
    %556 = arith.addf %554, %555 : vector<8x96xf32>
    %557 = vector.extract_strided_slice %553 {offsets = [0, 0], sizes = [8, 32], strides = [1, 1]} : vector<8x96xf32> to vector<8x32xf32>
    %558 = vector.extract_strided_slice %556 {offsets = [0, 0], sizes = [8, 32], strides = [1, 1]} : vector<8x96xf32> to vector<8x32xf32>
    %559 = arith.addf %557, %558 : vector<8x32xf32>
    %560 = arith.negf %559 : vector<8x32xf32>
    %561 = math.exp %560 : vector<8x32xf32>
    %cst_171 = arith.constant 1.000000e+00 : f32
    %562 = vector.broadcast %cst_171 : f32 to vector<8x32xf32>
    %563 = arith.addf %562, %561 : vector<8x32xf32>
    %564 = arith.divf %562, %563 : vector<8x32xf32>
    %565 = vector.extract_strided_slice %553 {offsets = [0, 32], sizes = [8, 32], strides = [1, 1]} : vector<8x96xf32> to vector<8x32xf32>
    %566 = vector.extract_strided_slice %556 {offsets = [0, 32], sizes = [8, 32], strides = [1, 1]} : vector<8x96xf32> to vector<8x32xf32>
    %567 = arith.addf %565, %566 : vector<8x32xf32>
    %568 = arith.negf %567 : vector<8x32xf32>
    %569 = math.exp %568 : vector<8x32xf32>
    %cst_172 = arith.constant 1.000000e+00 : f32
    %570 = vector.broadcast %cst_172 : f32 to vector<8x32xf32>
    %571 = arith.addf %570, %569 : vector<8x32xf32>
    %572 = arith.divf %570, %571 : vector<8x32xf32>
    %573 = vector.extract_strided_slice %553 {offsets = [0, 64], sizes = [8, 32], strides = [1, 1]} : vector<8x96xf32> to vector<8x32xf32>
    %574 = vector.extract_strided_slice %556 {offsets = [0, 64], sizes = [8, 32], strides = [1, 1]} : vector<8x96xf32> to vector<8x32xf32>
    %575 = arith.mulf %564, %574 : vector<8x32xf32>
    %576 = arith.addf %573, %575 : vector<8x32xf32>
    %577 = math.tanh %576 : vector<8x32xf32>
    %cst_173 = arith.constant 1.000000e+00 : f32
    %578 = vector.broadcast %cst_173 : f32 to vector<8x32xf32>
    %579 = arith.subf %578, %572 : vector<8x32xf32>
    %580 = arith.mulf %579, %577 : vector<8x32xf32>
    %581 = arith.mulf %572, %509 : vector<8x32xf32>
    %582 = arith.addf %580, %581 : vector<8x32xf32>
    %583 = arith.index_cast %c6_i32 : i32 to index
    %c0_174 = arith.constant 0 : index
    %c0_175 = arith.constant 0 : index
    %584 = vector.load %arg12[%583, %c0_174, %c0_175] : memref<8x8x32xf32, #tpu.memory_space<vmem>>, vector<1x8x32xf32>
    %585 = vector.shape_cast %584 : vector<1x8x32xf32> to vector<8x32xf32>
    %586 = vector.shape_cast %550 : vector<8x32xf32> to vector<1x8x32xf32>
    tpu.vector_store %arg12[%583, %c0_174, %c0_175], %586 {strides = array<i32>} : memref<8x8x32xf32, #tpu.memory_space<vmem>>, vector<1x8x32xf32>,
    %587 = arith.index_cast %518 : i32 to index
    %c0_176 = arith.constant 0 : index
    %c0_177 = arith.constant 0 : index
    %588 = vector.load %arg13[%587, %c0_176, %c0_177] : memref<8x8x32xf32, #tpu.memory_space<vmem>>, vector<1x8x32xf32>
    %589 = vector.shape_cast %588 : vector<1x8x32xf32> to vector<8x32xf32>
    %590 = vector.shape_cast %582 : vector<8x32xf32> to vector<1x8x32xf32>
    tpu.vector_store %arg13[%587, %c0_176, %c0_177], %590 {strides = array<i32>} : memref<8x8x32xf32, #tpu.memory_space<vmem>>, vector<1x8x32xf32>,
    %c7_i32_178 = arith.constant 7 : i32
    %c7_i32_179 = arith.constant 7 : i32
    %591 = arith.subi %c7_i32_179, %c7_i32_178 : i32
    %592 = arith.index_cast %c7_i32_178 : i32 to index
    %c0_180 = arith.constant 0 : index
    %c0_181 = arith.constant 0 : index
    %593 = vector.load %arg15[%592, %c0_180, %c0_181] : memref<8x8x96xf32, #tpu.memory_space<vmem>>, vector<1x8x96xf32>
    %594 = vector.shape_cast %593 : vector<1x8x96xf32> to vector<8x96xf32>
    %cst_182 = arith.constant dense<0.000000e+00> : vector<8x96xf32>
    %595 = tpu.matmul %550, %75, %cst_182 {dimension_numbers = #tpu.dot_dimension_numbers<[1], [0], [0], [1], [0, 0, 1, 1], [], []>} : vector<8x32xf32>, vector<32x96xf32>, vector<8x96xf32> -> vector<8x96xf32>
    %596 = vector.broadcast %76 : vector<1x96xf32> to vector<8x96xf32>
    %597 = arith.addf %595, %596 : vector<8x96xf32>
    %598 = vector.extract_strided_slice %594 {offsets = [0, 0], sizes = [8, 32], strides = [1, 1]} : vector<8x96xf32> to vector<8x32xf32>
    %599 = vector.extract_strided_slice %597 {offsets = [0, 0], sizes = [8, 32], strides = [1, 1]} : vector<8x96xf32> to vector<8x32xf32>
    %600 = arith.addf %598, %599 : vector<8x32xf32>
    %601 = arith.negf %600 : vector<8x32xf32>
    %602 = math.exp %601 : vector<8x32xf32>
    %cst_183 = arith.constant 1.000000e+00 : f32
    %603 = vector.broadcast %cst_183 : f32 to vector<8x32xf32>
    %604 = arith.addf %603, %602 : vector<8x32xf32>
    %605 = arith.divf %603, %604 : vector<8x32xf32>
    %606 = vector.extract_strided_slice %594 {offsets = [0, 32], sizes = [8, 32], strides = [1, 1]} : vector<8x96xf32> to vector<8x32xf32>
    %607 = vector.extract_strided_slice %597 {offsets = [0, 32], sizes = [8, 32], strides = [1, 1]} : vector<8x96xf32> to vector<8x32xf32>
    %608 = arith.addf %606, %607 : vector<8x32xf32>
    %609 = arith.negf %608 : vector<8x32xf32>
    %610 = math.exp %609 : vector<8x32xf32>
    %cst_184 = arith.constant 1.000000e+00 : f32
    %611 = vector.broadcast %cst_184 : f32 to vector<8x32xf32>
    %612 = arith.addf %611, %610 : vector<8x32xf32>
    %613 = arith.divf %611, %612 : vector<8x32xf32>
    %614 = vector.extract_strided_slice %594 {offsets = [0, 64], sizes = [8, 32], strides = [1, 1]} : vector<8x96xf32> to vector<8x32xf32>
    %615 = vector.extract_strided_slice %597 {offsets = [0, 64], sizes = [8, 32], strides = [1, 1]} : vector<8x96xf32> to vector<8x32xf32>
    %616 = arith.mulf %605, %615 : vector<8x32xf32>
    %617 = arith.addf %614, %616 : vector<8x32xf32>
    %618 = math.tanh %617 : vector<8x32xf32>
    %cst_185 = arith.constant 1.000000e+00 : f32
    %619 = vector.broadcast %cst_185 : f32 to vector<8x32xf32>
    %620 = arith.subf %619, %613 : vector<8x32xf32>
    %621 = arith.mulf %620, %618 : vector<8x32xf32>
    %622 = arith.mulf %613, %550 : vector<8x32xf32>
    %623 = arith.addf %621, %622 : vector<8x32xf32>
    %624 = arith.index_cast %591 : i32 to index
    %c0_186 = arith.constant 0 : index
    %c0_187 = arith.constant 0 : index
    %625 = vector.load %arg16[%624, %c0_186, %c0_187] : memref<8x8x96xf32, #tpu.memory_space<vmem>>, vector<1x8x96xf32>
    %626 = vector.shape_cast %625 : vector<1x8x96xf32> to vector<8x96xf32>
    %cst_188 = arith.constant dense<0.000000e+00> : vector<8x96xf32>
    %627 = tpu.matmul %582, %77, %cst_188 {dimension_numbers = #tpu.dot_dimension_numbers<[1], [0], [0], [1], [0, 0, 1, 1], [], []>} : vector<8x32xf32>, vector<32x96xf32>, vector<8x96xf32> -> vector<8x96xf32>
    %628 = vector.broadcast %78 : vector<1x96xf32> to vector<8x96xf32>
    %629 = arith.addf %627, %628 : vector<8x96xf32>
    %630 = vector.extract_strided_slice %626 {offsets = [0, 0], sizes = [8, 32], strides = [1, 1]} : vector<8x96xf32> to vector<8x32xf32>
    %631 = vector.extract_strided_slice %629 {offsets = [0, 0], sizes = [8, 32], strides = [1, 1]} : vector<8x96xf32> to vector<8x32xf32>
    %632 = arith.addf %630, %631 : vector<8x32xf32>
    %633 = arith.negf %632 : vector<8x32xf32>
    %634 = math.exp %633 : vector<8x32xf32>
    %cst_189 = arith.constant 1.000000e+00 : f32
    %635 = vector.broadcast %cst_189 : f32 to vector<8x32xf32>
    %636 = arith.addf %635, %634 : vector<8x32xf32>
    %637 = arith.divf %635, %636 : vector<8x32xf32>
    %638 = vector.extract_strided_slice %626 {offsets = [0, 32], sizes = [8, 32], strides = [1, 1]} : vector<8x96xf32> to vector<8x32xf32>
    %639 = vector.extract_strided_slice %629 {offsets = [0, 32], sizes = [8, 32], strides = [1, 1]} : vector<8x96xf32> to vector<8x32xf32>
    %640 = arith.addf %638, %639 : vector<8x32xf32>
    %641 = arith.negf %640 : vector<8x32xf32>
    %642 = math.exp %641 : vector<8x32xf32>
    %cst_190 = arith.constant 1.000000e+00 : f32
    %643 = vector.broadcast %cst_190 : f32 to vector<8x32xf32>
    %644 = arith.addf %643, %642 : vector<8x32xf32>
    %645 = arith.divf %643, %644 : vector<8x32xf32>
    %646 = vector.extract_strided_slice %626 {offsets = [0, 64], sizes = [8, 32], strides = [1, 1]} : vector<8x96xf32> to vector<8x32xf32>
    %647 = vector.extract_strided_slice %629 {offsets = [0, 64], sizes = [8, 32], strides = [1, 1]} : vector<8x96xf32> to vector<8x32xf32>
    %648 = arith.mulf %637, %647 : vector<8x32xf32>
    %649 = arith.addf %646, %648 : vector<8x32xf32>
    %650 = math.tanh %649 : vector<8x32xf32>
    %cst_191 = arith.constant 1.000000e+00 : f32
    %651 = vector.broadcast %cst_191 : f32 to vector<8x32xf32>
    %652 = arith.subf %651, %645 : vector<8x32xf32>
    %653 = arith.mulf %652, %650 : vector<8x32xf32>
    %654 = arith.mulf %645, %582 : vector<8x32xf32>
    %655 = arith.addf %653, %654 : vector<8x32xf32>
    %656 = arith.index_cast %c7_i32_178 : i32 to index
    %c0_192 = arith.constant 0 : index
    %c0_193 = arith.constant 0 : index
    %657 = vector.load %arg12[%656, %c0_192, %c0_193] : memref<8x8x32xf32, #tpu.memory_space<vmem>>, vector<1x8x32xf32>
    %658 = vector.shape_cast %657 : vector<1x8x32xf32> to vector<8x32xf32>
    %659 = vector.shape_cast %623 : vector<8x32xf32> to vector<1x8x32xf32>
    tpu.vector_store %arg12[%656, %c0_192, %c0_193], %659 {strides = array<i32>} : memref<8x8x32xf32, #tpu.memory_space<vmem>>, vector<1x8x32xf32>,
    %660 = arith.index_cast %591 : i32 to index
    %c0_194 = arith.constant 0 : index
    %c0_195 = arith.constant 0 : index
    %661 = vector.load %arg13[%660, %c0_194, %c0_195] : memref<8x8x32xf32, #tpu.memory_space<vmem>>, vector<1x8x32xf32>
    %662 = vector.shape_cast %661 : vector<1x8x32xf32> to vector<8x32xf32>
    %663 = vector.shape_cast %655 : vector<8x32xf32> to vector<1x8x32xf32>
    tpu.vector_store %arg13[%660, %c0_194, %c0_195], %663 {strides = array<i32>} : memref<8x8x32xf32, #tpu.memory_space<vmem>>, vector<1x8x32xf32>,
    %c8_i32 = arith.constant 8 : i32
    %c0_196 = arith.constant 0 : index
    %c0_197 = arith.constant 0 : index
    %664 = vector.load %arg9[%c0_196, %c0_197] : memref<32x32xf32, #tpu.memory_space<vmem>>, vector<32x32xf32>
    %cst_198 = arith.constant dense<0.000000e+00> : vector<8x32xf32>
    %665 = tpu.matmul %623, %664, %cst_198 {dimension_numbers = #tpu.dot_dimension_numbers<[1], [0], [0], [1], [0, 0, 1, 1], [], []>} : vector<8x32xf32>, vector<32x32xf32>, vector<8x32xf32> -> vector<8x32xf32>
    %c0_199 = arith.constant 0 : index
    %c0_200 = arith.constant 0 : index
    %666 = vector.load %arg10[%c0_199, %c0_200] : memref<32x32xf32, #tpu.memory_space<vmem>>, vector<32x32xf32>
    %cst_201 = arith.constant dense<0.000000e+00> : vector<8x32xf32>
    %667 = tpu.matmul %655, %666, %cst_201 {dimension_numbers = #tpu.dot_dimension_numbers<[1], [0], [0], [1], [0, 0, 1, 1], [], []>} : vector<8x32xf32>, vector<32x32xf32>, vector<8x32xf32> -> vector<8x32xf32>
    %668 = arith.addf %665, %667 : vector<8x32xf32>
    %c0_202 = arith.constant 0 : index
    %c0_203 = arith.constant 0 : index
    %669 = vector.load %arg11[%c0_202, %c0_203] : memref<1x32xf32, #tpu.memory_space<vmem>>, vector<1x32xf32>
    %670 = vector.broadcast %669 : vector<1x32xf32> to vector<8x32xf32>
    %671 = arith.addf %668, %670 : vector<8x32xf32>
    %672 = math.tanh %671 : vector<8x32xf32>
    %c0_204 = arith.constant 0 : index
    %c0_205 = arith.constant 0 : index
    %673 = vector.load %arg14[%c0_204, %c0_205] : memref<8x32xf32, #tpu.memory_space<vmem>>, vector<8x32xf32>
    tpu.vector_store %arg14[%c0_204, %c0_205], %672 {strides = array<i32>} : memref<8x32xf32, #tpu.memory_space<vmem>>, vector<8x32xf32>,
    return
  }
}

module attributes {stable_mosaic.version = 11 : i64} {
  func.func @_decoder_kernel(%arg0: memref<8x1xi32, #tpu.memory_space<vmem>>, %arg1: memref<8x32xf32, #tpu.memory_space<vmem>>, %arg2: memref<8x8x64xf32, #tpu.memory_space<vmem>>, %arg3: memref<16x32xf32, #tpu.memory_space<vmem>>, %arg4: memref<32x32xf32, #tpu.memory_space<vmem>>, %arg5: memref<64x32xf32, #tpu.memory_space<vmem>>, %arg6: memref<1x32xf32, #tpu.memory_space<vmem>>, %arg7: memref<1x32xf32, #tpu.memory_space<vmem>>, %arg8: memref<32x96xf32, #tpu.memory_space<vmem>>, %arg9: memref<64x96xf32, #tpu.memory_space<vmem>>, %arg10: memref<32x96xf32, #tpu.memory_space<vmem>>, %arg11: memref<1x96xf32, #tpu.memory_space<vmem>>, %arg12: memref<1x96xf32, #tpu.memory_space<vmem>>, %arg13: memref<32x16xf32, #tpu.memory_space<vmem>>, %arg14: memref<64x16xf32, #tpu.memory_space<vmem>>, %arg15: memref<32x16xf32, #tpu.memory_space<vmem>>, %arg16: memref<1x16xf32, #tpu.memory_space<vmem>>, %arg17: memref<8x8x16xf32, #tpu.memory_space<vmem>>, %arg18: memref<8x8x32xf32, #tpu.memory_space<vmem>>) attributes {dimension_semantics = [], scalar_prefetch = 0 : i64, scratch_operands = 1 : i64, tpu.core_type = #tpu.core_type<tc>} {
    %c0 = arith.constant 0 : index
    %c0_0 = arith.constant 0 : index
    %c0_1 = arith.constant 0 : index
    %0 = vector.load %arg2[%c0, %c0_0, %c0_1] : memref<8x8x64xf32, #tpu.memory_space<vmem>>, vector<1x8x64xf32>
    %1 = vector.shape_cast %0 : vector<1x8x64xf32> to vector<8x64xf32>
    %c0_2 = arith.constant 0 : index
    %c0_3 = arith.constant 0 : index
    %2 = vector.load %arg5[%c0_2, %c0_3] : memref<64x32xf32, #tpu.memory_space<vmem>>, vector<64x32xf32>
    %cst = arith.constant dense<0.000000e+00> : vector<8x32xf32>
    %3 = tpu.matmul %1, %2, %cst {dimension_numbers = #tpu.dot_dimension_numbers<[1], [0], [0], [1], [0, 0, 1, 1], [], []>} : vector<8x64xf32>, vector<64x32xf32>, vector<8x32xf32> -> vector<8x32xf32>
    %c0_4 = arith.constant 0 : index
    %c0_5 = arith.constant 0 : index
    %4 = vector.load %arg6[%c0_4, %c0_5] : memref<1x32xf32, #tpu.memory_space<vmem>>, vector<1x32xf32>
    %5 = vector.broadcast %4 : vector<1x32xf32> to vector<8x32xf32>
    %6 = arith.addf %3, %5 : vector<8x32xf32>
    %c0_6 = arith.constant 0 : index
    %c0_7 = arith.constant 0 : index
    %c0_8 = arith.constant 0 : index
    %7 = vector.load %arg18[%c0_6, %c0_7, %c0_8] : memref<8x8x32xf32, #tpu.memory_space<vmem>>, vector<1x8x32xf32>
    %8 = vector.shape_cast %7 : vector<1x8x32xf32> to vector<8x32xf32>
    %9 = vector.shape_cast %6 : vector<8x32xf32> to vector<1x8x32xf32>
    tpu.vector_store %arg18[%c0_6, %c0_7, %c0_8], %9 {strides = array<i32>} : memref<8x8x32xf32, #tpu.memory_space<vmem>>, vector<1x8x32xf32>,
    %c1 = arith.constant 1 : index
    %c0_9 = arith.constant 0 : index
    %c0_10 = arith.constant 0 : index
    %10 = vector.load %arg2[%c1, %c0_9, %c0_10] : memref<8x8x64xf32, #tpu.memory_space<vmem>>, vector<1x8x64xf32>
    %11 = vector.shape_cast %10 : vector<1x8x64xf32> to vector<8x64xf32>
    %c0_11 = arith.constant 0 : index
    %c0_12 = arith.constant 0 : index
    %12 = vector.load %arg5[%c0_11, %c0_12] : memref<64x32xf32, #tpu.memory_space<vmem>>, vector<64x32xf32>
    %cst_13 = arith.constant dense<0.000000e+00> : vector<8x32xf32>
    %13 = tpu.matmul %11, %12, %cst_13 {dimension_numbers = #tpu.dot_dimension_numbers<[1], [0], [0], [1], [0, 0, 1, 1], [], []>} : vector<8x64xf32>, vector<64x32xf32>, vector<8x32xf32> -> vector<8x32xf32>
    %c0_14 = arith.constant 0 : index
    %c0_15 = arith.constant 0 : index
    %14 = vector.load %arg6[%c0_14, %c0_15] : memref<1x32xf32, #tpu.memory_space<vmem>>, vector<1x32xf32>
    %15 = vector.broadcast %14 : vector<1x32xf32> to vector<8x32xf32>
    %16 = arith.addf %13, %15 : vector<8x32xf32>
    %c1_16 = arith.constant 1 : index
    %c0_17 = arith.constant 0 : index
    %c0_18 = arith.constant 0 : index
    %17 = vector.load %arg18[%c1_16, %c0_17, %c0_18] : memref<8x8x32xf32, #tpu.memory_space<vmem>>, vector<1x8x32xf32>
    %18 = vector.shape_cast %17 : vector<1x8x32xf32> to vector<8x32xf32>
    %19 = vector.shape_cast %16 : vector<8x32xf32> to vector<1x8x32xf32>
    tpu.vector_store %arg18[%c1_16, %c0_17, %c0_18], %19 {strides = array<i32>} : memref<8x8x32xf32, #tpu.memory_space<vmem>>, vector<1x8x32xf32>,
    %c2 = arith.constant 2 : index
    %c0_19 = arith.constant 0 : index
    %c0_20 = arith.constant 0 : index
    %20 = vector.load %arg2[%c2, %c0_19, %c0_20] : memref<8x8x64xf32, #tpu.memory_space<vmem>>, vector<1x8x64xf32>
    %21 = vector.shape_cast %20 : vector<1x8x64xf32> to vector<8x64xf32>
    %c0_21 = arith.constant 0 : index
    %c0_22 = arith.constant 0 : index
    %22 = vector.load %arg5[%c0_21, %c0_22] : memref<64x32xf32, #tpu.memory_space<vmem>>, vector<64x32xf32>
    %cst_23 = arith.constant dense<0.000000e+00> : vector<8x32xf32>
    %23 = tpu.matmul %21, %22, %cst_23 {dimension_numbers = #tpu.dot_dimension_numbers<[1], [0], [0], [1], [0, 0, 1, 1], [], []>} : vector<8x64xf32>, vector<64x32xf32>, vector<8x32xf32> -> vector<8x32xf32>
    %c0_24 = arith.constant 0 : index
    %c0_25 = arith.constant 0 : index
    %24 = vector.load %arg6[%c0_24, %c0_25] : memref<1x32xf32, #tpu.memory_space<vmem>>, vector<1x32xf32>
    %25 = vector.broadcast %24 : vector<1x32xf32> to vector<8x32xf32>
    %26 = arith.addf %23, %25 : vector<8x32xf32>
    %c2_26 = arith.constant 2 : index
    %c0_27 = arith.constant 0 : index
    %c0_28 = arith.constant 0 : index
    %27 = vector.load %arg18[%c2_26, %c0_27, %c0_28] : memref<8x8x32xf32, #tpu.memory_space<vmem>>, vector<1x8x32xf32>
    %28 = vector.shape_cast %27 : vector<1x8x32xf32> to vector<8x32xf32>
    %29 = vector.shape_cast %26 : vector<8x32xf32> to vector<1x8x32xf32>
    tpu.vector_store %arg18[%c2_26, %c0_27, %c0_28], %29 {strides = array<i32>} : memref<8x8x32xf32, #tpu.memory_space<vmem>>, vector<1x8x32xf32>,
    %c3 = arith.constant 3 : index
    %c0_29 = arith.constant 0 : index
    %c0_30 = arith.constant 0 : index
    %30 = vector.load %arg2[%c3, %c0_29, %c0_30] : memref<8x8x64xf32, #tpu.memory_space<vmem>>, vector<1x8x64xf32>
    %31 = vector.shape_cast %30 : vector<1x8x64xf32> to vector<8x64xf32>
    %c0_31 = arith.constant 0 : index
    %c0_32 = arith.constant 0 : index
    %32 = vector.load %arg5[%c0_31, %c0_32] : memref<64x32xf32, #tpu.memory_space<vmem>>, vector<64x32xf32>
    %cst_33 = arith.constant dense<0.000000e+00> : vector<8x32xf32>
    %33 = tpu.matmul %31, %32, %cst_33 {dimension_numbers = #tpu.dot_dimension_numbers<[1], [0], [0], [1], [0, 0, 1, 1], [], []>} : vector<8x64xf32>, vector<64x32xf32>, vector<8x32xf32> -> vector<8x32xf32>
    %c0_34 = arith.constant 0 : index
    %c0_35 = arith.constant 0 : index
    %34 = vector.load %arg6[%c0_34, %c0_35] : memref<1x32xf32, #tpu.memory_space<vmem>>, vector<1x32xf32>
    %35 = vector.broadcast %34 : vector<1x32xf32> to vector<8x32xf32>
    %36 = arith.addf %33, %35 : vector<8x32xf32>
    %c3_36 = arith.constant 3 : index
    %c0_37 = arith.constant 0 : index
    %c0_38 = arith.constant 0 : index
    %37 = vector.load %arg18[%c3_36, %c0_37, %c0_38] : memref<8x8x32xf32, #tpu.memory_space<vmem>>, vector<1x8x32xf32>
    %38 = vector.shape_cast %37 : vector<1x8x32xf32> to vector<8x32xf32>
    %39 = vector.shape_cast %36 : vector<8x32xf32> to vector<1x8x32xf32>
    tpu.vector_store %arg18[%c3_36, %c0_37, %c0_38], %39 {strides = array<i32>} : memref<8x8x32xf32, #tpu.memory_space<vmem>>, vector<1x8x32xf32>,
    %c4 = arith.constant 4 : index
    %c0_39 = arith.constant 0 : index
    %c0_40 = arith.constant 0 : index
    %40 = vector.load %arg2[%c4, %c0_39, %c0_40] : memref<8x8x64xf32, #tpu.memory_space<vmem>>, vector<1x8x64xf32>
    %41 = vector.shape_cast %40 : vector<1x8x64xf32> to vector<8x64xf32>
    %c0_41 = arith.constant 0 : index
    %c0_42 = arith.constant 0 : index
    %42 = vector.load %arg5[%c0_41, %c0_42] : memref<64x32xf32, #tpu.memory_space<vmem>>, vector<64x32xf32>
    %cst_43 = arith.constant dense<0.000000e+00> : vector<8x32xf32>
    %43 = tpu.matmul %41, %42, %cst_43 {dimension_numbers = #tpu.dot_dimension_numbers<[1], [0], [0], [1], [0, 0, 1, 1], [], []>} : vector<8x64xf32>, vector<64x32xf32>, vector<8x32xf32> -> vector<8x32xf32>
    %c0_44 = arith.constant 0 : index
    %c0_45 = arith.constant 0 : index
    %44 = vector.load %arg6[%c0_44, %c0_45] : memref<1x32xf32, #tpu.memory_space<vmem>>, vector<1x32xf32>
    %45 = vector.broadcast %44 : vector<1x32xf32> to vector<8x32xf32>
    %46 = arith.addf %43, %45 : vector<8x32xf32>
    %c4_46 = arith.constant 4 : index
    %c0_47 = arith.constant 0 : index
    %c0_48 = arith.constant 0 : index
    %47 = vector.load %arg18[%c4_46, %c0_47, %c0_48] : memref<8x8x32xf32, #tpu.memory_space<vmem>>, vector<1x8x32xf32>
    %48 = vector.shape_cast %47 : vector<1x8x32xf32> to vector<8x32xf32>
    %49 = vector.shape_cast %46 : vector<8x32xf32> to vector<1x8x32xf32>
    tpu.vector_store %arg18[%c4_46, %c0_47, %c0_48], %49 {strides = array<i32>} : memref<8x8x32xf32, #tpu.memory_space<vmem>>, vector<1x8x32xf32>,
    %c5 = arith.constant 5 : index
    %c0_49 = arith.constant 0 : index
    %c0_50 = arith.constant 0 : index
    %50 = vector.load %arg2[%c5, %c0_49, %c0_50] : memref<8x8x64xf32, #tpu.memory_space<vmem>>, vector<1x8x64xf32>
    %51 = vector.shape_cast %50 : vector<1x8x64xf32> to vector<8x64xf32>
    %c0_51 = arith.constant 0 : index
    %c0_52 = arith.constant 0 : index
    %52 = vector.load %arg5[%c0_51, %c0_52] : memref<64x32xf32, #tpu.memory_space<vmem>>, vector<64x32xf32>
    %cst_53 = arith.constant dense<0.000000e+00> : vector<8x32xf32>
    %53 = tpu.matmul %51, %52, %cst_53 {dimension_numbers = #tpu.dot_dimension_numbers<[1], [0], [0], [1], [0, 0, 1, 1], [], []>} : vector<8x64xf32>, vector<64x32xf32>, vector<8x32xf32> -> vector<8x32xf32>
    %c0_54 = arith.constant 0 : index
    %c0_55 = arith.constant 0 : index
    %54 = vector.load %arg6[%c0_54, %c0_55] : memref<1x32xf32, #tpu.memory_space<vmem>>, vector<1x32xf32>
    %55 = vector.broadcast %54 : vector<1x32xf32> to vector<8x32xf32>
    %56 = arith.addf %53, %55 : vector<8x32xf32>
    %c5_56 = arith.constant 5 : index
    %c0_57 = arith.constant 0 : index
    %c0_58 = arith.constant 0 : index
    %57 = vector.load %arg18[%c5_56, %c0_57, %c0_58] : memref<8x8x32xf32, #tpu.memory_space<vmem>>, vector<1x8x32xf32>
    %58 = vector.shape_cast %57 : vector<1x8x32xf32> to vector<8x32xf32>
    %59 = vector.shape_cast %56 : vector<8x32xf32> to vector<1x8x32xf32>
    tpu.vector_store %arg18[%c5_56, %c0_57, %c0_58], %59 {strides = array<i32>} : memref<8x8x32xf32, #tpu.memory_space<vmem>>, vector<1x8x32xf32>,
    %c6 = arith.constant 6 : index
    %c0_59 = arith.constant 0 : index
    %c0_60 = arith.constant 0 : index
    %60 = vector.load %arg2[%c6, %c0_59, %c0_60] : memref<8x8x64xf32, #tpu.memory_space<vmem>>, vector<1x8x64xf32>
    %61 = vector.shape_cast %60 : vector<1x8x64xf32> to vector<8x64xf32>
    %c0_61 = arith.constant 0 : index
    %c0_62 = arith.constant 0 : index
    %62 = vector.load %arg5[%c0_61, %c0_62] : memref<64x32xf32, #tpu.memory_space<vmem>>, vector<64x32xf32>
    %cst_63 = arith.constant dense<0.000000e+00> : vector<8x32xf32>
    %63 = tpu.matmul %61, %62, %cst_63 {dimension_numbers = #tpu.dot_dimension_numbers<[1], [0], [0], [1], [0, 0, 1, 1], [], []>} : vector<8x64xf32>, vector<64x32xf32>, vector<8x32xf32> -> vector<8x32xf32>
    %c0_64 = arith.constant 0 : index
    %c0_65 = arith.constant 0 : index
    %64 = vector.load %arg6[%c0_64, %c0_65] : memref<1x32xf32, #tpu.memory_space<vmem>>, vector<1x32xf32>
    %65 = vector.broadcast %64 : vector<1x32xf32> to vector<8x32xf32>
    %66 = arith.addf %63, %65 : vector<8x32xf32>
    %c6_66 = arith.constant 6 : index
    %c0_67 = arith.constant 0 : index
    %c0_68 = arith.constant 0 : index
    %67 = vector.load %arg18[%c6_66, %c0_67, %c0_68] : memref<8x8x32xf32, #tpu.memory_space<vmem>>, vector<1x8x32xf32>
    %68 = vector.shape_cast %67 : vector<1x8x32xf32> to vector<8x32xf32>
    %69 = vector.shape_cast %66 : vector<8x32xf32> to vector<1x8x32xf32>
    tpu.vector_store %arg18[%c6_66, %c0_67, %c0_68], %69 {strides = array<i32>} : memref<8x8x32xf32, #tpu.memory_space<vmem>>, vector<1x8x32xf32>,
    %c7 = arith.constant 7 : index
    %c0_69 = arith.constant 0 : index
    %c0_70 = arith.constant 0 : index
    %70 = vector.load %arg2[%c7, %c0_69, %c0_70] : memref<8x8x64xf32, #tpu.memory_space<vmem>>, vector<1x8x64xf32>
    %71 = vector.shape_cast %70 : vector<1x8x64xf32> to vector<8x64xf32>
    %c0_71 = arith.constant 0 : index
    %c0_72 = arith.constant 0 : index
    %72 = vector.load %arg5[%c0_71, %c0_72] : memref<64x32xf32, #tpu.memory_space<vmem>>, vector<64x32xf32>
    %cst_73 = arith.constant dense<0.000000e+00> : vector<8x32xf32>
    %73 = tpu.matmul %71, %72, %cst_73 {dimension_numbers = #tpu.dot_dimension_numbers<[1], [0], [0], [1], [0, 0, 1, 1], [], []>} : vector<8x64xf32>, vector<64x32xf32>, vector<8x32xf32> -> vector<8x32xf32>
    %c0_74 = arith.constant 0 : index
    %c0_75 = arith.constant 0 : index
    %74 = vector.load %arg6[%c0_74, %c0_75] : memref<1x32xf32, #tpu.memory_space<vmem>>, vector<1x32xf32>
    %75 = vector.broadcast %74 : vector<1x32xf32> to vector<8x32xf32>
    %76 = arith.addf %73, %75 : vector<8x32xf32>
    %c7_76 = arith.constant 7 : index
    %c0_77 = arith.constant 0 : index
    %c0_78 = arith.constant 0 : index
    %77 = vector.load %arg18[%c7_76, %c0_77, %c0_78] : memref<8x8x32xf32, #tpu.memory_space<vmem>>, vector<1x8x32xf32>
    %78 = vector.shape_cast %77 : vector<1x8x32xf32> to vector<8x32xf32>
    %79 = vector.shape_cast %76 : vector<8x32xf32> to vector<1x8x32xf32>
    tpu.vector_store %arg18[%c7_76, %c0_77, %c0_78], %79 {strides = array<i32>} : memref<8x8x32xf32, #tpu.memory_space<vmem>>, vector<1x8x32xf32>,
    %cst_79 = arith.constant 0.000000e+00 : f32
    %80 = vector.broadcast %cst_79 : f32 to vector<8x16xf32>
    %c0_80 = arith.constant 0 : index
    %c0_81 = arith.constant 0 : index
    %c0_82 = arith.constant 0 : index
    %81 = vector.load %arg17[%c0_80, %c0_81, %c0_82] : memref<8x8x16xf32, #tpu.memory_space<vmem>>, vector<1x8x16xf32>
    %82 = vector.shape_cast %81 : vector<1x8x16xf32> to vector<8x16xf32>
    %83 = vector.shape_cast %80 : vector<8x16xf32> to vector<1x8x16xf32>
    tpu.vector_store %arg17[%c0_80, %c0_81, %c0_82], %83 {strides = array<i32>} : memref<8x8x16xf32, #tpu.memory_space<vmem>>, vector<1x8x16xf32>,
    %84 = tpu.iota {dimensions = array<i32: 1>} : vector<8x16xi32>
    %85 = arith.sitofp %84 : vector<8x16xi32> to vector<8x16xf32>
    %c0_83 = arith.constant 0 : index
    %c0_84 = arith.constant 0 : index
    %86 = vector.load %arg1[%c0_83, %c0_84] : memref<8x32xf32, #tpu.memory_space<vmem>>, vector<8x32xf32>
    %c0_85 = arith.constant 0 : index
    %c0_86 = arith.constant 0 : index
    %87 = vector.load %arg0[%c0_85, %c0_86] : memref<8x1xi32, #tpu.memory_space<vmem>>, vector<8x1xi32>
    %c1_i32 = arith.constant 1 : i32
    %88 = vector.broadcast %87 : vector<8x1xi32> to vector<8x16xi32>
    %89 = arith.cmpi eq, %84, %88 : vector<8x16xi32>
    %90 = arith.extui %89 : vector<8x16xi1> to vector<8x16xi32>
    %91 = arith.sitofp %90 : vector<8x16xi32> to vector<8x16xf32>
    %c0_87 = arith.constant 0 : index
    %c0_88 = arith.constant 0 : index
    %92 = vector.load %arg3[%c0_87, %c0_88] : memref<16x32xf32, #tpu.memory_space<vmem>>, vector<16x32xf32>
    %cst_89 = arith.constant dense<0.000000e+00> : vector<8x32xf32>
    %93 = tpu.matmul %91, %92, %cst_89 {dimension_numbers = #tpu.dot_dimension_numbers<[1], [0], [0], [1], [0, 0, 1, 1], [], []>} : vector<8x16xf32>, vector<16x32xf32>, vector<8x32xf32> -> vector<8x32xf32>
    %c0_90 = arith.constant 0 : index
    %c0_91 = arith.constant 0 : index
    %94 = vector.load %arg4[%c0_90, %c0_91] : memref<32x32xf32, #tpu.memory_space<vmem>>, vector<32x32xf32>
    %cst_92 = arith.constant dense<0.000000e+00> : vector<8x32xf32>
    %95 = tpu.matmul %86, %94, %cst_92 {dimension_numbers = #tpu.dot_dimension_numbers<[1], [0], [0], [1], [0, 0, 1, 1], [], []>} : vector<8x32xf32>, vector<32x32xf32>, vector<8x32xf32> -> vector<8x32xf32>
    %c0_93 = arith.constant 0 : index
    %c0_94 = arith.constant 0 : index
    %c0_95 = arith.constant 0 : index
    %96 = vector.load %arg18[%c0_93, %c0_94, %c0_95] : memref<8x8x32xf32, #tpu.memory_space<vmem>>, vector<8x8x32xf32>
    %97 = vector.shape_cast %95 : vector<8x32xf32> to vector<1x8x32xf32>
    %98 = vector.broadcast %97 : vector<1x8x32xf32> to vector<8x8x32xf32>
    %99 = arith.addf %96, %98 : vector<8x8x32xf32>
    %100 = math.tanh %99 : vector<8x8x32xf32>
    %c0_96 = arith.constant 0 : index
    %c0_97 = arith.constant 0 : index
    %101 = vector.load %arg7[%c0_96, %c0_97] : memref<1x32xf32, #tpu.memory_space<vmem>>, vector<1x32xf32>
    %102 = vector.shape_cast %101 : vector<1x32xf32> to vector<1x1x32xf32>
    %103 = vector.broadcast %102 : vector<1x1x32xf32> to vector<8x8x32xf32>
    %104 = arith.mulf %100, %103 : vector<8x8x32xf32>
    %cst_98 = arith.constant dense<0.000000e+00> : vector<8x8xf32>
    %105 = vector.multi_reduction <add>, %104, %cst_98 [2] : vector<8x8x32xf32> to vector<8x8xf32>
    %106 = vector.shape_cast %105 : vector<8x8xf32> to vector<8x8x1xf32>
    %cst_99 = arith.constant dense<0xFF800000> : vector<8x1xf32>
    %107 = vector.multi_reduction <maximumf>, %106, %cst_99 [0] : vector<8x8x1xf32> to vector<8x1xf32>
    %108 = vector.shape_cast %107 : vector<8x1xf32> to vector<1x8x1xf32>
    %109 = vector.broadcast %108 : vector<1x8x1xf32> to vector<8x8x1xf32>
    %110 = arith.subf %106, %109 : vector<8x8x1xf32>
    %111 = math.exp %110 : vector<8x8x1xf32>
    %cst_100 = arith.constant dense<0.000000e+00> : vector<8x1xf32>
    %112 = vector.multi_reduction <add>, %111, %cst_100 [0] : vector<8x8x1xf32> to vector<8x1xf32>
    %113 = vector.shape_cast %112 : vector<8x1xf32> to vector<1x8x1xf32>
    %114 = vector.broadcast %113 : vector<1x8x1xf32> to vector<8x8x1xf32>
    %115 = arith.divf %111, %114 : vector<8x8x1xf32>
    %c0_101 = arith.constant 0 : index
    %c0_102 = arith.constant 0 : index
    %c0_103 = arith.constant 0 : index
    %116 = vector.load %arg2[%c0_101, %c0_102, %c0_103] : memref<8x8x64xf32, #tpu.memory_space<vmem>>, vector<8x8x64xf32>
    %117 = vector.broadcast %115 : vector<8x8x1xf32> to vector<8x8x64xf32>
    %118 = arith.mulf %117, %116 : vector<8x8x64xf32>
    %cst_104 = arith.constant dense<0.000000e+00> : vector<8x64xf32>
    %119 = vector.multi_reduction <add>, %118, %cst_104 [0] : vector<8x8x64xf32> to vector<8x64xf32>
    %c0_105 = arith.constant 0 : index
    %c0_106 = arith.constant 0 : index
    %120 = vector.load %arg8[%c0_105, %c0_106] : memref<32x96xf32, #tpu.memory_space<vmem>>, vector<32x96xf32>
    %cst_107 = arith.constant dense<0.000000e+00> : vector<8x96xf32>
    %121 = tpu.matmul %93, %120, %cst_107 {dimension_numbers = #tpu.dot_dimension_numbers<[1], [0], [0], [1], [0, 0, 1, 1], [], []>} : vector<8x32xf32>, vector<32x96xf32>, vector<8x96xf32> -> vector<8x96xf32>
    %c0_108 = arith.constant 0 : index
    %c0_109 = arith.constant 0 : index
    %122 = vector.load %arg9[%c0_108, %c0_109] : memref<64x96xf32, #tpu.memory_space<vmem>>, vector<64x96xf32>
    %cst_110 = arith.constant dense<0.000000e+00> : vector<8x96xf32>
    %123 = tpu.matmul %119, %122, %cst_110 {dimension_numbers = #tpu.dot_dimension_numbers<[1], [0], [0], [1], [0, 0, 1, 1], [], []>} : vector<8x64xf32>, vector<64x96xf32>, vector<8x96xf32> -> vector<8x96xf32>
    %124 = arith.addf %121, %123 : vector<8x96xf32>
    %c0_111 = arith.constant 0 : index
    %c0_112 = arith.constant 0 : index
    %125 = vector.load %arg11[%c0_111, %c0_112] : memref<1x96xf32, #tpu.memory_space<vmem>>, vector<1x96xf32>
    %126 = vector.broadcast %125 : vector<1x96xf32> to vector<8x96xf32>
    %127 = arith.addf %124, %126 : vector<8x96xf32>
    %c0_113 = arith.constant 0 : index
    %c0_114 = arith.constant 0 : index
    %128 = vector.load %arg10[%c0_113, %c0_114] : memref<32x96xf32, #tpu.memory_space<vmem>>, vector<32x96xf32>
    %cst_115 = arith.constant dense<0.000000e+00> : vector<8x96xf32>
    %129 = tpu.matmul %86, %128, %cst_115 {dimension_numbers = #tpu.dot_dimension_numbers<[1], [0], [0], [1], [0, 0, 1, 1], [], []>} : vector<8x32xf32>, vector<32x96xf32>, vector<8x96xf32> -> vector<8x96xf32>
    %c0_116 = arith.constant 0 : index
    %c0_117 = arith.constant 0 : index
    %130 = vector.load %arg12[%c0_116, %c0_117] : memref<1x96xf32, #tpu.memory_space<vmem>>, vector<1x96xf32>
    %131 = vector.broadcast %130 : vector<1x96xf32> to vector<8x96xf32>
    %132 = arith.addf %129, %131 : vector<8x96xf32>
    %133 = vector.extract_strided_slice %127 {offsets = [0, 0], sizes = [8, 32], strides = [1, 1]} : vector<8x96xf32> to vector<8x32xf32>
    %134 = vector.extract_strided_slice %132 {offsets = [0, 0], sizes = [8, 32], strides = [1, 1]} : vector<8x96xf32> to vector<8x32xf32>
    %135 = arith.addf %133, %134 : vector<8x32xf32>
    %136 = arith.negf %135 : vector<8x32xf32>
    %137 = math.exp %136 : vector<8x32xf32>
    %cst_118 = arith.constant 1.000000e+00 : f32
    %138 = vector.broadcast %cst_118 : f32 to vector<8x32xf32>
    %139 = arith.addf %138, %137 : vector<8x32xf32>
    %140 = arith.divf %138, %139 : vector<8x32xf32>
    %141 = vector.extract_strided_slice %127 {offsets = [0, 32], sizes = [8, 32], strides = [1, 1]} : vector<8x96xf32> to vector<8x32xf32>
    %142 = vector.extract_strided_slice %132 {offsets = [0, 32], sizes = [8, 32], strides = [1, 1]} : vector<8x96xf32> to vector<8x32xf32>
    %143 = arith.addf %141, %142 : vector<8x32xf32>
    %144 = arith.negf %143 : vector<8x32xf32>
    %145 = math.exp %144 : vector<8x32xf32>
    %cst_119 = arith.constant 1.000000e+00 : f32
    %146 = vector.broadcast %cst_119 : f32 to vector<8x32xf32>
    %147 = arith.addf %146, %145 : vector<8x32xf32>
    %148 = arith.divf %146, %147 : vector<8x32xf32>
    %149 = vector.extract_strided_slice %127 {offsets = [0, 64], sizes = [8, 32], strides = [1, 1]} : vector<8x96xf32> to vector<8x32xf32>
    %150 = vector.extract_strided_slice %132 {offsets = [0, 64], sizes = [8, 32], strides = [1, 1]} : vector<8x96xf32> to vector<8x32xf32>
    %151 = arith.mulf %140, %150 : vector<8x32xf32>
    %152 = arith.addf %149, %151 : vector<8x32xf32>
    %153 = math.tanh %152 : vector<8x32xf32>
    %cst_120 = arith.constant 1.000000e+00 : f32
    %154 = vector.broadcast %cst_120 : f32 to vector<8x32xf32>
    %155 = arith.subf %154, %148 : vector<8x32xf32>
    %156 = arith.mulf %155, %153 : vector<8x32xf32>
    %157 = arith.mulf %148, %86 : vector<8x32xf32>
    %158 = arith.addf %156, %157 : vector<8x32xf32>
    %c0_121 = arith.constant 0 : index
    %c0_122 = arith.constant 0 : index
    %159 = vector.load %arg13[%c0_121, %c0_122] : memref<32x16xf32, #tpu.memory_space<vmem>>, vector<32x16xf32>
    %cst_123 = arith.constant dense<0.000000e+00> : vector<8x16xf32>
    %160 = tpu.matmul %158, %159, %cst_123 {dimension_numbers = #tpu.dot_dimension_numbers<[1], [0], [0], [1], [0, 0, 1, 1], [], []>} : vector<8x32xf32>, vector<32x16xf32>, vector<8x16xf32> -> vector<8x16xf32>
    %c0_124 = arith.constant 0 : index
    %c0_125 = arith.constant 0 : index
    %161 = vector.load %arg14[%c0_124, %c0_125] : memref<64x16xf32, #tpu.memory_space<vmem>>, vector<64x16xf32>
    %cst_126 = arith.constant dense<0.000000e+00> : vector<8x16xf32>
    %162 = tpu.matmul %119, %161, %cst_126 {dimension_numbers = #tpu.dot_dimension_numbers<[1], [0], [0], [1], [0, 0, 1, 1], [], []>} : vector<8x64xf32>, vector<64x16xf32>, vector<8x16xf32> -> vector<8x16xf32>
    %163 = arith.addf %160, %162 : vector<8x16xf32>
    %c0_127 = arith.constant 0 : index
    %c0_128 = arith.constant 0 : index
    %164 = vector.load %arg15[%c0_127, %c0_128] : memref<32x16xf32, #tpu.memory_space<vmem>>, vector<32x16xf32>
    %cst_129 = arith.constant dense<0.000000e+00> : vector<8x16xf32>
    %165 = tpu.matmul %93, %164, %cst_129 {dimension_numbers = #tpu.dot_dimension_numbers<[1], [0], [0], [1], [0, 0, 1, 1], [], []>} : vector<8x32xf32>, vector<32x16xf32>, vector<8x16xf32> -> vector<8x16xf32>
    %166 = arith.addf %163, %165 : vector<8x16xf32>
    %c0_130 = arith.constant 0 : index
    %c0_131 = arith.constant 0 : index
    %167 = vector.load %arg16[%c0_130, %c0_131] : memref<1x16xf32, #tpu.memory_space<vmem>>, vector<1x16xf32>
    %168 = vector.broadcast %167 : vector<1x16xf32> to vector<8x16xf32>
    %169 = arith.addf %166, %168 : vector<8x16xf32>
    %170 = arith.index_cast %c1_i32 : i32 to index
    %c0_132 = arith.constant 0 : index
    %c0_133 = arith.constant 0 : index
    %171 = vector.load %arg17[%170, %c0_132, %c0_133] : memref<8x8x16xf32, #tpu.memory_space<vmem>>, vector<1x8x16xf32>
    %172 = vector.shape_cast %171 : vector<1x8x16xf32> to vector<8x16xf32>
    %173 = vector.shape_cast %169 : vector<8x16xf32> to vector<1x8x16xf32>
    tpu.vector_store %arg17[%170, %c0_132, %c0_133], %173 {strides = array<i32>} : memref<8x8x16xf32, #tpu.memory_space<vmem>>, vector<1x8x16xf32>,
    %cst_134 = arith.constant dense<0xFF800000> : vector<8xf32>
    %174 = vector.multi_reduction <maximumf>, %169, %cst_134 [1] : vector<8x16xf32> to vector<8xf32>
    %175 = vector.shape_cast %174 : vector<8xf32> to vector<8x1xf32>
    %176 = vector.broadcast %175 : vector<8x1xf32> to vector<8x16xf32>
    %177 = arith.cmpf oeq, %169, %176 : vector<8x16xf32>
    %cst_135 = arith.constant 1.600000e+01 : f32
    %178 = vector.broadcast %cst_135 : f32 to vector<8x16xf32>
    %179 = arith.select %177, %85, %178 : vector<8x16xi1>, vector<8x16xf32>
    %cst_136 = arith.constant dense<0x7F800000> : vector<8xf32>
    %180 = vector.multi_reduction <minimumf>, %179, %cst_136 [1] : vector<8x16xf32> to vector<8xf32>
    %181 = vector.shape_cast %180 : vector<8xf32> to vector<8x1xf32>
    %182 = arith.fptosi %181 : vector<8x1xf32> to vector<8x1xi32>
    %c2_i32 = arith.constant 2 : i32
    %183 = vector.broadcast %182 : vector<8x1xi32> to vector<8x16xi32>
    %184 = arith.cmpi eq, %84, %183 : vector<8x16xi32>
    %185 = arith.extui %184 : vector<8x16xi1> to vector<8x16xi32>
    %186 = arith.sitofp %185 : vector<8x16xi32> to vector<8x16xf32>
    %c0_137 = arith.constant 0 : index
    %c0_138 = arith.constant 0 : index
    %187 = vector.load %arg3[%c0_137, %c0_138] : memref<16x32xf32, #tpu.memory_space<vmem>>, vector<16x32xf32>
    %cst_139 = arith.constant dense<0.000000e+00> : vector<8x32xf32>
    %188 = tpu.matmul %186, %187, %cst_139 {dimension_numbers = #tpu.dot_dimension_numbers<[1], [0], [0], [1], [0, 0, 1, 1], [], []>} : vector<8x16xf32>, vector<16x32xf32>, vector<8x32xf32> -> vector<8x32xf32>
    %c0_140 = arith.constant 0 : index
    %c0_141 = arith.constant 0 : index
    %189 = vector.load %arg4[%c0_140, %c0_141] : memref<32x32xf32, #tpu.memory_space<vmem>>, vector<32x32xf32>
    %cst_142 = arith.constant dense<0.000000e+00> : vector<8x32xf32>
    %190 = tpu.matmul %158, %189, %cst_142 {dimension_numbers = #tpu.dot_dimension_numbers<[1], [0], [0], [1], [0, 0, 1, 1], [], []>} : vector<8x32xf32>, vector<32x32xf32>, vector<8x32xf32> -> vector<8x32xf32>
    %c0_143 = arith.constant 0 : index
    %c0_144 = arith.constant 0 : index
    %c0_145 = arith.constant 0 : index
    %191 = vector.load %arg18[%c0_143, %c0_144, %c0_145] : memref<8x8x32xf32, #tpu.memory_space<vmem>>, vector<8x8x32xf32>
    %192 = vector.shape_cast %190 : vector<8x32xf32> to vector<1x8x32xf32>
    %193 = vector.broadcast %192 : vector<1x8x32xf32> to vector<8x8x32xf32>
    %194 = arith.addf %191, %193 : vector<8x8x32xf32>
    %195 = math.tanh %194 : vector<8x8x32xf32>
    %c0_146 = arith.constant 0 : index
    %c0_147 = arith.constant 0 : index
    %196 = vector.load %arg7[%c0_146, %c0_147] : memref<1x32xf32, #tpu.memory_space<vmem>>, vector<1x32xf32>
    %197 = vector.shape_cast %196 : vector<1x32xf32> to vector<1x1x32xf32>
    %198 = vector.broadcast %197 : vector<1x1x32xf32> to vector<8x8x32xf32>
    %199 = arith.mulf %195, %198 : vector<8x8x32xf32>
    %cst_148 = arith.constant dense<0.000000e+00> : vector<8x8xf32>
    %200 = vector.multi_reduction <add>, %199, %cst_148 [2] : vector<8x8x32xf32> to vector<8x8xf32>
    %201 = vector.shape_cast %200 : vector<8x8xf32> to vector<8x8x1xf32>
    %cst_149 = arith.constant dense<0xFF800000> : vector<8x1xf32>
    %202 = vector.multi_reduction <maximumf>, %201, %cst_149 [0] : vector<8x8x1xf32> to vector<8x1xf32>
    %203 = vector.shape_cast %202 : vector<8x1xf32> to vector<1x8x1xf32>
    %204 = vector.broadcast %203 : vector<1x8x1xf32> to vector<8x8x1xf32>
    %205 = arith.subf %201, %204 : vector<8x8x1xf32>
    %206 = math.exp %205 : vector<8x8x1xf32>
    %cst_150 = arith.constant dense<0.000000e+00> : vector<8x1xf32>
    %207 = vector.multi_reduction <add>, %206, %cst_150 [0] : vector<8x8x1xf32> to vector<8x1xf32>
    %208 = vector.shape_cast %207 : vector<8x1xf32> to vector<1x8x1xf32>
    %209 = vector.broadcast %208 : vector<1x8x1xf32> to vector<8x8x1xf32>
    %210 = arith.divf %206, %209 : vector<8x8x1xf32>
    %c0_151 = arith.constant 0 : index
    %c0_152 = arith.constant 0 : index
    %c0_153 = arith.constant 0 : index
    %211 = vector.load %arg2[%c0_151, %c0_152, %c0_153] : memref<8x8x64xf32, #tpu.memory_space<vmem>>, vector<8x8x64xf32>
    %212 = vector.broadcast %210 : vector<8x8x1xf32> to vector<8x8x64xf32>
    %213 = arith.mulf %212, %211 : vector<8x8x64xf32>
    %cst_154 = arith.constant dense<0.000000e+00> : vector<8x64xf32>
    %214 = vector.multi_reduction <add>, %213, %cst_154 [0] : vector<8x8x64xf32> to vector<8x64xf32>
    %c0_155 = arith.constant 0 : index
    %c0_156 = arith.constant 0 : index
    %215 = vector.load %arg8[%c0_155, %c0_156] : memref<32x96xf32, #tpu.memory_space<vmem>>, vector<32x96xf32>
    %cst_157 = arith.constant dense<0.000000e+00> : vector<8x96xf32>
    %216 = tpu.matmul %188, %215, %cst_157 {dimension_numbers = #tpu.dot_dimension_numbers<[1], [0], [0], [1], [0, 0, 1, 1], [], []>} : vector<8x32xf32>, vector<32x96xf32>, vector<8x96xf32> -> vector<8x96xf32>
    %c0_158 = arith.constant 0 : index
    %c0_159 = arith.constant 0 : index
    %217 = vector.load %arg9[%c0_158, %c0_159] : memref<64x96xf32, #tpu.memory_space<vmem>>, vector<64x96xf32>
    %cst_160 = arith.constant dense<0.000000e+00> : vector<8x96xf32>
    %218 = tpu.matmul %214, %217, %cst_160 {dimension_numbers = #tpu.dot_dimension_numbers<[1], [0], [0], [1], [0, 0, 1, 1], [], []>} : vector<8x64xf32>, vector<64x96xf32>, vector<8x96xf32> -> vector<8x96xf32>
    %219 = arith.addf %216, %218 : vector<8x96xf32>
    %c0_161 = arith.constant 0 : index
    %c0_162 = arith.constant 0 : index
    %220 = vector.load %arg11[%c0_161, %c0_162] : memref<1x96xf32, #tpu.memory_space<vmem>>, vector<1x96xf32>
    %221 = vector.broadcast %220 : vector<1x96xf32> to vector<8x96xf32>
    %222 = arith.addf %219, %221 : vector<8x96xf32>
    %c0_163 = arith.constant 0 : index
    %c0_164 = arith.constant 0 : index
    %223 = vector.load %arg10[%c0_163, %c0_164] : memref<32x96xf32, #tpu.memory_space<vmem>>, vector<32x96xf32>
    %cst_165 = arith.constant dense<0.000000e+00> : vector<8x96xf32>
    %224 = tpu.matmul %158, %223, %cst_165 {dimension_numbers = #tpu.dot_dimension_numbers<[1], [0], [0], [1], [0, 0, 1, 1], [], []>} : vector<8x32xf32>, vector<32x96xf32>, vector<8x96xf32> -> vector<8x96xf32>
    %c0_166 = arith.constant 0 : index
    %c0_167 = arith.constant 0 : index
    %225 = vector.load %arg12[%c0_166, %c0_167] : memref<1x96xf32, #tpu.memory_space<vmem>>, vector<1x96xf32>
    %226 = vector.broadcast %225 : vector<1x96xf32> to vector<8x96xf32>
    %227 = arith.addf %224, %226 : vector<8x96xf32>
    %228 = vector.extract_strided_slice %222 {offsets = [0, 0], sizes = [8, 32], strides = [1, 1]} : vector<8x96xf32> to vector<8x32xf32>
    %229 = vector.extract_strided_slice %227 {offsets = [0, 0], sizes = [8, 32], strides = [1, 1]} : vector<8x96xf32> to vector<8x32xf32>
    %230 = arith.addf %228, %229 : vector<8x32xf32>
    %231 = arith.negf %230 : vector<8x32xf32>
    %232 = math.exp %231 : vector<8x32xf32>
    %cst_168 = arith.constant 1.000000e+00 : f32
    %233 = vector.broadcast %cst_168 : f32 to vector<8x32xf32>
    %234 = arith.addf %233, %232 : vector<8x32xf32>
    %235 = arith.divf %233, %234 : vector<8x32xf32>
    %236 = vector.extract_strided_slice %222 {offsets = [0, 32], sizes = [8, 32], strides = [1, 1]} : vector<8x96xf32> to vector<8x32xf32>
    %237 = vector.extract_strided_slice %227 {offsets = [0, 32], sizes = [8, 32], strides = [1, 1]} : vector<8x96xf32> to vector<8x32xf32>
    %238 = arith.addf %236, %237 : vector<8x32xf32>
    %239 = arith.negf %238 : vector<8x32xf32>
    %240 = math.exp %239 : vector<8x32xf32>
    %cst_169 = arith.constant 1.000000e+00 : f32
    %241 = vector.broadcast %cst_169 : f32 to vector<8x32xf32>
    %242 = arith.addf %241, %240 : vector<8x32xf32>
    %243 = arith.divf %241, %242 : vector<8x32xf32>
    %244 = vector.extract_strided_slice %222 {offsets = [0, 64], sizes = [8, 32], strides = [1, 1]} : vector<8x96xf32> to vector<8x32xf32>
    %245 = vector.extract_strided_slice %227 {offsets = [0, 64], sizes = [8, 32], strides = [1, 1]} : vector<8x96xf32> to vector<8x32xf32>
    %246 = arith.mulf %235, %245 : vector<8x32xf32>
    %247 = arith.addf %244, %246 : vector<8x32xf32>
    %248 = math.tanh %247 : vector<8x32xf32>
    %cst_170 = arith.constant 1.000000e+00 : f32
    %249 = vector.broadcast %cst_170 : f32 to vector<8x32xf32>
    %250 = arith.subf %249, %243 : vector<8x32xf32>
    %251 = arith.mulf %250, %248 : vector<8x32xf32>
    %252 = arith.mulf %243, %158 : vector<8x32xf32>
    %253 = arith.addf %251, %252 : vector<8x32xf32>
    %c0_171 = arith.constant 0 : index
    %c0_172 = arith.constant 0 : index
    %254 = vector.load %arg13[%c0_171, %c0_172] : memref<32x16xf32, #tpu.memory_space<vmem>>, vector<32x16xf32>
    %cst_173 = arith.constant dense<0.000000e+00> : vector<8x16xf32>
    %255 = tpu.matmul %253, %254, %cst_173 {dimension_numbers = #tpu.dot_dimension_numbers<[1], [0], [0], [1], [0, 0, 1, 1], [], []>} : vector<8x32xf32>, vector<32x16xf32>, vector<8x16xf32> -> vector<8x16xf32>
    %c0_174 = arith.constant 0 : index
    %c0_175 = arith.constant 0 : index
    %256 = vector.load %arg14[%c0_174, %c0_175] : memref<64x16xf32, #tpu.memory_space<vmem>>, vector<64x16xf32>
    %cst_176 = arith.constant dense<0.000000e+00> : vector<8x16xf32>
    %257 = tpu.matmul %214, %256, %cst_176 {dimension_numbers = #tpu.dot_dimension_numbers<[1], [0], [0], [1], [0, 0, 1, 1], [], []>} : vector<8x64xf32>, vector<64x16xf32>, vector<8x16xf32> -> vector<8x16xf32>
    %258 = arith.addf %255, %257 : vector<8x16xf32>
    %c0_177 = arith.constant 0 : index
    %c0_178 = arith.constant 0 : index
    %259 = vector.load %arg15[%c0_177, %c0_178] : memref<32x16xf32, #tpu.memory_space<vmem>>, vector<32x16xf32>
    %cst_179 = arith.constant dense<0.000000e+00> : vector<8x16xf32>
    %260 = tpu.matmul %188, %259, %cst_179 {dimension_numbers = #tpu.dot_dimension_numbers<[1], [0], [0], [1], [0, 0, 1, 1], [], []>} : vector<8x32xf32>, vector<32x16xf32>, vector<8x16xf32> -> vector<8x16xf32>
    %261 = arith.addf %258, %260 : vector<8x16xf32>
    %c0_180 = arith.constant 0 : index
    %c0_181 = arith.constant 0 : index
    %262 = vector.load %arg16[%c0_180, %c0_181] : memref<1x16xf32, #tpu.memory_space<vmem>>, vector<1x16xf32>
    %263 = vector.broadcast %262 : vector<1x16xf32> to vector<8x16xf32>
    %264 = arith.addf %261, %263 : vector<8x16xf32>
    %265 = arith.index_cast %c2_i32 : i32 to index
    %c0_182 = arith.constant 0 : index
    %c0_183 = arith.constant 0 : index
    %266 = vector.load %arg17[%265, %c0_182, %c0_183] : memref<8x8x16xf32, #tpu.memory_space<vmem>>, vector<1x8x16xf32>
    %267 = vector.shape_cast %266 : vector<1x8x16xf32> to vector<8x16xf32>
    %268 = vector.shape_cast %264 : vector<8x16xf32> to vector<1x8x16xf32>
    tpu.vector_store %arg17[%265, %c0_182, %c0_183], %268 {strides = array<i32>} : memref<8x8x16xf32, #tpu.memory_space<vmem>>, vector<1x8x16xf32>,
    %cst_184 = arith.constant dense<0xFF800000> : vector<8xf32>
    %269 = vector.multi_reduction <maximumf>, %264, %cst_184 [1] : vector<8x16xf32> to vector<8xf32>
    %270 = vector.shape_cast %269 : vector<8xf32> to vector<8x1xf32>
    %271 = vector.broadcast %270 : vector<8x1xf32> to vector<8x16xf32>
    %272 = arith.cmpf oeq, %264, %271 : vector<8x16xf32>
    %cst_185 = arith.constant 1.600000e+01 : f32
    %273 = vector.broadcast %cst_185 : f32 to vector<8x16xf32>
    %274 = arith.select %272, %85, %273 : vector<8x16xi1>, vector<8x16xf32>
    %cst_186 = arith.constant dense<0x7F800000> : vector<8xf32>
    %275 = vector.multi_reduction <minimumf>, %274, %cst_186 [1] : vector<8x16xf32> to vector<8xf32>
    %276 = vector.shape_cast %275 : vector<8xf32> to vector<8x1xf32>
    %277 = arith.fptosi %276 : vector<8x1xf32> to vector<8x1xi32>
    %c3_i32 = arith.constant 3 : i32
    %278 = vector.broadcast %277 : vector<8x1xi32> to vector<8x16xi32>
    %279 = arith.cmpi eq, %84, %278 : vector<8x16xi32>
    %280 = arith.extui %279 : vector<8x16xi1> to vector<8x16xi32>
    %281 = arith.sitofp %280 : vector<8x16xi32> to vector<8x16xf32>
    %c0_187 = arith.constant 0 : index
    %c0_188 = arith.constant 0 : index
    %282 = vector.load %arg3[%c0_187, %c0_188] : memref<16x32xf32, #tpu.memory_space<vmem>>, vector<16x32xf32>
    %cst_189 = arith.constant dense<0.000000e+00> : vector<8x32xf32>
    %283 = tpu.matmul %281, %282, %cst_189 {dimension_numbers = #tpu.dot_dimension_numbers<[1], [0], [0], [1], [0, 0, 1, 1], [], []>} : vector<8x16xf32>, vector<16x32xf32>, vector<8x32xf32> -> vector<8x32xf32>
    %c0_190 = arith.constant 0 : index
    %c0_191 = arith.constant 0 : index
    %284 = vector.load %arg4[%c0_190, %c0_191] : memref<32x32xf32, #tpu.memory_space<vmem>>, vector<32x32xf32>
    %cst_192 = arith.constant dense<0.000000e+00> : vector<8x32xf32>
    %285 = tpu.matmul %253, %284, %cst_192 {dimension_numbers = #tpu.dot_dimension_numbers<[1], [0], [0], [1], [0, 0, 1, 1], [], []>} : vector<8x32xf32>, vector<32x32xf32>, vector<8x32xf32> -> vector<8x32xf32>
    %c0_193 = arith.constant 0 : index
    %c0_194 = arith.constant 0 : index
    %c0_195 = arith.constant 0 : index
    %286 = vector.load %arg18[%c0_193, %c0_194, %c0_195] : memref<8x8x32xf32, #tpu.memory_space<vmem>>, vector<8x8x32xf32>
    %287 = vector.shape_cast %285 : vector<8x32xf32> to vector<1x8x32xf32>
    %288 = vector.broadcast %287 : vector<1x8x32xf32> to vector<8x8x32xf32>
    %289 = arith.addf %286, %288 : vector<8x8x32xf32>
    %290 = math.tanh %289 : vector<8x8x32xf32>
    %c0_196 = arith.constant 0 : index
    %c0_197 = arith.constant 0 : index
    %291 = vector.load %arg7[%c0_196, %c0_197] : memref<1x32xf32, #tpu.memory_space<vmem>>, vector<1x32xf32>
    %292 = vector.shape_cast %291 : vector<1x32xf32> to vector<1x1x32xf32>
    %293 = vector.broadcast %292 : vector<1x1x32xf32> to vector<8x8x32xf32>
    %294 = arith.mulf %290, %293 : vector<8x8x32xf32>
    %cst_198 = arith.constant dense<0.000000e+00> : vector<8x8xf32>
    %295 = vector.multi_reduction <add>, %294, %cst_198 [2] : vector<8x8x32xf32> to vector<8x8xf32>
    %296 = vector.shape_cast %295 : vector<8x8xf32> to vector<8x8x1xf32>
    %cst_199 = arith.constant dense<0xFF800000> : vector<8x1xf32>
    %297 = vector.multi_reduction <maximumf>, %296, %cst_199 [0] : vector<8x8x1xf32> to vector<8x1xf32>
    %298 = vector.shape_cast %297 : vector<8x1xf32> to vector<1x8x1xf32>
    %299 = vector.broadcast %298 : vector<1x8x1xf32> to vector<8x8x1xf32>
    %300 = arith.subf %296, %299 : vector<8x8x1xf32>
    %301 = math.exp %300 : vector<8x8x1xf32>
    %cst_200 = arith.constant dense<0.000000e+00> : vector<8x1xf32>
    %302 = vector.multi_reduction <add>, %301, %cst_200 [0] : vector<8x8x1xf32> to vector<8x1xf32>
    %303 = vector.shape_cast %302 : vector<8x1xf32> to vector<1x8x1xf32>
    %304 = vector.broadcast %303 : vector<1x8x1xf32> to vector<8x8x1xf32>
    %305 = arith.divf %301, %304 : vector<8x8x1xf32>
    %c0_201 = arith.constant 0 : index
    %c0_202 = arith.constant 0 : index
    %c0_203 = arith.constant 0 : index
    %306 = vector.load %arg2[%c0_201, %c0_202, %c0_203] : memref<8x8x64xf32, #tpu.memory_space<vmem>>, vector<8x8x64xf32>
    %307 = vector.broadcast %305 : vector<8x8x1xf32> to vector<8x8x64xf32>
    %308 = arith.mulf %307, %306 : vector<8x8x64xf32>
    %cst_204 = arith.constant dense<0.000000e+00> : vector<8x64xf32>
    %309 = vector.multi_reduction <add>, %308, %cst_204 [0] : vector<8x8x64xf32> to vector<8x64xf32>
    %c0_205 = arith.constant 0 : index
    %c0_206 = arith.constant 0 : index
    %310 = vector.load %arg8[%c0_205, %c0_206] : memref<32x96xf32, #tpu.memory_space<vmem>>, vector<32x96xf32>
    %cst_207 = arith.constant dense<0.000000e+00> : vector<8x96xf32>
    %311 = tpu.matmul %283, %310, %cst_207 {dimension_numbers = #tpu.dot_dimension_numbers<[1], [0], [0], [1], [0, 0, 1, 1], [], []>} : vector<8x32xf32>, vector<32x96xf32>, vector<8x96xf32> -> vector<8x96xf32>
    %c0_208 = arith.constant 0 : index
    %c0_209 = arith.constant 0 : index
    %312 = vector.load %arg9[%c0_208, %c0_209] : memref<64x96xf32, #tpu.memory_space<vmem>>, vector<64x96xf32>
    %cst_210 = arith.constant dense<0.000000e+00> : vector<8x96xf32>
    %313 = tpu.matmul %309, %312, %cst_210 {dimension_numbers = #tpu.dot_dimension_numbers<[1], [0], [0], [1], [0, 0, 1, 1], [], []>} : vector<8x64xf32>, vector<64x96xf32>, vector<8x96xf32> -> vector<8x96xf32>
    %314 = arith.addf %311, %313 : vector<8x96xf32>
    %c0_211 = arith.constant 0 : index
    %c0_212 = arith.constant 0 : index
    %315 = vector.load %arg11[%c0_211, %c0_212] : memref<1x96xf32, #tpu.memory_space<vmem>>, vector<1x96xf32>
    %316 = vector.broadcast %315 : vector<1x96xf32> to vector<8x96xf32>
    %317 = arith.addf %314, %316 : vector<8x96xf32>
    %c0_213 = arith.constant 0 : index
    %c0_214 = arith.constant 0 : index
    %318 = vector.load %arg10[%c0_213, %c0_214] : memref<32x96xf32, #tpu.memory_space<vmem>>, vector<32x96xf32>
    %cst_215 = arith.constant dense<0.000000e+00> : vector<8x96xf32>
    %319 = tpu.matmul %253, %318, %cst_215 {dimension_numbers = #tpu.dot_dimension_numbers<[1], [0], [0], [1], [0, 0, 1, 1], [], []>} : vector<8x32xf32>, vector<32x96xf32>, vector<8x96xf32> -> vector<8x96xf32>
    %c0_216 = arith.constant 0 : index
    %c0_217 = arith.constant 0 : index
    %320 = vector.load %arg12[%c0_216, %c0_217] : memref<1x96xf32, #tpu.memory_space<vmem>>, vector<1x96xf32>
    %321 = vector.broadcast %320 : vector<1x96xf32> to vector<8x96xf32>
    %322 = arith.addf %319, %321 : vector<8x96xf32>
    %323 = vector.extract_strided_slice %317 {offsets = [0, 0], sizes = [8, 32], strides = [1, 1]} : vector<8x96xf32> to vector<8x32xf32>
    %324 = vector.extract_strided_slice %322 {offsets = [0, 0], sizes = [8, 32], strides = [1, 1]} : vector<8x96xf32> to vector<8x32xf32>
    %325 = arith.addf %323, %324 : vector<8x32xf32>
    %326 = arith.negf %325 : vector<8x32xf32>
    %327 = math.exp %326 : vector<8x32xf32>
    %cst_218 = arith.constant 1.000000e+00 : f32
    %328 = vector.broadcast %cst_218 : f32 to vector<8x32xf32>
    %329 = arith.addf %328, %327 : vector<8x32xf32>
    %330 = arith.divf %328, %329 : vector<8x32xf32>
    %331 = vector.extract_strided_slice %317 {offsets = [0, 32], sizes = [8, 32], strides = [1, 1]} : vector<8x96xf32> to vector<8x32xf32>
    %332 = vector.extract_strided_slice %322 {offsets = [0, 32], sizes = [8, 32], strides = [1, 1]} : vector<8x96xf32> to vector<8x32xf32>
    %333 = arith.addf %331, %332 : vector<8x32xf32>
    %334 = arith.negf %333 : vector<8x32xf32>
    %335 = math.exp %334 : vector<8x32xf32>
    %cst_219 = arith.constant 1.000000e+00 : f32
    %336 = vector.broadcast %cst_219 : f32 to vector<8x32xf32>
    %337 = arith.addf %336, %335 : vector<8x32xf32>
    %338 = arith.divf %336, %337 : vector<8x32xf32>
    %339 = vector.extract_strided_slice %317 {offsets = [0, 64], sizes = [8, 32], strides = [1, 1]} : vector<8x96xf32> to vector<8x32xf32>
    %340 = vector.extract_strided_slice %322 {offsets = [0, 64], sizes = [8, 32], strides = [1, 1]} : vector<8x96xf32> to vector<8x32xf32>
    %341 = arith.mulf %330, %340 : vector<8x32xf32>
    %342 = arith.addf %339, %341 : vector<8x32xf32>
    %343 = math.tanh %342 : vector<8x32xf32>
    %cst_220 = arith.constant 1.000000e+00 : f32
    %344 = vector.broadcast %cst_220 : f32 to vector<8x32xf32>
    %345 = arith.subf %344, %338 : vector<8x32xf32>
    %346 = arith.mulf %345, %343 : vector<8x32xf32>
    %347 = arith.mulf %338, %253 : vector<8x32xf32>
    %348 = arith.addf %346, %347 : vector<8x32xf32>
    %c0_221 = arith.constant 0 : index
    %c0_222 = arith.constant 0 : index
    %349 = vector.load %arg13[%c0_221, %c0_222] : memref<32x16xf32, #tpu.memory_space<vmem>>, vector<32x16xf32>
    %cst_223 = arith.constant dense<0.000000e+00> : vector<8x16xf32>
    %350 = tpu.matmul %348, %349, %cst_223 {dimension_numbers = #tpu.dot_dimension_numbers<[1], [0], [0], [1], [0, 0, 1, 1], [], []>} : vector<8x32xf32>, vector<32x16xf32>, vector<8x16xf32> -> vector<8x16xf32>
    %c0_224 = arith.constant 0 : index
    %c0_225 = arith.constant 0 : index
    %351 = vector.load %arg14[%c0_224, %c0_225] : memref<64x16xf32, #tpu.memory_space<vmem>>, vector<64x16xf32>
    %cst_226 = arith.constant dense<0.000000e+00> : vector<8x16xf32>
    %352 = tpu.matmul %309, %351, %cst_226 {dimension_numbers = #tpu.dot_dimension_numbers<[1], [0], [0], [1], [0, 0, 1, 1], [], []>} : vector<8x64xf32>, vector<64x16xf32>, vector<8x16xf32> -> vector<8x16xf32>
    %353 = arith.addf %350, %352 : vector<8x16xf32>
    %c0_227 = arith.constant 0 : index
    %c0_228 = arith.constant 0 : index
    %354 = vector.load %arg15[%c0_227, %c0_228] : memref<32x16xf32, #tpu.memory_space<vmem>>, vector<32x16xf32>
    %cst_229 = arith.constant dense<0.000000e+00> : vector<8x16xf32>
    %355 = tpu.matmul %283, %354, %cst_229 {dimension_numbers = #tpu.dot_dimension_numbers<[1], [0], [0], [1], [0, 0, 1, 1], [], []>} : vector<8x32xf32>, vector<32x16xf32>, vector<8x16xf32> -> vector<8x16xf32>
    %356 = arith.addf %353, %355 : vector<8x16xf32>
    %c0_230 = arith.constant 0 : index
    %c0_231 = arith.constant 0 : index
    %357 = vector.load %arg16[%c0_230, %c0_231] : memref<1x16xf32, #tpu.memory_space<vmem>>, vector<1x16xf32>
    %358 = vector.broadcast %357 : vector<1x16xf32> to vector<8x16xf32>
    %359 = arith.addf %356, %358 : vector<8x16xf32>
    %360 = arith.index_cast %c3_i32 : i32 to index
    %c0_232 = arith.constant 0 : index
    %c0_233 = arith.constant 0 : index
    %361 = vector.load %arg17[%360, %c0_232, %c0_233] : memref<8x8x16xf32, #tpu.memory_space<vmem>>, vector<1x8x16xf32>
    %362 = vector.shape_cast %361 : vector<1x8x16xf32> to vector<8x16xf32>
    %363 = vector.shape_cast %359 : vector<8x16xf32> to vector<1x8x16xf32>
    tpu.vector_store %arg17[%360, %c0_232, %c0_233], %363 {strides = array<i32>} : memref<8x8x16xf32, #tpu.memory_space<vmem>>, vector<1x8x16xf32>,
    %cst_234 = arith.constant dense<0xFF800000> : vector<8xf32>
    %364 = vector.multi_reduction <maximumf>, %359, %cst_234 [1] : vector<8x16xf32> to vector<8xf32>
    %365 = vector.shape_cast %364 : vector<8xf32> to vector<8x1xf32>
    %366 = vector.broadcast %365 : vector<8x1xf32> to vector<8x16xf32>
    %367 = arith.cmpf oeq, %359, %366 : vector<8x16xf32>
    %cst_235 = arith.constant 1.600000e+01 : f32
    %368 = vector.broadcast %cst_235 : f32 to vector<8x16xf32>
    %369 = arith.select %367, %85, %368 : vector<8x16xi1>, vector<8x16xf32>
    %cst_236 = arith.constant dense<0x7F800000> : vector<8xf32>
    %370 = vector.multi_reduction <minimumf>, %369, %cst_236 [1] : vector<8x16xf32> to vector<8xf32>
    %371 = vector.shape_cast %370 : vector<8xf32> to vector<8x1xf32>
    %372 = arith.fptosi %371 : vector<8x1xf32> to vector<8x1xi32>
    %c4_i32 = arith.constant 4 : i32
    %373 = vector.broadcast %372 : vector<8x1xi32> to vector<8x16xi32>
    %374 = arith.cmpi eq, %84, %373 : vector<8x16xi32>
    %375 = arith.extui %374 : vector<8x16xi1> to vector<8x16xi32>
    %376 = arith.sitofp %375 : vector<8x16xi32> to vector<8x16xf32>
    %c0_237 = arith.constant 0 : index
    %c0_238 = arith.constant 0 : index
    %377 = vector.load %arg3[%c0_237, %c0_238] : memref<16x32xf32, #tpu.memory_space<vmem>>, vector<16x32xf32>
    %cst_239 = arith.constant dense<0.000000e+00> : vector<8x32xf32>
    %378 = tpu.matmul %376, %377, %cst_239 {dimension_numbers = #tpu.dot_dimension_numbers<[1], [0], [0], [1], [0, 0, 1, 1], [], []>} : vector<8x16xf32>, vector<16x32xf32>, vector<8x32xf32> -> vector<8x32xf32>
    %c0_240 = arith.constant 0 : index
    %c0_241 = arith.constant 0 : index
    %379 = vector.load %arg4[%c0_240, %c0_241] : memref<32x32xf32, #tpu.memory_space<vmem>>, vector<32x32xf32>
    %cst_242 = arith.constant dense<0.000000e+00> : vector<8x32xf32>
    %380 = tpu.matmul %348, %379, %cst_242 {dimension_numbers = #tpu.dot_dimension_numbers<[1], [0], [0], [1], [0, 0, 1, 1], [], []>} : vector<8x32xf32>, vector<32x32xf32>, vector<8x32xf32> -> vector<8x32xf32>
    %c0_243 = arith.constant 0 : index
    %c0_244 = arith.constant 0 : index
    %c0_245 = arith.constant 0 : index
    %381 = vector.load %arg18[%c0_243, %c0_244, %c0_245] : memref<8x8x32xf32, #tpu.memory_space<vmem>>, vector<8x8x32xf32>
    %382 = vector.shape_cast %380 : vector<8x32xf32> to vector<1x8x32xf32>
    %383 = vector.broadcast %382 : vector<1x8x32xf32> to vector<8x8x32xf32>
    %384 = arith.addf %381, %383 : vector<8x8x32xf32>
    %385 = math.tanh %384 : vector<8x8x32xf32>
    %c0_246 = arith.constant 0 : index
    %c0_247 = arith.constant 0 : index
    %386 = vector.load %arg7[%c0_246, %c0_247] : memref<1x32xf32, #tpu.memory_space<vmem>>, vector<1x32xf32>
    %387 = vector.shape_cast %386 : vector<1x32xf32> to vector<1x1x32xf32>
    %388 = vector.broadcast %387 : vector<1x1x32xf32> to vector<8x8x32xf32>
    %389 = arith.mulf %385, %388 : vector<8x8x32xf32>
    %cst_248 = arith.constant dense<0.000000e+00> : vector<8x8xf32>
    %390 = vector.multi_reduction <add>, %389, %cst_248 [2] : vector<8x8x32xf32> to vector<8x8xf32>
    %391 = vector.shape_cast %390 : vector<8x8xf32> to vector<8x8x1xf32>
    %cst_249 = arith.constant dense<0xFF800000> : vector<8x1xf32>
    %392 = vector.multi_reduction <maximumf>, %391, %cst_249 [0] : vector<8x8x1xf32> to vector<8x1xf32>
    %393 = vector.shape_cast %392 : vector<8x1xf32> to vector<1x8x1xf32>
    %394 = vector.broadcast %393 : vector<1x8x1xf32> to vector<8x8x1xf32>
    %395 = arith.subf %391, %394 : vector<8x8x1xf32>
    %396 = math.exp %395 : vector<8x8x1xf32>
    %cst_250 = arith.constant dense<0.000000e+00> : vector<8x1xf32>
    %397 = vector.multi_reduction <add>, %396, %cst_250 [0] : vector<8x8x1xf32> to vector<8x1xf32>
    %398 = vector.shape_cast %397 : vector<8x1xf32> to vector<1x8x1xf32>
    %399 = vector.broadcast %398 : vector<1x8x1xf32> to vector<8x8x1xf32>
    %400 = arith.divf %396, %399 : vector<8x8x1xf32>
    %c0_251 = arith.constant 0 : index
    %c0_252 = arith.constant 0 : index
    %c0_253 = arith.constant 0 : index
    %401 = vector.load %arg2[%c0_251, %c0_252, %c0_253] : memref<8x8x64xf32, #tpu.memory_space<vmem>>, vector<8x8x64xf32>
    %402 = vector.broadcast %400 : vector<8x8x1xf32> to vector<8x8x64xf32>
    %403 = arith.mulf %402, %401 : vector<8x8x64xf32>
    %cst_254 = arith.constant dense<0.000000e+00> : vector<8x64xf32>
    %404 = vector.multi_reduction <add>, %403, %cst_254 [0] : vector<8x8x64xf32> to vector<8x64xf32>
    %c0_255 = arith.constant 0 : index
    %c0_256 = arith.constant 0 : index
    %405 = vector.load %arg8[%c0_255, %c0_256] : memref<32x96xf32, #tpu.memory_space<vmem>>, vector<32x96xf32>
    %cst_257 = arith.constant dense<0.000000e+00> : vector<8x96xf32>
    %406 = tpu.matmul %378, %405, %cst_257 {dimension_numbers = #tpu.dot_dimension_numbers<[1], [0], [0], [1], [0, 0, 1, 1], [], []>} : vector<8x32xf32>, vector<32x96xf32>, vector<8x96xf32> -> vector<8x96xf32>
    %c0_258 = arith.constant 0 : index
    %c0_259 = arith.constant 0 : index
    %407 = vector.load %arg9[%c0_258, %c0_259] : memref<64x96xf32, #tpu.memory_space<vmem>>, vector<64x96xf32>
    %cst_260 = arith.constant dense<0.000000e+00> : vector<8x96xf32>
    %408 = tpu.matmul %404, %407, %cst_260 {dimension_numbers = #tpu.dot_dimension_numbers<[1], [0], [0], [1], [0, 0, 1, 1], [], []>} : vector<8x64xf32>, vector<64x96xf32>, vector<8x96xf32> -> vector<8x96xf32>
    %409 = arith.addf %406, %408 : vector<8x96xf32>
    %c0_261 = arith.constant 0 : index
    %c0_262 = arith.constant 0 : index
    %410 = vector.load %arg11[%c0_261, %c0_262] : memref<1x96xf32, #tpu.memory_space<vmem>>, vector<1x96xf32>
    %411 = vector.broadcast %410 : vector<1x96xf32> to vector<8x96xf32>
    %412 = arith.addf %409, %411 : vector<8x96xf32>
    %c0_263 = arith.constant 0 : index
    %c0_264 = arith.constant 0 : index
    %413 = vector.load %arg10[%c0_263, %c0_264] : memref<32x96xf32, #tpu.memory_space<vmem>>, vector<32x96xf32>
    %cst_265 = arith.constant dense<0.000000e+00> : vector<8x96xf32>
    %414 = tpu.matmul %348, %413, %cst_265 {dimension_numbers = #tpu.dot_dimension_numbers<[1], [0], [0], [1], [0, 0, 1, 1], [], []>} : vector<8x32xf32>, vector<32x96xf32>, vector<8x96xf32> -> vector<8x96xf32>
    %c0_266 = arith.constant 0 : index
    %c0_267 = arith.constant 0 : index
    %415 = vector.load %arg12[%c0_266, %c0_267] : memref<1x96xf32, #tpu.memory_space<vmem>>, vector<1x96xf32>
    %416 = vector.broadcast %415 : vector<1x96xf32> to vector<8x96xf32>
    %417 = arith.addf %414, %416 : vector<8x96xf32>
    %418 = vector.extract_strided_slice %412 {offsets = [0, 0], sizes = [8, 32], strides = [1, 1]} : vector<8x96xf32> to vector<8x32xf32>
    %419 = vector.extract_strided_slice %417 {offsets = [0, 0], sizes = [8, 32], strides = [1, 1]} : vector<8x96xf32> to vector<8x32xf32>
    %420 = arith.addf %418, %419 : vector<8x32xf32>
    %421 = arith.negf %420 : vector<8x32xf32>
    %422 = math.exp %421 : vector<8x32xf32>
    %cst_268 = arith.constant 1.000000e+00 : f32
    %423 = vector.broadcast %cst_268 : f32 to vector<8x32xf32>
    %424 = arith.addf %423, %422 : vector<8x32xf32>
    %425 = arith.divf %423, %424 : vector<8x32xf32>
    %426 = vector.extract_strided_slice %412 {offsets = [0, 32], sizes = [8, 32], strides = [1, 1]} : vector<8x96xf32> to vector<8x32xf32>
    %427 = vector.extract_strided_slice %417 {offsets = [0, 32], sizes = [8, 32], strides = [1, 1]} : vector<8x96xf32> to vector<8x32xf32>
    %428 = arith.addf %426, %427 : vector<8x32xf32>
    %429 = arith.negf %428 : vector<8x32xf32>
    %430 = math.exp %429 : vector<8x32xf32>
    %cst_269 = arith.constant 1.000000e+00 : f32
    %431 = vector.broadcast %cst_269 : f32 to vector<8x32xf32>
    %432 = arith.addf %431, %430 : vector<8x32xf32>
    %433 = arith.divf %431, %432 : vector<8x32xf32>
    %434 = vector.extract_strided_slice %412 {offsets = [0, 64], sizes = [8, 32], strides = [1, 1]} : vector<8x96xf32> to vector<8x32xf32>
    %435 = vector.extract_strided_slice %417 {offsets = [0, 64], sizes = [8, 32], strides = [1, 1]} : vector<8x96xf32> to vector<8x32xf32>
    %436 = arith.mulf %425, %435 : vector<8x32xf32>
    %437 = arith.addf %434, %436 : vector<8x32xf32>
    %438 = math.tanh %437 : vector<8x32xf32>
    %cst_270 = arith.constant 1.000000e+00 : f32
    %439 = vector.broadcast %cst_270 : f32 to vector<8x32xf32>
    %440 = arith.subf %439, %433 : vector<8x32xf32>
    %441 = arith.mulf %440, %438 : vector<8x32xf32>
    %442 = arith.mulf %433, %348 : vector<8x32xf32>
    %443 = arith.addf %441, %442 : vector<8x32xf32>
    %c0_271 = arith.constant 0 : index
    %c0_272 = arith.constant 0 : index
    %444 = vector.load %arg13[%c0_271, %c0_272] : memref<32x16xf32, #tpu.memory_space<vmem>>, vector<32x16xf32>
    %cst_273 = arith.constant dense<0.000000e+00> : vector<8x16xf32>
    %445 = tpu.matmul %443, %444, %cst_273 {dimension_numbers = #tpu.dot_dimension_numbers<[1], [0], [0], [1], [0, 0, 1, 1], [], []>} : vector<8x32xf32>, vector<32x16xf32>, vector<8x16xf32> -> vector<8x16xf32>
    %c0_274 = arith.constant 0 : index
    %c0_275 = arith.constant 0 : index
    %446 = vector.load %arg14[%c0_274, %c0_275] : memref<64x16xf32, #tpu.memory_space<vmem>>, vector<64x16xf32>
    %cst_276 = arith.constant dense<0.000000e+00> : vector<8x16xf32>
    %447 = tpu.matmul %404, %446, %cst_276 {dimension_numbers = #tpu.dot_dimension_numbers<[1], [0], [0], [1], [0, 0, 1, 1], [], []>} : vector<8x64xf32>, vector<64x16xf32>, vector<8x16xf32> -> vector<8x16xf32>
    %448 = arith.addf %445, %447 : vector<8x16xf32>
    %c0_277 = arith.constant 0 : index
    %c0_278 = arith.constant 0 : index
    %449 = vector.load %arg15[%c0_277, %c0_278] : memref<32x16xf32, #tpu.memory_space<vmem>>, vector<32x16xf32>
    %cst_279 = arith.constant dense<0.000000e+00> : vector<8x16xf32>
    %450 = tpu.matmul %378, %449, %cst_279 {dimension_numbers = #tpu.dot_dimension_numbers<[1], [0], [0], [1], [0, 0, 1, 1], [], []>} : vector<8x32xf32>, vector<32x16xf32>, vector<8x16xf32> -> vector<8x16xf32>
    %451 = arith.addf %448, %450 : vector<8x16xf32>
    %c0_280 = arith.constant 0 : index
    %c0_281 = arith.constant 0 : index
    %452 = vector.load %arg16[%c0_280, %c0_281] : memref<1x16xf32, #tpu.memory_space<vmem>>, vector<1x16xf32>
    %453 = vector.broadcast %452 : vector<1x16xf32> to vector<8x16xf32>
    %454 = arith.addf %451, %453 : vector<8x16xf32>
    %455 = arith.index_cast %c4_i32 : i32 to index
    %c0_282 = arith.constant 0 : index
    %c0_283 = arith.constant 0 : index
    %456 = vector.load %arg17[%455, %c0_282, %c0_283] : memref<8x8x16xf32, #tpu.memory_space<vmem>>, vector<1x8x16xf32>
    %457 = vector.shape_cast %456 : vector<1x8x16xf32> to vector<8x16xf32>
    %458 = vector.shape_cast %454 : vector<8x16xf32> to vector<1x8x16xf32>
    tpu.vector_store %arg17[%455, %c0_282, %c0_283], %458 {strides = array<i32>} : memref<8x8x16xf32, #tpu.memory_space<vmem>>, vector<1x8x16xf32>,
    %cst_284 = arith.constant dense<0xFF800000> : vector<8xf32>
    %459 = vector.multi_reduction <maximumf>, %454, %cst_284 [1] : vector<8x16xf32> to vector<8xf32>
    %460 = vector.shape_cast %459 : vector<8xf32> to vector<8x1xf32>
    %461 = vector.broadcast %460 : vector<8x1xf32> to vector<8x16xf32>
    %462 = arith.cmpf oeq, %454, %461 : vector<8x16xf32>
    %cst_285 = arith.constant 1.600000e+01 : f32
    %463 = vector.broadcast %cst_285 : f32 to vector<8x16xf32>
    %464 = arith.select %462, %85, %463 : vector<8x16xi1>, vector<8x16xf32>
    %cst_286 = arith.constant dense<0x7F800000> : vector<8xf32>
    %465 = vector.multi_reduction <minimumf>, %464, %cst_286 [1] : vector<8x16xf32> to vector<8xf32>
    %466 = vector.shape_cast %465 : vector<8xf32> to vector<8x1xf32>
    %467 = arith.fptosi %466 : vector<8x1xf32> to vector<8x1xi32>
    %c5_i32 = arith.constant 5 : i32
    %468 = vector.broadcast %467 : vector<8x1xi32> to vector<8x16xi32>
    %469 = arith.cmpi eq, %84, %468 : vector<8x16xi32>
    %470 = arith.extui %469 : vector<8x16xi1> to vector<8x16xi32>
    %471 = arith.sitofp %470 : vector<8x16xi32> to vector<8x16xf32>
    %c0_287 = arith.constant 0 : index
    %c0_288 = arith.constant 0 : index
    %472 = vector.load %arg3[%c0_287, %c0_288] : memref<16x32xf32, #tpu.memory_space<vmem>>, vector<16x32xf32>
    %cst_289 = arith.constant dense<0.000000e+00> : vector<8x32xf32>
    %473 = tpu.matmul %471, %472, %cst_289 {dimension_numbers = #tpu.dot_dimension_numbers<[1], [0], [0], [1], [0, 0, 1, 1], [], []>} : vector<8x16xf32>, vector<16x32xf32>, vector<8x32xf32> -> vector<8x32xf32>
    %c0_290 = arith.constant 0 : index
    %c0_291 = arith.constant 0 : index
    %474 = vector.load %arg4[%c0_290, %c0_291] : memref<32x32xf32, #tpu.memory_space<vmem>>, vector<32x32xf32>
    %cst_292 = arith.constant dense<0.000000e+00> : vector<8x32xf32>
    %475 = tpu.matmul %443, %474, %cst_292 {dimension_numbers = #tpu.dot_dimension_numbers<[1], [0], [0], [1], [0, 0, 1, 1], [], []>} : vector<8x32xf32>, vector<32x32xf32>, vector<8x32xf32> -> vector<8x32xf32>
    %c0_293 = arith.constant 0 : index
    %c0_294 = arith.constant 0 : index
    %c0_295 = arith.constant 0 : index
    %476 = vector.load %arg18[%c0_293, %c0_294, %c0_295] : memref<8x8x32xf32, #tpu.memory_space<vmem>>, vector<8x8x32xf32>
    %477 = vector.shape_cast %475 : vector<8x32xf32> to vector<1x8x32xf32>
    %478 = vector.broadcast %477 : vector<1x8x32xf32> to vector<8x8x32xf32>
    %479 = arith.addf %476, %478 : vector<8x8x32xf32>
    %480 = math.tanh %479 : vector<8x8x32xf32>
    %c0_296 = arith.constant 0 : index
    %c0_297 = arith.constant 0 : index
    %481 = vector.load %arg7[%c0_296, %c0_297] : memref<1x32xf32, #tpu.memory_space<vmem>>, vector<1x32xf32>
    %482 = vector.shape_cast %481 : vector<1x32xf32> to vector<1x1x32xf32>
    %483 = vector.broadcast %482 : vector<1x1x32xf32> to vector<8x8x32xf32>
    %484 = arith.mulf %480, %483 : vector<8x8x32xf32>
    %cst_298 = arith.constant dense<0.000000e+00> : vector<8x8xf32>
    %485 = vector.multi_reduction <add>, %484, %cst_298 [2] : vector<8x8x32xf32> to vector<8x8xf32>
    %486 = vector.shape_cast %485 : vector<8x8xf32> to vector<8x8x1xf32>
    %cst_299 = arith.constant dense<0xFF800000> : vector<8x1xf32>
    %487 = vector.multi_reduction <maximumf>, %486, %cst_299 [0] : vector<8x8x1xf32> to vector<8x1xf32>
    %488 = vector.shape_cast %487 : vector<8x1xf32> to vector<1x8x1xf32>
    %489 = vector.broadcast %488 : vector<1x8x1xf32> to vector<8x8x1xf32>
    %490 = arith.subf %486, %489 : vector<8x8x1xf32>
    %491 = math.exp %490 : vector<8x8x1xf32>
    %cst_300 = arith.constant dense<0.000000e+00> : vector<8x1xf32>
    %492 = vector.multi_reduction <add>, %491, %cst_300 [0] : vector<8x8x1xf32> to vector<8x1xf32>
    %493 = vector.shape_cast %492 : vector<8x1xf32> to vector<1x8x1xf32>
    %494 = vector.broadcast %493 : vector<1x8x1xf32> to vector<8x8x1xf32>
    %495 = arith.divf %491, %494 : vector<8x8x1xf32>
    %c0_301 = arith.constant 0 : index
    %c0_302 = arith.constant 0 : index
    %c0_303 = arith.constant 0 : index
    %496 = vector.load %arg2[%c0_301, %c0_302, %c0_303] : memref<8x8x64xf32, #tpu.memory_space<vmem>>, vector<8x8x64xf32>
    %497 = vector.broadcast %495 : vector<8x8x1xf32> to vector<8x8x64xf32>
    %498 = arith.mulf %497, %496 : vector<8x8x64xf32>
    %cst_304 = arith.constant dense<0.000000e+00> : vector<8x64xf32>
    %499 = vector.multi_reduction <add>, %498, %cst_304 [0] : vector<8x8x64xf32> to vector<8x64xf32>
    %c0_305 = arith.constant 0 : index
    %c0_306 = arith.constant 0 : index
    %500 = vector.load %arg8[%c0_305, %c0_306] : memref<32x96xf32, #tpu.memory_space<vmem>>, vector<32x96xf32>
    %cst_307 = arith.constant dense<0.000000e+00> : vector<8x96xf32>
    %501 = tpu.matmul %473, %500, %cst_307 {dimension_numbers = #tpu.dot_dimension_numbers<[1], [0], [0], [1], [0, 0, 1, 1], [], []>} : vector<8x32xf32>, vector<32x96xf32>, vector<8x96xf32> -> vector<8x96xf32>
    %c0_308 = arith.constant 0 : index
    %c0_309 = arith.constant 0 : index
    %502 = vector.load %arg9[%c0_308, %c0_309] : memref<64x96xf32, #tpu.memory_space<vmem>>, vector<64x96xf32>
    %cst_310 = arith.constant dense<0.000000e+00> : vector<8x96xf32>
    %503 = tpu.matmul %499, %502, %cst_310 {dimension_numbers = #tpu.dot_dimension_numbers<[1], [0], [0], [1], [0, 0, 1, 1], [], []>} : vector<8x64xf32>, vector<64x96xf32>, vector<8x96xf32> -> vector<8x96xf32>
    %504 = arith.addf %501, %503 : vector<8x96xf32>
    %c0_311 = arith.constant 0 : index
    %c0_312 = arith.constant 0 : index
    %505 = vector.load %arg11[%c0_311, %c0_312] : memref<1x96xf32, #tpu.memory_space<vmem>>, vector<1x96xf32>
    %506 = vector.broadcast %505 : vector<1x96xf32> to vector<8x96xf32>
    %507 = arith.addf %504, %506 : vector<8x96xf32>
    %c0_313 = arith.constant 0 : index
    %c0_314 = arith.constant 0 : index
    %508 = vector.load %arg10[%c0_313, %c0_314] : memref<32x96xf32, #tpu.memory_space<vmem>>, vector<32x96xf32>
    %cst_315 = arith.constant dense<0.000000e+00> : vector<8x96xf32>
    %509 = tpu.matmul %443, %508, %cst_315 {dimension_numbers = #tpu.dot_dimension_numbers<[1], [0], [0], [1], [0, 0, 1, 1], [], []>} : vector<8x32xf32>, vector<32x96xf32>, vector<8x96xf32> -> vector<8x96xf32>
    %c0_316 = arith.constant 0 : index
    %c0_317 = arith.constant 0 : index
    %510 = vector.load %arg12[%c0_316, %c0_317] : memref<1x96xf32, #tpu.memory_space<vmem>>, vector<1x96xf32>
    %511 = vector.broadcast %510 : vector<1x96xf32> to vector<8x96xf32>
    %512 = arith.addf %509, %511 : vector<8x96xf32>
    %513 = vector.extract_strided_slice %507 {offsets = [0, 0], sizes = [8, 32], strides = [1, 1]} : vector<8x96xf32> to vector<8x32xf32>
    %514 = vector.extract_strided_slice %512 {offsets = [0, 0], sizes = [8, 32], strides = [1, 1]} : vector<8x96xf32> to vector<8x32xf32>
    %515 = arith.addf %513, %514 : vector<8x32xf32>
    %516 = arith.negf %515 : vector<8x32xf32>
    %517 = math.exp %516 : vector<8x32xf32>
    %cst_318 = arith.constant 1.000000e+00 : f32
    %518 = vector.broadcast %cst_318 : f32 to vector<8x32xf32>
    %519 = arith.addf %518, %517 : vector<8x32xf32>
    %520 = arith.divf %518, %519 : vector<8x32xf32>
    %521 = vector.extract_strided_slice %507 {offsets = [0, 32], sizes = [8, 32], strides = [1, 1]} : vector<8x96xf32> to vector<8x32xf32>
    %522 = vector.extract_strided_slice %512 {offsets = [0, 32], sizes = [8, 32], strides = [1, 1]} : vector<8x96xf32> to vector<8x32xf32>
    %523 = arith.addf %521, %522 : vector<8x32xf32>
    %524 = arith.negf %523 : vector<8x32xf32>
    %525 = math.exp %524 : vector<8x32xf32>
    %cst_319 = arith.constant 1.000000e+00 : f32
    %526 = vector.broadcast %cst_319 : f32 to vector<8x32xf32>
    %527 = arith.addf %526, %525 : vector<8x32xf32>
    %528 = arith.divf %526, %527 : vector<8x32xf32>
    %529 = vector.extract_strided_slice %507 {offsets = [0, 64], sizes = [8, 32], strides = [1, 1]} : vector<8x96xf32> to vector<8x32xf32>
    %530 = vector.extract_strided_slice %512 {offsets = [0, 64], sizes = [8, 32], strides = [1, 1]} : vector<8x96xf32> to vector<8x32xf32>
    %531 = arith.mulf %520, %530 : vector<8x32xf32>
    %532 = arith.addf %529, %531 : vector<8x32xf32>
    %533 = math.tanh %532 : vector<8x32xf32>
    %cst_320 = arith.constant 1.000000e+00 : f32
    %534 = vector.broadcast %cst_320 : f32 to vector<8x32xf32>
    %535 = arith.subf %534, %528 : vector<8x32xf32>
    %536 = arith.mulf %535, %533 : vector<8x32xf32>
    %537 = arith.mulf %528, %443 : vector<8x32xf32>
    %538 = arith.addf %536, %537 : vector<8x32xf32>
    %c0_321 = arith.constant 0 : index
    %c0_322 = arith.constant 0 : index
    %539 = vector.load %arg13[%c0_321, %c0_322] : memref<32x16xf32, #tpu.memory_space<vmem>>, vector<32x16xf32>
    %cst_323 = arith.constant dense<0.000000e+00> : vector<8x16xf32>
    %540 = tpu.matmul %538, %539, %cst_323 {dimension_numbers = #tpu.dot_dimension_numbers<[1], [0], [0], [1], [0, 0, 1, 1], [], []>} : vector<8x32xf32>, vector<32x16xf32>, vector<8x16xf32> -> vector<8x16xf32>
    %c0_324 = arith.constant 0 : index
    %c0_325 = arith.constant 0 : index
    %541 = vector.load %arg14[%c0_324, %c0_325] : memref<64x16xf32, #tpu.memory_space<vmem>>, vector<64x16xf32>
    %cst_326 = arith.constant dense<0.000000e+00> : vector<8x16xf32>
    %542 = tpu.matmul %499, %541, %cst_326 {dimension_numbers = #tpu.dot_dimension_numbers<[1], [0], [0], [1], [0, 0, 1, 1], [], []>} : vector<8x64xf32>, vector<64x16xf32>, vector<8x16xf32> -> vector<8x16xf32>
    %543 = arith.addf %540, %542 : vector<8x16xf32>
    %c0_327 = arith.constant 0 : index
    %c0_328 = arith.constant 0 : index
    %544 = vector.load %arg15[%c0_327, %c0_328] : memref<32x16xf32, #tpu.memory_space<vmem>>, vector<32x16xf32>
    %cst_329 = arith.constant dense<0.000000e+00> : vector<8x16xf32>
    %545 = tpu.matmul %473, %544, %cst_329 {dimension_numbers = #tpu.dot_dimension_numbers<[1], [0], [0], [1], [0, 0, 1, 1], [], []>} : vector<8x32xf32>, vector<32x16xf32>, vector<8x16xf32> -> vector<8x16xf32>
    %546 = arith.addf %543, %545 : vector<8x16xf32>
    %c0_330 = arith.constant 0 : index
    %c0_331 = arith.constant 0 : index
    %547 = vector.load %arg16[%c0_330, %c0_331] : memref<1x16xf32, #tpu.memory_space<vmem>>, vector<1x16xf32>
    %548 = vector.broadcast %547 : vector<1x16xf32> to vector<8x16xf32>
    %549 = arith.addf %546, %548 : vector<8x16xf32>
    %550 = arith.index_cast %c5_i32 : i32 to index
    %c0_332 = arith.constant 0 : index
    %c0_333 = arith.constant 0 : index
    %551 = vector.load %arg17[%550, %c0_332, %c0_333] : memref<8x8x16xf32, #tpu.memory_space<vmem>>, vector<1x8x16xf32>
    %552 = vector.shape_cast %551 : vector<1x8x16xf32> to vector<8x16xf32>
    %553 = vector.shape_cast %549 : vector<8x16xf32> to vector<1x8x16xf32>
    tpu.vector_store %arg17[%550, %c0_332, %c0_333], %553 {strides = array<i32>} : memref<8x8x16xf32, #tpu.memory_space<vmem>>, vector<1x8x16xf32>,
    %cst_334 = arith.constant dense<0xFF800000> : vector<8xf32>
    %554 = vector.multi_reduction <maximumf>, %549, %cst_334 [1] : vector<8x16xf32> to vector<8xf32>
    %555 = vector.shape_cast %554 : vector<8xf32> to vector<8x1xf32>
    %556 = vector.broadcast %555 : vector<8x1xf32> to vector<8x16xf32>
    %557 = arith.cmpf oeq, %549, %556 : vector<8x16xf32>
    %cst_335 = arith.constant 1.600000e+01 : f32
    %558 = vector.broadcast %cst_335 : f32 to vector<8x16xf32>
    %559 = arith.select %557, %85, %558 : vector<8x16xi1>, vector<8x16xf32>
    %cst_336 = arith.constant dense<0x7F800000> : vector<8xf32>
    %560 = vector.multi_reduction <minimumf>, %559, %cst_336 [1] : vector<8x16xf32> to vector<8xf32>
    %561 = vector.shape_cast %560 : vector<8xf32> to vector<8x1xf32>
    %562 = arith.fptosi %561 : vector<8x1xf32> to vector<8x1xi32>
    %c6_i32 = arith.constant 6 : i32
    %563 = vector.broadcast %562 : vector<8x1xi32> to vector<8x16xi32>
    %564 = arith.cmpi eq, %84, %563 : vector<8x16xi32>
    %565 = arith.extui %564 : vector<8x16xi1> to vector<8x16xi32>
    %566 = arith.sitofp %565 : vector<8x16xi32> to vector<8x16xf32>
    %c0_337 = arith.constant 0 : index
    %c0_338 = arith.constant 0 : index
    %567 = vector.load %arg3[%c0_337, %c0_338] : memref<16x32xf32, #tpu.memory_space<vmem>>, vector<16x32xf32>
    %cst_339 = arith.constant dense<0.000000e+00> : vector<8x32xf32>
    %568 = tpu.matmul %566, %567, %cst_339 {dimension_numbers = #tpu.dot_dimension_numbers<[1], [0], [0], [1], [0, 0, 1, 1], [], []>} : vector<8x16xf32>, vector<16x32xf32>, vector<8x32xf32> -> vector<8x32xf32>
    %c0_340 = arith.constant 0 : index
    %c0_341 = arith.constant 0 : index
    %569 = vector.load %arg4[%c0_340, %c0_341] : memref<32x32xf32, #tpu.memory_space<vmem>>, vector<32x32xf32>
    %cst_342 = arith.constant dense<0.000000e+00> : vector<8x32xf32>
    %570 = tpu.matmul %538, %569, %cst_342 {dimension_numbers = #tpu.dot_dimension_numbers<[1], [0], [0], [1], [0, 0, 1, 1], [], []>} : vector<8x32xf32>, vector<32x32xf32>, vector<8x32xf32> -> vector<8x32xf32>
    %c0_343 = arith.constant 0 : index
    %c0_344 = arith.constant 0 : index
    %c0_345 = arith.constant 0 : index
    %571 = vector.load %arg18[%c0_343, %c0_344, %c0_345] : memref<8x8x32xf32, #tpu.memory_space<vmem>>, vector<8x8x32xf32>
    %572 = vector.shape_cast %570 : vector<8x32xf32> to vector<1x8x32xf32>
    %573 = vector.broadcast %572 : vector<1x8x32xf32> to vector<8x8x32xf32>
    %574 = arith.addf %571, %573 : vector<8x8x32xf32>
    %575 = math.tanh %574 : vector<8x8x32xf32>
    %c0_346 = arith.constant 0 : index
    %c0_347 = arith.constant 0 : index
    %576 = vector.load %arg7[%c0_346, %c0_347] : memref<1x32xf32, #tpu.memory_space<vmem>>, vector<1x32xf32>
    %577 = vector.shape_cast %576 : vector<1x32xf32> to vector<1x1x32xf32>
    %578 = vector.broadcast %577 : vector<1x1x32xf32> to vector<8x8x32xf32>
    %579 = arith.mulf %575, %578 : vector<8x8x32xf32>
    %cst_348 = arith.constant dense<0.000000e+00> : vector<8x8xf32>
    %580 = vector.multi_reduction <add>, %579, %cst_348 [2] : vector<8x8x32xf32> to vector<8x8xf32>
    %581 = vector.shape_cast %580 : vector<8x8xf32> to vector<8x8x1xf32>
    %cst_349 = arith.constant dense<0xFF800000> : vector<8x1xf32>
    %582 = vector.multi_reduction <maximumf>, %581, %cst_349 [0] : vector<8x8x1xf32> to vector<8x1xf32>
    %583 = vector.shape_cast %582 : vector<8x1xf32> to vector<1x8x1xf32>
    %584 = vector.broadcast %583 : vector<1x8x1xf32> to vector<8x8x1xf32>
    %585 = arith.subf %581, %584 : vector<8x8x1xf32>
    %586 = math.exp %585 : vector<8x8x1xf32>
    %cst_350 = arith.constant dense<0.000000e+00> : vector<8x1xf32>
    %587 = vector.multi_reduction <add>, %586, %cst_350 [0] : vector<8x8x1xf32> to vector<8x1xf32>
    %588 = vector.shape_cast %587 : vector<8x1xf32> to vector<1x8x1xf32>
    %589 = vector.broadcast %588 : vector<1x8x1xf32> to vector<8x8x1xf32>
    %590 = arith.divf %586, %589 : vector<8x8x1xf32>
    %c0_351 = arith.constant 0 : index
    %c0_352 = arith.constant 0 : index
    %c0_353 = arith.constant 0 : index
    %591 = vector.load %arg2[%c0_351, %c0_352, %c0_353] : memref<8x8x64xf32, #tpu.memory_space<vmem>>, vector<8x8x64xf32>
    %592 = vector.broadcast %590 : vector<8x8x1xf32> to vector<8x8x64xf32>
    %593 = arith.mulf %592, %591 : vector<8x8x64xf32>
    %cst_354 = arith.constant dense<0.000000e+00> : vector<8x64xf32>
    %594 = vector.multi_reduction <add>, %593, %cst_354 [0] : vector<8x8x64xf32> to vector<8x64xf32>
    %c0_355 = arith.constant 0 : index
    %c0_356 = arith.constant 0 : index
    %595 = vector.load %arg8[%c0_355, %c0_356] : memref<32x96xf32, #tpu.memory_space<vmem>>, vector<32x96xf32>
    %cst_357 = arith.constant dense<0.000000e+00> : vector<8x96xf32>
    %596 = tpu.matmul %568, %595, %cst_357 {dimension_numbers = #tpu.dot_dimension_numbers<[1], [0], [0], [1], [0, 0, 1, 1], [], []>} : vector<8x32xf32>, vector<32x96xf32>, vector<8x96xf32> -> vector<8x96xf32>
    %c0_358 = arith.constant 0 : index
    %c0_359 = arith.constant 0 : index
    %597 = vector.load %arg9[%c0_358, %c0_359] : memref<64x96xf32, #tpu.memory_space<vmem>>, vector<64x96xf32>
    %cst_360 = arith.constant dense<0.000000e+00> : vector<8x96xf32>
    %598 = tpu.matmul %594, %597, %cst_360 {dimension_numbers = #tpu.dot_dimension_numbers<[1], [0], [0], [1], [0, 0, 1, 1], [], []>} : vector<8x64xf32>, vector<64x96xf32>, vector<8x96xf32> -> vector<8x96xf32>
    %599 = arith.addf %596, %598 : vector<8x96xf32>
    %c0_361 = arith.constant 0 : index
    %c0_362 = arith.constant 0 : index
    %600 = vector.load %arg11[%c0_361, %c0_362] : memref<1x96xf32, #tpu.memory_space<vmem>>, vector<1x96xf32>
    %601 = vector.broadcast %600 : vector<1x96xf32> to vector<8x96xf32>
    %602 = arith.addf %599, %601 : vector<8x96xf32>
    %c0_363 = arith.constant 0 : index
    %c0_364 = arith.constant 0 : index
    %603 = vector.load %arg10[%c0_363, %c0_364] : memref<32x96xf32, #tpu.memory_space<vmem>>, vector<32x96xf32>
    %cst_365 = arith.constant dense<0.000000e+00> : vector<8x96xf32>
    %604 = tpu.matmul %538, %603, %cst_365 {dimension_numbers = #tpu.dot_dimension_numbers<[1], [0], [0], [1], [0, 0, 1, 1], [], []>} : vector<8x32xf32>, vector<32x96xf32>, vector<8x96xf32> -> vector<8x96xf32>
    %c0_366 = arith.constant 0 : index
    %c0_367 = arith.constant 0 : index
    %605 = vector.load %arg12[%c0_366, %c0_367] : memref<1x96xf32, #tpu.memory_space<vmem>>, vector<1x96xf32>
    %606 = vector.broadcast %605 : vector<1x96xf32> to vector<8x96xf32>
    %607 = arith.addf %604, %606 : vector<8x96xf32>
    %608 = vector.extract_strided_slice %602 {offsets = [0, 0], sizes = [8, 32], strides = [1, 1]} : vector<8x96xf32> to vector<8x32xf32>
    %609 = vector.extract_strided_slice %607 {offsets = [0, 0], sizes = [8, 32], strides = [1, 1]} : vector<8x96xf32> to vector<8x32xf32>
    %610 = arith.addf %608, %609 : vector<8x32xf32>
    %611 = arith.negf %610 : vector<8x32xf32>
    %612 = math.exp %611 : vector<8x32xf32>
    %cst_368 = arith.constant 1.000000e+00 : f32
    %613 = vector.broadcast %cst_368 : f32 to vector<8x32xf32>
    %614 = arith.addf %613, %612 : vector<8x32xf32>
    %615 = arith.divf %613, %614 : vector<8x32xf32>
    %616 = vector.extract_strided_slice %602 {offsets = [0, 32], sizes = [8, 32], strides = [1, 1]} : vector<8x96xf32> to vector<8x32xf32>
    %617 = vector.extract_strided_slice %607 {offsets = [0, 32], sizes = [8, 32], strides = [1, 1]} : vector<8x96xf32> to vector<8x32xf32>
    %618 = arith.addf %616, %617 : vector<8x32xf32>
    %619 = arith.negf %618 : vector<8x32xf32>
    %620 = math.exp %619 : vector<8x32xf32>
    %cst_369 = arith.constant 1.000000e+00 : f32
    %621 = vector.broadcast %cst_369 : f32 to vector<8x32xf32>
    %622 = arith.addf %621, %620 : vector<8x32xf32>
    %623 = arith.divf %621, %622 : vector<8x32xf32>
    %624 = vector.extract_strided_slice %602 {offsets = [0, 64], sizes = [8, 32], strides = [1, 1]} : vector<8x96xf32> to vector<8x32xf32>
    %625 = vector.extract_strided_slice %607 {offsets = [0, 64], sizes = [8, 32], strides = [1, 1]} : vector<8x96xf32> to vector<8x32xf32>
    %626 = arith.mulf %615, %625 : vector<8x32xf32>
    %627 = arith.addf %624, %626 : vector<8x32xf32>
    %628 = math.tanh %627 : vector<8x32xf32>
    %cst_370 = arith.constant 1.000000e+00 : f32
    %629 = vector.broadcast %cst_370 : f32 to vector<8x32xf32>
    %630 = arith.subf %629, %623 : vector<8x32xf32>
    %631 = arith.mulf %630, %628 : vector<8x32xf32>
    %632 = arith.mulf %623, %538 : vector<8x32xf32>
    %633 = arith.addf %631, %632 : vector<8x32xf32>
    %c0_371 = arith.constant 0 : index
    %c0_372 = arith.constant 0 : index
    %634 = vector.load %arg13[%c0_371, %c0_372] : memref<32x16xf32, #tpu.memory_space<vmem>>, vector<32x16xf32>
    %cst_373 = arith.constant dense<0.000000e+00> : vector<8x16xf32>
    %635 = tpu.matmul %633, %634, %cst_373 {dimension_numbers = #tpu.dot_dimension_numbers<[1], [0], [0], [1], [0, 0, 1, 1], [], []>} : vector<8x32xf32>, vector<32x16xf32>, vector<8x16xf32> -> vector<8x16xf32>
    %c0_374 = arith.constant 0 : index
    %c0_375 = arith.constant 0 : index
    %636 = vector.load %arg14[%c0_374, %c0_375] : memref<64x16xf32, #tpu.memory_space<vmem>>, vector<64x16xf32>
    %cst_376 = arith.constant dense<0.000000e+00> : vector<8x16xf32>
    %637 = tpu.matmul %594, %636, %cst_376 {dimension_numbers = #tpu.dot_dimension_numbers<[1], [0], [0], [1], [0, 0, 1, 1], [], []>} : vector<8x64xf32>, vector<64x16xf32>, vector<8x16xf32> -> vector<8x16xf32>
    %638 = arith.addf %635, %637 : vector<8x16xf32>
    %c0_377 = arith.constant 0 : index
    %c0_378 = arith.constant 0 : index
    %639 = vector.load %arg15[%c0_377, %c0_378] : memref<32x16xf32, #tpu.memory_space<vmem>>, vector<32x16xf32>
    %cst_379 = arith.constant dense<0.000000e+00> : vector<8x16xf32>
    %640 = tpu.matmul %568, %639, %cst_379 {dimension_numbers = #tpu.dot_dimension_numbers<[1], [0], [0], [1], [0, 0, 1, 1], [], []>} : vector<8x32xf32>, vector<32x16xf32>, vector<8x16xf32> -> vector<8x16xf32>
    %641 = arith.addf %638, %640 : vector<8x16xf32>
    %c0_380 = arith.constant 0 : index
    %c0_381 = arith.constant 0 : index
    %642 = vector.load %arg16[%c0_380, %c0_381] : memref<1x16xf32, #tpu.memory_space<vmem>>, vector<1x16xf32>
    %643 = vector.broadcast %642 : vector<1x16xf32> to vector<8x16xf32>
    %644 = arith.addf %641, %643 : vector<8x16xf32>
    %645 = arith.index_cast %c6_i32 : i32 to index
    %c0_382 = arith.constant 0 : index
    %c0_383 = arith.constant 0 : index
    %646 = vector.load %arg17[%645, %c0_382, %c0_383] : memref<8x8x16xf32, #tpu.memory_space<vmem>>, vector<1x8x16xf32>
    %647 = vector.shape_cast %646 : vector<1x8x16xf32> to vector<8x16xf32>
    %648 = vector.shape_cast %644 : vector<8x16xf32> to vector<1x8x16xf32>
    tpu.vector_store %arg17[%645, %c0_382, %c0_383], %648 {strides = array<i32>} : memref<8x8x16xf32, #tpu.memory_space<vmem>>, vector<1x8x16xf32>,
    %cst_384 = arith.constant dense<0xFF800000> : vector<8xf32>
    %649 = vector.multi_reduction <maximumf>, %644, %cst_384 [1] : vector<8x16xf32> to vector<8xf32>
    %650 = vector.shape_cast %649 : vector<8xf32> to vector<8x1xf32>
    %651 = vector.broadcast %650 : vector<8x1xf32> to vector<8x16xf32>
    %652 = arith.cmpf oeq, %644, %651 : vector<8x16xf32>
    %cst_385 = arith.constant 1.600000e+01 : f32
    %653 = vector.broadcast %cst_385 : f32 to vector<8x16xf32>
    %654 = arith.select %652, %85, %653 : vector<8x16xi1>, vector<8x16xf32>
    %cst_386 = arith.constant dense<0x7F800000> : vector<8xf32>
    %655 = vector.multi_reduction <minimumf>, %654, %cst_386 [1] : vector<8x16xf32> to vector<8xf32>
    %656 = vector.shape_cast %655 : vector<8xf32> to vector<8x1xf32>
    %657 = arith.fptosi %656 : vector<8x1xf32> to vector<8x1xi32>
    %c7_i32 = arith.constant 7 : i32
    %658 = vector.broadcast %657 : vector<8x1xi32> to vector<8x16xi32>
    %659 = arith.cmpi eq, %84, %658 : vector<8x16xi32>
    %660 = arith.extui %659 : vector<8x16xi1> to vector<8x16xi32>
    %661 = arith.sitofp %660 : vector<8x16xi32> to vector<8x16xf32>
    %c0_387 = arith.constant 0 : index
    %c0_388 = arith.constant 0 : index
    %662 = vector.load %arg3[%c0_387, %c0_388] : memref<16x32xf32, #tpu.memory_space<vmem>>, vector<16x32xf32>
    %cst_389 = arith.constant dense<0.000000e+00> : vector<8x32xf32>
    %663 = tpu.matmul %661, %662, %cst_389 {dimension_numbers = #tpu.dot_dimension_numbers<[1], [0], [0], [1], [0, 0, 1, 1], [], []>} : vector<8x16xf32>, vector<16x32xf32>, vector<8x32xf32> -> vector<8x32xf32>
    %c0_390 = arith.constant 0 : index
    %c0_391 = arith.constant 0 : index
    %664 = vector.load %arg4[%c0_390, %c0_391] : memref<32x32xf32, #tpu.memory_space<vmem>>, vector<32x32xf32>
    %cst_392 = arith.constant dense<0.000000e+00> : vector<8x32xf32>
    %665 = tpu.matmul %633, %664, %cst_392 {dimension_numbers = #tpu.dot_dimension_numbers<[1], [0], [0], [1], [0, 0, 1, 1], [], []>} : vector<8x32xf32>, vector<32x32xf32>, vector<8x32xf32> -> vector<8x32xf32>
    %c0_393 = arith.constant 0 : index
    %c0_394 = arith.constant 0 : index
    %c0_395 = arith.constant 0 : index
    %666 = vector.load %arg18[%c0_393, %c0_394, %c0_395] : memref<8x8x32xf32, #tpu.memory_space<vmem>>, vector<8x8x32xf32>
    %667 = vector.shape_cast %665 : vector<8x32xf32> to vector<1x8x32xf32>
    %668 = vector.broadcast %667 : vector<1x8x32xf32> to vector<8x8x32xf32>
    %669 = arith.addf %666, %668 : vector<8x8x32xf32>
    %670 = math.tanh %669 : vector<8x8x32xf32>
    %c0_396 = arith.constant 0 : index
    %c0_397 = arith.constant 0 : index
    %671 = vector.load %arg7[%c0_396, %c0_397] : memref<1x32xf32, #tpu.memory_space<vmem>>, vector<1x32xf32>
    %672 = vector.shape_cast %671 : vector<1x32xf32> to vector<1x1x32xf32>
    %673 = vector.broadcast %672 : vector<1x1x32xf32> to vector<8x8x32xf32>
    %674 = arith.mulf %670, %673 : vector<8x8x32xf32>
    %cst_398 = arith.constant dense<0.000000e+00> : vector<8x8xf32>
    %675 = vector.multi_reduction <add>, %674, %cst_398 [2] : vector<8x8x32xf32> to vector<8x8xf32>
    %676 = vector.shape_cast %675 : vector<8x8xf32> to vector<8x8x1xf32>
    %cst_399 = arith.constant dense<0xFF800000> : vector<8x1xf32>
    %677 = vector.multi_reduction <maximumf>, %676, %cst_399 [0] : vector<8x8x1xf32> to vector<8x1xf32>
    %678 = vector.shape_cast %677 : vector<8x1xf32> to vector<1x8x1xf32>
    %679 = vector.broadcast %678 : vector<1x8x1xf32> to vector<8x8x1xf32>
    %680 = arith.subf %676, %679 : vector<8x8x1xf32>
    %681 = math.exp %680 : vector<8x8x1xf32>
    %cst_400 = arith.constant dense<0.000000e+00> : vector<8x1xf32>
    %682 = vector.multi_reduction <add>, %681, %cst_400 [0] : vector<8x8x1xf32> to vector<8x1xf32>
    %683 = vector.shape_cast %682 : vector<8x1xf32> to vector<1x8x1xf32>
    %684 = vector.broadcast %683 : vector<1x8x1xf32> to vector<8x8x1xf32>
    %685 = arith.divf %681, %684 : vector<8x8x1xf32>
    %c0_401 = arith.constant 0 : index
    %c0_402 = arith.constant 0 : index
    %c0_403 = arith.constant 0 : index
    %686 = vector.load %arg2[%c0_401, %c0_402, %c0_403] : memref<8x8x64xf32, #tpu.memory_space<vmem>>, vector<8x8x64xf32>
    %687 = vector.broadcast %685 : vector<8x8x1xf32> to vector<8x8x64xf32>
    %688 = arith.mulf %687, %686 : vector<8x8x64xf32>
    %cst_404 = arith.constant dense<0.000000e+00> : vector<8x64xf32>
    %689 = vector.multi_reduction <add>, %688, %cst_404 [0] : vector<8x8x64xf32> to vector<8x64xf32>
    %c0_405 = arith.constant 0 : index
    %c0_406 = arith.constant 0 : index
    %690 = vector.load %arg8[%c0_405, %c0_406] : memref<32x96xf32, #tpu.memory_space<vmem>>, vector<32x96xf32>
    %cst_407 = arith.constant dense<0.000000e+00> : vector<8x96xf32>
    %691 = tpu.matmul %663, %690, %cst_407 {dimension_numbers = #tpu.dot_dimension_numbers<[1], [0], [0], [1], [0, 0, 1, 1], [], []>} : vector<8x32xf32>, vector<32x96xf32>, vector<8x96xf32> -> vector<8x96xf32>
    %c0_408 = arith.constant 0 : index
    %c0_409 = arith.constant 0 : index
    %692 = vector.load %arg9[%c0_408, %c0_409] : memref<64x96xf32, #tpu.memory_space<vmem>>, vector<64x96xf32>
    %cst_410 = arith.constant dense<0.000000e+00> : vector<8x96xf32>
    %693 = tpu.matmul %689, %692, %cst_410 {dimension_numbers = #tpu.dot_dimension_numbers<[1], [0], [0], [1], [0, 0, 1, 1], [], []>} : vector<8x64xf32>, vector<64x96xf32>, vector<8x96xf32> -> vector<8x96xf32>
    %694 = arith.addf %691, %693 : vector<8x96xf32>
    %c0_411 = arith.constant 0 : index
    %c0_412 = arith.constant 0 : index
    %695 = vector.load %arg11[%c0_411, %c0_412] : memref<1x96xf32, #tpu.memory_space<vmem>>, vector<1x96xf32>
    %696 = vector.broadcast %695 : vector<1x96xf32> to vector<8x96xf32>
    %697 = arith.addf %694, %696 : vector<8x96xf32>
    %c0_413 = arith.constant 0 : index
    %c0_414 = arith.constant 0 : index
    %698 = vector.load %arg10[%c0_413, %c0_414] : memref<32x96xf32, #tpu.memory_space<vmem>>, vector<32x96xf32>
    %cst_415 = arith.constant dense<0.000000e+00> : vector<8x96xf32>
    %699 = tpu.matmul %633, %698, %cst_415 {dimension_numbers = #tpu.dot_dimension_numbers<[1], [0], [0], [1], [0, 0, 1, 1], [], []>} : vector<8x32xf32>, vector<32x96xf32>, vector<8x96xf32> -> vector<8x96xf32>
    %c0_416 = arith.constant 0 : index
    %c0_417 = arith.constant 0 : index
    %700 = vector.load %arg12[%c0_416, %c0_417] : memref<1x96xf32, #tpu.memory_space<vmem>>, vector<1x96xf32>
    %701 = vector.broadcast %700 : vector<1x96xf32> to vector<8x96xf32>
    %702 = arith.addf %699, %701 : vector<8x96xf32>
    %703 = vector.extract_strided_slice %697 {offsets = [0, 0], sizes = [8, 32], strides = [1, 1]} : vector<8x96xf32> to vector<8x32xf32>
    %704 = vector.extract_strided_slice %702 {offsets = [0, 0], sizes = [8, 32], strides = [1, 1]} : vector<8x96xf32> to vector<8x32xf32>
    %705 = arith.addf %703, %704 : vector<8x32xf32>
    %706 = arith.negf %705 : vector<8x32xf32>
    %707 = math.exp %706 : vector<8x32xf32>
    %cst_418 = arith.constant 1.000000e+00 : f32
    %708 = vector.broadcast %cst_418 : f32 to vector<8x32xf32>
    %709 = arith.addf %708, %707 : vector<8x32xf32>
    %710 = arith.divf %708, %709 : vector<8x32xf32>
    %711 = vector.extract_strided_slice %697 {offsets = [0, 32], sizes = [8, 32], strides = [1, 1]} : vector<8x96xf32> to vector<8x32xf32>
    %712 = vector.extract_strided_slice %702 {offsets = [0, 32], sizes = [8, 32], strides = [1, 1]} : vector<8x96xf32> to vector<8x32xf32>
    %713 = arith.addf %711, %712 : vector<8x32xf32>
    %714 = arith.negf %713 : vector<8x32xf32>
    %715 = math.exp %714 : vector<8x32xf32>
    %cst_419 = arith.constant 1.000000e+00 : f32
    %716 = vector.broadcast %cst_419 : f32 to vector<8x32xf32>
    %717 = arith.addf %716, %715 : vector<8x32xf32>
    %718 = arith.divf %716, %717 : vector<8x32xf32>
    %719 = vector.extract_strided_slice %697 {offsets = [0, 64], sizes = [8, 32], strides = [1, 1]} : vector<8x96xf32> to vector<8x32xf32>
    %720 = vector.extract_strided_slice %702 {offsets = [0, 64], sizes = [8, 32], strides = [1, 1]} : vector<8x96xf32> to vector<8x32xf32>
    %721 = arith.mulf %710, %720 : vector<8x32xf32>
    %722 = arith.addf %719, %721 : vector<8x32xf32>
    %723 = math.tanh %722 : vector<8x32xf32>
    %cst_420 = arith.constant 1.000000e+00 : f32
    %724 = vector.broadcast %cst_420 : f32 to vector<8x32xf32>
    %725 = arith.subf %724, %718 : vector<8x32xf32>
    %726 = arith.mulf %725, %723 : vector<8x32xf32>
    %727 = arith.mulf %718, %633 : vector<8x32xf32>
    %728 = arith.addf %726, %727 : vector<8x32xf32>
    %c0_421 = arith.constant 0 : index
    %c0_422 = arith.constant 0 : index
    %729 = vector.load %arg13[%c0_421, %c0_422] : memref<32x16xf32, #tpu.memory_space<vmem>>, vector<32x16xf32>
    %cst_423 = arith.constant dense<0.000000e+00> : vector<8x16xf32>
    %730 = tpu.matmul %728, %729, %cst_423 {dimension_numbers = #tpu.dot_dimension_numbers<[1], [0], [0], [1], [0, 0, 1, 1], [], []>} : vector<8x32xf32>, vector<32x16xf32>, vector<8x16xf32> -> vector<8x16xf32>
    %c0_424 = arith.constant 0 : index
    %c0_425 = arith.constant 0 : index
    %731 = vector.load %arg14[%c0_424, %c0_425] : memref<64x16xf32, #tpu.memory_space<vmem>>, vector<64x16xf32>
    %cst_426 = arith.constant dense<0.000000e+00> : vector<8x16xf32>
    %732 = tpu.matmul %689, %731, %cst_426 {dimension_numbers = #tpu.dot_dimension_numbers<[1], [0], [0], [1], [0, 0, 1, 1], [], []>} : vector<8x64xf32>, vector<64x16xf32>, vector<8x16xf32> -> vector<8x16xf32>
    %733 = arith.addf %730, %732 : vector<8x16xf32>
    %c0_427 = arith.constant 0 : index
    %c0_428 = arith.constant 0 : index
    %734 = vector.load %arg15[%c0_427, %c0_428] : memref<32x16xf32, #tpu.memory_space<vmem>>, vector<32x16xf32>
    %cst_429 = arith.constant dense<0.000000e+00> : vector<8x16xf32>
    %735 = tpu.matmul %663, %734, %cst_429 {dimension_numbers = #tpu.dot_dimension_numbers<[1], [0], [0], [1], [0, 0, 1, 1], [], []>} : vector<8x32xf32>, vector<32x16xf32>, vector<8x16xf32> -> vector<8x16xf32>
    %736 = arith.addf %733, %735 : vector<8x16xf32>
    %c0_430 = arith.constant 0 : index
    %c0_431 = arith.constant 0 : index
    %737 = vector.load %arg16[%c0_430, %c0_431] : memref<1x16xf32, #tpu.memory_space<vmem>>, vector<1x16xf32>
    %738 = vector.broadcast %737 : vector<1x16xf32> to vector<8x16xf32>
    %739 = arith.addf %736, %738 : vector<8x16xf32>
    %740 = arith.index_cast %c7_i32 : i32 to index
    %c0_432 = arith.constant 0 : index
    %c0_433 = arith.constant 0 : index
    %741 = vector.load %arg17[%740, %c0_432, %c0_433] : memref<8x8x16xf32, #tpu.memory_space<vmem>>, vector<1x8x16xf32>
    %742 = vector.shape_cast %741 : vector<1x8x16xf32> to vector<8x16xf32>
    %743 = vector.shape_cast %739 : vector<8x16xf32> to vector<1x8x16xf32>
    tpu.vector_store %arg17[%740, %c0_432, %c0_433], %743 {strides = array<i32>} : memref<8x8x16xf32, #tpu.memory_space<vmem>>, vector<1x8x16xf32>,
    %cst_434 = arith.constant dense<0xFF800000> : vector<8xf32>
    %744 = vector.multi_reduction <maximumf>, %739, %cst_434 [1] : vector<8x16xf32> to vector<8xf32>
    %745 = vector.shape_cast %744 : vector<8xf32> to vector<8x1xf32>
    %746 = vector.broadcast %745 : vector<8x1xf32> to vector<8x16xf32>
    %747 = arith.cmpf oeq, %739, %746 : vector<8x16xf32>
    %cst_435 = arith.constant 1.600000e+01 : f32
    %748 = vector.broadcast %cst_435 : f32 to vector<8x16xf32>
    %749 = arith.select %747, %85, %748 : vector<8x16xi1>, vector<8x16xf32>
    %cst_436 = arith.constant dense<0x7F800000> : vector<8xf32>
    %750 = vector.multi_reduction <minimumf>, %749, %cst_436 [1] : vector<8x16xf32> to vector<8xf32>
    %751 = vector.shape_cast %750 : vector<8xf32> to vector<8x1xf32>
    %752 = arith.fptosi %751 : vector<8x1xf32> to vector<8x1xi32>
    %c7_i32_437 = arith.constant 7 : i32
    return
  }
}

</mosaic_0001>

<llo_original>
// kernel: seq2seq_forward.2
$region0: #{seq2seq_forward.2}
  #allocation0 [shape = 'u32[]', space=smem, size = 0x4, offset = 0x4, fixed_abs, tag = 'smem constant byte address 0x4 - core index']
  #allocation1 [shape = 'u32[144,128]{1,0:T(1,128)}', space=vmem, size = 0x12000, scoped, tag = 'internal scratch']
  #allocation2 [shape = 'f32[8,8,96]{2,1,0:T(8,128)}', space=vmem, size = 0x8000, scoped, tag = 'scratch operand']
  #allocation3 [shape = 'f32[8,8,96]{2,1,0:T(8,128)}', space=vmem, size = 0x8000, scoped, tag = 'scratch operand']
  %s0 = inlined_call_operand.vmem [shape: f32[64,32], index: 0, kind: input, shape index: {}]
  %s1 = inlined_call_operand.vmem [shape: f32[32,96], index: 1, kind: input, shape index: {}]
  %s2 = inlined_call_operand.vmem [shape: f32[32,96], index: 2, kind: input, shape index: {}]
  %s3 = inlined_call_operand.vmem [shape: f32[1,96], index: 3, kind: input, shape index: {}]
  %s4 = inlined_call_operand.vmem [shape: f32[1,96], index: 4, kind: input, shape index: {}]
  %s5 = inlined_call_operand.vmem [shape: f32[32,96], index: 5, kind: input, shape index: {}]
  %s6 = inlined_call_operand.vmem [shape: f32[32,96], index: 6, kind: input, shape index: {}]
  %s7 = inlined_call_operand.vmem [shape: f32[1,96], index: 7, kind: input, shape index: {}]
  %s8 = inlined_call_operand.vmem [shape: f32[1,96], index: 8, kind: input, shape index: {}]
  %s9 = inlined_call_operand.vmem [shape: f32[32,32], index: 9, kind: input, shape index: {}]
  %s10 = inlined_call_operand.vmem [shape: f32[32,32], index: 10, kind: input, shape index: {}]
  %s11 = inlined_call_operand.vmem [shape: f32[1,32], index: 11, kind: input, shape index: {}]
  %s12 = inlined_call_operand.vmem [shape: f32[8,8,32], index: 12, kind: output, shape index: {0}]
  %s13 = inlined_call_operand.vmem [shape: f32[8,8,32], index: 13, kind: output, shape index: {1}]
  %s14 = inlined_call_operand.vmem [shape: f32[8,32], index: 14, kind: output, shape index: {2}]
  %15 = xla_tuple %s12, %s13, %s14
  %s16 = sld [smem:[#allocation0]]
  $region74: #{seq2seq_forward.2} parent=0
    _
  %s18 = ssub.s32 1, %s16
  %s19 = scalar_select 0, %s18, %s16
  // Predicated region
  $region2: #{seq2seq_forward.2} parent=0 // pred_check
    _
  $region3: #{seq2seq_forward.2} parent=0 // pred_check_branch
    %21 = sbr.rel (0) target = $region5
  $region4: #{seq2seq_forward.2} parent=0 // pred_region
    _
  $region5: #{seq2seq_forward.2} parent=0 // pred_fallthru
    _
  // Predicated region
  $region6: #{seq2seq_forward.2} parent=0 // pred_check
    _
  $region7: #{seq2seq_forward.2} parent=0 // pred_check_branch
    %23 = sbr.rel (0) target = $region9
  $region8: #{seq2seq_forward.2} parent=0 // pred_region
    _
  $region9: #{seq2seq_forward.2} parent=0 // pred_fallthru
    _
  // Predicated region
  $region10: #{seq2seq_forward.2} parent=0 // pred_check
    _
  $region11: #{seq2seq_forward.2} parent=0 // pred_check_branch
    %25 = sbr.rel (0) target = $region13
  $region12: #{seq2seq_forward.2} parent=0 // pred_region
    _
  $region13: #{seq2seq_forward.2} parent=0 // pred_fallthru
    _
  // Predicated region
  $region14: #{seq2seq_forward.2} parent=0 // pred_check
    _
  $region15: #{seq2seq_forward.2} parent=0 // pred_check_branch
    %27 = sbr.rel (0) target = $region17
  $region16: #{seq2seq_forward.2} parent=0 // pred_region
    _
  $region17: #{seq2seq_forward.2} parent=0 // pred_fallthru
    _
  // Predicated region
  $region18: #{seq2seq_forward.2} parent=0 // pred_check
    _
  $region19: #{seq2seq_forward.2} parent=0 // pred_check_branch
    %29 = sbr.rel (0) target = $region21
  $region20: #{seq2seq_forward.2} parent=0 // pred_region
    _
  $region21: #{seq2seq_forward.2} parent=0 // pred_fallthru
    _
  // Predicated region
  $region22: #{seq2seq_forward.2} parent=0 // pred_check
    _
  $region23: #{seq2seq_forward.2} parent=0 // pred_check_branch
    %31 = sbr.rel (0) target = $region25
  $region24: #{seq2seq_forward.2} parent=0 // pred_region
    _
  $region25: #{seq2seq_forward.2} parent=0 // pred_fallthru
    _
  // Predicated region
  $region26: #{seq2seq_forward.2} parent=0 // pred_check
    _
  $region27: #{seq2seq_forward.2} parent=0 // pred_check_branch
    %33 = sbr.rel (0) target = $region29
  $region28: #{seq2seq_forward.2} parent=0 // pred_region
    _
  $region29: #{seq2seq_forward.2} parent=0 // pred_fallthru
    _
  // Predicated region
  $region30: #{seq2seq_forward.2} parent=0 // pred_check
    _
  $region31: #{seq2seq_forward.2} parent=0 // pred_check_branch
    %35 = sbr.rel (0) target = $region33
  $region32: #{seq2seq_forward.2} parent=0 // pred_region
    _
  $region33: #{seq2seq_forward.2} parent=0 // pred_fallthru
    _
  // Predicated region
  $region34: #{seq2seq_forward.2} parent=0 // pred_check
    _
  $region35: #{seq2seq_forward.2} parent=0 // pred_check_branch
    %37 = sbr.rel (0) target = $region37
  $region36: #{seq2seq_forward.2} parent=0 // pred_region
    _
  $region37: #{seq2seq_forward.2} parent=0 // pred_fallthru
    _
  // Predicated region
  $region38: #{seq2seq_forward.2} parent=0 // pred_check
    _
  $region39: #{seq2seq_forward.2} parent=0 // pred_check_branch
    %39 = sbr.rel (0) target = $region41
  $region40: #{seq2seq_forward.2} parent=0 // pred_region
    _
  $region41: #{seq2seq_forward.2} parent=0 // pred_fallthru
    _
  // Predicated region
  $region42: #{seq2seq_forward.2} parent=0 // pred_check
    _
  $region43: #{seq2seq_forward.2} parent=0 // pred_check_branch
    %41 = sbr.rel (0) target = $region45
  $region44: #{seq2seq_forward.2} parent=0 // pred_region
    _
  $region45: #{seq2seq_forward.2} parent=0 // pred_fallthru
    _
  // Predicated region
  $region46: #{seq2seq_forward.2} parent=0 // pred_check
    _
  $region47: #{seq2seq_forward.2} parent=0 // pred_check_branch
    %43 = sbr.rel (0) target = $region49
  $region48: #{seq2seq_forward.2} parent=0 // pred_region
    _
  $region49: #{seq2seq_forward.2} parent=0 // pred_fallthru
    _
  %v44 = vld [vmem:[%s0] sm:$0xff]
  %v45 = vld [vmem:[%s0 + $0x8] sm:$0xff]
  %v46 = vld [vmem:[%s0 + $0x10] sm:$0xff]
  %v47 = vld [vmem:[%s0 + $0x18] sm:$0xff]
  %v48 = vld [vmem:[%s0 + $0x20] sm:$0xff]
  %v49 = vld [vmem:[%s0 + $0x28] sm:$0xff]
  %v50 = vld [vmem:[%s0 + $0x30] sm:$0xff]
  %v51 = vld [vmem:[%s0 + $0x38] sm:$0xff]
  %v52 = vld [vmem:[%s1] sm:$0xff]
  %v53 = vld [vmem:[%s1 + $0x8] sm:$0xff]
  %v54 = vld [vmem:[%s1 + $0x10] sm:$0xff]
  %v55 = vld [vmem:[%s1 + $0x18] sm:$0xff]
  %v56 = vld [vmem:[%s3] sm:$0x1]
  %v58 = vlaneseq
  %v59 = vshrl.u32 %v58, 7
  %v60 = vsub.s32 0, %v59
  %v61 = vrot.slane %v56, %v60
  %vm63 = vcmask 261120
  %v65 = vsel %vm63, %v44, 0
  %v68 = vsel %vm63, %v45, 0
  %v71 = vsel %vm63, %v46, 0
  %v74 = vsel %vm63, %v47, 0
  %v77 = vsel %vm63, %v48, 0
  %v80 = vsel %vm63, %v49, 0
  %v83 = vsel %vm63, %v50, 0
  %v86 = vsel %vm63, %v51, 0
  %88 = vmatprep.subr.mxu0 0.0
  %89 = vmatpush1.msra.mxu0 0.0
  %90 = vmatprep.subr.mxu0 0.0
  %91 = vmatpush1.msra.mxu0 0.0
  %92 = vmatprep.subr.mxu0 0.0
  %93 = vmatpush1.msra.mxu0 0.0
  %94 = vmatprep.subr.mxu0 0.0
  %95 = vmatpush1.msra.mxu0 0.0
  %96 = vmatprep.subr.mxu0 0.0
  %97 = vmatpush1.msra.mxu0 0.0
  %98 = vmatprep.subr.mxu0 0.0
  %99 = vmatpush1.msra.mxu0 0.0
  %100 = vmatprep.subr.mxu0 0.0
  %101 = vmatpush1.msra.mxu0 0.0
  %102 = vmatprep.subr.mxu0 0.0
  %103 = vmatpush1.msra.mxu0 0.0
  %104 = vmatprep.subr.mxu0 0.0
  %105 = vmatpush1.msra.mxu0 0.0
  %106 = vmatprep.subr.mxu0 0.0
  %107 = vmatpush1.msra.mxu0 0.0
  %108 = vmatprep.subr.mxu0 0.0
  %109 = vmatpush1.msra.mxu0 0.0
  %110 = vmatprep.subr.mxu0 0.0
  %111 = vmatpush1.msra.mxu0 0.0
  %112 = vmatprep.subr.mxu0 0.0
  %113 = vmatpush1.msra.mxu0 %v55
  %114 = vmatprep.subr.mxu0 0.0
  %115 = vmatpush1.msra.mxu0 %v54
  %116 = vmatprep.subr.mxu0 0.0
  %117 = vmatpush1.msra.mxu0 %v53
  %118 = vmatprep.subr.mxu0 0.0
  %119 = vmatpush1.msra.mxu0 %v52
  %120 = vmatprep.subr.mxu0 0.0
  %121 = vmatpush2.msra.mxu0 0.0
  %122 = vmatprep.subr.mxu0 0.0
  %123 = vmatpush2.msra.mxu0 0.0
  %124 = vmatprep.subr.mxu0 0.0
  %125 = vmatpush2.msra.mxu0 0.0
  %126 = vmatprep.subr.mxu0 0.0
  %127 = vmatpush2.msra.mxu0 0.0
  %128 = vmatprep.subr.mxu0 0.0
  %129 = vmatpush2.msra.mxu0 0.0
  %130 = vmatprep.subr.mxu0 0.0
  %131 = vmatpush2.msra.mxu0 0.0
  %132 = vmatprep.subr.mxu0 0.0
  %133 = vmatpush2.msra.mxu0 0.0
  %134 = vmatprep.subr.mxu0 0.0
  %135 = vmatpush2.msra.mxu0 0.0
  %136 = vmatprep.subr.mxu0 0.0
  %137 = vmatpush2.msra.mxu0 0.0
  %138 = vmatprep.subr.mxu0 0.0
  %139 = vmatpush2.msra.mxu0 0.0
  %140 = vmatprep.subr.mxu0 0.0
  %141 = vmatpush2.msra.mxu0 0.0
  %142 = vmatprep.subr.mxu0 0.0
  %143 = vmatpush2.msra.mxu0 0.0
  %144 = vmatprep.subr.mxu0 0.0
  %145 = vmatpush2.msra.mxu0 0.0
  %146 = vmatprep.subr.mxu0 0.0
  %147 = vmatpush2.msra.mxu0 0.0
  %148 = vmatprep.subr.mxu0 0.0
  %149 = vmatpush2.msra.mxu0 0.0
  %150 = vmatprep.subr.mxu0 0.0
  %151 = vmatpush2.msra.mxu0 0.0
  %152 = vmatprep.mubr.f32.mxu0 0.0
  %153 = vmatmul.mubr.f32.gmra.mxu0 %v65
  %v154 = vpop.f32.mrf.mxu0
  %v155 = vadd.f32 %v61, %v154
  %v156 = vpop.f32.mrf.mxu0
  %157 = vmatprep.mubr.f32.mxu0 0.0
  %158 = vmatmul.mubr.f32.gmra.mxu0 %v68
  %v159 = vpop.f32.mrf.mxu0
  %v160 = vadd.f32 %v61, %v159
  %v161 = vpop.f32.mrf.mxu0
  %162 = vmatprep.mubr.f32.mxu0 0.0
  %163 = vmatmul.mubr.f32.gmra.mxu0 %v71
  %v164 = vpop.f32.mrf.mxu0
  %v165 = vadd.f32 %v61, %v164
  %v166 = vpop.f32.mrf.mxu0
  %167 = vmatprep.mubr.f32.mxu0 0.0
  %168 = vmatmul.mubr.f32.gmra.mxu0 %v74
  %v169 = vpop.f32.mrf.mxu0
  %v170 = vadd.f32 %v61, %v169
  %v171 = vpop.f32.mrf.mxu0
  %172 = vmatprep.mubr.f32.mxu0 0.0
  %173 = vmatmul.mubr.f32.gmra.mxu0 %v77
  %v174 = vpop.f32.mrf.mxu0
  %v175 = vadd.f32 %v61, %v174
  %v176 = vpop.f32.mrf.mxu0
  %177 = vmatprep.mubr.f32.mxu0 0.0
  %178 = vmatmul.mubr.f32.gmra.mxu0 %v80
  %v179 = vpop.f32.mrf.mxu0
  %v180 = vadd.f32 %v61, %v179
  %v181 = vpop.f32.mrf.mxu0
  %182 = vmatprep.mubr.f32.mxu0 0.0
  %183 = vmatmul.mubr.f32.gmra.mxu0 %v83
  %v184 = vpop.f32.mrf.mxu0
  %v185 = vadd.f32 %v61, %v184
  %v186 = vpop.f32.mrf.mxu0
  %187 = vmatprep.mubr.f32.mxu0 0.0
  %188 = vmatmul.mubr.f32.gmra.mxu0 %v86
  %v189 = vpop.f32.mrf.mxu0
  %v190 = vadd.f32 %v61, %v189
  %v191 = vpop.f32.mrf.mxu0
  %192 = vdwg.mxu0
  %v193 = vld [vmem:[%s5] sm:$0xff]
  %v194 = vld [vmem:[%s5 + $0x8] sm:$0xff]
  %v195 = vld [vmem:[%s5 + $0x10] sm:$0xff]
  %v196 = vld [vmem:[%s5 + $0x18] sm:$0xff]
  %v197 = vld [vmem:[%s7] sm:$0x1]
  %v199 = vlaneseq
  %v200 = vshrl.u32 %v199, 7
  %v201 = vsub.s32 0, %v200
  %v202 = vrot.slane %v197, %v201
  %204 = vmatprep.subr.mxu0 0.0
  %205 = vmatpush1.msra.mxu0 0.0
  %206 = vmatprep.subr.mxu0 0.0
  %207 = vmatpush1.msra.mxu0 0.0
  %208 = vmatprep.subr.mxu0 0.0
  %209 = vmatpush1.msra.mxu0 0.0
  %210 = vmatprep.subr.mxu0 0.0
  %211 = vmatpush1.msra.mxu0 0.0
  %212 = vmatprep.subr.mxu0 0.0
  %213 = vmatpush1.msra.mxu0 0.0
  %214 = vmatprep.subr.mxu0 0.0
  %215 = vmatpush1.msra.mxu0 0.0
  %216 = vmatprep.subr.mxu0 0.0
  %217 = vmatpush1.msra.mxu0 0.0
  %218 = vmatprep.subr.mxu0 0.0
  %219 = vmatpush1.msra.mxu0 0.0
  %220 = vmatprep.subr.mxu0 0.0
  %221 = vmatpush1.msra.mxu0 0.0
  %222 = vmatprep.subr.mxu0 0.0
  %223 = vmatpush1.msra.mxu0 0.0
  %224 = vmatprep.subr.mxu0 0.0
  %225 = vmatpush1.msra.mxu0 0.0
  %226 = vmatprep.subr.mxu0 0.0
  %227 = vmatpush1.msra.mxu0 0.0
  %228 = vmatprep.subr.mxu0 0.0
  %229 = vmatpush1.msra.mxu0 %v196
  %230 = vmatprep.subr.mxu0 0.0
  %231 = vmatpush1.msra.mxu0 %v195
  %232 = vmatprep.subr.mxu0 0.0
  %233 = vmatpush1.msra.mxu0 %v194
  %234 = vmatprep.subr.mxu0 0.0
  %235 = vmatpush1.msra.mxu0 %v193
  %236 = vmatprep.subr.mxu0 0.0
  %237 = vmatpush2.msra.mxu0 0.0
  %238 = vmatprep.subr.mxu0 0.0
  %239 = vmatpush2.msra.mxu0 0.0
  %240 = vmatprep.subr.mxu0 0.0
  %241 = vmatpush2.msra.mxu0 0.0
  %242 = vmatprep.subr.mxu0 0.0
  %243 = vmatpush2.msra.mxu0 0.0
  %244 = vmatprep.subr.mxu0 0.0
  %245 = vmatpush2.msra.mxu0 0.0
  %246 = vmatprep.subr.mxu0 0.0
  %247 = vmatpush2.msra.mxu0 0.0
  %248 = vmatprep.subr.mxu0 0.0
  %249 = vmatpush2.msra.mxu0 0.0
  %250 = vmatprep.subr.mxu0 0.0
  %251 = vmatpush2.msra.mxu0 0.0
  %252 = vmatprep.subr.mxu0 0.0
  %253 = vmatpush2.msra.mxu0 0.0
  %254 = vmatprep.subr.mxu0 0.0
  %255 = vmatpush2.msra.mxu0 0.0
  %256 = vmatprep.subr.mxu0 0.0
  %257 = vmatpush2.msra.mxu0 0.0
  %258 = vmatprep.subr.mxu0 0.0
  %259 = vmatpush2.msra.mxu0 0.0
  %260 = vmatprep.subr.mxu0 0.0
  %261 = vmatpush2.msra.mxu0 0.0
  %262 = vmatprep.subr.mxu0 0.0
  %263 = vmatpush2.msra.mxu0 0.0
  %264 = vmatprep.subr.mxu0 0.0
  %265 = vmatpush2.msra.mxu0 0.0
  %266 = vmatprep.subr.mxu0 0.0
  %267 = vmatpush2.msra.mxu0 0.0
  %268 = vmatprep.mubr.f32.mxu0 0.0
  %269 = vmatmul.mubr.f32.gmra.mxu0 %v65
  %v270 = vpop.f32.mrf.mxu0
  %v271 = vadd.f32 %v202, %v270
  %v272 = vpop.f32.mrf.mxu0
  %273 = vmatprep.mubr.f32.mxu0 0.0
  %274 = vmatmul.mubr.f32.gmra.mxu0 %v68
  %v275 = vpop.f32.mrf.mxu0
  %v276 = vadd.f32 %v202, %v275
  %v277 = vpop.f32.mrf.mxu0
  %278 = vmatprep.mubr.f32.mxu0 0.0
  %279 = vmatmul.mubr.f32.gmra.mxu0 %v71
  %v280 = vpop.f32.mrf.mxu0
  %v281 = vadd.f32 %v202, %v280
  %v282 = vpop.f32.mrf.mxu0
  %283 = vmatprep.mubr.f32.mxu0 0.0
  %284 = vmatmul.mubr.f32.gmra.mxu0 %v74
  %v285 = vpop.f32.mrf.mxu0
  %v286 = vadd.f32 %v202, %v285
  %v287 = vpop.f32.mrf.mxu0
  %288 = vmatprep.mubr.f32.mxu0 0.0
  %289 = vmatmul.mubr.f32.gmra.mxu0 %v77
  %v290 = vpop.f32.mrf.mxu0
  %v291 = vadd.f32 %v202, %v290
  %v292 = vpop.f32.mrf.mxu0
  %293 = vmatprep.mubr.f32.mxu0 0.0
  %294 = vmatmul.mubr.f32.gmra.mxu0 %v80
  %v295 = vpop.f32.mrf.mxu0
  %v296 = vadd.f32 %v202, %v295
  %v297 = vpop.f32.mrf.mxu0
  %298 = vmatprep.mubr.f32.mxu0 0.0
  %299 = vmatmul.mubr.f32.gmra.mxu0 %v83
  %v300 = vpop.f32.mrf.mxu0
  %v301 = vadd.f32 %v202, %v300
  %v302 = vpop.f32.mrf.mxu0
  %303 = vmatprep.mubr.f32.mxu0 0.0
  %304 = vmatmul.mubr.f32.gmra.mxu0 %v86
  %v305 = vpop.f32.mrf.mxu0
  %v306 = vadd.f32 %v202, %v305
  %v307 = vpop.f32.mrf.mxu0
  %308 = vdwg.mxu0
  %vm309 = vcmask 785408
  %310 = vst.msk [vmem:[#allocation2] sm:$0xff] %vm309, %v155
  %311 = vst.msk [vmem:[#allocation3] sm:$0xff] %vm309, %v271
  %s312 = scalar_lea.vmem [#allocation2], 8
  %313 = vst.msk [vmem:[%s312] sm:$0xff] %vm309, %v160
  %s314 = scalar_lea.vmem [#allocation3], 8
  %315 = vst.msk [vmem:[%s314] sm:$0xff] %vm309, %v276
  %s316 = scalar_lea.vmem [#allocation2], 16
  %317 = vst.msk [vmem:[%s316] sm:$0xff] %vm309, %v165
  %s318 = scalar_lea.vmem [#allocation3], 16
  %319 = vst.msk [vmem:[%s318] sm:$0xff] %vm309, %v281
  %s320 = scalar_lea.vmem [#allocation2], 24
  %321 = vst.msk [vmem:[%s320] sm:$0xff] %vm309, %v170
  %s322 = scalar_lea.vmem [#allocation3], 24
  %323 = vst.msk [vmem:[%s322] sm:$0xff] %vm309, %v286
  %s324 = scalar_lea.vmem [#allocation2], 32
  %325 = vst.msk [vmem:[%s324] sm:$0xff] %vm309, %v175
  %s326 = scalar_lea.vmem [#allocation3], 32
  %327 = vst.msk [vmem:[%s326] sm:$0xff] %vm309, %v291
  %s328 = scalar_lea.vmem [#allocation2], 40
  %329 = vst.msk [vmem:[%s328] sm:$0xff] %vm309, %v180
  %s330 = scalar_lea.vmem [#allocation3], 40
  %331 = vst.msk [vmem:[%s330] sm:$0xff] %vm309, %v296
  %s332 = scalar_lea.vmem [#allocation2], 48
  %333 = vst.msk [vmem:[%s332] sm:$0xff] %vm309, %v185
  %s334 = scalar_lea.vmem [#allocation3], 48
  %335 = vst.msk [vmem:[%s334] sm:$0xff] %vm309, %v301
  %s336 = scalar_lea.vmem [#allocation2], 56
  %337 = vst.msk [vmem:[%s336] sm:$0xff] %vm309, %v190
  %s338 = scalar_lea.vmem [#allocation3], 56
  %339 = vst.msk [vmem:[%s338] sm:$0xff] %vm309, %v306
  %v340 = vld [vmem:[%s2] sm:$0xff]
  %v341 = vld [vmem:[%s2 + $0x8] sm:$0xff]
  %v342 = vld [vmem:[%s2 + $0x10] sm:$0xff]
  %v343 = vld [vmem:[%s2 + $0x18] sm:$0xff]
  %v344 = vld [vmem:[%s4] sm:$0x1]
  %v345 = vld [vmem:[%s6] sm:$0xff]
  %v346 = vld [vmem:[%s6 + $0x8] sm:$0xff]
  %v347 = vld [vmem:[%s6 + $0x10] sm:$0xff]
  %v348 = vld [vmem:[%s6 + $0x18] sm:$0xff]
  %v349 = vld [vmem:[%s8] sm:$0x1]
  %v350 = vld [vmem:[#allocation2] sm:$0xff]
  %v352 = vlaneseq
  %v353 = vshrl.u32 %v352, 7
  %v354 = vsub.s32 0, %v353
  %v355 = vrot.slane %v344, %v354
  %v358 = vsel %vm63, 0.0, 0
  %360 = vmatprep.subr.mxu0 0.0
  %361 = vmatpush1.msra.mxu0 0.0
  %362 = vmatprep.subr.mxu0 0.0
  %363 = vmatpush1.msra.mxu0 0.0
  %364 = vmatprep.subr.mxu0 0.0
  %365 = vmatpush1.msra.mxu0 0.0
  %366 = vmatprep.subr.mxu0 0.0
  %367 = vmatpush1.msra.mxu0 0.0
  %368 = vmatprep.subr.mxu0 0.0
  %369 = vmatpush1.msra.mxu0 0.0
  %370 = vmatprep.subr.mxu0 0.0
  %371 = vmatpush1.msra.mxu0 0.0
  %372 = vmatprep.subr.mxu0 0.0
  %373 = vmatpush1.msra.mxu0 0.0
  %374 = vmatprep.subr.mxu0 0.0
  %375 = vmatpush1.msra.mxu0 0.0
  %376 = vmatprep.subr.mxu0 0.0
  %377 = vmatpush1.msra.mxu0 0.0
  %378 = vmatprep.subr.mxu0 0.0
  %379 = vmatpush1.msra.mxu0 0.0
  %380 = vmatprep.subr.mxu0 0.0
  %381 = vmatpush1.msra.mxu0 0.0
  %382 = vmatprep.subr.mxu0 0.0
  %383 = vmatpush1.msra.mxu0 0.0
  %384 = vmatprep.subr.mxu0 0.0
  %385 = vmatpush1.msra.mxu0 %v343
  %386 = vmatprep.subr.mxu0 0.0
  %387 = vmatpush1.msra.mxu0 %v342
  %388 = vmatprep.subr.mxu0 0.0
  %389 = vmatpush1.msra.mxu0 %v341
  %390 = vmatprep.subr.mxu0 0.0
  %391 = vmatpush1.msra.mxu0 %v340
  %392 = vmatprep.subr.mxu0 0.0
  %393 = vmatpush2.msra.mxu0 0.0
  %394 = vmatprep.subr.mxu0 0.0
  %395 = vmatpush2.msra.mxu0 0.0
  %396 = vmatprep.subr.mxu0 0.0
  %397 = vmatpush2.msra.mxu0 0.0
  %398 = vmatprep.subr.mxu0 0.0
  %399 = vmatpush2.msra.mxu0 0.0
  %400 = vmatprep.subr.mxu0 0.0
  %401 = vmatpush2.msra.mxu0 0.0
  %402 = vmatprep.subr.mxu0 0.0
  %403 = vmatpush2.msra.mxu0 0.0
  %404 = vmatprep.subr.mxu0 0.0
  %405 = vmatpush2.msra.mxu0 0.0
  %406 = vmatprep.subr.mxu0 0.0
  %407 = vmatpush2.msra.mxu0 0.0
  %408 = vmatprep.subr.mxu0 0.0
  %409 = vmatpush2.msra.mxu0 0.0
  %410 = vmatprep.subr.mxu0 0.0
  %411 = vmatpush2.msra.mxu0 0.0
  %412 = vmatprep.subr.mxu0 0.0
  %413 = vmatpush2.msra.mxu0 0.0
  %414 = vmatprep.subr.mxu0 0.0
  %415 = vmatpush2.msra.mxu0 0.0
  %416 = vmatprep.subr.mxu0 0.0
  %417 = vmatpush2.msra.mxu0 0.0
  %418 = vmatprep.subr.mxu0 0.0
  %419 = vmatpush2.msra.mxu0 0.0
  %420 = vmatprep.subr.mxu0 0.0
  %421 = vmatpush2.msra.mxu0 0.0
  %422 = vmatprep.subr.mxu0 0.0
  %423 = vmatpush2.msra.mxu0 0.0
  %424 = vmatprep.mubr.f32.mxu0 0.0
  %425 = vmatmul.mubr.f32.gmra.mxu0 %v358
  %v426 = vpop.f32.mrf.mxu0
  %v427 = vadd.f32 %v355, %v426
  %v428 = vpop.f32.mrf.mxu0
  %429 = vdwg.mxu0
  %v430 = vadd.f32 %v350, %v427
  %v431 = vxor.u32 %v430, 2147483648
  %v432 = vmul.f32 %v431, 1.442695
  %v433 = vpow.pop %v432
  %v434 = vadd.f32 %v433, 1.0
  %v435 = vrcp.pop %v434
  %v436 = vmul.f32 1.0, %v435
  %438 = vrot.lane.b32.xlu0 %v427, 64
  %v439 = vpop.permute.xlu0 %438
  %v441 = vmul.f32 %v436, %v439
  %443 = vrot.lane.b32.xlu0 %v441, 64
  %v444 = vpop.permute.xlu0 %443
  %v446 = vadd.f32 %v350, %v444
  %v447 = vtanh.pop %v446
  %v448 = vsub.f32 1.0, %v436
  %450 = vrot.lane.b32.xlu0 %v447, 96
  %v451 = vpop.permute.xlu0 %450
  %v453 = vmul.f32 %v448, %v451
  %v454 = vmul.f32 %v436, 0.0
  %v455 = vadd.f32 %v453, %v454
  %v456 = vld [vmem:[%s338] sm:$0xff]
  %v458 = vlaneseq
  %v459 = vshrl.u32 %v458, 7
  %v460 = vsub.s32 0, %v459
  %v461 = vrot.slane %v349, %v460
  %463 = vmatprep.subr.mxu0 0.0
  %464 = vmatpush1.msra.mxu0 0.0
  %465 = vmatprep.subr.mxu0 0.0
  %466 = vmatpush1.msra.mxu0 0.0
  %467 = vmatprep.subr.mxu0 0.0
  %468 = vmatpush1.msra.mxu0 0.0
  %469 = vmatprep.subr.mxu0 0.0
  %470 = vmatpush1.msra.mxu0 0.0
  %471 = vmatprep.subr.mxu0 0.0
  %472 = vmatpush1.msra.mxu0 0.0
  %473 = vmatprep.subr.mxu0 0.0
  %474 = vmatpush1.msra.mxu0 0.0
  %475 = vmatprep.subr.mxu0 0.0
  %476 = vmatpush1.msra.mxu0 0.0
  %477 = vmatprep.subr.mxu0 0.0
  %478 = vmatpush1.msra.mxu0 0.0
  %479 = vmatprep.subr.mxu0 0.0
  %480 = vmatpush1.msra.mxu0 0.0
  %481 = vmatprep.subr.mxu0 0.0
  %482 = vmatpush1.msra.mxu0 0.0
  %483 = vmatprep.subr.mxu0 0.0
  %484 = vmatpush1.msra.mxu0 0.0
  %485 = vmatprep.subr.mxu0 0.0
  %486 = vmatpush1.msra.mxu0 0.0
  %487 = vmatprep.subr.mxu0 0.0
  %488 = vmatpush1.msra.mxu0 %v348
  %489 = vmatprep.subr.mxu0 0.0
  %490 = vmatpush1.msra.mxu0 %v347
  %491 = vmatprep.subr.mxu0 0.0
  %492 = vmatpush1.msra.mxu0 %v346
  %493 = vmatprep.subr.mxu0 0.0
  %494 = vmatpush1.msra.mxu0 %v345
  %495 = vmatprep.subr.mxu0 0.0
  %496 = vmatpush2.msra.mxu0 0.0
  %497 = vmatprep.subr.mxu0 0.0
  %498 = vmatpush2.msra.mxu0 0.0
  %499 = vmatprep.subr.mxu0 0.0
  %500 = vmatpush2.msra.mxu0 0.0
  %501 = vmatprep.subr.mxu0 0.0
  %502 = vmatpush2.msra.mxu0 0.0
  %503 = vmatprep.subr.mxu0 0.0
  %504 = vmatpush2.msra.mxu0 0.0
  %505 = vmatprep.subr.mxu0 0.0
  %506 = vmatpush2.msra.mxu0 0.0
  %507 = vmatprep.subr.mxu0 0.0
  %508 = vmatpush2.msra.mxu0 0.0
  %509 = vmatprep.subr.mxu0 0.0
  %510 = vmatpush2.msra.mxu0 0.0
  %511 = vmatprep.subr.mxu0 0.0
  %512 = vmatpush2.msra.mxu0 0.0
  %513 = vmatprep.subr.mxu0 0.0
  %514 = vmatpush2.msra.mxu0 0.0
  %515 = vmatprep.subr.mxu0 0.0
  %516 = vmatpush2.msra.mxu0 0.0
  %517 = vmatprep.subr.mxu0 0.0
  %518 = vmatpush2.msra.mxu0 0.0
  %519 = vmatprep.subr.mxu0 0.0
  %520 = vmatpush2.msra.mxu0 0.0
  %521 = vmatprep.subr.mxu0 0.0
  %522 = vmatpush2.msra.mxu0 0.0
  %523 = vmatprep.subr.mxu0 0.0
  %524 = vmatpush2.msra.mxu0 0.0
  %525 = vmatprep.subr.mxu0 0.0
  %526 = vmatpush2.msra.mxu0 0.0
  %527 = vmatprep.mubr.f32.mxu0 0.0
  %528 = vmatmul.mubr.f32.gmra.mxu0 %v358
  %v529 = vpop.f32.mrf.mxu0
  %v530 = vadd.f32 %v461, %v529
  %v531 = vpop.f32.mrf.mxu0
  %532 = vdwg.mxu0
  %v533 = vadd.f32 %v456, %v530
  %v534 = vxor.u32 %v533, 2147483648
  %v535 = vmul.f32 %v534, 1.442695
  %v536 = vpow.pop %v535
  %v537 = vadd.f32 %v536, 1.0
  %v538 = vrcp.pop %v537
  %v539 = vmul.f32 1.0, %v538
  %541 = vrot.lane.b32.xlu0 %v530, 64
  %v542 = vpop.permute.xlu0 %541
  %v544 = vmul.f32 %v539, %v542
  %546 = vrot.lane.b32.xlu0 %v544, 64
  %v547 = vpop.permute.xlu0 %546
  %v549 = vadd.f32 %v456, %v547
  %v550 = vtanh.pop %v549
  %v551 = vsub.f32 1.0, %v539
  %553 = vrot.lane.b32.xlu0 %v550, 96
  %v554 = vpop.permute.xlu0 %553
  %v556 = vmul.f32 %v551, %v554
  %v557 = vmul.f32 %v539, 0.0
  %v558 = vadd.f32 %v556, %v557
  %560 = vrot.lane.b32.xlu0 %v455, 96
  %v561 = vpop.permute.xlu0 %560
  %563 = vst.msk [vmem:[%s12] sm:$0xff] %vm63, %v561
  %565 = vrot.lane.b32.xlu0 %v558, 96
  %v566 = vpop.permute.xlu0 %565
  %s568 = scalar_lea.vmem %s13, 56
  %569 = vst.msk [vmem:[%s568] sm:$0xff] %vm63, %v566
  %v570 = vld [vmem:[%s312] sm:$0xff]
  %v571 = vsel %vm63, %v561, 0
  %573 = vmatprep.subr.mxu0 0.0
  %574 = vmatpush1.msra.mxu0 0.0
  %575 = vmatprep.subr.mxu0 0.0
  %576 = vmatpush1.msra.mxu0 0.0
  %577 = vmatprep.subr.mxu0 0.0
  %578 = vmatpush1.msra.mxu0 0.0
  %579 = vmatprep.subr.mxu0 0.0
  %580 = vmatpush1.msra.mxu0 0.0
  %581 = vmatprep.subr.mxu0 0.0
  %582 = vmatpush1.msra.mxu0 0.0
  %583 = vmatprep.subr.mxu0 0.0
  %584 = vmatpush1.msra.mxu0 0.0
  %585 = vmatprep.subr.mxu0 0.0
  %586 = vmatpush1.msra.mxu0 0.0
  %587 = vmatprep.subr.mxu0 0.0
  %588 = vmatpush1.msra.mxu0 0.0
  %589 = vmatprep.subr.mxu0 0.0
  %590 = vmatpush1.msra.mxu0 0.0
  %591 = vmatprep.subr.mxu0 0.0
  %592 = vmatpush1.msra.mxu0 0.0
  %593 = vmatprep.subr.mxu0 0.0
  %594 = vmatpush1.msra.mxu0 0.0
  %595 = vmatprep.subr.mxu0 0.0
  %596 = vmatpush1.msra.mxu0 0.0
  %597 = vmatprep.subr.mxu0 0.0
  %598 = vmatpush1.msra.mxu0 %v343
  %599 = vmatprep.subr.mxu0 0.0
  %600 = vmatpush1.msra.mxu0 %v342
  %601 = vmatprep.subr.mxu0 0.0
  %602 = vmatpush1.msra.mxu0 %v341
  %603 = vmatprep.subr.mxu0 0.0
  %604 = vmatpush1.msra.mxu0 %v340
  %605 = vmatprep.subr.mxu0 0.0
  %606 = vmatpush2.msra.mxu0 0.0
  %607 = vmatprep.subr.mxu0 0.0
  %608 = vmatpush2.msra.mxu0 0.0
  %609 = vmatprep.subr.mxu0 0.0
  %610 = vmatpush2.msra.mxu0 0.0
  %611 = vmatprep.subr.mxu0 0.0
  %612 = vmatpush2.msra.mxu0 0.0
  %613 = vmatprep.subr.mxu0 0.0
  %614 = vmatpush2.msra.mxu0 0.0
  %615 = vmatprep.subr.mxu0 0.0
  %616 = vmatpush2.msra.mxu0 0.0
  %617 = vmatprep.subr.mxu0 0.0
  %618 = vmatpush2.msra.mxu0 0.0
  %619 = vmatprep.subr.mxu0 0.0
  %620 = vmatpush2.msra.mxu0 0.0
  %621 = vmatprep.subr.mxu0 0.0
  %622 = vmatpush2.msra.mxu0 0.0
  %623 = vmatprep.subr.mxu0 0.0
  %624 = vmatpush2.msra.mxu0 0.0
  %625 = vmatprep.subr.mxu0 0.0
  %626 = vmatpush2.msra.mxu0 0.0
  %627 = vmatprep.subr.mxu0 0.0
  %628 = vmatpush2.msra.mxu0 0.0
  %629 = vmatprep.subr.mxu0 0.0
  %630 = vmatpush2.msra.mxu0 0.0
  %631 = vmatprep.subr.mxu0 0.0
  %632 = vmatpush2.msra.mxu0 0.0
  %633 = vmatprep.subr.mxu0 0.0
  %634 = vmatpush2.msra.mxu0 0.0
  %635 = vmatprep.subr.mxu0 0.0
  %636 = vmatpush2.msra.mxu0 0.0
  %637 = vmatprep.mubr.f32.mxu0 0.0
  %638 = vmatmul.mubr.f32.gmra.mxu0 %v571
  %v639 = vpop.f32.mrf.mxu0
  %v640 = vadd.f32 %v355, %v639
  %v641 = vpop.f32.mrf.mxu0
  %642 = vdwg.mxu0
  %v643 = vadd.f32 %v570, %v640
  %v644 = vxor.u32 %v643, 2147483648
  %v645 = vmul.f32 %v644, 1.442695
  %v646 = vpow.pop %v645
  %v647 = vadd.f32 %v646, 1.0
  %v648 = vrcp.pop %v647
  %v649 = vmul.f32 1.0, %v648
  %651 = vrot.lane.b32.xlu0 %v640, 64
  %v652 = vpop.permute.xlu0 %651
  %v654 = vmul.f32 %v649, %v652
  %656 = vrot.lane.b32.xlu0 %v654, 64
  %v657 = vpop.permute.xlu0 %656
  %v659 = vadd.f32 %v570, %v657
  %v660 = vtanh.pop %v659
  %v661 = vsub.f32 1.0, %v649
  %663 = vrot.lane.b32.xlu0 %v660, 96
  %v664 = vpop.permute.xlu0 %663
  %v666 = vmul.f32 %v661, %v664
  %v667 = vmul.f32 %v649, %v455
  %v668 = vadd.f32 %v666, %v667
  %v669 = vld [vmem:[%s334] sm:$0xff]
  %v670 = vsel %vm63, %v566, 0
  %672 = vmatprep.subr.mxu0 0.0
  %673 = vmatpush1.msra.mxu0 0.0
  %674 = vmatprep.subr.mxu0 0.0
  %675 = vmatpush1.msra.mxu0 0.0
  %676 = vmatprep.subr.mxu0 0.0
  %677 = vmatpush1.msra.mxu0 0.0
  %678 = vmatprep.subr.mxu0 0.0
  %679 = vmatpush1.msra.mxu0 0.0
  %680 = vmatprep.subr.mxu0 0.0
  %681 = vmatpush1.msra.mxu0 0.0
  %682 = vmatprep.subr.mxu0 0.0
  %683 = vmatpush1.msra.mxu0 0.0
  %684 = vmatprep.subr.mxu0 0.0
  %685 = vmatpush1.msra.mxu0 0.0
  %686 = vmatprep.subr.mxu0 0.0
  %687 = vmatpush1.msra.mxu0 0.0
  %688 = vmatprep.subr.mxu0 0.0
  %689 = vmatpush1.msra.mxu0 0.0
  %690 = vmatprep.subr.mxu0 0.0
  %691 = vmatpush1.msra.mxu0 0.0
  %692 = vmatprep.subr.mxu0 0.0
  %693 = vmatpush1.msra.mxu0 0.0
  %694 = vmatprep.subr.mxu0 0.0
  %695 = vmatpush1.msra.mxu0 0.0
  %696 = vmatprep.subr.mxu0 0.0
  %697 = vmatpush1.msra.mxu0 %v348
  %698 = vmatprep.subr.mxu0 0.0
  %699 = vmatpush1.msra.mxu0 %v347
  %700 = vmatprep.subr.mxu0 0.0
  %701 = vmatpush1.msra.mxu0 %v346
  %702 = vmatprep.subr.mxu0 0.0
  %703 = vmatpush1.msra.mxu0 %v345
  %704 = vmatprep.subr.mxu0 0.0
  %705 = vmatpush2.msra.mxu0 0.0
  %706 = vmatprep.subr.mxu0 0.0
  %707 = vmatpush2.msra.mxu0 0.0
  %708 = vmatprep.subr.mxu0 0.0
  %709 = vmatpush2.msra.mxu0 0.0
  %710 = vmatprep.subr.mxu0 0.0
  %711 = vmatpush2.msra.mxu0 0.0
  %712 = vmatprep.subr.mxu0 0.0
  %713 = vmatpush2.msra.mxu0 0.0
  %714 = vmatprep.subr.mxu0 0.0
  %715 = vmatpush2.msra.mxu0 0.0
  %716 = vmatprep.subr.mxu0 0.0
  %717 = vmatpush2.msra.mxu0 0.0
  %718 = vmatprep.subr.mxu0 0.0
  %719 = vmatpush2.msra.mxu0 0.0
  %720 = vmatprep.subr.mxu0 0.0
  %721 = vmatpush2.msra.mxu0 0.0
  %722 = vmatprep.subr.mxu0 0.0
  %723 = vmatpush2.msra.mxu0 0.0
  %724 = vmatprep.subr.mxu0 0.0
  %725 = vmatpush2.msra.mxu0 0.0
  %726 = vmatprep.subr.mxu0 0.0
  %727 = vmatpush2.msra.mxu0 0.0
  %728 = vmatprep.subr.mxu0 0.0
  %729 = vmatpush2.msra.mxu0 0.0
  %730 = vmatprep.subr.mxu0 0.0
  %731 = vmatpush2.msra.mxu0 0.0
  %732 = vmatprep.subr.mxu0 0.0
  %733 = vmatpush2.msra.mxu0 0.0
  %734 = vmatprep.subr.mxu0 0.0
  %735 = vmatpush2.msra.mxu0 0.0
  %736 = vmatprep.mubr.f32.mxu0 0.0
  %737 = vmatmul.mubr.f32.gmra.mxu0 %v670
  %v738 = vpop.f32.mrf.mxu0
  %v739 = vadd.f32 %v461, %v738
  %v740 = vpop.f32.mrf.mxu0
  %741 = vdwg.mxu0
  %v742 = vadd.f32 %v669, %v739
  %v743 = vxor.u32 %v742, 2147483648
  %v744 = vmul.f32 %v743, 1.442695
  %v745 = vpow.pop %v744
  %v746 = vadd.f32 %v745, 1.0
  %v747 = vrcp.pop %v746
  %v748 = vmul.f32 1.0, %v747
  %750 = vrot.lane.b32.xlu0 %v739, 64
  %v751 = vpop.permute.xlu0 %750
  %v753 = vmul.f32 %v748, %v751
  %755 = vrot.lane.b32.xlu0 %v753, 64
  %v756 = vpop.permute.xlu0 %755
  %v758 = vadd.f32 %v669, %v756
  %v759 = vtanh.pop %v758
  %v760 = vsub.f32 1.0, %v748
  %762 = vrot.lane.b32.xlu0 %v759, 96
  %v763 = vpop.permute.xlu0 %762
  %v765 = vmul.f32 %v760, %v763
  %v766 = vmul.f32 %v748, %v558
  %v767 = vadd.f32 %v765, %v766
  %769 = vrot.lane.b32.xlu0 %v668, 96
  %v770 = vpop.permute.xlu0 %769
  %s772 = scalar_lea.vmem %s12, 8
  %773 = vst.msk [vmem:[%s772] sm:$0xff] %vm63, %v770
  %775 = vrot.lane.b32.xlu0 %v767, 96
  %v776 = vpop.permute.xlu0 %775
  %s778 = scalar_lea.vmem %s13, 48
  %779 = vst.msk [vmem:[%s778] sm:$0xff] %vm63, %v776
  %v780 = vld [vmem:[%s316] sm:$0xff]
  %v781 = vsel %vm63, %v770, 0
  %783 = vmatprep.subr.mxu0 0.0
  %784 = vmatpush1.msra.mxu0 0.0
  %785 = vmatprep.subr.mxu0 0.0
  %786 = vmatpush1.msra.mxu0 0.0
  %787 = vmatprep.subr.mxu0 0.0
  %788 = vmatpush1.msra.mxu0 0.0
  %789 = vmatprep.subr.mxu0 0.0
  %790 = vmatpush1.msra.mxu0 0.0
  %791 = vmatprep.subr.mxu0 0.0
  %792 = vmatpush1.msra.mxu0 0.0
  %793 = vmatprep.subr.mxu0 0.0
  %794 = vmatpush1.msra.mxu0 0.0
  %795 = vmatprep.subr.mxu0 0.0
  %796 = vmatpush1.msra.mxu0 0.0
  %797 = vmatprep.subr.mxu0 0.0
  %798 = vmatpush1.msra.mxu0 0.0
  %799 = vmatprep.subr.mxu0 0.0
  %800 = vmatpush1.msra.mxu0 0.0
  %801 = vmatprep.subr.mxu0 0.0
  %802 = vmatpush1.msra.mxu0 0.0
  %803 = vmatprep.subr.mxu0 0.0
  %804 = vmatpush1.msra.mxu0 0.0
  %805 = vmatprep.subr.mxu0 0.0
  %806 = vmatpush1.msra.mxu0 0.0
  %807 = vmatprep.subr.mxu0 0.0
  %808 = vmatpush1.msra.mxu0 %v343
  %809 = vmatprep.subr.mxu0 0.0
  %810 = vmatpush1.msra.mxu0 %v342
  %811 = vmatprep.subr.mxu0 0.0
  %812 = vmatpush1.msra.mxu0 %v341
  %813 = vmatprep.subr.mxu0 0.0
  %814 = vmatpush1.msra.mxu0 %v340
  %815 = vmatprep.subr.mxu0 0.0
  %816 = vmatpush2.msra.mxu0 0.0
  %817 = vmatprep.subr.mxu0 0.0
  %818 = vmatpush2.msra.mxu0 0.0
  %819 = vmatprep.subr.mxu0 0.0
  %820 = vmatpush2.msra.mxu0 0.0
  %821 = vmatprep.subr.mxu0 0.0
  %822 = vmatpush2.msra.mxu0 0.0
  %823 = vmatprep.subr.mxu0 0.0
  %824 = vmatpush2.msra.mxu0 0.0
  %825 = vmatprep.subr.mxu0 0.0
  %826 = vmatpush2.msra.mxu0 0.0
  %827 = vmatprep.subr.mxu0 0.0
  %828 = vmatpush2.msra.mxu0 0.0
  %829 = vmatprep.subr.mxu0 0.0
  %830 = vmatpush2.msra.mxu0 0.0
  %831 = vmatprep.subr.mxu0 0.0
  %832 = vmatpush2.msra.mxu0 0.0
  %833 = vmatprep.subr.mxu0 0.0
  %834 = vmatpush2.msra.mxu0 0.0
  %835 = vmatprep.subr.mxu0 0.0
  %836 = vmatpush2.msra.mxu0 0.0
  %837 = vmatprep.subr.mxu0 0.0
  %838 = vmatpush2.msra.mxu0 0.0
  %839 = vmatprep.subr.mxu0 0.0
  %840 = vmatpush2.msra.mxu0 0.0
  %841 = vmatprep.subr.mxu0 0.0
  %842 = vmatpush2.msra.mxu0 0.0
  %843 = vmatprep.subr.mxu0 0.0
  %844 = vmatpush2.msra.mxu0 0.0
  %845 = vmatprep.subr.mxu0 0.0
  %846 = vmatpush2.msra.mxu0 0.0
  %847 = vmatprep.mubr.f32.mxu0 0.0
  %848 = vmatmul.mubr.f32.gmra.mxu0 %v781
  %v849 = vpop.f32.mrf.mxu0
  %v850 = vadd.f32 %v355, %v849
  %v851 = vpop.f32.mrf.mxu0
  %852 = vdwg.mxu0
  %v853 = vadd.f32 %v780, %v850
  %v854 = vxor.u32 %v853, 2147483648
  %v855 = vmul.f32 %v854, 1.442695
  %v856 = vpow.pop %v855
  %v857 = vadd.f32 %v856, 1.0
  %v858 = vrcp.pop %v857
  %v859 = vmul.f32 1.0, %v858
  %861 = vrot.lane.b32.xlu0 %v850, 64
  %v862 = vpop.permute.xlu0 %861
  %v864 = vmul.f32 %v859, %v862
  %866 = vrot.lane.b32.xlu0 %v864, 64
  %v867 = vpop.permute.xlu0 %866
  %v869 = vadd.f32 %v780, %v867
  %v870 = vtanh.pop %v869
  %v871 = vsub.f32 1.0, %v859
  %873 = vrot.lane.b32.xlu0 %v870, 96
  %v874 = vpop.permute.xlu0 %873
  %v876 = vmul.f32 %v871, %v874
  %v877 = vmul.f32 %v859, %v668
  %v878 = vadd.f32 %v876, %v877
  %v879 = vld [vmem:[%s330] sm:$0xff]
  %v880 = vsel %vm63, %v776, 0
  %882 = vmatprep.subr.mxu0 0.0
  %883 = vmatpush1.msra.mxu0 0.0
  %884 = vmatprep.subr.mxu0 0.0
  %885 = vmatpush1.msra.mxu0 0.0
  %886 = vmatprep.subr.mxu0 0.0
  %887 = vmatpush1.msra.mxu0 0.0
  %888 = vmatprep.subr.mxu0 0.0
  %889 = vmatpush1.msra.mxu0 0.0
  %890 = vmatprep.subr.mxu0 0.0
  %891 = vmatpush1.msra.mxu0 0.0
  %892 = vmatprep.subr.mxu0 0.0
  %893 = vmatpush1.msra.mxu0 0.0
  %894 = vmatprep.subr.mxu0 0.0
  %895 = vmatpush1.msra.mxu0 0.0
  %896 = vmatprep.subr.mxu0 0.0
  %897 = vmatpush1.msra.mxu0 0.0
  %898 = vmatprep.subr.mxu0 0.0
  %899 = vmatpush1.msra.mxu0 0.0
  %900 = vmatprep.subr.mxu0 0.0
  %901 = vmatpush1.msra.mxu0 0.0
  %902 = vmatprep.subr.mxu0 0.0
  %903 = vmatpush1.msra.mxu0 0.0
  %904 = vmatprep.subr.mxu0 0.0
  %905 = vmatpush1.msra.mxu0 0.0
  %906 = vmatprep.subr.mxu0 0.0
  %907 = vmatpush1.msra.mxu0 %v348
  %908 = vmatprep.subr.mxu0 0.0
  %909 = vmatpush1.msra.mxu0 %v347
  %910 = vmatprep.subr.mxu0 0.0
  %911 = vmatpush1.msra.mxu0 %v346
  %912 = vmatprep.subr.mxu0 0.0
  %913 = vmatpush1.msra.mxu0 %v345
  %914 = vmatprep.subr.mxu0 0.0
  %915 = vmatpush2.msra.mxu0 0.0
  %916 = vmatprep.subr.mxu0 0.0
  %917 = vmatpush2.msra.mxu0 0.0
  %918 = vmatprep.subr.mxu0 0.0
  %919 = vmatpush2.msra.mxu0 0.0
  %920 = vmatprep.subr.mxu0 0.0
  %921 = vmatpush2.msra.mxu0 0.0
  %922 = vmatprep.subr.mxu0 0.0
  %923 = vmatpush2.msra.mxu0 0.0
  %924 = vmatprep.subr.mxu0 0.0
  %925 = vmatpush2.msra.mxu0 0.0
  %926 = vmatprep.subr.mxu0 0.0
  %927 = vmatpush2.msra.mxu0 0.0
  %928 = vmatprep.subr.mxu0 0.0
  %929 = vmatpush2.msra.mxu0 0.0
  %930 = vmatprep.subr.mxu0 0.0
  %931 = vmatpush2.msra.mxu0 0.0
  %932 = vmatprep.subr.mxu0 0.0
  %933 = vmatpush2.msra.mxu0 0.0
  %934 = vmatprep.subr.mxu0 0.0
  %935 = vmatpush2.msra.mxu0 0.0
  %936 = vmatprep.subr.mxu0 0.0
  %937 = vmatpush2.msra.mxu0 0.0
  %938 = vmatprep.subr.mxu0 0.0
  %939 = vmatpush2.msra.mxu0 0.0
  %940 = vmatprep.subr.mxu0 0.0
  %941 = vmatpush2.msra.mxu0 0.0
  %942 = vmatprep.subr.mxu0 0.0
  %943 = vmatpush2.msra.mxu0 0.0
  %944 = vmatprep.subr.mxu0 0.0
  %945 = vmatpush2.msra.mxu0 0.0
  %946 = vmatprep.mubr.f32.mxu0 0.0
  %947 = vmatmul.mubr.f32.gmra.mxu0 %v880
  %v948 = vpop.f32.mrf.mxu0
  %v949 = vadd.f32 %v461, %v948
  %v950 = vpop.f32.mrf.mxu0
  %951 = vdwg.mxu0
  %v952 = vadd.f32 %v879, %v949
  %v953 = vxor.u32 %v952, 2147483648
  %v954 = vmul.f32 %v953, 1.442695
  %v955 = vpow.pop %v954
  %v956 = vadd.f32 %v955, 1.0
  %v957 = vrcp.pop %v956
  %v958 = vmul.f32 1.0, %v957
  %960 = vrot.lane.b32.xlu0 %v949, 64
  %v961 = vpop.permute.xlu0 %960
  %v963 = vmul.f32 %v958, %v961
  %965 = vrot.lane.b32.xlu0 %v963, 64
  %v966 = vpop.permute.xlu0 %965
  %v968 = vadd.f32 %v879, %v966
  %v969 = vtanh.pop %v968
  %v970 = vsub.f32 1.0, %v958
  %972 = vrot.lane.b32.xlu0 %v969, 96
  %v973 = vpop.permute.xlu0 %972
  %v975 = vmul.f32 %v970, %v973
  %v976 = vmul.f32 %v958, %v767
  %v977 = vadd.f32 %v975, %v976
  %979 = vrot.lane.b32.xlu0 %v878, 96
  %v980 = vpop.permute.xlu0 %979
  %s982 = scalar_lea.vmem %s12, 16
  %983 = vst.msk [vmem:[%s982] sm:$0xff] %vm63, %v980
  %985 = vrot.lane.b32.xlu0 %v977, 96
  %v986 = vpop.permute.xlu0 %985
  %s988 = scalar_lea.vmem %s13, 40
  %989 = vst.msk [vmem:[%s988] sm:$0xff] %vm63, %v986
  %v990 = vld [vmem:[%s320] sm:$0xff]
  %v991 = vsel %vm63, %v980, 0
  %993 = vmatprep.subr.mxu0 0.0
  %994 = vmatpush1.msra.mxu0 0.0
  %995 = vmatprep.subr.mxu0 0.0
  %996 = vmatpush1.msra.mxu0 0.0
  %997 = vmatprep.subr.mxu0 0.0
  %998 = vmatpush1.msra.mxu0 0.0
  %999 = vmatprep.subr.mxu0 0.0
  %1000 = vmatpush1.msra.mxu0 0.0
  %1001 = vmatprep.subr.mxu0 0.0
  %1002 = vmatpush1.msra.mxu0 0.0
  %1003 = vmatprep.subr.mxu0 0.0
  %1004 = vmatpush1.msra.mxu0 0.0
  %1005 = vmatprep.subr.mxu0 0.0
  %1006 = vmatpush1.msra.mxu0 0.0
  %1007 = vmatprep.subr.mxu0 0.0
  %1008 = vmatpush1.msra.mxu0 0.0
  %1009 = vmatprep.subr.mxu0 0.0
  %1010 = vmatpush1.msra.mxu0 0.0
  %1011 = vmatprep.subr.mxu0 0.0
  %1012 = vmatpush1.msra.mxu0 0.0
  %1013 = vmatprep.subr.mxu0 0.0
  %1014 = vmatpush1.msra.mxu0 0.0
  %1015 = vmatprep.subr.mxu0 0.0
  %1016 = vmatpush1.msra.mxu0 0.0
  %1017 = vmatprep.subr.mxu0 0.0
  %1018 = vmatpush1.msra.mxu0 %v343
  %1019 = vmatprep.subr.mxu0 0.0
  %1020 = vmatpush1.msra.mxu0 %v342
  %1021 = vmatprep.subr.mxu0 0.0
  %1022 = vmatpush1.msra.mxu0 %v341
  %1023 = vmatprep.subr.mxu0 0.0
  %1024 = vmatpush1.msra.mxu0 %v340
  %1025 = vmatprep.subr.mxu0 0.0
  %1026 = vmatpush2.msra.mxu0 0.0
  %1027 = vmatprep.subr.mxu0 0.0
  %1028 = vmatpush2.msra.mxu0 0.0
  %1029 = vmatprep.subr.mxu0 0.0
  %1030 = vmatpush2.msra.mxu0 0.0
  %1031 = vmatprep.subr.mxu0 0.0
  %1032 = vmatpush2.msra.mxu0 0.0
  %1033 = vmatprep.subr.mxu0 0.0
  %1034 = vmatpush2.msra.mxu0 0.0
  %1035 = vmatprep.subr.mxu0 0.0
  %1036 = vmatpush2.msra.mxu0 0.0
  %1037 = vmatprep.subr.mxu0 0.0
  %1038 = vmatpush2.msra.mxu0 0.0
  %1039 = vmatprep.subr.mxu0 0.0
  %1040 = vmatpush2.msra.mxu0 0.0
  %1041 = vmatprep.subr.mxu0 0.0
  %1042 = vmatpush2.msra.mxu0 0.0
  %1043 = vmatprep.subr.mxu0 0.0
  %1044 = vmatpush2.msra.mxu0 0.0
  %1045 = vmatprep.subr.mxu0 0.0
  %1046 = vmatpush2.msra.mxu0 0.0
  %1047 = vmatprep.subr.mxu0 0.0
  %1048 = vmatpush2.msra.mxu0 0.0
  %1049 = vmatprep.subr.mxu0 0.0
  %1050 = vmatpush2.msra.mxu0 0.0
  %1051 = vmatprep.subr.mxu0 0.0
  %1052 = vmatpush2.msra.mxu0 0.0
  %1053 = vmatprep.subr.mxu0 0.0
  %1054 = vmatpush2.msra.mxu0 0.0
  %1055 = vmatprep.subr.mxu0 0.0
  %1056 = vmatpush2.msra.mxu0 0.0
  %1057 = vmatprep.mubr.f32.mxu0 0.0
  %1058 = vmatmul.mubr.f32.gmra.mxu0 %v991
  %v1059 = vpop.f32.mrf.mxu0
  %v1060 = vadd.f32 %v355, %v1059
  %v1061 = vpop.f32.mrf.mxu0
  %1062 = vdwg.mxu0
  %v1063 = vadd.f32 %v990, %v1060
  %v1064 = vxor.u32 %v1063, 2147483648
  %v1065 = vmul.f32 %v1064, 1.442695
  %v1066 = vpow.pop %v1065
  %v1067 = vadd.f32 %v1066, 1.0
  %v1068 = vrcp.pop %v1067
  %v1069 = vmul.f32 1.0, %v1068
  %1071 = vrot.lane.b32.xlu0 %v1060, 64
  %v1072 = vpop.permute.xlu0 %1071
  %v1074 = vmul.f32 %v1069, %v1072
  %1076 = vrot.lane.b32.xlu0 %v1074, 64
  %v1077 = vpop.permute.xlu0 %1076
  %v1079 = vadd.f32 %v990, %v1077
  %v1080 = vtanh.pop %v1079
  %v1081 = vsub.f32 1.0, %v1069
  %1083 = vrot.lane.b32.xlu0 %v1080, 96
  %v1084 = vpop.permute.xlu0 %1083
  %v1086 = vmul.f32 %v1081, %v1084
  %v1087 = vmul.f32 %v1069, %v878
  %v1088 = vadd.f32 %v1086, %v1087
  %v1089 = vld [vmem:[%s326] sm:$0xff]
  %v1090 = vsel %vm63, %v986, 0
  %1092 = vmatprep.subr.mxu0 0.0
  %1093 = vmatpush1.msra.mxu0 0.0
  %1094 = vmatprep.subr.mxu0 0.0
  %1095 = vmatpush1.msra.mxu0 0.0
  %1096 = vmatprep.subr.mxu0 0.0
  %1097 = vmatpush1.msra.mxu0 0.0
  %1098 = vmatprep.subr.mxu0 0.0
  %1099 = vmatpush1.msra.mxu0 0.0
  %1100 = vmatprep.subr.mxu0 0.0
  %1101 = vmatpush1.msra.mxu0 0.0
  %1102 = vmatprep.subr.mxu0 0.0
  %1103 = vmatpush1.msra.mxu0 0.0
  %1104 = vmatprep.subr.mxu0 0.0
  %1105 = vmatpush1.msra.mxu0 0.0
  %1106 = vmatprep.subr.mxu0 0.0
  %1107 = vmatpush1.msra.mxu0 0.0
  %1108 = vmatprep.subr.mxu0 0.0
  %1109 = vmatpush1.msra.mxu0 0.0
  %1110 = vmatprep.subr.mxu0 0.0
  %1111 = vmatpush1.msra.mxu0 0.0
  %1112 = vmatprep.subr.mxu0 0.0
  %1113 = vmatpush1.msra.mxu0 0.0
  %1114 = vmatprep.subr.mxu0 0.0
  %1115 = vmatpush1.msra.mxu0 0.0
  %1116 = vmatprep.subr.mxu0 0.0
  %1117 = vmatpush1.msra.mxu0 %v348
  %1118 = vmatprep.subr.mxu0 0.0
  %1119 = vmatpush1.msra.mxu0 %v347
  %1120 = vmatprep.subr.mxu0 0.0
  %1121 = vmatpush1.msra.mxu0 %v346
  %1122 = vmatprep.subr.mxu0 0.0
  %1123 = vmatpush1.msra.mxu0 %v345
  %1124 = vmatprep.subr.mxu0 0.0
  %1125 = vmatpush2.msra.mxu0 0.0
  %1126 = vmatprep.subr.mxu0 0.0
  %1127 = vmatpush2.msra.mxu0 0.0
  %1128 = vmatprep.subr.mxu0 0.0
  %1129 = vmatpush2.msra.mxu0 0.0
  %1130 = vmatprep.subr.mxu0 0.0
  %1131 = vmatpush2.msra.mxu0 0.0
  %1132 = vmatprep.subr.mxu0 0.0
  %1133 = vmatpush2.msra.mxu0 0.0
  %1134 = vmatprep.subr.mxu0 0.0
  %1135 = vmatpush2.msra.mxu0 0.0
  %1136 = vmatprep.subr.mxu0 0.0
  %1137 = vmatpush2.msra.mxu0 0.0
  %1138 = vmatprep.subr.mxu0 0.0
  %1139 = vmatpush2.msra.mxu0 0.0
  %1140 = vmatprep.subr.mxu0 0.0
  %1141 = vmatpush2.msra.mxu0 0.0
  %1142 = vmatprep.subr.mxu0 0.0
  %1143 = vmatpush2.msra.mxu0 0.0
  %1144 = vmatprep.subr.mxu0 0.0
  %1145 = vmatpush2.msra.mxu0 0.0
  %1146 = vmatprep.subr.mxu0 0.0
  %1147 = vmatpush2.msra.mxu0 0.0
  %1148 = vmatprep.subr.mxu0 0.0
  %1149 = vmatpush2.msra.mxu0 0.0
  %1150 = vmatprep.subr.mxu0 0.0
  %1151 = vmatpush2.msra.mxu0 0.0
  %1152 = vmatprep.subr.mxu0 0.0
  %1153 = vmatpush2.msra.mxu0 0.0
  %1154 = vmatprep.subr.mxu0 0.0
  %1155 = vmatpush2.msra.mxu0 0.0
  %1156 = vmatprep.mubr.f32.mxu0 0.0
  %1157 = vmatmul.mubr.f32.gmra.mxu0 %v1090
  %v1158 = vpop.f32.mrf.mxu0
  %v1159 = vadd.f32 %v461, %v1158
  %v1160 = vpop.f32.mrf.mxu0
  %1161 = vdwg.mxu0
  %v1162 = vadd.f32 %v1089, %v1159
  %v1163 = vxor.u32 %v1162, 2147483648
  %v1164 = vmul.f32 %v1163, 1.442695
  %v1165 = vpow.pop %v1164
  %v1166 = vadd.f32 %v1165, 1.0
  %v1167 = vrcp.pop %v1166
  %v1168 = vmul.f32 1.0, %v1167
  %1170 = vrot.lane.b32.xlu0 %v1159, 64
  %v1171 = vpop.permute.xlu0 %1170
  %v1173 = vmul.f32 %v1168, %v1171
  %1175 = vrot.lane.b32.xlu0 %v1173, 64
  %v1176 = vpop.permute.xlu0 %1175
  %v1178 = vadd.f32 %v1089, %v1176
  %v1179 = vtanh.pop %v1178
  %v1180 = vsub.f32 1.0, %v1168
  %1182 = vrot.lane.b32.xlu0 %v1179, 96
  %v1183 = vpop.permute.xlu0 %1182
  %v1185 = vmul.f32 %v1180, %v1183
  %v1186 = vmul.f32 %v1168, %v977
  %v1187 = vadd.f32 %v1185, %v1186
  %1189 = vrot.lane.b32.xlu0 %v1088, 96
  %v1190 = vpop.permute.xlu0 %1189
  %s1192 = scalar_lea.vmem %s12, 24
  %1193 = vst.msk [vmem:[%s1192] sm:$0xff] %vm63, %v1190
  %1195 = vrot.lane.b32.xlu0 %v1187, 96
  %v1196 = vpop.permute.xlu0 %1195
  %s1198 = scalar_lea.vmem %s13, 32
  %1199 = vst.msk [vmem:[%s1198] sm:$0xff] %vm63, %v1196
  %v1200 = vld [vmem:[%s324] sm:$0xff]
  %v1201 = vsel %vm63, %v1190, 0
  %1203 = vmatprep.subr.mxu0 0.0
  %1204 = vmatpush1.msra.mxu0 0.0
  %1205 = vmatprep.subr.mxu0 0.0
  %1206 = vmatpush1.msra.mxu0 0.0
  %1207 = vmatprep.subr.mxu0 0.0
  %1208 = vmatpush1.msra.mxu0 0.0
  %1209 = vmatprep.subr.mxu0 0.0
  %1210 = vmatpush1.msra.mxu0 0.0
  %1211 = vmatprep.subr.mxu0 0.0
  %1212 = vmatpush1.msra.mxu0 0.0
  %1213 = vmatprep.subr.mxu0 0.0
  %1214 = vmatpush1.msra.mxu0 0.0
  %1215 = vmatprep.subr.mxu0 0.0
  %1216 = vmatpush1.msra.mxu0 0.0
  %1217 = vmatprep.subr.mxu0 0.0
  %1218 = vmatpush1.msra.mxu0 0.0
  %1219 = vmatprep.subr.mxu0 0.0
  %1220 = vmatpush1.msra.mxu0 0.0
  %1221 = vmatprep.subr.mxu0 0.0
  %1222 = vmatpush1.msra.mxu0 0.0
  %1223 = vmatprep.subr.mxu0 0.0
  %1224 = vmatpush1.msra.mxu0 0.0
  %1225 = vmatprep.subr.mxu0 0.0
  %1226 = vmatpush1.msra.mxu0 0.0
  %1227 = vmatprep.subr.mxu0 0.0
  %1228 = vmatpush1.msra.mxu0 %v343
  %1229 = vmatprep.subr.mxu0 0.0
  %1230 = vmatpush1.msra.mxu0 %v342
  %1231 = vmatprep.subr.mxu0 0.0
  %1232 = vmatpush1.msra.mxu0 %v341
  %1233 = vmatprep.subr.mxu0 0.0
  %1234 = vmatpush1.msra.mxu0 %v340
  %1235 = vmatprep.subr.mxu0 0.0
  %1236 = vmatpush2.msra.mxu0 0.0
  %1237 = vmatprep.subr.mxu0 0.0
  %1238 = vmatpush2.msra.mxu0 0.0
  %1239 = vmatprep.subr.mxu0 0.0
  %1240 = vmatpush2.msra.mxu0 0.0
  %1241 = vmatprep.subr.mxu0 0.0
  %1242 = vmatpush2.msra.mxu0 0.0
  %1243 = vmatprep.subr.mxu0 0.0
  %1244 = vmatpush2.msra.mxu0 0.0
  %1245 = vmatprep.subr.mxu0 0.0
  %1246 = vmatpush2.msra.mxu0 0.0
  %1247 = vmatprep.subr.mxu0 0.0
  %1248 = vmatpush2.msra.mxu0 0.0
  %1249 = vmatprep.subr.mxu0 0.0
  %1250 = vmatpush2.msra.mxu0 0.0
  %1251 = vmatprep.subr.mxu0 0.0
  %1252 = vmatpush2.msra.mxu0 0.0
  %1253 = vmatprep.subr.mxu0 0.0
  %1254 = vmatpush2.msra.mxu0 0.0
  %1255 = vmatprep.subr.mxu0 0.0
  %1256 = vmatpush2.msra.mxu0 0.0
  %1257 = vmatprep.subr.mxu0 0.0
  %1258 = vmatpush2.msra.mxu0 0.0
  %1259 = vmatprep.subr.mxu0 0.0
  %1260 = vmatpush2.msra.mxu0 0.0
  %1261 = vmatprep.subr.mxu0 0.0
  %1262 = vmatpush2.msra.mxu0 0.0
  %1263 = vmatprep.subr.mxu0 0.0
  %1264 = vmatpush2.msra.mxu0 0.0
  %1265 = vmatprep.subr.mxu0 0.0
  %1266 = vmatpush2.msra.mxu0 0.0
  %1267 = vmatprep.mubr.f32.mxu0 0.0
  %1268 = vmatmul.mubr.f32.gmra.mxu0 %v1201
  %v1269 = vpop.f32.mrf.mxu0
  %v1270 = vadd.f32 %v355, %v1269
  %v1271 = vpop.f32.mrf.mxu0
  %1272 = vdwg.mxu0
  %v1273 = vadd.f32 %v1200, %v1270
  %v1274 = vxor.u32 %v1273, 2147483648
  %v1275 = vmul.f32 %v1274, 1.442695
  %v1276 = vpow.pop %v1275
  %v1277 = vadd.f32 %v1276, 1.0
  %v1278 = vrcp.pop %v1277
  %v1279 = vmul.f32 1.0, %v1278
  %1281 = vrot.lane.b32.xlu0 %v1270, 64
  %v1282 = vpop.permute.xlu0 %1281
  %v1284 = vmul.f32 %v1279, %v1282
  %1286 = vrot.lane.b32.xlu0 %v1284, 64
  %v1287 = vpop.permute.xlu0 %1286
  %v1289 = vadd.f32 %v1200, %v1287
  %v1290 = vtanh.pop %v1289
  %v1291 = vsub.f32 1.0, %v1279
  %1293 = vrot.lane.b32.xlu0 %v1290, 96
  %v1294 = vpop.permute.xlu0 %1293
  %v1296 = vmul.f32 %v1291, %v1294
  %v1297 = vmul.f32 %v1279, %v1088
  %v1298 = vadd.f32 %v1296, %v1297
  %v1299 = vld [vmem:[%s322] sm:$0xff]
  %v1300 = vsel %vm63, %v1196, 0
  %1302 = vmatprep.subr.mxu0 0.0
  %1303 = vmatpush1.msra.mxu0 0.0
  %1304 = vmatprep.subr.mxu0 0.0
  %1305 = vmatpush1.msra.mxu0 0.0
  %1306 = vmatprep.subr.mxu0 0.0
  %1307 = vmatpush1.msra.mxu0 0.0
  %1308 = vmatprep.subr.mxu0 0.0
  %1309 = vmatpush1.msra.mxu0 0.0
  %1310 = vmatprep.subr.mxu0 0.0
  %1311 = vmatpush1.msra.mxu0 0.0
  %1312 = vmatprep.subr.mxu0 0.0
  %1313 = vmatpush1.msra.mxu0 0.0
  %1314 = vmatprep.subr.mxu0 0.0
  %1315 = vmatpush1.msra.mxu0 0.0
  %1316 = vmatprep.subr.mxu0 0.0
  %1317 = vmatpush1.msra.mxu0 0.0
  %1318 = vmatprep.subr.mxu0 0.0
  %1319 = vmatpush1.msra.mxu0 0.0
  %1320 = vmatprep.subr.mxu0 0.0
  %1321 = vmatpush1.msra.mxu0 0.0
  %1322 = vmatprep.subr.mxu0 0.0
  %1323 = vmatpush1.msra.mxu0 0.0
  %1324 = vmatprep.subr.mxu0 0.0
  %1325 = vmatpush1.msra.mxu0 0.0
  %1326 = vmatprep.subr.mxu0 0.0
  %1327 = vmatpush1.msra.mxu0 %v348
  %1328 = vmatprep.subr.mxu0 0.0
  %1329 = vmatpush1.msra.mxu0 %v347
  %1330 = vmatprep.subr.mxu0 0.0
  %1331 = vmatpush1.msra.mxu0 %v346
  %1332 = vmatprep.subr.mxu0 0.0
  %1333 = vmatpush1.msra.mxu0 %v345
  %1334 = vmatprep.subr.mxu0 0.0
  %1335 = vmatpush2.msra.mxu0 0.0
  %1336 = vmatprep.subr.mxu0 0.0
  %1337 = vmatpush2.msra.mxu0 0.0
  %1338 = vmatprep.subr.mxu0 0.0
  %1339 = vmatpush2.msra.mxu0 0.0
  %1340 = vmatprep.subr.mxu0 0.0
  %1341 = vmatpush2.msra.mxu0 0.0
  %1342 = vmatprep.subr.mxu0 0.0
  %1343 = vmatpush2.msra.mxu0 0.0
  %1344 = vmatprep.subr.mxu0 0.0
  %1345 = vmatpush2.msra.mxu0 0.0
  %1346 = vmatprep.subr.mxu0 0.0
  %1347 = vmatpush2.msra.mxu0 0.0
  %1348 = vmatprep.subr.mxu0 0.0
  %1349 = vmatpush2.msra.mxu0 0.0
  %1350 = vmatprep.subr.mxu0 0.0
  %1351 = vmatpush2.msra.mxu0 0.0
  %1352 = vmatprep.subr.mxu0 0.0
  %1353 = vmatpush2.msra.mxu0 0.0
  %1354 = vmatprep.subr.mxu0 0.0
  %1355 = vmatpush2.msra.mxu0 0.0
  %1356 = vmatprep.subr.mxu0 0.0
  %1357 = vmatpush2.msra.mxu0 0.0
  %1358 = vmatprep.subr.mxu0 0.0
  %1359 = vmatpush2.msra.mxu0 0.0
  %1360 = vmatprep.subr.mxu0 0.0
  %1361 = vmatpush2.msra.mxu0 0.0
  %1362 = vmatprep.subr.mxu0 0.0
  %1363 = vmatpush2.msra.mxu0 0.0
  %1364 = vmatprep.subr.mxu0 0.0
  %1365 = vmatpush2.msra.mxu0 0.0
  %1366 = vmatprep.mubr.f32.mxu0 0.0
  %1367 = vmatmul.mubr.f32.gmra.mxu0 %v1300
  %v1368 = vpop.f32.mrf.mxu0
  %v1369 = vadd.f32 %v461, %v1368
  %v1370 = vpop.f32.mrf.mxu0
  %1371 = vdwg.mxu0
  %v1372 = vadd.f32 %v1299, %v1369
  %v1373 = vxor.u32 %v1372, 2147483648
  %v1374 = vmul.f32 %v1373, 1.442695
  %v1375 = vpow.pop %v1374
  %v1376 = vadd.f32 %v1375, 1.0
  %v1377 = vrcp.pop %v1376
  %v1378 = vmul.f32 1.0, %v1377
  %1380 = vrot.lane.b32.xlu0 %v1369, 64
  %v1381 = vpop.permute.xlu0 %1380
  %v1383 = vmul.f32 %v1378, %v1381
  %1385 = vrot.lane.b32.xlu0 %v1383, 64
  %v1386 = vpop.permute.xlu0 %1385
  %v1388 = vadd.f32 %v1299, %v1386
  %v1389 = vtanh.pop %v1388
  %v1390 = vsub.f32 1.0, %v1378
  %1392 = vrot.lane.b32.xlu0 %v1389, 96
  %v1393 = vpop.permute.xlu0 %1392
  %v1395 = vmul.f32 %v1390, %v1393
  %v1396 = vmul.f32 %v1378, %v1187
  %v1397 = vadd.f32 %v1395, %v1396
  %1399 = vrot.lane.b32.xlu0 %v1298, 96
  %v1400 = vpop.permute.xlu0 %1399
  %s1402 = scalar_lea.vmem %s12, 32
  %1403 = vst.msk [vmem:[%s1402] sm:$0xff] %vm63, %v1400
  %1405 = vrot.lane.b32.xlu0 %v1397, 96
  %v1406 = vpop.permute.xlu0 %1405
  %s1408 = scalar_lea.vmem %s13, 24
  %1409 = vst.msk [vmem:[%s1408] sm:$0xff] %vm63, %v1406
  %v1410 = vld [vmem:[%s328] sm:$0xff]
  %v1411 = vsel %vm63, %v1400, 0
  %1413 = vmatprep.subr.mxu0 0.0
  %1414 = vmatpush1.msra.mxu0 0.0
  %1415 = vmatprep.subr.mxu0 0.0
  %1416 = vmatpush1.msra.mxu0 0.0
  %1417 = vmatprep.subr.mxu0 0.0
  %1418 = vmatpush1.msra.mxu0 0.0
  %1419 = vmatprep.subr.mxu0 0.0
  %1420 = vmatpush1.msra.mxu0 0.0
  %1421 = vmatprep.subr.mxu0 0.0
  %1422 = vmatpush1.msra.mxu0 0.0
  %1423 = vmatprep.subr.mxu0 0.0
  %1424 = vmatpush1.msra.mxu0 0.0
  %1425 = vmatprep.subr.mxu0 0.0
  %1426 = vmatpush1.msra.mxu0 0.0
  %1427 = vmatprep.subr.mxu0 0.0
  %1428 = vmatpush1.msra.mxu0 0.0
  %1429 = vmatprep.subr.mxu0 0.0
  %1430 = vmatpush1.msra.mxu0 0.0
  %1431 = vmatprep.subr.mxu0 0.0
  %1432 = vmatpush1.msra.mxu0 0.0
  %1433 = vmatprep.subr.mxu0 0.0
  %1434 = vmatpush1.msra.mxu0 0.0
  %1435 = vmatprep.subr.mxu0 0.0
  %1436 = vmatpush1.msra.mxu0 0.0
  %1437 = vmatprep.subr.mxu0 0.0
  %1438 = vmatpush1.msra.mxu0 %v343
  %1439 = vmatprep.subr.mxu0 0.0
  %1440 = vmatpush1.msra.mxu0 %v342
  %1441 = vmatprep.subr.mxu0 0.0
  %1442 = vmatpush1.msra.mxu0 %v341
  %1443 = vmatprep.subr.mxu0 0.0
  %1444 = vmatpush1.msra.mxu0 %v340
  %1445 = vmatprep.subr.mxu0 0.0
  %1446 = vmatpush2.msra.mxu0 0.0
  %1447 = vmatprep.subr.mxu0 0.0
  %1448 = vmatpush2.msra.mxu0 0.0
  %1449 = vmatprep.subr.mxu0 0.0
  %1450 = vmatpush2.msra.mxu0 0.0
  %1451 = vmatprep.subr.mxu0 0.0
  %1452 = vmatpush2.msra.mxu0 0.0
  %1453 = vmatprep.subr.mxu0 0.0
  %1454 = vmatpush2.msra.mxu0 0.0
  %1455 = vmatprep.subr.mxu0 0.0
  %1456 = vmatpush2.msra.mxu0 0.0
  %1457 = vmatprep.subr.mxu0 0.0
  %1458 = vmatpush2.msra.mxu0 0.0
  %1459 = vmatprep.subr.mxu0 0.0
  %1460 = vmatpush2.msra.mxu0 0.0
  %1461 = vmatprep.subr.mxu0 0.0
  %1462 = vmatpush2.msra.mxu0 0.0
  %1463 = vmatprep.subr.mxu0 0.0
  %1464 = vmatpush2.msra.mxu0 0.0
  %1465 = vmatprep.subr.mxu0 0.0
  %1466 = vmatpush2.msra.mxu0 0.0
  %1467 = vmatprep.subr.mxu0 0.0
  %1468 = vmatpush2.msra.mxu0 0.0
  %1469 = vmatprep.subr.mxu0 0.0
  %1470 = vmatpush2.msra.mxu0 0.0
  %1471 = vmatprep.subr.mxu0 0.0
  %1472 = vmatpush2.msra.mxu0 0.0
  %1473 = vmatprep.subr.mxu0 0.0
  %1474 = vmatpush2.msra.mxu0 0.0
  %1475 = vmatprep.subr.mxu0 0.0
  %1476 = vmatpush2.msra.mxu0 0.0
  %1477 = vmatprep.mubr.f32.mxu0 0.0
  %1478 = vmatmul.mubr.f32.gmra.mxu0 %v1411
  %v1479 = vpop.f32.mrf.mxu0
  %v1480 = vadd.f32 %v355, %v1479
  %v1481 = vpop.f32.mrf.mxu0
  %1482 = vdwg.mxu0
  %v1483 = vadd.f32 %v1410, %v1480
  %v1484 = vxor.u32 %v1483, 2147483648
  %v1485 = vmul.f32 %v1484, 1.442695
  %v1486 = vpow.pop %v1485
  %v1487 = vadd.f32 %v1486, 1.0
  %v1488 = vrcp.pop %v1487
  %v1489 = vmul.f32 1.0, %v1488
  %1491 = vrot.lane.b32.xlu0 %v1480, 64
  %v1492 = vpop.permute.xlu0 %1491
  %v1494 = vmul.f32 %v1489, %v1492
  %1496 = vrot.lane.b32.xlu0 %v1494, 64
  %v1497 = vpop.permute.xlu0 %1496
  %v1499 = vadd.f32 %v1410, %v1497
  %v1500 = vtanh.pop %v1499
  %v1501 = vsub.f32 1.0, %v1489
  %1503 = vrot.lane.b32.xlu0 %v1500, 96
  %v1504 = vpop.permute.xlu0 %1503
  %v1506 = vmul.f32 %v1501, %v1504
  %v1507 = vmul.f32 %v1489, %v1298
  %v1508 = vadd.f32 %v1506, %v1507
  %v1509 = vld [vmem:[%s318] sm:$0xff]
  %v1510 = vsel %vm63, %v1406, 0
  %1512 = vmatprep.subr.mxu0 0.0
  %1513 = vmatpush1.msra.mxu0 0.0
  %1514 = vmatprep.subr.mxu0 0.0
  %1515 = vmatpush1.msra.mxu0 0.0
  %1516 = vmatprep.subr.mxu0 0.0
  %1517 = vmatpush1.msra.mxu0 0.0
  %1518 = vmatprep.subr.mxu0 0.0
  %1519 = vmatpush1.msra.mxu0 0.0
  %1520 = vmatprep.subr.mxu0 0.0
  %1521 = vmatpush1.msra.mxu0 0.0
  %1522 = vmatprep.subr.mxu0 0.0
  %1523 = vmatpush1.msra.mxu0 0.0
  %1524 = vmatprep.subr.mxu0 0.0
  %1525 = vmatpush1.msra.mxu0 0.0
  %1526 = vmatprep.subr.mxu0 0.0
  %1527 = vmatpush1.msra.mxu0 0.0
  %1528 = vmatprep.subr.mxu0 0.0
  %1529 = vmatpush1.msra.mxu0 0.0
  %1530 = vmatprep.subr.mxu0 0.0
  %1531 = vmatpush1.msra.mxu0 0.0
  %1532 = vmatprep.subr.mxu0 0.0
  %1533 = vmatpush1.msra.mxu0 0.0
  %1534 = vmatprep.subr.mxu0 0.0
  %1535 = vmatpush1.msra.mxu0 0.0
  %1536 = vmatprep.subr.mxu0 0.0
  %1537 = vmatpush1.msra.mxu0 %v348
  %1538 = vmatprep.subr.mxu0 0.0
  %1539 = vmatpush1.msra.mxu0 %v347
  %1540 = vmatprep.subr.mxu0 0.0
  %1541 = vmatpush1.msra.mxu0 %v346
  %1542 = vmatprep.subr.mxu0 0.0
  %1543 = vmatpush1.msra.mxu0 %v345
  %1544 = vmatprep.subr.mxu0 0.0
  %1545 = vmatpush2.msra.mxu0 0.0
  %1546 = vmatprep.subr.mxu0 0.0
  %1547 = vmatpush2.msra.mxu0 0.0
  %1548 = vmatprep.subr.mxu0 0.0
  %1549 = vmatpush2.msra.mxu0 0.0
  %1550 = vmatprep.subr.mxu0 0.0
  %1551 = vmatpush2.msra.mxu0 0.0
  %1552 = vmatprep.subr.mxu0 0.0
  %1553 = vmatpush2.msra.mxu0 0.0
  %1554 = vmatprep.subr.mxu0 0.0
  %1555 = vmatpush2.msra.mxu0 0.0
  %1556 = vmatprep.subr.mxu0 0.0
  %1557 = vmatpush2.msra.mxu0 0.0
  %1558 = vmatprep.subr.mxu0 0.0
  %1559 = vmatpush2.msra.mxu0 0.0
  %1560 = vmatprep.subr.mxu0 0.0
  %1561 = vmatpush2.msra.mxu0 0.0
  %1562 = vmatprep.subr.mxu0 0.0
  %1563 = vmatpush2.msra.mxu0 0.0
  %1564 = vmatprep.subr.mxu0 0.0
  %1565 = vmatpush2.msra.mxu0 0.0
  %1566 = vmatprep.subr.mxu0 0.0
  %1567 = vmatpush2.msra.mxu0 0.0
  %1568 = vmatprep.subr.mxu0 0.0
  %1569 = vmatpush2.msra.mxu0 0.0
  %1570 = vmatprep.subr.mxu0 0.0
  %1571 = vmatpush2.msra.mxu0 0.0
  %1572 = vmatprep.subr.mxu0 0.0
  %1573 = vmatpush2.msra.mxu0 0.0
  %1574 = vmatprep.subr.mxu0 0.0
  %1575 = vmatpush2.msra.mxu0 0.0
  %1576 = vmatprep.mubr.f32.mxu0 0.0
  %1577 = vmatmul.mubr.f32.gmra.mxu0 %v1510
  %v1578 = vpop.f32.mrf.mxu0
  %v1579 = vadd.f32 %v461, %v1578
  %v1580 = vpop.f32.mrf.mxu0
  %1581 = vdwg.mxu0
  %v1582 = vadd.f32 %v1509, %v1579
  %v1583 = vxor.u32 %v1582, 2147483648
  %v1584 = vmul.f32 %v1583, 1.442695
  %v1585 = vpow.pop %v1584
  %v1586 = vadd.f32 %v1585, 1.0
  %v1587 = vrcp.pop %v1586
  %v1588 = vmul.f32 1.0, %v1587
  %1590 = vrot.lane.b32.xlu0 %v1579, 64
  %v1591 = vpop.permute.xlu0 %1590
  %v1593 = vmul.f32 %v1588, %v1591
  %1595 = vrot.lane.b32.xlu0 %v1593, 64
  %v1596 = vpop.permute.xlu0 %1595
  %v1598 = vadd.f32 %v1509, %v1596
  %v1599 = vtanh.pop %v1598
  %v1600 = vsub.f32 1.0, %v1588
  %1602 = vrot.lane.b32.xlu0 %v1599, 96
  %v1603 = vpop.permute.xlu0 %1602
  %v1605 = vmul.f32 %v1600, %v1603
  %v1606 = vmul.f32 %v1588, %v1397
  %v1607 = vadd.f32 %v1605, %v1606
  %1609 = vrot.lane.b32.xlu0 %v1508, 96
  %v1610 = vpop.permute.xlu0 %1609
  %s1612 = scalar_lea.vmem %s12, 40
  %1613 = vst.msk [vmem:[%s1612] sm:$0xff] %vm63, %v1610
  %1615 = vrot.lane.b32.xlu0 %v1607, 96
  %v1616 = vpop.permute.xlu0 %1615
  %s1618 = scalar_lea.vmem %s13, 16
  %1619 = vst.msk [vmem:[%s1618] sm:$0xff] %vm63, %v1616
  %v1620 = vld [vmem:[%s332] sm:$0xff]
  %v1621 = vsel %vm63, %v1610, 0
  %1623 = vmatprep.subr.mxu0 0.0
  %1624 = vmatpush1.msra.mxu0 0.0
  %1625 = vmatprep.subr.mxu0 0.0
  %1626 = vmatpush1.msra.mxu0 0.0
  %1627 = vmatprep.subr.mxu0 0.0
  %1628 = vmatpush1.msra.mxu0 0.0
  %1629 = vmatprep.subr.mxu0 0.0
  %1630 = vmatpush1.msra.mxu0 0.0
  %1631 = vmatprep.subr.mxu0 0.0
  %1632 = vmatpush1.msra.mxu0 0.0
  %1633 = vmatprep.subr.mxu0 0.0
  %1634 = vmatpush1.msra.mxu0 0.0
  %1635 = vmatprep.subr.mxu0 0.0
  %1636 = vmatpush1.msra.mxu0 0.0
  %1637 = vmatprep.subr.mxu0 0.0
  %1638 = vmatpush1.msra.mxu0 0.0
  %1639 = vmatprep.subr.mxu0 0.0
  %1640 = vmatpush1.msra.mxu0 0.0
  %1641 = vmatprep.subr.mxu0 0.0
  %1642 = vmatpush1.msra.mxu0 0.0
  %1643 = vmatprep.subr.mxu0 0.0
  %1644 = vmatpush1.msra.mxu0 0.0
  %1645 = vmatprep.subr.mxu0 0.0
  %1646 = vmatpush1.msra.mxu0 0.0
  %1647 = vmatprep.subr.mxu0 0.0
  %1648 = vmatpush1.msra.mxu0 %v343
  %1649 = vmatprep.subr.mxu0 0.0
  %1650 = vmatpush1.msra.mxu0 %v342
  %1651 = vmatprep.subr.mxu0 0.0
  %1652 = vmatpush1.msra.mxu0 %v341
  %1653 = vmatprep.subr.mxu0 0.0
  %1654 = vmatpush1.msra.mxu0 %v340
  %1655 = vmatprep.subr.mxu0 0.0
  %1656 = vmatpush2.msra.mxu0 0.0
  %1657 = vmatprep.subr.mxu0 0.0
  %1658 = vmatpush2.msra.mxu0 0.0
  %1659 = vmatprep.subr.mxu0 0.0
  %1660 = vmatpush2.msra.mxu0 0.0
  %1661 = vmatprep.subr.mxu0 0.0
  %1662 = vmatpush2.msra.mxu0 0.0
  %1663 = vmatprep.subr.mxu0 0.0
  %1664 = vmatpush2.msra.mxu0 0.0
  %1665 = vmatprep.subr.mxu0 0.0
  %1666 = vmatpush2.msra.mxu0 0.0
  %1667 = vmatprep.subr.mxu0 0.0
  %1668 = vmatpush2.msra.mxu0 0.0
  %1669 = vmatprep.subr.mxu0 0.0
  %1670 = vmatpush2.msra.mxu0 0.0
  %1671 = vmatprep.subr.mxu0 0.0
  %1672 = vmatpush2.msra.mxu0 0.0
  %1673 = vmatprep.subr.mxu0 0.0
  %1674 = vmatpush2.msra.mxu0 0.0
  %1675 = vmatprep.subr.mxu0 0.0
  %1676 = vmatpush2.msra.mxu0 0.0
  %1677 = vmatprep.subr.mxu0 0.0
  %1678 = vmatpush2.msra.mxu0 0.0
  %1679 = vmatprep.subr.mxu0 0.0
  %1680 = vmatpush2.msra.mxu0 0.0
  %1681 = vmatprep.subr.mxu0 0.0
  %1682 = vmatpush2.msra.mxu0 0.0
  %1683 = vmatprep.subr.mxu0 0.0
  %1684 = vmatpush2.msra.mxu0 0.0
  %1685 = vmatprep.subr.mxu0 0.0
  %1686 = vmatpush2.msra.mxu0 0.0
  %1687 = vmatprep.mubr.f32.mxu0 0.0
  %1688 = vmatmul.mubr.f32.gmra.mxu0 %v1621
  %v1689 = vpop.f32.mrf.mxu0
  %v1690 = vadd.f32 %v355, %v1689
  %v1691 = vpop.f32.mrf.mxu0
  %1692 = vdwg.mxu0
  %v1693 = vadd.f32 %v1620, %v1690
  %v1694 = vxor.u32 %v1693, 2147483648
  %v1695 = vmul.f32 %v1694, 1.442695
  %v1696 = vpow.pop %v1695
  %v1697 = vadd.f32 %v1696, 1.0
  %v1698 = vrcp.pop %v1697
  %v1699 = vmul.f32 1.0, %v1698
  %1701 = vrot.lane.b32.xlu0 %v1690, 64
  %v1702 = vpop.permute.xlu0 %1701
  %v1704 = vmul.f32 %v1699, %v1702
  %1706 = vrot.lane.b32.xlu0 %v1704, 64
  %v1707 = vpop.permute.xlu0 %1706
  %v1709 = vadd.f32 %v1620, %v1707
  %v1710 = vtanh.pop %v1709
  %v1711 = vsub.f32 1.0, %v1699
  %1713 = vrot.lane.b32.xlu0 %v1710, 96
  %v1714 = vpop.permute.xlu0 %1713
  %v1716 = vmul.f32 %v1711, %v1714
  %v1717 = vmul.f32 %v1699, %v1508
  %v1718 = vadd.f32 %v1716, %v1717
  %v1719 = vld [vmem:[%s314] sm:$0xff]
  %v1720 = vsel %vm63, %v1616, 0
  %1722 = vmatprep.subr.mxu0 0.0
  %1723 = vmatpush1.msra.mxu0 0.0
  %1724 = vmatprep.subr.mxu0 0.0
  %1725 = vmatpush1.msra.mxu0 0.0
  %1726 = vmatprep.subr.mxu0 0.0
  %1727 = vmatpush1.msra.mxu0 0.0
  %1728 = vmatprep.subr.mxu0 0.0
  %1729 = vmatpush1.msra.mxu0 0.0
  %1730 = vmatprep.subr.mxu0 0.0
  %1731 = vmatpush1.msra.mxu0 0.0
  %1732 = vmatprep.subr.mxu0 0.0
  %1733 = vmatpush1.msra.mxu0 0.0
  %1734 = vmatprep.subr.mxu0 0.0
  %1735 = vmatpush1.msra.mxu0 0.0
  %1736 = vmatprep.subr.mxu0 0.0
  %1737 = vmatpush1.msra.mxu0 0.0
  %1738 = vmatprep.subr.mxu0 0.0
  %1739 = vmatpush1.msra.mxu0 0.0
  %1740 = vmatprep.subr.mxu0 0.0
  %1741 = vmatpush1.msra.mxu0 0.0
  %1742 = vmatprep.subr.mxu0 0.0
  %1743 = vmatpush1.msra.mxu0 0.0
  %1744 = vmatprep.subr.mxu0 0.0
  %1745 = vmatpush1.msra.mxu0 0.0
  %1746 = vmatprep.subr.mxu0 0.0
  %1747 = vmatpush1.msra.mxu0 %v348
  %1748 = vmatprep.subr.mxu0 0.0
  %1749 = vmatpush1.msra.mxu0 %v347
  %1750 = vmatprep.subr.mxu0 0.0
  %1751 = vmatpush1.msra.mxu0 %v346
  %1752 = vmatprep.subr.mxu0 0.0
  %1753 = vmatpush1.msra.mxu0 %v345
  %1754 = vmatprep.subr.mxu0 0.0
  %1755 = vmatpush2.msra.mxu0 0.0
  %1756 = vmatprep.subr.mxu0 0.0
  %1757 = vmatpush2.msra.mxu0 0.0
  %1758 = vmatprep.subr.mxu0 0.0
  %1759 = vmatpush2.msra.mxu0 0.0
  %1760 = vmatprep.subr.mxu0 0.0
  %1761 = vmatpush2.msra.mxu0 0.0
  %1762 = vmatprep.subr.mxu0 0.0
  %1763 = vmatpush2.msra.mxu0 0.0
  %1764 = vmatprep.subr.mxu0 0.0
  %1765 = vmatpush2.msra.mxu0 0.0
  %1766 = vmatprep.subr.mxu0 0.0
  %1767 = vmatpush2.msra.mxu0 0.0
  %1768 = vmatprep.subr.mxu0 0.0
  %1769 = vmatpush2.msra.mxu0 0.0
  %1770 = vmatprep.subr.mxu0 0.0
  %1771 = vmatpush2.msra.mxu0 0.0
  %1772 = vmatprep.subr.mxu0 0.0
  %1773 = vmatpush2.msra.mxu0 0.0
  %1774 = vmatprep.subr.mxu0 0.0
  %1775 = vmatpush2.msra.mxu0 0.0
  %1776 = vmatprep.subr.mxu0 0.0
  %1777 = vmatpush2.msra.mxu0 0.0
  %1778 = vmatprep.subr.mxu0 0.0
  %1779 = vmatpush2.msra.mxu0 0.0
  %1780 = vmatprep.subr.mxu0 0.0
  %1781 = vmatpush2.msra.mxu0 0.0
  %1782 = vmatprep.subr.mxu0 0.0
  %1783 = vmatpush2.msra.mxu0 0.0
  %1784 = vmatprep.subr.mxu0 0.0
  %1785 = vmatpush2.msra.mxu0 0.0
  %1786 = vmatprep.mubr.f32.mxu0 0.0
  %1787 = vmatmul.mubr.f32.gmra.mxu0 %v1720
  %v1788 = vpop.f32.mrf.mxu0
  %v1789 = vadd.f32 %v461, %v1788
  %v1790 = vpop.f32.mrf.mxu0
  %1791 = vdwg.mxu0
  %v1792 = vadd.f32 %v1719, %v1789
  %v1793 = vxor.u32 %v1792, 2147483648
  %v1794 = vmul.f32 %v1793, 1.442695
  %v1795 = vpow.pop %v1794
  %v1796 = vadd.f32 %v1795, 1.0
  %v1797 = vrcp.pop %v1796
  %v1798 = vmul.f32 1.0, %v1797
  %1800 = vrot.lane.b32.xlu0 %v1789, 64
  %v1801 = vpop.permute.xlu0 %1800
  %v1803 = vmul.f32 %v1798, %v1801
  %1805 = vrot.lane.b32.xlu0 %v1803, 64
  %v1806 = vpop.permute.xlu0 %1805
  %v1808 = vadd.f32 %v1719, %v1806
  %v1809 = vtanh.pop %v1808
  %v1810 = vsub.f32 1.0, %v1798
  %1812 = vrot.lane.b32.xlu0 %v1809, 96
  %v1813 = vpop.permute.xlu0 %1812
  %v1815 = vmul.f32 %v1810, %v1813
  %v1816 = vmul.f32 %v1798, %v1607
  %v1817 = vadd.f32 %v1815, %v1816
  %1819 = vrot.lane.b32.xlu0 %v1718, 96
  %v1820 = vpop.permute.xlu0 %1819
  %s1822 = scalar_lea.vmem %s12, 48
  %1823 = vst.msk [vmem:[%s1822] sm:$0xff] %vm63, %v1820
  %1825 = vrot.lane.b32.xlu0 %v1817, 96
  %v1826 = vpop.permute.xlu0 %1825
  %s1828 = scalar_lea.vmem %s13, 8
  %1829 = vst.msk [vmem:[%s1828] sm:$0xff] %vm63, %v1826
  %v1830 = vld [vmem:[%s336] sm:$0xff]
  %v1831 = vsel %vm63, %v1820, 0
  %1833 = vmatprep.subr.mxu0 0.0
  %1834 = vmatpush1.msra.mxu0 0.0
  %1835 = vmatprep.subr.mxu0 0.0
  %1836 = vmatpush1.msra.mxu0 0.0
  %1837 = vmatprep.subr.mxu0 0.0
  %1838 = vmatpush1.msra.mxu0 0.0
  %1839 = vmatprep.subr.mxu0 0.0
  %1840 = vmatpush1.msra.mxu0 0.0
  %1841 = vmatprep.subr.mxu0 0.0
  %1842 = vmatpush1.msra.mxu0 0.0
  %1843 = vmatprep.subr.mxu0 0.0
  %1844 = vmatpush1.msra.mxu0 0.0
  %1845 = vmatprep.subr.mxu0 0.0
  %1846 = vmatpush1.msra.mxu0 0.0
  %1847 = vmatprep.subr.mxu0 0.0
  %1848 = vmatpush1.msra.mxu0 0.0
  %1849 = vmatprep.subr.mxu0 0.0
  %1850 = vmatpush1.msra.mxu0 0.0
  %1851 = vmatprep.subr.mxu0 0.0
  %1852 = vmatpush1.msra.mxu0 0.0
  %1853 = vmatprep.subr.mxu0 0.0
  %1854 = vmatpush1.msra.mxu0 0.0
  %1855 = vmatprep.subr.mxu0 0.0
  %1856 = vmatpush1.msra.mxu0 0.0
  %1857 = vmatprep.subr.mxu0 0.0
  %1858 = vmatpush1.msra.mxu0 %v343
  %1859 = vmatprep.subr.mxu0 0.0
  %1860 = vmatpush1.msra.mxu0 %v342
  %1861 = vmatprep.subr.mxu0 0.0
  %1862 = vmatpush1.msra.mxu0 %v341
  %1863 = vmatprep.subr.mxu0 0.0
  %1864 = vmatpush1.msra.mxu0 %v340
  %1865 = vmatprep.subr.mxu0 0.0
  %1866 = vmatpush2.msra.mxu0 0.0
  %1867 = vmatprep.subr.mxu0 0.0
  %1868 = vmatpush2.msra.mxu0 0.0
  %1869 = vmatprep.subr.mxu0 0.0
  %1870 = vmatpush2.msra.mxu0 0.0
  %1871 = vmatprep.subr.mxu0 0.0
  %1872 = vmatpush2.msra.mxu0 0.0
  %1873 = vmatprep.subr.mxu0 0.0
  %1874 = vmatpush2.msra.mxu0 0.0
  %1875 = vmatprep.subr.mxu0 0.0
  %1876 = vmatpush2.msra.mxu0 0.0
  %1877 = vmatprep.subr.mxu0 0.0
  %1878 = vmatpush2.msra.mxu0 0.0
  %1879 = vmatprep.subr.mxu0 0.0
  %1880 = vmatpush2.msra.mxu0 0.0
  %1881 = vmatprep.subr.mxu0 0.0
  %1882 = vmatpush2.msra.mxu0 0.0
  %1883 = vmatprep.subr.mxu0 0.0
  %1884 = vmatpush2.msra.mxu0 0.0
  %1885 = vmatprep.subr.mxu0 0.0
  %1886 = vmatpush2.msra.mxu0 0.0
  %1887 = vmatprep.subr.mxu0 0.0
  %1888 = vmatpush2.msra.mxu0 0.0
  %1889 = vmatprep.subr.mxu0 0.0
  %1890 = vmatpush2.msra.mxu0 0.0
  %1891 = vmatprep.subr.mxu0 0.0
  %1892 = vmatpush2.msra.mxu0 0.0
  %1893 = vmatprep.subr.mxu0 0.0
  %1894 = vmatpush2.msra.mxu0 0.0
  %1895 = vmatprep.subr.mxu0 0.0
  %1896 = vmatpush2.msra.mxu0 0.0
  %1897 = vmatprep.mubr.f32.mxu0 0.0
  %1898 = vmatmul.mubr.f32.gmra.mxu0 %v1831
  %v1899 = vpop.f32.mrf.mxu0
  %v1900 = vadd.f32 %v355, %v1899
  %v1901 = vpop.f32.mrf.mxu0
  %1902 = vdwg.mxu0
  %v1903 = vadd.f32 %v1830, %v1900
  %v1904 = vxor.u32 %v1903, 2147483648
  %v1905 = vmul.f32 %v1904, 1.442695
  %v1906 = vpow.pop %v1905
  %v1907 = vadd.f32 %v1906, 1.0
  %v1908 = vrcp.pop %v1907
  %v1909 = vmul.f32 1.0, %v1908
  %1911 = vrot.lane.b32.xlu0 %v1900, 64
  %v1912 = vpop.permute.xlu0 %1911
  %v1914 = vmul.f32 %v1909, %v1912
  %1916 = vrot.lane.b32.xlu0 %v1914, 64
  %v1917 = vpop.permute.xlu0 %1916
  %v1919 = vadd.f32 %v1830, %v1917
  %v1920 = vtanh.pop %v1919
  %v1921 = vsub.f32 1.0, %v1909
  %1923 = vrot.lane.b32.xlu0 %v1920, 96
  %v1924 = vpop.permute.xlu0 %1923
  %v1926 = vmul.f32 %v1921, %v1924
  %v1927 = vmul.f32 %v1909, %v1718
  %v1928 = vadd.f32 %v1926, %v1927
  %v1929 = vld [vmem:[#allocation3] sm:$0xff]
  %v1930 = vsel %vm63, %v1826, 0
  %1932 = vmatprep.subr.mxu0 0.0
  %1933 = vmatpush1.msra.mxu0 0.0
  %1934 = vmatprep.subr.mxu0 0.0
  %1935 = vmatpush1.msra.mxu0 0.0
  %1936 = vmatprep.subr.mxu0 0.0
  %1937 = vmatpush1.msra.mxu0 0.0
  %1938 = vmatprep.subr.mxu0 0.0
  %1939 = vmatpush1.msra.mxu0 0.0
  %1940 = vmatprep.subr.mxu0 0.0
  %1941 = vmatpush1.msra.mxu0 0.0
  %1942 = vmatprep.subr.mxu0 0.0
  %1943 = vmatpush1.msra.mxu0 0.0
  %1944 = vmatprep.subr.mxu0 0.0
  %1945 = vmatpush1.msra.mxu0 0.0
  %1946 = vmatprep.subr.mxu0 0.0
  %1947 = vmatpush1.msra.mxu0 0.0
  %1948 = vmatprep.subr.mxu0 0.0
  %1949 = vmatpush1.msra.mxu0 0.0
  %1950 = vmatprep.subr.mxu0 0.0
  %1951 = vmatpush1.msra.mxu0 0.0
  %1952 = vmatprep.subr.mxu0 0.0
  %1953 = vmatpush1.msra.mxu0 0.0
  %1954 = vmatprep.subr.mxu0 0.0
  %1955 = vmatpush1.msra.mxu0 0.0
  %1956 = vmatprep.subr.mxu0 0.0
  %1957 = vmatpush1.msra.mxu0 %v348
  %1958 = vmatprep.subr.mxu0 0.0
  %1959 = vmatpush1.msra.mxu0 %v347
  %1960 = vmatprep.subr.mxu0 0.0
  %1961 = vmatpush1.msra.mxu0 %v346
  %1962 = vmatprep.subr.mxu0 0.0
  %1963 = vmatpush1.msra.mxu0 %v345
  %1964 = vmatprep.subr.mxu0 0.0
  %1965 = vmatpush2.msra.mxu0 0.0
  %1966 = vmatprep.subr.mxu0 0.0
  %1967 = vmatpush2.msra.mxu0 0.0
  %1968 = vmatprep.subr.mxu0 0.0
  %1969 = vmatpush2.msra.mxu0 0.0
  %1970 = vmatprep.subr.mxu0 0.0
  %1971 = vmatpush2.msra.mxu0 0.0
  %1972 = vmatprep.subr.mxu0 0.0
  %1973 = vmatpush2.msra.mxu0 0.0
  %1974 = vmatprep.subr.mxu0 0.0
  %1975 = vmatpush2.msra.mxu0 0.0
  %1976 = vmatprep.subr.mxu0 0.0
  %1977 = vmatpush2.msra.mxu0 0.0
  %1978 = vmatprep.subr.mxu0 0.0
  %1979 = vmatpush2.msra.mxu0 0.0
  %1980 = vmatprep.subr.mxu0 0.0
  %1981 = vmatpush2.msra.mxu0 0.0
  %1982 = vmatprep.subr.mxu0 0.0
  %1983 = vmatpush2.msra.mxu0 0.0
  %1984 = vmatprep.subr.mxu0 0.0
  %1985 = vmatpush2.msra.mxu0 0.0
  %1986 = vmatprep.subr.mxu0 0.0
  %1987 = vmatpush2.msra.mxu0 0.0
  %1988 = vmatprep.subr.mxu0 0.0
  %1989 = vmatpush2.msra.mxu0 0.0
  %1990 = vmatprep.subr.mxu0 0.0
  %1991 = vmatpush2.msra.mxu0 0.0
  %1992 = vmatprep.subr.mxu0 0.0
  %1993 = vmatpush2.msra.mxu0 0.0
  %1994 = vmatprep.subr.mxu0 0.0
  %1995 = vmatpush2.msra.mxu0 0.0
  %1996 = vmatprep.mubr.f32.mxu0 0.0
  %1997 = vmatmul.mubr.f32.gmra.mxu0 %v1930
  %v1998 = vpop.f32.mrf.mxu0
  %v1999 = vadd.f32 %v461, %v1998
  %v2000 = vpop.f32.mrf.mxu0
  %2001 = vdwg.mxu0
  %v2002 = vadd.f32 %v1929, %v1999
  %v2003 = vxor.u32 %v2002, 2147483648
  %v2004 = vmul.f32 %v2003, 1.442695
  %v2005 = vpow.pop %v2004
  %v2006 = vadd.f32 %v2005, 1.0
  %v2007 = vrcp.pop %v2006
  %v2008 = vmul.f32 1.0, %v2007
  %2010 = vrot.lane.b32.xlu0 %v1999, 64
  %v2011 = vpop.permute.xlu0 %2010
  %v2013 = vmul.f32 %v2008, %v2011
  %2015 = vrot.lane.b32.xlu0 %v2013, 64
  %v2016 = vpop.permute.xlu0 %2015
  %v2018 = vadd.f32 %v1929, %v2016
  %v2019 = vtanh.pop %v2018
  %v2020 = vsub.f32 1.0, %v2008
  %2022 = vrot.lane.b32.xlu0 %v2019, 96
  %v2023 = vpop.permute.xlu0 %2022
  %v2025 = vmul.f32 %v2020, %v2023
  %v2026 = vmul.f32 %v2008, %v1817
  %v2027 = vadd.f32 %v2025, %v2026
  %2029 = vrot.lane.b32.xlu0 %v1928, 96
  %v2030 = vpop.permute.xlu0 %2029
  %s2032 = scalar_lea.vmem %s12, 56
  %2033 = vst.msk [vmem:[%s2032] sm:$0xff] %vm63, %v2030
  %2035 = vrot.lane.b32.xlu0 %v2027, 96
  %v2036 = vpop.permute.xlu0 %2035
  %2038 = vst.msk [vmem:[%s13] sm:$0xff] %vm63, %v2036
  %v2039 = vld [vmem:[%s9] sm:$0xff]
  %v2040 = vld [vmem:[%s9 + $0x8] sm:$0xff]
  %v2041 = vld [vmem:[%s9 + $0x10] sm:$0xff]
  %v2042 = vld [vmem:[%s9 + $0x18] sm:$0xff]
  %v2043 = vld [vmem:[%s10] sm:$0xff]
  %v2044 = vld [vmem:[%s10 + $0x8] sm:$0xff]
  %v2045 = vld [vmem:[%s10 + $0x10] sm:$0xff]
  %v2046 = vld [vmem:[%s10 + $0x18] sm:$0xff]
  %v2047 = vsel %vm63, %v2036, 0
  %2049 = vmatprep.subr.mxu0 0.0
  %2050 = vmatpush1.msra.mxu0 0.0
  %2051 = vmatprep.subr.mxu0 0.0
  %2052 = vmatpush1.msra.mxu0 0.0
  %2053 = vmatprep.subr.mxu0 0.0
  %2054 = vmatpush1.msra.mxu0 0.0
  %2055 = vmatprep.subr.mxu0 0.0
  %2056 = vmatpush1.msra.mxu0 0.0
  %2057 = vmatprep.subr.mxu0 0.0
  %2058 = vmatpush1.msra.mxu0 0.0
  %2059 = vmatprep.subr.mxu0 0.0
  %2060 = vmatpush1.msra.mxu0 0.0
  %2061 = vmatprep.subr.mxu0 0.0
  %2062 = vmatpush1.msra.mxu0 0.0
  %2063 = vmatprep.subr.mxu0 0.0
  %2064 = vmatpush1.msra.mxu0 0.0
  %2065 = vmatprep.subr.mxu0 0.0
  %2066 = vmatpush1.msra.mxu0 0.0
  %2067 = vmatprep.subr.mxu0 0.0
  %2068 = vmatpush1.msra.mxu0 0.0
  %2069 = vmatprep.subr.mxu0 0.0
  %2070 = vmatpush1.msra.mxu0 0.0
  %2071 = vmatprep.subr.mxu0 0.0
  %2072 = vmatpush1.msra.mxu0 0.0
  %2073 = vmatprep.subr.mxu0 0.0
  %2074 = vmatpush1.msra.mxu0 %v2046
  %2075 = vmatprep.subr.mxu0 0.0
  %2076 = vmatpush1.msra.mxu0 %v2045
  %2077 = vmatprep.subr.mxu0 0.0
  %2078 = vmatpush1.msra.mxu0 %v2044
  %2079 = vmatprep.subr.mxu0 0.0
  %2080 = vmatpush1.msra.mxu0 %v2043
  %2081 = vmatprep.subr.mxu0 0.0
  %2082 = vmatpush2.msra.mxu0 0.0
  %2083 = vmatprep.subr.mxu0 0.0
  %2084 = vmatpush2.msra.mxu0 0.0
  %2085 = vmatprep.subr.mxu0 0.0
  %2086 = vmatpush2.msra.mxu0 0.0
  %2087 = vmatprep.subr.mxu0 0.0
  %2088 = vmatpush2.msra.mxu0 0.0
  %2089 = vmatprep.subr.mxu0 0.0
  %2090 = vmatpush2.msra.mxu0 0.0
  %2091 = vmatprep.subr.mxu0 0.0
  %2092 = vmatpush2.msra.mxu0 0.0
  %2093 = vmatprep.subr.mxu0 0.0
  %2094 = vmatpush2.msra.mxu0 0.0
  %2095 = vmatprep.subr.mxu0 0.0
  %2096 = vmatpush2.msra.mxu0 0.0
  %2097 = vmatprep.subr.mxu0 0.0
  %2098 = vmatpush2.msra.mxu0 0.0
  %2099 = vmatprep.subr.mxu0 0.0
  %2100 = vmatpush2.msra.mxu0 0.0
  %2101 = vmatprep.subr.mxu0 0.0
  %2102 = vmatpush2.msra.mxu0 0.0
  %2103 = vmatprep.subr.mxu0 0.0
  %2104 = vmatpush2.msra.mxu0 0.0
  %2105 = vmatprep.subr.mxu0 0.0
  %2106 = vmatpush2.msra.mxu0 0.0
  %2107 = vmatprep.subr.mxu0 0.0
  %2108 = vmatpush2.msra.mxu0 0.0
  %2109 = vmatprep.subr.mxu0 0.0
  %2110 = vmatpush2.msra.mxu0 0.0
  %2111 = vmatprep.subr.mxu0 0.0
  %2112 = vmatpush2.msra.mxu0 0.0
  %2113 = vmatprep.mubr.f32.mxu0 0.0
  %2114 = vmatmul.mubr.f32.gmra.mxu0 %v2047
  %v2115 = vpop.f32.mrf.mxu0
  %v2116 = vadd.f32 0.0, %v2115
  %v2117 = vpop.f32.mrf.mxu0
  %2118 = vdwg.mxu0
  %v2119 = vsel %vm63, %v2030, 0
  %2121 = vmatprep.subr.mxu0 0.0
  %2122 = vmatpush1.msra.mxu0 0.0
  %2123 = vmatprep.subr.mxu0 0.0
  %2124 = vmatpush1.msra.mxu0 0.0
  %2125 = vmatprep.subr.mxu0 0.0
  %2126 = vmatpush1.msra.mxu0 0.0
  %2127 = vmatprep.subr.mxu0 0.0
  %2128 = vmatpush1.msra.mxu0 0.0
  %2129 = vmatprep.subr.mxu0 0.0
  %2130 = vmatpush1.msra.mxu0 0.0
  %2131 = vmatprep.subr.mxu0 0.0
  %2132 = vmatpush1.msra.mxu0 0.0
  %2133 = vmatprep.subr.mxu0 0.0
  %2134 = vmatpush1.msra.mxu0 0.0
  %2135 = vmatprep.subr.mxu0 0.0
  %2136 = vmatpush1.msra.mxu0 0.0
  %2137 = vmatprep.subr.mxu0 0.0
  %2138 = vmatpush1.msra.mxu0 0.0
  %2139 = vmatprep.subr.mxu0 0.0
  %2140 = vmatpush1.msra.mxu0 0.0
  %2141 = vmatprep.subr.mxu0 0.0
  %2142 = vmatpush1.msra.mxu0 0.0
  %2143 = vmatprep.subr.mxu0 0.0
  %2144 = vmatpush1.msra.mxu0 0.0
  %2145 = vmatprep.subr.mxu0 0.0
  %2146 = vmatpush1.msra.mxu0 %v2042
  %2147 = vmatprep.subr.mxu0 0.0
  %2148 = vmatpush1.msra.mxu0 %v2041
  %2149 = vmatprep.subr.mxu0 0.0
  %2150 = vmatpush1.msra.mxu0 %v2040
  %2151 = vmatprep.subr.mxu0 0.0
  %2152 = vmatpush1.msra.mxu0 %v2039
  %2153 = vmatprep.subr.mxu0 0.0
  %2154 = vmatpush2.msra.mxu0 0.0
  %2155 = vmatprep.subr.mxu0 0.0
  %2156 = vmatpush2.msra.mxu0 0.0
  %2157 = vmatprep.subr.mxu0 0.0
  %2158 = vmatpush2.msra.mxu0 0.0
  %2159 = vmatprep.subr.mxu0 0.0
  %2160 = vmatpush2.msra.mxu0 0.0
  %2161 = vmatprep.subr.mxu0 0.0
  %2162 = vmatpush2.msra.mxu0 0.0
  %2163 = vmatprep.subr.mxu0 0.0
  %2164 = vmatpush2.msra.mxu0 0.0
  %2165 = vmatprep.subr.mxu0 0.0
  %2166 = vmatpush2.msra.mxu0 0.0
  %2167 = vmatprep.subr.mxu0 0.0
  %2168 = vmatpush2.msra.mxu0 0.0
  %2169 = vmatprep.subr.mxu0 0.0
  %2170 = vmatpush2.msra.mxu0 0.0
  %2171 = vmatprep.subr.mxu0 0.0
  %2172 = vmatpush2.msra.mxu0 0.0
  %2173 = vmatprep.subr.mxu0 0.0
  %2174 = vmatpush2.msra.mxu0 0.0
  %2175 = vmatprep.subr.mxu0 0.0
  %2176 = vmatpush2.msra.mxu0 0.0
  %2177 = vmatprep.subr.mxu0 0.0
  %2178 = vmatpush2.msra.mxu0 0.0
  %2179 = vmatprep.subr.mxu0 0.0
  %2180 = vmatpush2.msra.mxu0 0.0
  %2181 = vmatprep.subr.mxu0 0.0
  %2182 = vmatpush2.msra.mxu0 0.0
  %2183 = vmatprep.subr.mxu0 0.0
  %2184 = vmatpush2.msra.mxu0 0.0
  %2185 = vmatprep.mubr.f32.mxu0 0.0
  %2186 = vmatmul.mubr.f32.gmra.mxu0 %v2119
  %v2187 = vpop.f32.mrf.mxu0
  %v2188 = vadd.f32 %v2116, %v2187
  %v2189 = vpop.f32.mrf.mxu0
  %2190 = vdwg.mxu0
  %v2191 = vld [vmem:[%s11] sm:$0x1]
  %v2193 = vlaneseq
  %v2194 = vshrl.u32 %v2193, 7
  %v2195 = vsub.s32 0, %v2194
  %v2196 = vrot.slane %v2191, %v2195
  %v2198 = vadd.f32 %v2188, %v2196
  %v2199 = vtanh.pop %v2198
  %2200 = vst.msk [vmem:[%s14] sm:$0xff] %vm63, %v2199
  // Predicated region
  $region50: #{seq2seq_forward.2} parent=0 // pred_check
    _
  $region51: #{seq2seq_forward.2} parent=0 // pred_check_branch
    %2202 = sbr.rel (0) target = $region53
  $region52: #{seq2seq_forward.2} parent=0 // pred_region
    _
  $region53: #{seq2seq_forward.2} parent=0 // pred_fallthru
    _
  // Predicated region
  $region54: #{seq2seq_forward.2} parent=0 // pred_check
    _
  $region55: #{seq2seq_forward.2} parent=0 // pred_check_branch
    %2204 = sbr.rel (0) target = $region57
  $region56: #{seq2seq_forward.2} parent=0 // pred_region
    _
  $region57: #{seq2seq_forward.2} parent=0 // pred_fallthru
    _
  // Predicated region
  $region58: #{seq2seq_forward.2} parent=0 // pred_check
    _
  $region59: #{seq2seq_forward.2} parent=0 // pred_check_branch
    %2206 = sbr.rel (0) target = $region61
  $region60: #{seq2seq_forward.2} parent=0 // pred_region
    _
  $region61: #{seq2seq_forward.2} parent=0 // pred_fallthru
    _
  // Predicated region
  $region62: #{seq2seq_forward.2} parent=0 // pred_check
    _
  $region63: #{seq2seq_forward.2} parent=0 // pred_check_branch
    %2208 = sbr.rel (0) target = $region65
  $region64: #{seq2seq_forward.2} parent=0 // pred_region
    _
  $region65: #{seq2seq_forward.2} parent=0 // pred_fallthru
    _
  // Predicated region
  $region66: #{seq2seq_forward.2} parent=0 // pred_check
    _
  $region67: #{seq2seq_forward.2} parent=0 // pred_check_branch
    %2210 = sbr.rel (0) target = $region69
  $region68: #{seq2seq_forward.2} parent=0 // pred_region
    _
  $region69: #{seq2seq_forward.2} parent=0 // pred_fallthru
    _
  // Predicated region
  $region70: #{seq2seq_forward.2} parent=0 // pred_check
    _
  $region71: #{seq2seq_forward.2} parent=0 // pred_check_branch
    %2212 = sbr.rel (0) target = $region73
  $region72: #{seq2seq_forward.2} parent=0 // pred_region
    _
  $region73: #{seq2seq_forward.2} parent=0 // pred_fallthru
    _

// kernel: seq2seq_forward.3
$region0: #{seq2seq_forward.3}
  #allocation0 [shape = 'u32[]', space=smem, size = 0x4, offset = 0x4, fixed_abs, tag = 'smem constant byte address 0x4 - core index']
  #allocation1 [shape = 'u32[144,128]{1,0:T(1,128)}', space=vmem, size = 0x12000, scoped, tag = 'internal scratch']
  #allocation2 [shape = 'f32[8,8,32]{2,1,0:T(8,128)}', space=vmem, size = 0x8000, scoped, tag = 'scratch operand']
  %s0 = inlined_call_operand.vmem [shape: s32[8,1], index: 0, kind: input, shape index: {}]
  %s1 = inlined_call_operand.vmem [shape: f32[8,32], index: 1, kind: input, shape index: {}]
  %s2 = inlined_call_operand.vmem [shape: f32[8,8,64], index: 2, kind: input, shape index: {}]
  %s3 = inlined_call_operand.vmem [shape: f32[16,32], index: 3, kind: input, shape index: {}]
  %s4 = inlined_call_operand.vmem [shape: f32[32,32], index: 4, kind: input, shape index: {}]
  %s5 = inlined_call_operand.vmem [shape: f32[64,32], index: 5, kind: input, shape index: {}]
  %s6 = inlined_call_operand.vmem [shape: f32[1,32], index: 6, kind: input, shape index: {}]
  %s7 = inlined_call_operand.vmem [shape: f32[1,32], index: 7, kind: input, shape index: {}]
  %s8 = inlined_call_operand.vmem [shape: f32[32,96], index: 8, kind: input, shape index: {}]
  %s9 = inlined_call_operand.vmem [shape: f32[64,96], index: 9, kind: input, shape index: {}]
  %s10 = inlined_call_operand.vmem [shape: f32[32,96], index: 10, kind: input, shape index: {}]
  %s11 = inlined_call_operand.vmem [shape: f32[1,96], index: 11, kind: input, shape index: {}]
  %s12 = inlined_call_operand.vmem [shape: f32[1,96], index: 12, kind: input, shape index: {}]
  %s13 = inlined_call_operand.vmem [shape: f32[32,16], index: 13, kind: input, shape index: {}]
  %s14 = inlined_call_operand.vmem [shape: f32[64,16], index: 14, kind: input, shape index: {}]
  %s15 = inlined_call_operand.vmem [shape: f32[32,16], index: 15, kind: input, shape index: {}]
  %s16 = inlined_call_operand.vmem [shape: f32[1,16], index: 16, kind: input, shape index: {}]
  %s17 = inlined_call_operand.vmem [shape: f32[8,8,16], index: 17, kind: output, shape index: {}]
  %s18 = sld [smem:[#allocation0]]
  $region78: #{seq2seq_forward.3} parent=0
    _
  %s20 = ssub.s32 1, %s18
  %s21 = scalar_select 0, %s20, %s18
  // Predicated region
  $region2: #{seq2seq_forward.3} parent=0 // pred_check
    _
  $region3: #{seq2seq_forward.3} parent=0 // pred_check_branch
    %23 = sbr.rel (0) target = $region5
  $region4: #{seq2seq_forward.3} parent=0 // pred_region
    _
  $region5: #{seq2seq_forward.3} parent=0 // pred_fallthru
    _
  // Predicated region
  $region6: #{seq2seq_forward.3} parent=0 // pred_check
    _
  $region7: #{seq2seq_forward.3} parent=0 // pred_check_branch
    %25 = sbr.rel (0) target = $region9
  $region8: #{seq2seq_forward.3} parent=0 // pred_region
    _
  $region9: #{seq2seq_forward.3} parent=0 // pred_fallthru
    _
  // Predicated region
  $region10: #{seq2seq_forward.3} parent=0 // pred_check
    _
  $region11: #{seq2seq_forward.3} parent=0 // pred_check_branch
    %27 = sbr.rel (0) target = $region13
  $region12: #{seq2seq_forward.3} parent=0 // pred_region
    _
  $region13: #{seq2seq_forward.3} parent=0 // pred_fallthru
    _
  // Predicated region
  $region14: #{seq2seq_forward.3} parent=0 // pred_check
    _
  $region15: #{seq2seq_forward.3} parent=0 // pred_check_branch
    %29 = sbr.rel (0) target = $region17
  $region16: #{seq2seq_forward.3} parent=0 // pred_region
    _
  $region17: #{seq2seq_forward.3} parent=0 // pred_fallthru
    _
  // Predicated region
  $region18: #{seq2seq_forward.3} parent=0 // pred_check
    _
  $region19: #{seq2seq_forward.3} parent=0 // pred_check_branch
    %31 = sbr.rel (0) target = $region21
  $region20: #{seq2seq_forward.3} parent=0 // pred_region
    _
  $region21: #{seq2seq_forward.3} parent=0 // pred_fallthru
    _
  // Predicated region
  $region22: #{seq2seq_forward.3} parent=0 // pred_check
    _
  $region23: #{seq2seq_forward.3} parent=0 // pred_check_branch
    %33 = sbr.rel (0) target = $region25
  $region24: #{seq2seq_forward.3} parent=0 // pred_region
    _
  $region25: #{seq2seq_forward.3} parent=0 // pred_fallthru
    _
  // Predicated region
  $region26: #{seq2seq_forward.3} parent=0 // pred_check
    _
  $region27: #{seq2seq_forward.3} parent=0 // pred_check_branch
    %35 = sbr.rel (0) target = $region29
  $region28: #{seq2seq_forward.3} parent=0 // pred_region
    _
  $region29: #{seq2seq_forward.3} parent=0 // pred_fallthru
    _
  // Predicated region
  $region30: #{seq2seq_forward.3} parent=0 // pred_check
    _
  $region31: #{seq2seq_forward.3} parent=0 // pred_check_branch
    %37 = sbr.rel (0) target = $region33
  $region32: #{seq2seq_forward.3} parent=0 // pred_region
    _
  $region33: #{seq2seq_forward.3} parent=0 // pred_fallthru
    _
  // Predicated region
  $region34: #{seq2seq_forward.3} parent=0 // pred_check
    _
  $region35: #{seq2seq_forward.3} parent=0 // pred_check_branch
    %39 = sbr.rel (0) target = $region37
  $region36: #{seq2seq_forward.3} parent=0 // pred_region
    _
  $region37: #{seq2seq_forward.3} parent=0 // pred_fallthru
    _
  // Predicated region
  $region38: #{seq2seq_forward.3} parent=0 // pred_check
    _
  $region39: #{seq2seq_forward.3} parent=0 // pred_check_branch
    %41 = sbr.rel (0) target = $region41
  $region40: #{seq2seq_forward.3} parent=0 // pred_region
    _
  $region41: #{seq2seq_forward.3} parent=0 // pred_fallthru
    _
  // Predicated region
  $region42: #{seq2seq_forward.3} parent=0 // pred_check
    _
  $region43: #{seq2seq_forward.3} parent=0 // pred_check_branch
    %43 = sbr.rel (0) target = $region45
  $region44: #{seq2seq_forward.3} parent=0 // pred_region
    _
  $region45: #{seq2seq_forward.3} parent=0 // pred_fallthru
    _
  // Predicated region
  $region46: #{seq2seq_forward.3} parent=0 // pred_check
    _
  $region47: #{seq2seq_forward.3} parent=0 // pred_check_branch
    %45 = sbr.rel (0) target = $region49
  $region48: #{seq2seq_forward.3} parent=0 // pred_region
    _
  $region49: #{seq2seq_forward.3} parent=0 // pred_fallthru
    _
  // Predicated region
  $region50: #{seq2seq_forward.3} parent=0 // pred_check
    _
  $region51: #{seq2seq_forward.3} parent=0 // pred_check_branch
    %47 = sbr.rel (0) target = $region53
  $region52: #{seq2seq_forward.3} parent=0 // pred_region
    _
  $region53: #{seq2seq_forward.3} parent=0 // pred_fallthru
    _
  // Predicated region
  $region54: #{seq2seq_forward.3} parent=0 // pred_check
    _
  $region55: #{seq2seq_forward.3} parent=0 // pred_check_branch
    %49 = sbr.rel (0) target = $region57
  $region56: #{seq2seq_forward.3} parent=0 // pred_region
    _
  $region57: #{seq2seq_forward.3} parent=0 // pred_fallthru
    _
  // Predicated region
  $region58: #{seq2seq_forward.3} parent=0 // pred_check
    _
  $region59: #{seq2seq_forward.3} parent=0 // pred_check_branch
    %51 = sbr.rel (0) target = $region61
  $region60: #{seq2seq_forward.3} parent=0 // pred_region
    _
  $region61: #{seq2seq_forward.3} parent=0 // pred_fallthru
    _
  // Predicated region
  $region62: #{seq2seq_forward.3} parent=0 // pred_check
    _
  $region63: #{seq2seq_forward.3} parent=0 // pred_check_branch
    %53 = sbr.rel (0) target = $region65
  $region64: #{seq2seq_forward.3} parent=0 // pred_region
    _
  $region65: #{seq2seq_forward.3} parent=0 // pred_fallthru
    _
  // Predicated region
  $region66: #{seq2seq_forward.3} parent=0 // pred_check
    _
  $region67: #{seq2seq_forward.3} parent=0 // pred_check_branch
    %55 = sbr.rel (0) target = $region69
  $region68: #{seq2seq_forward.3} parent=0 // pred_region
    _
  $region69: #{seq2seq_forward.3} parent=0 // pred_fallthru
    _
  %v56 = vld [vmem:[%s2] sm:$0xff]
  %v57 = vld [vmem:[%s5] sm:$0xff]
  %v58 = vld [vmem:[%s5 + $0x8] sm:$0xff]
  %v59 = vld [vmem:[%s5 + $0x10] sm:$0xff]
  %v60 = vld [vmem:[%s5 + $0x18] sm:$0xff]
  %v61 = vld [vmem:[%s5 + $0x20] sm:$0xff]
  %v62 = vld [vmem:[%s5 + $0x28] sm:$0xff]
  %v63 = vld [vmem:[%s5 + $0x30] sm:$0xff]
  %v64 = vld [vmem:[%s5 + $0x38] sm:$0xff]
  %v65 = vld [vmem:[%s6] sm:$0x1]
  %v67 = vlaneseq
  %v68 = vshrl.u32 %v67, 7
  %v69 = vsub.s32 0, %v68
  %v70 = vrot.slane %v65, %v69
  %vm72 = vcmask 523264
  %v74 = vsel %vm72, %v56, 0
  %76 = vmatprep.subr.mxu0 0.0
  %77 = vmatpush1.msra.mxu0 0.0
  %78 = vmatprep.subr.mxu0 0.0
  %79 = vmatpush1.msra.mxu0 0.0
  %80 = vmatprep.subr.mxu0 0.0
  %81 = vmatpush1.msra.mxu0 0.0
  %82 = vmatprep.subr.mxu0 0.0
  %83 = vmatpush1.msra.mxu0 0.0
  %84 = vmatprep.subr.mxu0 0.0
  %85 = vmatpush1.msra.mxu0 0.0
  %86 = vmatprep.subr.mxu0 0.0
  %87 = vmatpush1.msra.mxu0 0.0
  %88 = vmatprep.subr.mxu0 0.0
  %89 = vmatpush1.msra.mxu0 0.0
  %90 = vmatprep.subr.mxu0 0.0
  %91 = vmatpush1.msra.mxu0 0.0
  %92 = vmatprep.subr.mxu0 0.0
  %93 = vmatpush1.msra.mxu0 %v64
  %94 = vmatprep.subr.mxu0 0.0
  %95 = vmatpush1.msra.mxu0 %v63
  %96 = vmatprep.subr.mxu0 0.0
  %97 = vmatpush1.msra.mxu0 %v62
  %98 = vmatprep.subr.mxu0 0.0
  %99 = vmatpush1.msra.mxu0 %v61
  %100 = vmatprep.subr.mxu0 0.0
  %101 = vmatpush1.msra.mxu0 %v60
  %102 = vmatprep.subr.mxu0 0.0
  %103 = vmatpush1.msra.mxu0 %v59
  %104 = vmatprep.subr.mxu0 0.0
  %105 = vmatpush1.msra.mxu0 %v58
  %106 = vmatprep.subr.mxu0 0.0
  %107 = vmatpush1.msra.mxu0 %v57
  %108 = vmatprep.subr.mxu0 0.0
  %109 = vmatpush2.msra.mxu0 0.0
  %110 = vmatprep.subr.mxu0 0.0
  %111 = vmatpush2.msra.mxu0 0.0
  %112 = vmatprep.subr.mxu0 0.0
  %113 = vmatpush2.msra.mxu0 0.0
  %114 = vmatprep.subr.mxu0 0.0
  %115 = vmatpush2.msra.mxu0 0.0
  %116 = vmatprep.subr.mxu0 0.0
  %117 = vmatpush2.msra.mxu0 0.0
  %118 = vmatprep.subr.mxu0 0.0
  %119 = vmatpush2.msra.mxu0 0.0
  %120 = vmatprep.subr.mxu0 0.0
  %121 = vmatpush2.msra.mxu0 0.0
  %122 = vmatprep.subr.mxu0 0.0
  %123 = vmatpush2.msra.mxu0 0.0
  %124 = vmatprep.subr.mxu0 0.0
  %125 = vmatpush2.msra.mxu0 0.0
  %126 = vmatprep.subr.mxu0 0.0
  %127 = vmatpush2.msra.mxu0 0.0
  %128 = vmatprep.subr.mxu0 0.0
  %129 = vmatpush2.msra.mxu0 0.0
  %130 = vmatprep.subr.mxu0 0.0
  %131 = vmatpush2.msra.mxu0 0.0
  %132 = vmatprep.subr.mxu0 0.0
  %133 = vmatpush2.msra.mxu0 0.0
  %134 = vmatprep.subr.mxu0 0.0
  %135 = vmatpush2.msra.mxu0 0.0
  %136 = vmatprep.subr.mxu0 0.0
  %137 = vmatpush2.msra.mxu0 0.0
  %138 = vmatprep.subr.mxu0 0.0
  %139 = vmatpush2.msra.mxu0 0.0
  %140 = vmatprep.mubr.f32.mxu0 0.0
  %141 = vmatmul.mubr.f32.gmra.mxu0 %v74
  %v142 = vpop.f32.mrf.mxu0
  %v143 = vadd.f32 %v70, %v142
  %v144 = vpop.f32.mrf.mxu0
  %145 = vdwg.mxu0
  %vm146 = vcmask 261120
  %147 = vst.msk [vmem:[#allocation2] sm:$0xff] %vm146, %v143
  %s148 = scalar_lea.vmem %s2, 8
  %v149 = vld [vmem:[%s148] sm:$0xff]
  %v150 = vld [vmem:[%s5] sm:$0xff]
  %v151 = vld [vmem:[%s5 + $0x8] sm:$0xff]
  %v152 = vld [vmem:[%s5 + $0x10] sm:$0xff]
  %v153 = vld [vmem:[%s5 + $0x18] sm:$0xff]
  %v154 = vld [vmem:[%s5 + $0x20] sm:$0xff]
  %v155 = vld [vmem:[%s5 + $0x28] sm:$0xff]
  %v156 = vld [vmem:[%s5 + $0x30] sm:$0xff]
  %v157 = vld [vmem:[%s5 + $0x38] sm:$0xff]
  %v158 = vld [vmem:[%s6] sm:$0x1]
  %v160 = vlaneseq
  %v161 = vshrl.u32 %v160, 7
  %v162 = vsub.s32 0, %v161
  %v163 = vrot.slane %v158, %v162
  %v166 = vsel %vm72, %v149, 0
  %168 = vmatprep.subr.mxu0 0.0
  %169 = vmatpush1.msra.mxu0 0.0
  %170 = vmatprep.subr.mxu0 0.0
  %171 = vmatpush1.msra.mxu0 0.0
  %172 = vmatprep.subr.mxu0 0.0
  %173 = vmatpush1.msra.mxu0 0.0
  %174 = vmatprep.subr.mxu0 0.0
  %175 = vmatpush1.msra.mxu0 0.0
  %176 = vmatprep.subr.mxu0 0.0
  %177 = vmatpush1.msra.mxu0 0.0
  %178 = vmatprep.subr.mxu0 0.0
  %179 = vmatpush1.msra.mxu0 0.0
  %180 = vmatprep.subr.mxu0 0.0
  %181 = vmatpush1.msra.mxu0 0.0
  %182 = vmatprep.subr.mxu0 0.0
  %183 = vmatpush1.msra.mxu0 0.0
  %184 = vmatprep.subr.mxu0 0.0
  %185 = vmatpush1.msra.mxu0 %v157
  %186 = vmatprep.subr.mxu0 0.0
  %187 = vmatpush1.msra.mxu0 %v156
  %188 = vmatprep.subr.mxu0 0.0
  %189 = vmatpush1.msra.mxu0 %v155
  %190 = vmatprep.subr.mxu0 0.0
  %191 = vmatpush1.msra.mxu0 %v154
  %192 = vmatprep.subr.mxu0 0.0
  %193 = vmatpush1.msra.mxu0 %v153
  %194 = vmatprep.subr.mxu0 0.0
  %195 = vmatpush1.msra.mxu0 %v152
  %196 = vmatprep.subr.mxu0 0.0
  %197 = vmatpush1.msra.mxu0 %v151
  %198 = vmatprep.subr.mxu0 0.0
  %199 = vmatpush1.msra.mxu0 %v150
  %200 = vmatprep.subr.mxu0 0.0
  %201 = vmatpush2.msra.mxu0 0.0
  %202 = vmatprep.subr.mxu0 0.0
  %203 = vmatpush2.msra.mxu0 0.0
  %204 = vmatprep.subr.mxu0 0.0
  %205 = vmatpush2.msra.mxu0 0.0
  %206 = vmatprep.subr.mxu0 0.0
  %207 = vmatpush2.msra.mxu0 0.0
  %208 = vmatprep.subr.mxu0 0.0
  %209 = vmatpush2.msra.mxu0 0.0
  %210 = vmatprep.subr.mxu0 0.0
  %211 = vmatpush2.msra.mxu0 0.0
  %212 = vmatprep.subr.mxu0 0.0
  %213 = vmatpush2.msra.mxu0 0.0
  %214 = vmatprep.subr.mxu0 0.0
  %215 = vmatpush2.msra.mxu0 0.0
  %216 = vmatprep.subr.mxu0 0.0
  %217 = vmatpush2.msra.mxu0 0.0
  %218 = vmatprep.subr.mxu0 0.0
  %219 = vmatpush2.msra.mxu0 0.0
  %220 = vmatprep.subr.mxu0 0.0
  %221 = vmatpush2.msra.mxu0 0.0
  %222 = vmatprep.subr.mxu0 0.0
  %223 = vmatpush2.msra.mxu0 0.0
  %224 = vmatprep.subr.mxu0 0.0
  %225 = vmatpush2.msra.mxu0 0.0
  %226 = vmatprep.subr.mxu0 0.0
  %227 = vmatpush2.msra.mxu0 0.0
  %228 = vmatprep.subr.mxu0 0.0
  %229 = vmatpush2.msra.mxu0 0.0
  %230 = vmatprep.subr.mxu0 0.0
  %231 = vmatpush2.msra.mxu0 0.0
  %232 = vmatprep.mubr.f32.mxu0 0.0
  %233 = vmatmul.mubr.f32.gmra.mxu0 %v166
  %v234 = vpop.f32.mrf.mxu0
  %v235 = vadd.f32 %v163, %v234
  %v236 = vpop.f32.mrf.mxu0
  %237 = vdwg.mxu0
  %s238 = scalar_lea.vmem [#allocation2], 8
  %239 = vst.msk [vmem:[%s238] sm:$0xff] %vm146, %v235
  %s240 = scalar_lea.vmem %s2, 16
  %v241 = vld [vmem:[%s240] sm:$0xff]
  %v242 = vld [vmem:[%s5] sm:$0xff]
  %v243 = vld [vmem:[%s5 + $0x8] sm:$0xff]
  %v244 = vld [vmem:[%s5 + $0x10] sm:$0xff]
  %v245 = vld [vmem:[%s5 + $0x18] sm:$0xff]
  %v246 = vld [vmem:[%s5 + $0x20] sm:$0xff]
  %v247 = vld [vmem:[%s5 + $0x28] sm:$0xff]
  %v248 = vld [vmem:[%s5 + $0x30] sm:$0xff]
  %v249 = vld [vmem:[%s5 + $0x38] sm:$0xff]
  %v250 = vld [vmem:[%s6] sm:$0x1]
  %v252 = vlaneseq
  %v253 = vshrl.u32 %v252, 7
  %v254 = vsub.s32 0, %v253
  %v255 = vrot.slane %v250, %v254
  %v258 = vsel %vm72, %v241, 0
  %260 = vmatprep.subr.mxu0 0.0
  %261 = vmatpush1.msra.mxu0 0.0
  %262 = vmatprep.subr.mxu0 0.0
  %263 = vmatpush1.msra.mxu0 0.0
  %264 = vmatprep.subr.mxu0 0.0
  %265 = vmatpush1.msra.mxu0 0.0
  %266 = vmatprep.subr.mxu0 0.0
  %267 = vmatpush1.msra.mxu0 0.0
  %268 = vmatprep.subr.mxu0 0.0
  %269 = vmatpush1.msra.mxu0 0.0
  %270 = vmatprep.subr.mxu0 0.0
  %271 = vmatpush1.msra.mxu0 0.0
  %272 = vmatprep.subr.mxu0 0.0
  %273 = vmatpush1.msra.mxu0 0.0
  %274 = vmatprep.subr.mxu0 0.0
  %275 = vmatpush1.msra.mxu0 0.0
  %276 = vmatprep.subr.mxu0 0.0
  %277 = vmatpush1.msra.mxu0 %v249
  %278 = vmatprep.subr.mxu0 0.0
  %279 = vmatpush1.msra.mxu0 %v248
  %280 = vmatprep.subr.mxu0 0.0
  %281 = vmatpush1.msra.mxu0 %v247
  %282 = vmatprep.subr.mxu0 0.0
  %283 = vmatpush1.msra.mxu0 %v246
  %284 = vmatprep.subr.mxu0 0.0
  %285 = vmatpush1.msra.mxu0 %v245
  %286 = vmatprep.subr.mxu0 0.0
  %287 = vmatpush1.msra.mxu0 %v244
  %288 = vmatprep.subr.mxu0 0.0
  %289 = vmatpush1.msra.mxu0 %v243
  %290 = vmatprep.subr.mxu0 0.0
  %291 = vmatpush1.msra.mxu0 %v242
  %292 = vmatprep.subr.mxu0 0.0
  %293 = vmatpush2.msra.mxu0 0.0
  %294 = vmatprep.subr.mxu0 0.0
  %295 = vmatpush2.msra.mxu0 0.0
  %296 = vmatprep.subr.mxu0 0.0
  %297 = vmatpush2.msra.mxu0 0.0
  %298 = vmatprep.subr.mxu0 0.0
  %299 = vmatpush2.msra.mxu0 0.0
  %300 = vmatprep.subr.mxu0 0.0
  %301 = vmatpush2.msra.mxu0 0.0
  %302 = vmatprep.subr.mxu0 0.0
  %303 = vmatpush2.msra.mxu0 0.0
  %304 = vmatprep.subr.mxu0 0.0
  %305 = vmatpush2.msra.mxu0 0.0
  %306 = vmatprep.subr.mxu0 0.0
  %307 = vmatpush2.msra.mxu0 0.0
  %308 = vmatprep.subr.mxu0 0.0
  %309 = vmatpush2.msra.mxu0 0.0
  %310 = vmatprep.subr.mxu0 0.0
  %311 = vmatpush2.msra.mxu0 0.0
  %312 = vmatprep.subr.mxu0 0.0
  %313 = vmatpush2.msra.mxu0 0.0
  %314 = vmatprep.subr.mxu0 0.0
  %315 = vmatpush2.msra.mxu0 0.0
  %316 = vmatprep.subr.mxu0 0.0
  %317 = vmatpush2.msra.mxu0 0.0
  %318 = vmatprep.subr.mxu0 0.0
  %319 = vmatpush2.msra.mxu0 0.0
  %320 = vmatprep.subr.mxu0 0.0
  %321 = vmatpush2.msra.mxu0 0.0
  %322 = vmatprep.subr.mxu0 0.0
  %323 = vmatpush2.msra.mxu0 0.0
  %324 = vmatprep.mubr.f32.mxu0 0.0
  %325 = vmatmul.mubr.f32.gmra.mxu0 %v258
  %v326 = vpop.f32.mrf.mxu0
  %v327 = vadd.f32 %v255, %v326
  %v328 = vpop.f32.mrf.mxu0
  %329 = vdwg.mxu0
  %s330 = scalar_lea.vmem [#allocation2], 16
  %331 = vst.msk [vmem:[%s330] sm:$0xff] %vm146, %v327
  %s332 = scalar_lea.vmem %s2, 24
  %v333 = vld [vmem:[%s332] sm:$0xff]
  %v334 = vld [vmem:[%s5] sm:$0xff]
  %v335 = vld [vmem:[%s5 + $0x8] sm:$0xff]
  %v336 = vld [vmem:[%s5 + $0x10] sm:$0xff]
  %v337 = vld [vmem:[%s5 + $0x18] sm:$0xff]
  %v338 = vld [vmem:[%s5 + $0x20] sm:$0xff]
  %v339 = vld [vmem:[%s5 + $0x28] sm:$0xff]
  %v340 = vld [vmem:[%s5 + $0x30] sm:$0xff]
  %v341 = vld [vmem:[%s5 + $0x38] sm:$0xff]
  %v342 = vld [vmem:[%s6] sm:$0x1]
  %v344 = vlaneseq
  %v345 = vshrl.u32 %v344, 7
  %v346 = vsub.s32 0, %v345
  %v347 = vrot.slane %v342, %v346
  %v350 = vsel %vm72, %v333, 0
  %352 = vmatprep.subr.mxu0 0.0
  %353 = vmatpush1.msra.mxu0 0.0
  %354 = vmatprep.subr.mxu0 0.0
  %355 = vmatpush1.msra.mxu0 0.0
  %356 = vmatprep.subr.mxu0 0.0
  %357 = vmatpush1.msra.mxu0 0.0
  %358 = vmatprep.subr.mxu0 0.0
  %359 = vmatpush1.msra.mxu0 0.0
  %360 = vmatprep.subr.mxu0 0.0
  %361 = vmatpush1.msra.mxu0 0.0
  %362 = vmatprep.subr.mxu0 0.0
  %363 = vmatpush1.msra.mxu0 0.0
  %364 = vmatprep.subr.mxu0 0.0
  %365 = vmatpush1.msra.mxu0 0.0
  %366 = vmatprep.subr.mxu0 0.0
  %367 = vmatpush1.msra.mxu0 0.0
  %368 = vmatprep.subr.mxu0 0.0
  %369 = vmatpush1.msra.mxu0 %v341
  %370 = vmatprep.subr.mxu0 0.0
  %371 = vmatpush1.msra.mxu0 %v340
  %372 = vmatprep.subr.mxu0 0.0
  %373 = vmatpush1.msra.mxu0 %v339
  %374 = vmatprep.subr.mxu0 0.0
  %375 = vmatpush1.msra.mxu0 %v338
  %376 = vmatprep.subr.mxu0 0.0
  %377 = vmatpush1.msra.mxu0 %v337
  %378 = vmatprep.subr.mxu0 0.0
  %379 = vmatpush1.msra.mxu0 %v336
  %380 = vmatprep.subr.mxu0 0.0
  %381 = vmatpush1.msra.mxu0 %v335
  %382 = vmatprep.subr.mxu0 0.0
  %383 = vmatpush1.msra.mxu0 %v334
  %384 = vmatprep.subr.mxu0 0.0
  %385 = vmatpush2.msra.mxu0 0.0
  %386 = vmatprep.subr.mxu0 0.0
  %387 = vmatpush2.msra.mxu0 0.0
  %388 = vmatprep.subr.mxu0 0.0
  %389 = vmatpush2.msra.mxu0 0.0
  %390 = vmatprep.subr.mxu0 0.0
  %391 = vmatpush2.msra.mxu0 0.0
  %392 = vmatprep.subr.mxu0 0.0
  %393 = vmatpush2.msra.mxu0 0.0
  %394 = vmatprep.subr.mxu0 0.0
  %395 = vmatpush2.msra.mxu0 0.0
  %396 = vmatprep.subr.mxu0 0.0
  %397 = vmatpush2.msra.mxu0 0.0
  %398 = vmatprep.subr.mxu0 0.0
  %399 = vmatpush2.msra.mxu0 0.0
  %400 = vmatprep.subr.mxu0 0.0
  %401 = vmatpush2.msra.mxu0 0.0
  %402 = vmatprep.subr.mxu0 0.0
  %403 = vmatpush2.msra.mxu0 0.0
  %404 = vmatprep.subr.mxu0 0.0
  %405 = vmatpush2.msra.mxu0 0.0
  %406 = vmatprep.subr.mxu0 0.0
  %407 = vmatpush2.msra.mxu0 0.0
  %408 = vmatprep.subr.mxu0 0.0
  %409 = vmatpush2.msra.mxu0 0.0
  %410 = vmatprep.subr.mxu0 0.0
  %411 = vmatpush2.msra.mxu0 0.0
  %412 = vmatprep.subr.mxu0 0.0
  %413 = vmatpush2.msra.mxu0 0.0
  %414 = vmatprep.subr.mxu0 0.0
  %415 = vmatpush2.msra.mxu0 0.0
  %416 = vmatprep.mubr.f32.mxu0 0.0
  %417 = vmatmul.mubr.f32.gmra.mxu0 %v350
  %v418 = vpop.f32.mrf.mxu0
  %v419 = vadd.f32 %v347, %v418
  %v420 = vpop.f32.mrf.mxu0
  %421 = vdwg.mxu0
  %s422 = scalar_lea.vmem [#allocation2], 24
  %423 = vst.msk [vmem:[%s422] sm:$0xff] %vm146, %v419
  %s424 = scalar_lea.vmem %s2, 32
  %v425 = vld [vmem:[%s424] sm:$0xff]
  %v426 = vld [vmem:[%s5] sm:$0xff]
  %v427 = vld [vmem:[%s5 + $0x8] sm:$0xff]
  %v428 = vld [vmem:[%s5 + $0x10] sm:$0xff]
  %v429 = vld [vmem:[%s5 + $0x18] sm:$0xff]
  %v430 = vld [vmem:[%s5 + $0x20] sm:$0xff]
  %v431 = vld [vmem:[%s5 + $0x28] sm:$0xff]
  %v432 = vld [vmem:[%s5 + $0x30] sm:$0xff]
  %v433 = vld [vmem:[%s5 + $0x38] sm:$0xff]
  %v434 = vld [vmem:[%s6] sm:$0x1]
  %v436 = vlaneseq
  %v437 = vshrl.u32 %v436, 7
  %v438 = vsub.s32 0, %v437
  %v439 = vrot.slane %v434, %v438
  %v442 = vsel %vm72, %v425, 0
  %444 = vmatprep.subr.mxu0 0.0
  %445 = vmatpush1.msra.mxu0 0.0
  %446 = vmatprep.subr.mxu0 0.0
  %447 = vmatpush1.msra.mxu0 0.0
  %448 = vmatprep.subr.mxu0 0.0
  %449 = vmatpush1.msra.mxu0 0.0
  %450 = vmatprep.subr.mxu0 0.0
  %451 = vmatpush1.msra.mxu0 0.0
  %452 = vmatprep.subr.mxu0 0.0
  %453 = vmatpush1.msra.mxu0 0.0
  %454 = vmatprep.subr.mxu0 0.0
  %455 = vmatpush1.msra.mxu0 0.0
  %456 = vmatprep.subr.mxu0 0.0
  %457 = vmatpush1.msra.mxu0 0.0
  %458 = vmatprep.subr.mxu0 0.0
  %459 = vmatpush1.msra.mxu0 0.0
  %460 = vmatprep.subr.mxu0 0.0
  %461 = vmatpush1.msra.mxu0 %v433
  %462 = vmatprep.subr.mxu0 0.0
  %463 = vmatpush1.msra.mxu0 %v432
  %464 = vmatprep.subr.mxu0 0.0
  %465 = vmatpush1.msra.mxu0 %v431
  %466 = vmatprep.subr.mxu0 0.0
  %467 = vmatpush1.msra.mxu0 %v430
  %468 = vmatprep.subr.mxu0 0.0
  %469 = vmatpush1.msra.mxu0 %v429
  %470 = vmatprep.subr.mxu0 0.0
  %471 = vmatpush1.msra.mxu0 %v428
  %472 = vmatprep.subr.mxu0 0.0
  %473 = vmatpush1.msra.mxu0 %v427
  %474 = vmatprep.subr.mxu0 0.0
  %475 = vmatpush1.msra.mxu0 %v426
  %476 = vmatprep.subr.mxu0 0.0
  %477 = vmatpush2.msra.mxu0 0.0
  %478 = vmatprep.subr.mxu0 0.0
  %479 = vmatpush2.msra.mxu0 0.0
  %480 = vmatprep.subr.mxu0 0.0
  %481 = vmatpush2.msra.mxu0 0.0
  %482 = vmatprep.subr.mxu0 0.0
  %483 = vmatpush2.msra.mxu0 0.0
  %484 = vmatprep.subr.mxu0 0.0
  %485 = vmatpush2.msra.mxu0 0.0
  %486 = vmatprep.subr.mxu0 0.0
  %487 = vmatpush2.msra.mxu0 0.0
  %488 = vmatprep.subr.mxu0 0.0
  %489 = vmatpush2.msra.mxu0 0.0
  %490 = vmatprep.subr.mxu0 0.0
  %491 = vmatpush2.msra.mxu0 0.0
  %492 = vmatprep.subr.mxu0 0.0
  %493 = vmatpush2.msra.mxu0 0.0
  %494 = vmatprep.subr.mxu0 0.0
  %495 = vmatpush2.msra.mxu0 0.0
  %496 = vmatprep.subr.mxu0 0.0
  %497 = vmatpush2.msra.mxu0 0.0
  %498 = vmatprep.subr.mxu0 0.0
  %499 = vmatpush2.msra.mxu0 0.0
  %500 = vmatprep.subr.mxu0 0.0
  %501 = vmatpush2.msra.mxu0 0.0
  %502 = vmatprep.subr.mxu0 0.0
  %503 = vmatpush2.msra.mxu0 0.0
  %504 = vmatprep.subr.mxu0 0.0
  %505 = vmatpush2.msra.mxu0 0.0
  %506 = vmatprep.subr.mxu0 0.0
  %507 = vmatpush2.msra.mxu0 0.0
  %508 = vmatprep.mubr.f32.mxu0 0.0
  %509 = vmatmul.mubr.f32.gmra.mxu0 %v442
  %v510 = vpop.f32.mrf.mxu0
  %v511 = vadd.f32 %v439, %v510
  %v512 = vpop.f32.mrf.mxu0
  %513 = vdwg.mxu0
  %s514 = scalar_lea.vmem [#allocation2], 32
  %515 = vst.msk [vmem:[%s514] sm:$0xff] %vm146, %v511
  %s516 = scalar_lea.vmem %s2, 40
  %v517 = vld [vmem:[%s516] sm:$0xff]
  %v518 = vld [vmem:[%s5] sm:$0xff]
  %v519 = vld [vmem:[%s5 + $0x8] sm:$0xff]
  %v520 = vld [vmem:[%s5 + $0x10] sm:$0xff]
  %v521 = vld [vmem:[%s5 + $0x18] sm:$0xff]
  %v522 = vld [vmem:[%s5 + $0x20] sm:$0xff]
  %v523 = vld [vmem:[%s5 + $0x28] sm:$0xff]
  %v524 = vld [vmem:[%s5 + $0x30] sm:$0xff]
  %v525 = vld [vmem:[%s5 + $0x38] sm:$0xff]
  %v526 = vld [vmem:[%s6] sm:$0x1]
  %v528 = vlaneseq
  %v529 = vshrl.u32 %v528, 7
  %v530 = vsub.s32 0, %v529
  %v531 = vrot.slane %v526, %v530
  %v534 = vsel %vm72, %v517, 0
  %536 = vmatprep.subr.mxu0 0.0
  %537 = vmatpush1.msra.mxu0 0.0
  %538 = vmatprep.subr.mxu0 0.0
  %539 = vmatpush1.msra.mxu0 0.0
  %540 = vmatprep.subr.mxu0 0.0
  %541 = vmatpush1.msra.mxu0 0.0
  %542 = vmatprep.subr.mxu0 0.0
  %543 = vmatpush1.msra.mxu0 0.0
  %544 = vmatprep.subr.mxu0 0.0
  %545 = vmatpush1.msra.mxu0 0.0
  %546 = vmatprep.subr.mxu0 0.0
  %547 = vmatpush1.msra.mxu0 0.0
  %548 = vmatprep.subr.mxu0 0.0
  %549 = vmatpush1.msra.mxu0 0.0
  %550 = vmatprep.subr.mxu0 0.0
  %551 = vmatpush1.msra.mxu0 0.0
  %552 = vmatprep.subr.mxu0 0.0
  %553 = vmatpush1.msra.mxu0 %v525
  %554 = vmatprep.subr.mxu0 0.0
  %555 = vmatpush1.msra.mxu0 %v524
  %556 = vmatprep.subr.mxu0 0.0
  %557 = vmatpush1.msra.mxu0 %v523
  %558 = vmatprep.subr.mxu0 0.0
  %559 = vmatpush1.msra.mxu0 %v522
  %560 = vmatprep.subr.mxu0 0.0
  %561 = vmatpush1.msra.mxu0 %v521
  %562 = vmatprep.subr.mxu0 0.0
  %563 = vmatpush1.msra.mxu0 %v520
  %564 = vmatprep.subr.mxu0 0.0
  %565 = vmatpush1.msra.mxu0 %v519
  %566 = vmatprep.subr.mxu0 0.0
  %567 = vmatpush1.msra.mxu0 %v518
  %568 = vmatprep.subr.mxu0 0.0
  %569 = vmatpush2.msra.mxu0 0.0
  %570 = vmatprep.subr.mxu0 0.0
  %571 = vmatpush2.msra.mxu0 0.0
  %572 = vmatprep.subr.mxu0 0.0
  %573 = vmatpush2.msra.mxu0 0.0
  %574 = vmatprep.subr.mxu0 0.0
  %575 = vmatpush2.msra.mxu0 0.0
  %576 = vmatprep.subr.mxu0 0.0
  %577 = vmatpush2.msra.mxu0 0.0
  %578 = vmatprep.subr.mxu0 0.0
  %579 = vmatpush2.msra.mxu0 0.0
  %580 = vmatprep.subr.mxu0 0.0
  %581 = vmatpush2.msra.mxu0 0.0
  %582 = vmatprep.subr.mxu0 0.0
  %583 = vmatpush2.msra.mxu0 0.0
  %584 = vmatprep.subr.mxu0 0.0
  %585 = vmatpush2.msra.mxu0 0.0
  %586 = vmatprep.subr.mxu0 0.0
  %587 = vmatpush2.msra.mxu0 0.0
  %588 = vmatprep.subr.mxu0 0.0
  %589 = vmatpush2.msra.mxu0 0.0
  %590 = vmatprep.subr.mxu0 0.0
  %591 = vmatpush2.msra.mxu0 0.0
  %592 = vmatprep.subr.mxu0 0.0
  %593 = vmatpush2.msra.mxu0 0.0
  %594 = vmatprep.subr.mxu0 0.0
  %595 = vmatpush2.msra.mxu0 0.0
  %596 = vmatprep.subr.mxu0 0.0
  %597 = vmatpush2.msra.mxu0 0.0
  %598 = vmatprep.subr.mxu0 0.0
  %599 = vmatpush2.msra.mxu0 0.0
  %600 = vmatprep.mubr.f32.mxu0 0.0
  %601 = vmatmul.mubr.f32.gmra.mxu0 %v534
  %v602 = vpop.f32.mrf.mxu0
  %v603 = vadd.f32 %v531, %v602
  %v604 = vpop.f32.mrf.mxu0
  %605 = vdwg.mxu0
  %s606 = scalar_lea.vmem [#allocation2], 40
  %607 = vst.msk [vmem:[%s606] sm:$0xff] %vm146, %v603
  %s608 = scalar_lea.vmem %s2, 48
  %v609 = vld [vmem:[%s608] sm:$0xff]
  %v610 = vld [vmem:[%s5] sm:$0xff]
  %v611 = vld [vmem:[%s5 + $0x8] sm:$0xff]
  %v612 = vld [vmem:[%s5 + $0x10] sm:$0xff]
  %v613 = vld [vmem:[%s5 + $0x18] sm:$0xff]
  %v614 = vld [vmem:[%s5 + $0x20] sm:$0xff]
  %v615 = vld [vmem:[%s5 + $0x28] sm:$0xff]
  %v616 = vld [vmem:[%s5 + $0x30] sm:$0xff]
  %v617 = vld [vmem:[%s5 + $0x38] sm:$0xff]
  %v618 = vld [vmem:[%s6] sm:$0x1]
  %v620 = vlaneseq
  %v621 = vshrl.u32 %v620, 7
  %v622 = vsub.s32 0, %v621
  %v623 = vrot.slane %v618, %v622
  %v626 = vsel %vm72, %v609, 0
  %628 = vmatprep.subr.mxu0 0.0
  %629 = vmatpush1.msra.mxu0 0.0
  %630 = vmatprep.subr.mxu0 0.0
  %631 = vmatpush1.msra.mxu0 0.0
  %632 = vmatprep.subr.mxu0 0.0
  %633 = vmatpush1.msra.mxu0 0.0
  %634 = vmatprep.subr.mxu0 0.0
  %635 = vmatpush1.msra.mxu0 0.0
  %636 = vmatprep.subr.mxu0 0.0
  %637 = vmatpush1.msra.mxu0 0.0
  %638 = vmatprep.subr.mxu0 0.0
  %639 = vmatpush1.msra.mxu0 0.0
  %640 = vmatprep.subr.mxu0 0.0
  %641 = vmatpush1.msra.mxu0 0.0
  %642 = vmatprep.subr.mxu0 0.0
  %643 = vmatpush1.msra.mxu0 0.0
  %644 = vmatprep.subr.mxu0 0.0
  %645 = vmatpush1.msra.mxu0 %v617
  %646 = vmatprep.subr.mxu0 0.0
  %647 = vmatpush1.msra.mxu0 %v616
  %648 = vmatprep.subr.mxu0 0.0
  %649 = vmatpush1.msra.mxu0 %v615
  %650 = vmatprep.subr.mxu0 0.0
  %651 = vmatpush1.msra.mxu0 %v614
  %652 = vmatprep.subr.mxu0 0.0
  %653 = vmatpush1.msra.mxu0 %v613
  %654 = vmatprep.subr.mxu0 0.0
  %655 = vmatpush1.msra.mxu0 %v612
  %656 = vmatprep.subr.mxu0 0.0
  %657 = vmatpush1.msra.mxu0 %v611
  %658 = vmatprep.subr.mxu0 0.0
  %659 = vmatpush1.msra.mxu0 %v610
  %660 = vmatprep.subr.mxu0 0.0
  %661 = vmatpush2.msra.mxu0 0.0
  %662 = vmatprep.subr.mxu0 0.0
  %663 = vmatpush2.msra.mxu0 0.0
  %664 = vmatprep.subr.mxu0 0.0
  %665 = vmatpush2.msra.mxu0 0.0
  %666 = vmatprep.subr.mxu0 0.0
  %667 = vmatpush2.msra.mxu0 0.0
  %668 = vmatprep.subr.mxu0 0.0
  %669 = vmatpush2.msra.mxu0 0.0
  %670 = vmatprep.subr.mxu0 0.0
  %671 = vmatpush2.msra.mxu0 0.0
  %672 = vmatprep.subr.mxu0 0.0
  %673 = vmatpush2.msra.mxu0 0.0
  %674 = vmatprep.subr.mxu0 0.0
  %675 = vmatpush2.msra.mxu0 0.0
  %676 = vmatprep.subr.mxu0 0.0
  %677 = vmatpush2.msra.mxu0 0.0
  %678 = vmatprep.subr.mxu0 0.0
  %679 = vmatpush2.msra.mxu0 0.0
  %680 = vmatprep.subr.mxu0 0.0
  %681 = vmatpush2.msra.mxu0 0.0
  %682 = vmatprep.subr.mxu0 0.0
  %683 = vmatpush2.msra.mxu0 0.0
  %684 = vmatprep.subr.mxu0 0.0
  %685 = vmatpush2.msra.mxu0 0.0
  %686 = vmatprep.subr.mxu0 0.0
  %687 = vmatpush2.msra.mxu0 0.0
  %688 = vmatprep.subr.mxu0 0.0
  %689 = vmatpush2.msra.mxu0 0.0
  %690 = vmatprep.subr.mxu0 0.0
  %691 = vmatpush2.msra.mxu0 0.0
  %692 = vmatprep.mubr.f32.mxu0 0.0
  %693 = vmatmul.mubr.f32.gmra.mxu0 %v626
  %v694 = vpop.f32.mrf.mxu0
  %v695 = vadd.f32 %v623, %v694
  %v696 = vpop.f32.mrf.mxu0
  %697 = vdwg.mxu0
  %s698 = scalar_lea.vmem [#allocation2], 48
  %699 = vst.msk [vmem:[%s698] sm:$0xff] %vm146, %v695
  %s700 = scalar_lea.vmem %s2, 56
  %v701 = vld [vmem:[%s700] sm:$0xff]
  %v702 = vld [vmem:[%s5] sm:$0xff]
  %v703 = vld [vmem:[%s5 + $0x8] sm:$0xff]
  %v704 = vld [vmem:[%s5 + $0x10] sm:$0xff]
  %v705 = vld [vmem:[%s5 + $0x18] sm:$0xff]
  %v706 = vld [vmem:[%s5 + $0x20] sm:$0xff]
  %v707 = vld [vmem:[%s5 + $0x28] sm:$0xff]
  %v708 = vld [vmem:[%s5 + $0x30] sm:$0xff]
  %v709 = vld [vmem:[%s5 + $0x38] sm:$0xff]
  %v710 = vld [vmem:[%s6] sm:$0x1]
  %v712 = vlaneseq
  %v713 = vshrl.u32 %v712, 7
  %v714 = vsub.s32 0, %v713
  %v715 = vrot.slane %v710, %v714
  %v718 = vsel %vm72, %v701, 0
  %720 = vmatprep.subr.mxu0 0.0
  %721 = vmatpush1.msra.mxu0 0.0
  %722 = vmatprep.subr.mxu0 0.0
  %723 = vmatpush1.msra.mxu0 0.0
  %724 = vmatprep.subr.mxu0 0.0
  %725 = vmatpush1.msra.mxu0 0.0
  %726 = vmatprep.subr.mxu0 0.0
  %727 = vmatpush1.msra.mxu0 0.0
  %728 = vmatprep.subr.mxu0 0.0
  %729 = vmatpush1.msra.mxu0 0.0
  %730 = vmatprep.subr.mxu0 0.0
  %731 = vmatpush1.msra.mxu0 0.0
  %732 = vmatprep.subr.mxu0 0.0
  %733 = vmatpush1.msra.mxu0 0.0
  %734 = vmatprep.subr.mxu0 0.0
  %735 = vmatpush1.msra.mxu0 0.0
  %736 = vmatprep.subr.mxu0 0.0
  %737 = vmatpush1.msra.mxu0 %v709
  %738 = vmatprep.subr.mxu0 0.0
  %739 = vmatpush1.msra.mxu0 %v708
  %740 = vmatprep.subr.mxu0 0.0
  %741 = vmatpush1.msra.mxu0 %v707
  %742 = vmatprep.subr.mxu0 0.0
  %743 = vmatpush1.msra.mxu0 %v706
  %744 = vmatprep.subr.mxu0 0.0
  %745 = vmatpush1.msra.mxu0 %v705
  %746 = vmatprep.subr.mxu0 0.0
  %747 = vmatpush1.msra.mxu0 %v704
  %748 = vmatprep.subr.mxu0 0.0
  %749 = vmatpush1.msra.mxu0 %v703
  %750 = vmatprep.subr.mxu0 0.0
  %751 = vmatpush1.msra.mxu0 %v702
  %752 = vmatprep.subr.mxu0 0.0
  %753 = vmatpush2.msra.mxu0 0.0
  %754 = vmatprep.subr.mxu0 0.0
  %755 = vmatpush2.msra.mxu0 0.0
  %756 = vmatprep.subr.mxu0 0.0
  %757 = vmatpush2.msra.mxu0 0.0
  %758 = vmatprep.subr.mxu0 0.0
  %759 = vmatpush2.msra.mxu0 0.0
  %760 = vmatprep.subr.mxu0 0.0
  %761 = vmatpush2.msra.mxu0 0.0
  %762 = vmatprep.subr.mxu0 0.0
  %763 = vmatpush2.msra.mxu0 0.0
  %764 = vmatprep.subr.mxu0 0.0
  %765 = vmatpush2.msra.mxu0 0.0
  %766 = vmatprep.subr.mxu0 0.0
  %767 = vmatpush2.msra.mxu0 0.0
  %768 = vmatprep.subr.mxu0 0.0
  %769 = vmatpush2.msra.mxu0 0.0
  %770 = vmatprep.subr.mxu0 0.0
  %771 = vmatpush2.msra.mxu0 0.0
  %772 = vmatprep.subr.mxu0 0.0
  %773 = vmatpush2.msra.mxu0 0.0
  %774 = vmatprep.subr.mxu0 0.0
  %775 = vmatpush2.msra.mxu0 0.0
  %776 = vmatprep.subr.mxu0 0.0
  %777 = vmatpush2.msra.mxu0 0.0
  %778 = vmatprep.subr.mxu0 0.0
  %779 = vmatpush2.msra.mxu0 0.0
  %780 = vmatprep.subr.mxu0 0.0
  %781 = vmatpush2.msra.mxu0 0.0
  %782 = vmatprep.subr.mxu0 0.0
  %783 = vmatpush2.msra.mxu0 0.0
  %784 = vmatprep.mubr.f32.mxu0 0.0
  %785 = vmatmul.mubr.f32.gmra.mxu0 %v718
  %v786 = vpop.f32.mrf.mxu0
  %v787 = vadd.f32 %v715, %v786
  %v788 = vpop.f32.mrf.mxu0
  %789 = vdwg.mxu0
  %s790 = scalar_lea.vmem [#allocation2], 56
  %791 = vst.msk [vmem:[%s790] sm:$0xff] %vm146, %v787
  %vm792 = vcmask 130048
  %793 = vst.msk [vmem:[%s17] sm:$0xff] %vm792, 0.0
  %v794 = vlaneseq
  %v795 = vand.u32 %v794, 127
  %v796 = vcvt.s32.f32 %v795
  %v797 = vld [vmem:[%s1] sm:$0xff]
  %v798 = vld [vmem:[%s0] sm:$0xff]
  %799 = vset.pattern.permute.xlu0 0
  %800 = vperm.xlu0 %799, %v798
  %v801 = vpop.permute.xlu0 %800
  %vm802 = vcmp.eq.s32.totalorder %v795, %v801
  %v803 = vsel %vm802, 1, 0
  %v804 = vcvt.s32.f32 %v803
  %v805 = vld [vmem:[%s3] sm:$0xff]
  %v806 = vld [vmem:[%s3 + $0x8] sm:$0xff]
  %v808 = vsel %vm792, %v804, 0
  %810 = vmatprep.subr.mxu0 0.0
  %811 = vmatpush1.msra.mxu0 0.0
  %812 = vmatprep.subr.mxu0 0.0
  %813 = vmatpush1.msra.mxu0 0.0
  %814 = vmatprep.subr.mxu0 0.0
  %815 = vmatpush1.msra.mxu0 0.0
  %816 = vmatprep.subr.mxu0 0.0
  %817 = vmatpush1.msra.mxu0 0.0
  %818 = vmatprep.subr.mxu0 0.0
  %819 = vmatpush1.msra.mxu0 0.0
  %820 = vmatprep.subr.mxu0 0.0
  %821 = vmatpush1.msra.mxu0 0.0
  %822 = vmatprep.subr.mxu0 0.0
  %823 = vmatpush1.msra.mxu0 0.0
  %824 = vmatprep.subr.mxu0 0.0
  %825 = vmatpush1.msra.mxu0 0.0
  %826 = vmatprep.subr.mxu0 0.0
  %827 = vmatpush1.msra.mxu0 0.0
  %828 = vmatprep.subr.mxu0 0.0
  %829 = vmatpush1.msra.mxu0 0.0
  %830 = vmatprep.subr.mxu0 0.0
  %831 = vmatpush1.msra.mxu0 0.0
  %832 = vmatprep.subr.mxu0 0.0
  %833 = vmatpush1.msra.mxu0 0.0
  %834 = vmatprep.subr.mxu0 0.0
  %835 = vmatpush1.msra.mxu0 0.0
  %836 = vmatprep.subr.mxu0 0.0
  %837 = vmatpush1.msra.mxu0 0.0
  %838 = vmatprep.subr.mxu0 0.0
  %839 = vmatpush1.msra.mxu0 %v806
  %840 = vmatprep.subr.mxu0 0.0
  %841 = vmatpush1.msra.mxu0 %v805
  %842 = vmatprep.subr.mxu0 0.0
  %843 = vmatpush2.msra.mxu0 0.0
  %844 = vmatprep.subr.mxu0 0.0
  %845 = vmatpush2.msra.mxu0 0.0
  %846 = vmatprep.subr.mxu0 0.0
  %847 = vmatpush2.msra.mxu0 0.0
  %848 = vmatprep.subr.mxu0 0.0
  %849 = vmatpush2.msra.mxu0 0.0
  %850 = vmatprep.subr.mxu0 0.0
  %851 = vmatpush2.msra.mxu0 0.0
  %852 = vmatprep.subr.mxu0 0.0
  %853 = vmatpush2.msra.mxu0 0.0
  %854 = vmatprep.subr.mxu0 0.0
  %855 = vmatpush2.msra.mxu0 0.0
  %856 = vmatprep.subr.mxu0 0.0
  %857 = vmatpush2.msra.mxu0 0.0
  %858 = vmatprep.subr.mxu0 0.0
  %859 = vmatpush2.msra.mxu0 0.0
  %860 = vmatprep.subr.mxu0 0.0
  %861 = vmatpush2.msra.mxu0 0.0
  %862 = vmatprep.subr.mxu0 0.0
  %863 = vmatpush2.msra.mxu0 0.0
  %864 = vmatprep.subr.mxu0 0.0
  %865 = vmatpush2.msra.mxu0 0.0
  %866 = vmatprep.subr.mxu0 0.0
  %867 = vmatpush2.msra.mxu0 0.0
  %868 = vmatprep.subr.mxu0 0.0
  %869 = vmatpush2.msra.mxu0 0.0
  %870 = vmatprep.subr.mxu0 0.0
  %871 = vmatpush2.msra.mxu0 0.0
  %872 = vmatprep.subr.mxu0 0.0
  %873 = vmatpush2.msra.mxu0 0.0
  %874 = vmatprep.mubr.f32.mxu0 0.0
  %875 = vmatmul.mubr.f32.gmra.mxu0 %v808
  %v876 = vpop.f32.mrf.mxu0
  %v877 = vadd.f32 0.0, %v876
  %v878 = vpop.f32.mrf.mxu0
  %879 = vdwg.mxu0
  %v880 = vld [vmem:[%s4] sm:$0xff]
  %v881 = vld [vmem:[%s4 + $0x8] sm:$0xff]
  %v882 = vld [vmem:[%s4 + $0x10] sm:$0xff]
  %v883 = vld [vmem:[%s4 + $0x18] sm:$0xff]
  %v885 = vsel %vm146, %v797, 0
  %887 = vmatprep.subr.mxu0 0.0
  %888 = vmatpush1.msra.mxu0 0.0
  %889 = vmatprep.subr.mxu0 0.0
  %890 = vmatpush1.msra.mxu0 0.0
  %891 = vmatprep.subr.mxu0 0.0
  %892 = vmatpush1.msra.mxu0 0.0
  %893 = vmatprep.subr.mxu0 0.0
  %894 = vmatpush1.msra.mxu0 0.0
  %895 = vmatprep.subr.mxu0 0.0
  %896 = vmatpush1.msra.mxu0 0.0
  %897 = vmatprep.subr.mxu0 0.0
  %898 = vmatpush1.msra.mxu0 0.0
  %899 = vmatprep.subr.mxu0 0.0
  %900 = vmatpush1.msra.mxu0 0.0
  %901 = vmatprep.subr.mxu0 0.0
  %902 = vmatpush1.msra.mxu0 0.0
  %903 = vmatprep.subr.mxu0 0.0
  %904 = vmatpush1.msra.mxu0 0.0
  %905 = vmatprep.subr.mxu0 0.0
  %906 = vmatpush1.msra.mxu0 0.0
  %907 = vmatprep.subr.mxu0 0.0
  %908 = vmatpush1.msra.mxu0 0.0
  %909 = vmatprep.subr.mxu0 0.0
  %910 = vmatpush1.msra.mxu0 0.0
  %911 = vmatprep.subr.mxu0 0.0
  %912 = vmatpush1.msra.mxu0 %v883
  %913 = vmatprep.subr.mxu0 0.0
  %914 = vmatpush1.msra.mxu0 %v882
  %915 = vmatprep.subr.mxu0 0.0
  %916 = vmatpush1.msra.mxu0 %v881
  %917 = vmatprep.subr.mxu0 0.0
  %918 = vmatpush1.msra.mxu0 %v880
  %919 = vmatprep.subr.mxu0 0.0
  %920 = vmatpush2.msra.mxu0 0.0
  %921 = vmatprep.subr.mxu0 0.0
  %922 = vmatpush2.msra.mxu0 0.0
  %923 = vmatprep.subr.mxu0 0.0
  %924 = vmatpush2.msra.mxu0 0.0
  %925 = vmatprep.subr.mxu0 0.0
  %926 = vmatpush2.msra.mxu0 0.0
  %927 = vmatprep.subr.mxu0 0.0
  %928 = vmatpush2.msra.mxu0 0.0
  %929 = vmatprep.subr.mxu0 0.0
  %930 = vmatpush2.msra.mxu0 0.0
  %931 = vmatprep.subr.mxu0 0.0
  %932 = vmatpush2.msra.mxu0 0.0
  %933 = vmatprep.subr.mxu0 0.0
  %934 = vmatpush2.msra.mxu0 0.0
  %935 = vmatprep.subr.mxu0 0.0
  %936 = vmatpush2.msra.mxu0 0.0
  %937 = vmatprep.subr.mxu0 0.0
  %938 = vmatpush2.msra.mxu0 0.0
  %939 = vmatprep.subr.mxu0 0.0
  %940 = vmatpush2.msra.mxu0 0.0
  %941 = vmatprep.subr.mxu0 0.0
  %942 = vmatpush2.msra.mxu0 0.0
  %943 = vmatprep.subr.mxu0 0.0
  %944 = vmatpush2.msra.mxu0 0.0
  %945 = vmatprep.subr.mxu0 0.0
  %946 = vmatpush2.msra.mxu0 0.0
  %947 = vmatprep.subr.mxu0 0.0
  %948 = vmatpush2.msra.mxu0 0.0
  %949 = vmatprep.subr.mxu0 0.0
  %950 = vmatpush2.msra.mxu0 0.0
  %951 = vmatprep.mubr.f32.mxu0 0.0
  %952 = vmatmul.mubr.f32.gmra.mxu0 %v885
  %v953 = vpop.f32.mrf.mxu0
  %v954 = vadd.f32 0.0, %v953
  %v955 = vpop.f32.mrf.mxu0
  %956 = vdwg.mxu0
  %v957 = vld [vmem:[#allocation2] sm:$0xff]
  %v958 = vld [vmem:[#allocation2 + $0x8] sm:$0xff]
  %v959 = vld [vmem:[#allocation2 + $0x10] sm:$0xff]
  %v960 = vld [vmem:[#allocation2 + $0x18] sm:$0xff]
  %v961 = vld [vmem:[#allocation2 + $0x20] sm:$0xff]
  %v962 = vld [vmem:[#allocation2 + $0x28] sm:$0xff]
  %v963 = vld [vmem:[#allocation2 + $0x30] sm:$0xff]
  %v964 = vld [vmem:[#allocation2 + $0x38] sm:$0xff]
  %v965 = vadd.f32 %v957, %v954
  %v966 = vadd.f32 %v958, %v954
  %v967 = vadd.f32 %v959, %v954
  %v968 = vadd.f32 %v960, %v954
  %v969 = vadd.f32 %v961, %v954
  %v970 = vadd.f32 %v962, %v954
  %v971 = vadd.f32 %v963, %v954
  %v972 = vadd.f32 %v964, %v954
  %v973 = vtanh.pop %v965
  %v974 = vtanh.pop %v966
  %v975 = vtanh.pop %v967
  %v976 = vtanh.pop %v968
  %v977 = vtanh.pop %v969
  %v978 = vtanh.pop %v970
  %v979 = vtanh.pop %v971
  %v980 = vtanh.pop %v972
  %v981 = vld [vmem:[%s7] sm:$0x1]
  %v983 = vlaneseq
  %v984 = vshrl.u32 %v983, 7
  %v985 = vsub.s32 0, %v984
  %v986 = vrot.slane %v981, %v985
  %v988 = vmul.f32 %v973, %v986
  %v989 = vmul.f32 %v974, %v986
  %v990 = vmul.f32 %v975, %v986
  %v991 = vmul.f32 %v976, %v986
  %v992 = vmul.f32 %v977, %v986
  %v993 = vmul.f32 %v978, %v986
  %v994 = vmul.f32 %v979, %v986
  %v995 = vmul.f32 %v980, %v986
  %v996 = vsel %vm146, %v988, 0.0
  %997 = vadd.xlane.f32.xlu0 %v996
  %v998 = vpop.xlane.xlu0 %997
  %v999 = vsel %vm146, %v989, 0.0
  %1000 = vadd.xlane.f32.xlu0 %v999
  %v1001 = vpop.xlane.xlu0 %1000
  %v1002 = vsel %vm146, %v990, 0.0
  %1003 = vadd.xlane.f32.xlu0 %v1002
  %v1004 = vpop.xlane.xlu0 %1003
  %v1005 = vsel %vm146, %v991, 0.0
  %1006 = vadd.xlane.f32.xlu0 %v1005
  %v1007 = vpop.xlane.xlu0 %1006
  %v1008 = vsel %vm146, %v992, 0.0
  %1009 = vadd.xlane.f32.xlu0 %v1008
  %v1010 = vpop.xlane.xlu0 %1009
  %v1011 = vsel %vm146, %v993, 0.0
  %1012 = vadd.xlane.f32.xlu0 %v1011
  %v1013 = vpop.xlane.xlu0 %1012
  %v1014 = vsel %vm146, %v994, 0.0
  %1015 = vadd.xlane.f32.xlu0 %v1014
  %v1016 = vpop.xlane.xlu0 %1015
  %v1017 = vsel %vm146, %v995, 0.0
  %1018 = vadd.xlane.f32.xlu0 %v1017
  %v1019 = vpop.xlane.xlu0 %1018
  %v1020 = vmax.f32 %v998, %v1010
  %v1021 = vmax.f32 %v1001, %v1013
  %v1022 = vmax.f32 %v1004, %v1016
  %v1023 = vmax.f32 %v1007, %v1019
  %v1024 = vmax.f32 %v1020, %v1021
  %v1025 = vmax.f32 %v1022, %v1023
  %v1026 = vmax.f32 %v1024, %v1025
  %v1027 = vsub.f32 %v998, %v1026
  %v1028 = vsub.f32 %v1001, %v1026
  %v1029 = vsub.f32 %v1004, %v1026
  %v1030 = vsub.f32 %v1007, %v1026
  %v1031 = vsub.f32 %v1010, %v1026
  %v1032 = vsub.f32 %v1013, %v1026
  %v1033 = vsub.f32 %v1016, %v1026
  %v1034 = vsub.f32 %v1019, %v1026
  %v1035 = vmul.f32 %v1027, 1.442695
  %v1036 = vpow.pop %v1035
  %v1037 = vmul.f32 %v1028, 1.442695
  %v1038 = vpow.pop %v1037
  %v1039 = vmul.f32 %v1029, 1.442695
  %v1040 = vpow.pop %v1039
  %v1041 = vmul.f32 %v1030, 1.442695
  %v1042 = vpow.pop %v1041
  %v1043 = vmul.f32 %v1031, 1.442695
  %v1044 = vpow.pop %v1043
  %v1045 = vmul.f32 %v1032, 1.442695
  %v1046 = vpow.pop %v1045
  %v1047 = vmul.f32 %v1033, 1.442695
  %v1048 = vpow.pop %v1047
  %v1049 = vmul.f32 %v1034, 1.442695
  %v1050 = vpow.pop %v1049
  %v1051 = vadd.f32 %v1036, %v1038
  %v1052 = vadd.f32 %v1051, %v1040
  %v1053 = vadd.f32 %v1052, %v1042
  %v1054 = vadd.f32 %v1053, %v1044
  %v1055 = vadd.f32 %v1054, %v1046
  %v1056 = vadd.f32 %v1055, %v1048
  %v1057 = vadd.f32 %v1056, %v1050
  %v1058 = vrcp.pop %v1057
  %v1059 = vmul.f32 %v1036, %v1058
  %v1060 = vmul.f32 %v1038, %v1058
  %v1061 = vmul.f32 %v1040, %v1058
  %v1062 = vmul.f32 %v1042, %v1058
  %v1063 = vmul.f32 %v1044, %v1058
  %v1064 = vmul.f32 %v1046, %v1058
  %v1065 = vmul.f32 %v1048, %v1058
  %v1066 = vmul.f32 %v1050, %v1058
  %v1067 = vld [vmem:[%s2] sm:$0xff]
  %v1068 = vld [vmem:[%s2 + $0x8] sm:$0xff]
  %v1069 = vld [vmem:[%s2 + $0x10] sm:$0xff]
  %v1070 = vld [vmem:[%s2 + $0x18] sm:$0xff]
  %v1071 = vld [vmem:[%s2 + $0x20] sm:$0xff]
  %v1072 = vld [vmem:[%s2 + $0x28] sm:$0xff]
  %v1073 = vld [vmem:[%s2 + $0x30] sm:$0xff]
  %v1074 = vld [vmem:[%s2 + $0x38] sm:$0xff]
  %v1075 = vmul.f32 %v1059, %v1067
  %v1076 = vmul.f32 %v1060, %v1068
  %v1077 = vmul.f32 %v1061, %v1069
  %v1078 = vmul.f32 %v1062, %v1070
  %v1079 = vmul.f32 %v1063, %v1071
  %v1080 = vmul.f32 %v1064, %v1072
  %v1081 = vmul.f32 %v1065, %v1073
  %v1082 = vmul.f32 %v1066, %v1074
  %v1083 = vsel %vm72, %v1075, 0.0
  %v1084 = vsel %vm72, %v1076, 0.0
  %v1085 = vadd.f32 %v1083, %v1084
  %v1086 = vsel %vm72, %v1077, 0.0
  %v1087 = vadd.f32 %v1085, %v1086
  %v1088 = vsel %vm72, %v1078, 0.0
  %v1089 = vadd.f32 %v1087, %v1088
  %v1090 = vsel %vm72, %v1079, 0.0
  %v1091 = vadd.f32 %v1089, %v1090
  %v1092 = vsel %vm72, %v1080, 0.0
  %v1093 = vadd.f32 %v1091, %v1092
  %v1094 = vsel %vm72, %v1081, 0.0
  %v1095 = vadd.f32 %v1093, %v1094
  %v1096 = vsel %vm72, %v1082, 0.0
  %v1097 = vadd.f32 %v1095, %v1096
  %v1098 = vld [vmem:[%s8] sm:$0xff]
  %v1099 = vld [vmem:[%s8 + $0x8] sm:$0xff]
  %v1100 = vld [vmem:[%s8 + $0x10] sm:$0xff]
  %v1101 = vld [vmem:[%s8 + $0x18] sm:$0xff]
  %v1102 = vld [vmem:[%s9] sm:$0xff]
  %v1103 = vld [vmem:[%s9 + $0x8] sm:$0xff]
  %v1104 = vld [vmem:[%s9 + $0x10] sm:$0xff]
  %v1105 = vld [vmem:[%s9 + $0x18] sm:$0xff]
  %v1106 = vld [vmem:[%s9 + $0x20] sm:$0xff]
  %v1107 = vld [vmem:[%s9 + $0x28] sm:$0xff]
  %v1108 = vld [vmem:[%s9 + $0x30] sm:$0xff]
  %v1109 = vld [vmem:[%s9 + $0x38] sm:$0xff]
  %v1111 = vsel %vm72, %v1097, 0
  %1113 = vmatprep.subr.mxu0 0.0
  %1114 = vmatpush1.msra.mxu0 0.0
  %1115 = vmatprep.subr.mxu0 0.0
  %1116 = vmatpush1.msra.mxu0 0.0
  %1117 = vmatprep.subr.mxu0 0.0
  %1118 = vmatpush1.msra.mxu0 0.0
  %1119 = vmatprep.subr.mxu0 0.0
  %1120 = vmatpush1.msra.mxu0 0.0
  %1121 = vmatprep.subr.mxu0 0.0
  %1122 = vmatpush1.msra.mxu0 0.0
  %1123 = vmatprep.subr.mxu0 0.0
  %1124 = vmatpush1.msra.mxu0 0.0
  %1125 = vmatprep.subr.mxu0 0.0
  %1126 = vmatpush1.msra.mxu0 0.0
  %1127 = vmatprep.subr.mxu0 0.0
  %1128 = vmatpush1.msra.mxu0 0.0
  %1129 = vmatprep.subr.mxu0 0.0
  %1130 = vmatpush1.msra.mxu0 %v1109
  %1131 = vmatprep.subr.mxu0 0.0
  %1132 = vmatpush1.msra.mxu0 %v1108
  %1133 = vmatprep.subr.mxu0 0.0
  %1134 = vmatpush1.msra.mxu0 %v1107
  %1135 = vmatprep.subr.mxu0 0.0
  %1136 = vmatpush1.msra.mxu0 %v1106
  %1137 = vmatprep.subr.mxu0 0.0
  %1138 = vmatpush1.msra.mxu0 %v1105
  %1139 = vmatprep.subr.mxu0 0.0
  %1140 = vmatpush1.msra.mxu0 %v1104
  %1141 = vmatprep.subr.mxu0 0.0
  %1142 = vmatpush1.msra.mxu0 %v1103
  %1143 = vmatprep.subr.mxu0 0.0
  %1144 = vmatpush1.msra.mxu0 %v1102
  %1145 = vmatprep.subr.mxu0 0.0
  %1146 = vmatpush2.msra.mxu0 0.0
  %1147 = vmatprep.subr.mxu0 0.0
  %1148 = vmatpush2.msra.mxu0 0.0
  %1149 = vmatprep.subr.mxu0 0.0
  %1150 = vmatpush2.msra.mxu0 0.0
  %1151 = vmatprep.subr.mxu0 0.0
  %1152 = vmatpush2.msra.mxu0 0.0
  %1153 = vmatprep.subr.mxu0 0.0
  %1154 = vmatpush2.msra.mxu0 0.0
  %1155 = vmatprep.subr.mxu0 0.0
  %1156 = vmatpush2.msra.mxu0 0.0
  %1157 = vmatprep.subr.mxu0 0.0
  %1158 = vmatpush2.msra.mxu0 0.0
  %1159 = vmatprep.subr.mxu0 0.0
  %1160 = vmatpush2.msra.mxu0 0.0
  %1161 = vmatprep.subr.mxu0 0.0
  %1162 = vmatpush2.msra.mxu0 0.0
  %1163 = vmatprep.subr.mxu0 0.0
  %1164 = vmatpush2.msra.mxu0 0.0
  %1165 = vmatprep.subr.mxu0 0.0
  %1166 = vmatpush2.msra.mxu0 0.0
  %1167 = vmatprep.subr.mxu0 0.0
  %1168 = vmatpush2.msra.mxu0 0.0
  %1169 = vmatprep.subr.mxu0 0.0
  %1170 = vmatpush2.msra.mxu0 0.0
  %1171 = vmatprep.subr.mxu0 0.0
  %1172 = vmatpush2.msra.mxu0 0.0
  %1173 = vmatprep.subr.mxu0 0.0
  %1174 = vmatpush2.msra.mxu0 0.0
  %1175 = vmatprep.subr.mxu0 0.0
  %1176 = vmatpush2.msra.mxu0 0.0
  %1177 = vmatprep.mubr.f32.mxu0 0.0
  %1178 = vmatmul.mubr.f32.gmra.mxu0 %v1111
  %v1179 = vpop.f32.mrf.mxu0
  %v1180 = vadd.f32 0.0, %v1179
  %v1181 = vpop.f32.mrf.mxu0
  %1182 = vdwg.mxu0
  %v1184 = vsel %vm146, %v877, 0
  %1186 = vmatprep.subr.mxu0 0.0
  %1187 = vmatpush1.msra.mxu0 0.0
  %1188 = vmatprep.subr.mxu0 0.0
  %1189 = vmatpush1.msra.mxu0 0.0
  %1190 = vmatprep.subr.mxu0 0.0
  %1191 = vmatpush1.msra.mxu0 0.0
  %1192 = vmatprep.subr.mxu0 0.0
  %1193 = vmatpush1.msra.mxu0 0.0
  %1194 = vmatprep.subr.mxu0 0.0
  %1195 = vmatpush1.msra.mxu0 0.0
  %1196 = vmatprep.subr.mxu0 0.0
  %1197 = vmatpush1.msra.mxu0 0.0
  %1198 = vmatprep.subr.mxu0 0.0
  %1199 = vmatpush1.msra.mxu0 0.0
  %1200 = vmatprep.subr.mxu0 0.0
  %1201 = vmatpush1.msra.mxu0 0.0
  %1202 = vmatprep.subr.mxu0 0.0
  %1203 = vmatpush1.msra.mxu0 0.0
  %1204 = vmatprep.subr.mxu0 0.0
  %1205 = vmatpush1.msra.mxu0 0.0
  %1206 = vmatprep.subr.mxu0 0.0
  %1207 = vmatpush1.msra.mxu0 0.0
  %1208 = vmatprep.subr.mxu0 0.0
  %1209 = vmatpush1.msra.mxu0 0.0
  %1210 = vmatprep.subr.mxu0 0.0
  %1211 = vmatpush1.msra.mxu0 %v1101
  %1212 = vmatprep.subr.mxu0 0.0
  %1213 = vmatpush1.msra.mxu0 %v1100
  %1214 = vmatprep.subr.mxu0 0.0
  %1215 = vmatpush1.msra.mxu0 %v1099
  %1216 = vmatprep.subr.mxu0 0.0
  %1217 = vmatpush1.msra.mxu0 %v1098
  %1218 = vmatprep.subr.mxu0 0.0
  %1219 = vmatpush2.msra.mxu0 0.0
  %1220 = vmatprep.subr.mxu0 0.0
  %1221 = vmatpush2.msra.mxu0 0.0
  %1222 = vmatprep.subr.mxu0 0.0
  %1223 = vmatpush2.msra.mxu0 0.0
  %1224 = vmatprep.subr.mxu0 0.0
  %1225 = vmatpush2.msra.mxu0 0.0
  %1226 = vmatprep.subr.mxu0 0.0
  %1227 = vmatpush2.msra.mxu0 0.0
  %1228 = vmatprep.subr.mxu0 0.0
  %1229 = vmatpush2.msra.mxu0 0.0
  %1230 = vmatprep.subr.mxu0 0.0
  %1231 = vmatpush2.msra.mxu0 0.0
  %1232 = vmatprep.subr.mxu0 0.0
  %1233 = vmatpush2.msra.mxu0 0.0
  %1234 = vmatprep.subr.mxu0 0.0
  %1235 = vmatpush2.msra.mxu0 0.0
  %1236 = vmatprep.subr.mxu0 0.0
  %1237 = vmatpush2.msra.mxu0 0.0
  %1238 = vmatprep.subr.mxu0 0.0
  %1239 = vmatpush2.msra.mxu0 0.0
  %1240 = vmatprep.subr.mxu0 0.0
  %1241 = vmatpush2.msra.mxu0 0.0
  %1242 = vmatprep.subr.mxu0 0.0
  %1243 = vmatpush2.msra.mxu0 0.0
  %1244 = vmatprep.subr.mxu0 0.0
  %1245 = vmatpush2.msra.mxu0 0.0
  %1246 = vmatprep.subr.mxu0 0.0
  %1247 = vmatpush2.msra.mxu0 0.0
  %1248 = vmatprep.subr.mxu0 0.0
  %1249 = vmatpush2.msra.mxu0 0.0
  %1250 = vmatprep.mubr.f32.mxu0 0.0
  %1251 = vmatmul.mubr.f32.gmra.mxu0 %v1184
  %v1252 = vpop.f32.mrf.mxu0
  %v1253 = vadd.f32 %v1180, %v1252
  %v1254 = vpop.f32.mrf.mxu0
  %1255 = vdwg.mxu0
  %v1256 = vld [vmem:[%s11] sm:$0x1]
  %v1258 = vlaneseq
  %v1259 = vshrl.u32 %v1258, 7
  %v1260 = vsub.s32 0, %v1259
  %v1261 = vrot.slane %v1256, %v1260
  %v1263 = vadd.f32 %v1253, %v1261
  %v1264 = vld [vmem:[%s10] sm:$0xff]
  %v1265 = vld [vmem:[%s10 + $0x8] sm:$0xff]
  %v1266 = vld [vmem:[%s10 + $0x10] sm:$0xff]
  %v1267 = vld [vmem:[%s10 + $0x18] sm:$0xff]
  %v1268 = vld [vmem:[%s12] sm:$0x1]
  %v1270 = vlaneseq
  %v1271 = vshrl.u32 %v1270, 7
  %v1272 = vsub.s32 0, %v1271
  %v1273 = vrot.slane %v1268, %v1272
  %1275 = vmatprep.subr.mxu0 0.0
  %1276 = vmatpush1.msra.mxu0 0.0
  %1277 = vmatprep.subr.mxu0 0.0
  %1278 = vmatpush1.msra.mxu0 0.0
  %1279 = vmatprep.subr.mxu0 0.0
  %1280 = vmatpush1.msra.mxu0 0.0
  %1281 = vmatprep.subr.mxu0 0.0
  %1282 = vmatpush1.msra.mxu0 0.0
  %1283 = vmatprep.subr.mxu0 0.0
  %1284 = vmatpush1.msra.mxu0 0.0
  %1285 = vmatprep.subr.mxu0 0.0
  %1286 = vmatpush1.msra.mxu0 0.0
  %1287 = vmatprep.subr.mxu0 0.0
  %1288 = vmatpush1.msra.mxu0 0.0
  %1289 = vmatprep.subr.mxu0 0.0
  %1290 = vmatpush1.msra.mxu0 0.0
  %1291 = vmatprep.subr.mxu0 0.0
  %1292 = vmatpush1.msra.mxu0 0.0
  %1293 = vmatprep.subr.mxu0 0.0
  %1294 = vmatpush1.msra.mxu0 0.0
  %1295 = vmatprep.subr.mxu0 0.0
  %1296 = vmatpush1.msra.mxu0 0.0
  %1297 = vmatprep.subr.mxu0 0.0
  %1298 = vmatpush1.msra.mxu0 0.0
  %1299 = vmatprep.subr.mxu0 0.0
  %1300 = vmatpush1.msra.mxu0 %v1267
  %1301 = vmatprep.subr.mxu0 0.0
  %1302 = vmatpush1.msra.mxu0 %v1266
  %1303 = vmatprep.subr.mxu0 0.0
  %1304 = vmatpush1.msra.mxu0 %v1265
  %1305 = vmatprep.subr.mxu0 0.0
  %1306 = vmatpush1.msra.mxu0 %v1264
  %1307 = vmatprep.subr.mxu0 0.0
  %1308 = vmatpush2.msra.mxu0 0.0
  %1309 = vmatprep.subr.mxu0 0.0
  %1310 = vmatpush2.msra.mxu0 0.0
  %1311 = vmatprep.subr.mxu0 0.0
  %1312 = vmatpush2.msra.mxu0 0.0
  %1313 = vmatprep.subr.mxu0 0.0
  %1314 = vmatpush2.msra.mxu0 0.0
  %1315 = vmatprep.subr.mxu0 0.0
  %1316 = vmatpush2.msra.mxu0 0.0
  %1317 = vmatprep.subr.mxu0 0.0
  %1318 = vmatpush2.msra.mxu0 0.0
  %1319 = vmatprep.subr.mxu0 0.0
  %1320 = vmatpush2.msra.mxu0 0.0
  %1321 = vmatprep.subr.mxu0 0.0
  %1322 = vmatpush2.msra.mxu0 0.0
  %1323 = vmatprep.subr.mxu0 0.0
  %1324 = vmatpush2.msra.mxu0 0.0
  %1325 = vmatprep.subr.mxu0 0.0
  %1326 = vmatpush2.msra.mxu0 0.0
  %1327 = vmatprep.subr.mxu0 0.0
  %1328 = vmatpush2.msra.mxu0 0.0
  %1329 = vmatprep.subr.mxu0 0.0
  %1330 = vmatpush2.msra.mxu0 0.0
  %1331 = vmatprep.subr.mxu0 0.0
  %1332 = vmatpush2.msra.mxu0 0.0
  %1333 = vmatprep.subr.mxu0 0.0
  %1334 = vmatpush2.msra.mxu0 0.0
  %1335 = vmatprep.subr.mxu0 0.0
  %1336 = vmatpush2.msra.mxu0 0.0
  %1337 = vmatprep.subr.mxu0 0.0
  %1338 = vmatpush2.msra.mxu0 0.0
  %1339 = vmatprep.mubr.f32.mxu0 0.0
  %1340 = vmatmul.mubr.f32.gmra.mxu0 %v885
  %v1341 = vpop.f32.mrf.mxu0
  %v1342 = vadd.f32 %v1273, %v1341
  %v1343 = vpop.f32.mrf.mxu0
  %1344 = vdwg.mxu0
  %v1345 = vadd.f32 %v1263, %v1342
  %v1346 = vxor.u32 %v1345, 2147483648
  %v1347 = vmul.f32 %v1346, 1.442695
  %v1348 = vpow.pop %v1347
  %v1349 = vadd.f32 %v1348, 1.0
  %v1350 = vrcp.pop %v1349
  %v1351 = vmul.f32 1.0, %v1350
  %1353 = vrot.lane.b32.xlu0 %v1342, 64
  %v1354 = vpop.permute.xlu0 %1353
  %v1356 = vmul.f32 %v1351, %v1354
  %1358 = vrot.lane.b32.xlu0 %v1356, 64
  %v1359 = vpop.permute.xlu0 %1358
  %v1361 = vadd.f32 %v1263, %v1359
  %v1362 = vtanh.pop %v1361
  %v1363 = vsub.f32 1.0, %v1351
  %1365 = vrot.lane.b32.xlu0 %v1362, 96
  %v1366 = vpop.permute.xlu0 %1365
  %v1368 = vmul.f32 %v1363, %v1366
  %1369 = vrot.lane.b32.xlu0 %v797, 32
  %v1370 = vpop.permute.xlu0 %1369
  %v1372 = vmul.f32 %v1351, %v1370
  %v1373 = vadd.f32 %v1368, %v1372
  %v1374 = vld [vmem:[%s13] sm:$0xff]
  %v1375 = vld [vmem:[%s13 + $0x8] sm:$0xff]
  %v1376 = vld [vmem:[%s13 + $0x10] sm:$0xff]
  %v1377 = vld [vmem:[%s13 + $0x18] sm:$0xff]
  %v1378 = vld [vmem:[%s14] sm:$0xff]
  %v1379 = vld [vmem:[%s14 + $0x8] sm:$0xff]
  %v1380 = vld [vmem:[%s14 + $0x10] sm:$0xff]
  %v1381 = vld [vmem:[%s14 + $0x18] sm:$0xff]
  %v1382 = vld [vmem:[%s14 + $0x20] sm:$0xff]
  %v1383 = vld [vmem:[%s14 + $0x28] sm:$0xff]
  %v1384 = vld [vmem:[%s14 + $0x30] sm:$0xff]
  %v1385 = vld [vmem:[%s14 + $0x38] sm:$0xff]
  %1386 = vmatprep.subr.mxu0 0.0
  %1387 = vmatpush1.msra.mxu0 0.0
  %1388 = vmatprep.subr.mxu0 0.0
  %1389 = vmatpush1.msra.mxu0 0.0
  %1390 = vmatprep.subr.mxu0 0.0
  %1391 = vmatpush1.msra.mxu0 0.0
  %1392 = vmatprep.subr.mxu0 0.0
  %1393 = vmatpush1.msra.mxu0 0.0
  %1394 = vmatprep.subr.mxu0 0.0
  %1395 = vmatpush1.msra.mxu0 0.0
  %1396 = vmatprep.subr.mxu0 0.0
  %1397 = vmatpush1.msra.mxu0 0.0
  %1398 = vmatprep.subr.mxu0 0.0
  %1399 = vmatpush1.msra.mxu0 0.0
  %1400 = vmatprep.subr.mxu0 0.0
  %1401 = vmatpush1.msra.mxu0 0.0
  %1402 = vmatprep.subr.mxu0 0.0
  %1403 = vmatpush1.msra.mxu0 %v1385
  %1404 = vmatprep.subr.mxu0 0.0
  %1405 = vmatpush1.msra.mxu0 %v1384
  %1406 = vmatprep.subr.mxu0 0.0
  %1407 = vmatpush1.msra.mxu0 %v1383
  %1408 = vmatprep.subr.mxu0 0.0
  %1409 = vmatpush1.msra.mxu0 %v1382
  %1410 = vmatprep.subr.mxu0 0.0
  %1411 = vmatpush1.msra.mxu0 %v1381
  %1412 = vmatprep.subr.mxu0 0.0
  %1413 = vmatpush1.msra.mxu0 %v1380
  %1414 = vmatprep.subr.mxu0 0.0
  %1415 = vmatpush1.msra.mxu0 %v1379
  %1416 = vmatprep.subr.mxu0 0.0
  %1417 = vmatpush1.msra.mxu0 %v1378
  %1418 = vmatprep.subr.mxu0 0.0
  %1419 = vmatpush2.msra.mxu0 0.0
  %1420 = vmatprep.subr.mxu0 0.0
  %1421 = vmatpush2.msra.mxu0 0.0
  %1422 = vmatprep.subr.mxu0 0.0
  %1423 = vmatpush2.msra.mxu0 0.0
  %1424 = vmatprep.subr.mxu0 0.0
  %1425 = vmatpush2.msra.mxu0 0.0
  %1426 = vmatprep.subr.mxu0 0.0
  %1427 = vmatpush2.msra.mxu0 0.0
  %1428 = vmatprep.subr.mxu0 0.0
  %1429 = vmatpush2.msra.mxu0 0.0
  %1430 = vmatprep.subr.mxu0 0.0
  %1431 = vmatpush2.msra.mxu0 0.0
  %1432 = vmatprep.subr.mxu0 0.0
  %1433 = vmatpush2.msra.mxu0 0.0
  %1434 = vmatprep.subr.mxu0 0.0
  %1435 = vmatpush2.msra.mxu0 0.0
  %1436 = vmatprep.subr.mxu0 0.0
  %1437 = vmatpush2.msra.mxu0 0.0
  %1438 = vmatprep.subr.mxu0 0.0
  %1439 = vmatpush2.msra.mxu0 0.0
  %1440 = vmatprep.subr.mxu0 0.0
  %1441 = vmatpush2.msra.mxu0 0.0
  %1442 = vmatprep.subr.mxu0 0.0
  %1443 = vmatpush2.msra.mxu0 0.0
  %1444 = vmatprep.subr.mxu0 0.0
  %1445 = vmatpush2.msra.mxu0 0.0
  %1446 = vmatprep.subr.mxu0 0.0
  %1447 = vmatpush2.msra.mxu0 0.0
  %1448 = vmatprep.subr.mxu0 0.0
  %1449 = vmatpush2.msra.mxu0 0.0
  %1450 = vmatprep.mubr.f32.mxu0 0.0
  %1451 = vmatmul.mubr.f32.gmra.mxu0 %v1111
  %v1452 = vpop.f32.mrf.mxu0
  %v1453 = vadd.f32 0.0, %v1452
  %v1454 = vpop.f32.mrf.mxu0
  %1455 = vdwg.mxu0
  %1457 = vrot.lane.b32.xlu0 %v1373, 96
  %v1458 = vpop.permute.xlu0 %1457
  %v1459 = vsel %vm146, %v1458, 0
  %1461 = vmatprep.subr.mxu0 0.0
  %1462 = vmatpush1.msra.mxu0 0.0
  %1463 = vmatprep.subr.mxu0 0.0
  %1464 = vmatpush1.msra.mxu0 0.0
  %1465 = vmatprep.subr.mxu0 0.0
  %1466 = vmatpush1.msra.mxu0 0.0
  %1467 = vmatprep.subr.mxu0 0.0
  %1468 = vmatpush1.msra.mxu0 0.0
  %1469 = vmatprep.subr.mxu0 0.0
  %1470 = vmatpush1.msra.mxu0 0.0
  %1471 = vmatprep.subr.mxu0 0.0
  %1472 = vmatpush1.msra.mxu0 0.0
  %1473 = vmatprep.subr.mxu0 0.0
  %1474 = vmatpush1.msra.mxu0 0.0
  %1475 = vmatprep.subr.mxu0 0.0
  %1476 = vmatpush1.msra.mxu0 0.0
  %1477 = vmatprep.subr.mxu0 0.0
  %1478 = vmatpush1.msra.mxu0 0.0
  %1479 = vmatprep.subr.mxu0 0.0
  %1480 = vmatpush1.msra.mxu0 0.0
  %1481 = vmatprep.subr.mxu0 0.0
  %1482 = vmatpush1.msra.mxu0 0.0
  %1483 = vmatprep.subr.mxu0 0.0
  %1484 = vmatpush1.msra.mxu0 0.0
  %1485 = vmatprep.subr.mxu0 0.0
  %1486 = vmatpush1.msra.mxu0 %v1377
  %1487 = vmatprep.subr.mxu0 0.0
  %1488 = vmatpush1.msra.mxu0 %v1376
  %1489 = vmatprep.subr.mxu0 0.0
  %1490 = vmatpush1.msra.mxu0 %v1375
  %1491 = vmatprep.subr.mxu0 0.0
  %1492 = vmatpush1.msra.mxu0 %v1374
  %1493 = vmatprep.subr.mxu0 0.0
  %1494 = vmatpush2.msra.mxu0 0.0
  %1495 = vmatprep.subr.mxu0 0.0
  %1496 = vmatpush2.msra.mxu0 0.0
  %1497 = vmatprep.subr.mxu0 0.0
  %1498 = vmatpush2.msra.mxu0 0.0
  %1499 = vmatprep.subr.mxu0 0.0
  %1500 = vmatpush2.msra.mxu0 0.0
  %1501 = vmatprep.subr.mxu0 0.0
  %1502 = vmatpush2.msra.mxu0 0.0
  %1503 = vmatprep.subr.mxu0 0.0
  %1504 = vmatpush2.msra.mxu0 0.0
  %1505 = vmatprep.subr.mxu0 0.0
  %1506 = vmatpush2.msra.mxu0 0.0
  %1507 = vmatprep.subr.mxu0 0.0
  %1508 = vmatpush2.msra.mxu0 0.0
  %1509 = vmatprep.subr.mxu0 0.0
  %1510 = vmatpush2.msra.mxu0 0.0
  %1511 = vmatprep.subr.mxu0 0.0
  %1512 = vmatpush2.msra.mxu0 0.0
  %1513 = vmatprep.subr.mxu0 0.0
  %1514 = vmatpush2.msra.mxu0 0.0
  %1515 = vmatprep.subr.mxu0 0.0
  %1516 = vmatpush2.msra.mxu0 0.0
  %1517 = vmatprep.subr.mxu0 0.0
  %1518 = vmatpush2.msra.mxu0 0.0
  %1519 = vmatprep.subr.mxu0 0.0
  %1520 = vmatpush2.msra.mxu0 0.0
  %1521 = vmatprep.subr.mxu0 0.0
  %1522 = vmatpush2.msra.mxu0 0.0
  %1523 = vmatprep.subr.mxu0 0.0
  %1524 = vmatpush2.msra.mxu0 0.0
  %1525 = vmatprep.mubr.f32.mxu0 0.0
  %1526 = vmatmul.mubr.f32.gmra.mxu0 %v1459
  %v1527 = vpop.f32.mrf.mxu0
  %v1528 = vadd.f32 %v1453, %v1527
  %v1529 = vpop.f32.mrf.mxu0
  %1530 = vdwg.mxu0
  %v1531 = vld [vmem:[%s15] sm:$0xff]
  %v1532 = vld [vmem:[%s15 + $0x8] sm:$0xff]
  %v1533 = vld [vmem:[%s15 + $0x10] sm:$0xff]
  %v1534 = vld [vmem:[%s15 + $0x18] sm:$0xff]
  %1535 = vmatprep.subr.mxu0 0.0
  %1536 = vmatpush1.msra.mxu0 0.0
  %1537 = vmatprep.subr.mxu0 0.0
  %1538 = vmatpush1.msra.mxu0 0.0
  %1539 = vmatprep.subr.mxu0 0.0
  %1540 = vmatpush1.msra.mxu0 0.0
  %1541 = vmatprep.subr.mxu0 0.0
  %1542 = vmatpush1.msra.mxu0 0.0
  %1543 = vmatprep.subr.mxu0 0.0
  %1544 = vmatpush1.msra.mxu0 0.0
  %1545 = vmatprep.subr.mxu0 0.0
  %1546 = vmatpush1.msra.mxu0 0.0
  %1547 = vmatprep.subr.mxu0 0.0
  %1548 = vmatpush1.msra.mxu0 0.0
  %1549 = vmatprep.subr.mxu0 0.0
  %1550 = vmatpush1.msra.mxu0 0.0
  %1551 = vmatprep.subr.mxu0 0.0
  %1552 = vmatpush1.msra.mxu0 0.0
  %1553 = vmatprep.subr.mxu0 0.0
  %1554 = vmatpush1.msra.mxu0 0.0
  %1555 = vmatprep.subr.mxu0 0.0
  %1556 = vmatpush1.msra.mxu0 0.0
  %1557 = vmatprep.subr.mxu0 0.0
  %1558 = vmatpush1.msra.mxu0 0.0
  %1559 = vmatprep.subr.mxu0 0.0
  %1560 = vmatpush1.msra.mxu0 %v1534
  %1561 = vmatprep.subr.mxu0 0.0
  %1562 = vmatpush1.msra.mxu0 %v1533
  %1563 = vmatprep.subr.mxu0 0.0
  %1564 = vmatpush1.msra.mxu0 %v1532
  %1565 = vmatprep.subr.mxu0 0.0
  %1566 = vmatpush1.msra.mxu0 %v1531
  %1567 = vmatprep.subr.mxu0 0.0
  %1568 = vmatpush2.msra.mxu0 0.0
  %1569 = vmatprep.subr.mxu0 0.0
  %1570 = vmatpush2.msra.mxu0 0.0
  %1571 = vmatprep.subr.mxu0 0.0
  %1572 = vmatpush2.msra.mxu0 0.0
  %1573 = vmatprep.subr.mxu0 0.0
  %1574 = vmatpush2.msra.mxu0 0.0
  %1575 = vmatprep.subr.mxu0 0.0
  %1576 = vmatpush2.msra.mxu0 0.0
  %1577 = vmatprep.subr.mxu0 0.0
  %1578 = vmatpush2.msra.mxu0 0.0
  %1579 = vmatprep.subr.mxu0 0.0
  %1580 = vmatpush2.msra.mxu0 0.0
  %1581 = vmatprep.subr.mxu0 0.0
  %1582 = vmatpush2.msra.mxu0 0.0
  %1583 = vmatprep.subr.mxu0 0.0
  %1584 = vmatpush2.msra.mxu0 0.0
  %1585 = vmatprep.subr.mxu0 0.0
  %1586 = vmatpush2.msra.mxu0 0.0
  %1587 = vmatprep.subr.mxu0 0.0
  %1588 = vmatpush2.msra.mxu0 0.0
  %1589 = vmatprep.subr.mxu0 0.0
  %1590 = vmatpush2.msra.mxu0 0.0
  %1591 = vmatprep.subr.mxu0 0.0
  %1592 = vmatpush2.msra.mxu0 0.0
  %1593 = vmatprep.subr.mxu0 0.0
  %1594 = vmatpush2.msra.mxu0 0.0
  %1595 = vmatprep.subr.mxu0 0.0
  %1596 = vmatpush2.msra.mxu0 0.0
  %1597 = vmatprep.subr.mxu0 0.0
  %1598 = vmatpush2.msra.mxu0 0.0
  %1599 = vmatprep.mubr.f32.mxu0 0.0
  %1600 = vmatmul.mubr.f32.gmra.mxu0 %v1184
  %v1601 = vpop.f32.mrf.mxu0
  %v1602 = vadd.f32 0.0, %v1601
  %v1603 = vpop.f32.mrf.mxu0
  %1604 = vdwg.mxu0
  %v1605 = vadd.f32 %v1528, %v1602
  %v1606 = vld [vmem:[%s16] sm:$0x1]
  %v1608 = vlaneseq
  %v1609 = vshrl.u32 %v1608, 7
  %v1610 = vsub.s32 0, %v1609
  %v1611 = vrot.slane %v1606, %v1610
  %v1613 = vadd.f32 %v1605, %v1611
  %s1614 = scalar_lea.vmem %s17, 8
  %1615 = vst.msk [vmem:[%s1614] sm:$0xff] %vm792, %v1613
  %v1616 = vsel %vm792, %v1613, -inf
  %1617 = vmax.xlane.f32.xlu0 %v1616
  %v1618 = vpop.xlane.xlu0 %1617
  %vm1619 = vcmp.eq.f32.partialorder %v1613, %v1618
  %v1620 = vsel %vm1619, %v796, 16.0
  %v1621 = vsel %vm792, %v1620, inf
  %1622 = vmin.xlane.f32.xlu0 %v1621
  %v1623 = vpop.xlane.xlu0 %1622
  %v1624 = vcvt.f32.s32.to.zero.pseudo %v1623
  %vm1625 = vcmp.eq.s32.totalorder %v795, %v1624
  %v1626 = vsel %vm1625, 1, 0
  %v1627 = vcvt.s32.f32 %v1626
  %v1628 = vld [vmem:[%s3] sm:$0xff]
  %v1629 = vld [vmem:[%s3 + $0x8] sm:$0xff]
  %v1631 = vsel %vm792, %v1627, 0
  %1633 = vmatprep.subr.mxu0 0.0
  %1634 = vmatpush1.msra.mxu0 0.0
  %1635 = vmatprep.subr.mxu0 0.0
  %1636 = vmatpush1.msra.mxu0 0.0
  %1637 = vmatprep.subr.mxu0 0.0
  %1638 = vmatpush1.msra.mxu0 0.0
  %1639 = vmatprep.subr.mxu0 0.0
  %1640 = vmatpush1.msra.mxu0 0.0
  %1641 = vmatprep.subr.mxu0 0.0
  %1642 = vmatpush1.msra.mxu0 0.0
  %1643 = vmatprep.subr.mxu0 0.0
  %1644 = vmatpush1.msra.mxu0 0.0
  %1645 = vmatprep.subr.mxu0 0.0
  %1646 = vmatpush1.msra.mxu0 0.0
  %1647 = vmatprep.subr.mxu0 0.0
  %1648 = vmatpush1.msra.mxu0 0.0
  %1649 = vmatprep.subr.mxu0 0.0
  %1650 = vmatpush1.msra.mxu0 0.0
  %1651 = vmatprep.subr.mxu0 0.0
  %1652 = vmatpush1.msra.mxu0 0.0
  %1653 = vmatprep.subr.mxu0 0.0
  %1654 = vmatpush1.msra.mxu0 0.0
  %1655 = vmatprep.subr.mxu0 0.0
  %1656 = vmatpush1.msra.mxu0 0.0
  %1657 = vmatprep.subr.mxu0 0.0
  %1658 = vmatpush1.msra.mxu0 0.0
  %1659 = vmatprep.subr.mxu0 0.0
  %1660 = vmatpush1.msra.mxu0 0.0
  %1661 = vmatprep.subr.mxu0 0.0
  %1662 = vmatpush1.msra.mxu0 %v1629
  %1663 = vmatprep.subr.mxu0 0.0
  %1664 = vmatpush1.msra.mxu0 %v1628
  %1665 = vmatprep.subr.mxu0 0.0
  %1666 = vmatpush2.msra.mxu0 0.0
  %1667 = vmatprep.subr.mxu0 0.0
  %1668 = vmatpush2.msra.mxu0 0.0
  %1669 = vmatprep.subr.mxu0 0.0
  %1670 = vmatpush2.msra.mxu0 0.0
  %1671 = vmatprep.subr.mxu0 0.0
  %1672 = vmatpush2.msra.mxu0 0.0
  %1673 = vmatprep.subr.mxu0 0.0
  %1674 = vmatpush2.msra.mxu0 0.0
  %1675 = vmatprep.subr.mxu0 0.0
  %1676 = vmatpush2.msra.mxu0 0.0
  %1677 = vmatprep.subr.mxu0 0.0
  %1678 = vmatpush2.msra.mxu0 0.0
  %1679 = vmatprep.subr.mxu0 0.0
  %1680 = vmatpush2.msra.mxu0 0.0
  %1681 = vmatprep.subr.mxu0 0.0
  %1682 = vmatpush2.msra.mxu0 0.0
  %1683 = vmatprep.subr.mxu0 0.0
  %1684 = vmatpush2.msra.mxu0 0.0
  %1685 = vmatprep.subr.mxu0 0.0
  %1686 = vmatpush2.msra.mxu0 0.0
  %1687 = vmatprep.subr.mxu0 0.0
  %1688 = vmatpush2.msra.mxu0 0.0
  %1689 = vmatprep.subr.mxu0 0.0
  %1690 = vmatpush2.msra.mxu0 0.0
  %1691 = vmatprep.subr.mxu0 0.0
  %1692 = vmatpush2.msra.mxu0 0.0
  %1693 = vmatprep.subr.mxu0 0.0
  %1694 = vmatpush2.msra.mxu0 0.0
  %1695 = vmatprep.subr.mxu0 0.0
  %1696 = vmatpush2.msra.mxu0 0.0
  %1697 = vmatprep.mubr.f32.mxu0 0.0
  %1698 = vmatmul.mubr.f32.gmra.mxu0 %v1631
  %v1699 = vpop.f32.mrf.mxu0
  %v1700 = vadd.f32 0.0, %v1699
  %v1701 = vpop.f32.mrf.mxu0
  %1702 = vdwg.mxu0
  %v1703 = vld [vmem:[%s4] sm:$0xff]
  %v1704 = vld [vmem:[%s4 + $0x8] sm:$0xff]
  %v1705 = vld [vmem:[%s4 + $0x10] sm:$0xff]
  %v1706 = vld [vmem:[%s4 + $0x18] sm:$0xff]
  %1707 = vmatprep.subr.mxu0 0.0
  %1708 = vmatpush1.msra.mxu0 0.0
  %1709 = vmatprep.subr.mxu0 0.0
  %1710 = vmatpush1.msra.mxu0 0.0
  %1711 = vmatprep.subr.mxu0 0.0
  %1712 = vmatpush1.msra.mxu0 0.0
  %1713 = vmatprep.subr.mxu0 0.0
  %1714 = vmatpush1.msra.mxu0 0.0
  %1715 = vmatprep.subr.mxu0 0.0
  %1716 = vmatpush1.msra.mxu0 0.0
  %1717 = vmatprep.subr.mxu0 0.0
  %1718 = vmatpush1.msra.mxu0 0.0
  %1719 = vmatprep.subr.mxu0 0.0
  %1720 = vmatpush1.msra.mxu0 0.0
  %1721 = vmatprep.subr.mxu0 0.0
  %1722 = vmatpush1.msra.mxu0 0.0
  %1723 = vmatprep.subr.mxu0 0.0
  %1724 = vmatpush1.msra.mxu0 0.0
  %1725 = vmatprep.subr.mxu0 0.0
  %1726 = vmatpush1.msra.mxu0 0.0
  %1727 = vmatprep.subr.mxu0 0.0
  %1728 = vmatpush1.msra.mxu0 0.0
  %1729 = vmatprep.subr.mxu0 0.0
  %1730 = vmatpush1.msra.mxu0 0.0
  %1731 = vmatprep.subr.mxu0 0.0
  %1732 = vmatpush1.msra.mxu0 %v1706
  %1733 = vmatprep.subr.mxu0 0.0
  %1734 = vmatpush1.msra.mxu0 %v1705
  %1735 = vmatprep.subr.mxu0 0.0
  %1736 = vmatpush1.msra.mxu0 %v1704
  %1737 = vmatprep.subr.mxu0 0.0
  %1738 = vmatpush1.msra.mxu0 %v1703
  %1739 = vmatprep.subr.mxu0 0.0
  %1740 = vmatpush2.msra.mxu0 0.0
  %1741 = vmatprep.subr.mxu0 0.0
  %1742 = vmatpush2.msra.mxu0 0.0
  %1743 = vmatprep.subr.mxu0 0.0
  %1744 = vmatpush2.msra.mxu0 0.0
  %1745 = vmatprep.subr.mxu0 0.0
  %1746 = vmatpush2.msra.mxu0 0.0
  %1747 = vmatprep.subr.mxu0 0.0
  %1748 = vmatpush2.msra.mxu0 0.0
  %1749 = vmatprep.subr.mxu0 0.0
  %1750 = vmatpush2.msra.mxu0 0.0
  %1751 = vmatprep.subr.mxu0 0.0
  %1752 = vmatpush2.msra.mxu0 0.0
  %1753 = vmatprep.subr.mxu0 0.0
  %1754 = vmatpush2.msra.mxu0 0.0
  %1755 = vmatprep.subr.mxu0 0.0
  %1756 = vmatpush2.msra.mxu0 0.0
  %1757 = vmatprep.subr.mxu0 0.0
  %1758 = vmatpush2.msra.mxu0 0.0
  %1759 = vmatprep.subr.mxu0 0.0
  %1760 = vmatpush2.msra.mxu0 0.0
  %1761 = vmatprep.subr.mxu0 0.0
  %1762 = vmatpush2.msra.mxu0 0.0
  %1763 = vmatprep.subr.mxu0 0.0
  %1764 = vmatpush2.msra.mxu0 0.0
  %1765 = vmatprep.subr.mxu0 0.0
  %1766 = vmatpush2.msra.mxu0 0.0
  %1767 = vmatprep.subr.mxu0 0.0
  %1768 = vmatpush2.msra.mxu0 0.0
  %1769 = vmatprep.subr.mxu0 0.0
  %1770 = vmatpush2.msra.mxu0 0.0
  %1771 = vmatprep.mubr.f32.mxu0 0.0
  %1772 = vmatmul.mubr.f32.gmra.mxu0 %v1459
  %v1773 = vpop.f32.mrf.mxu0
  %v1774 = vadd.f32 0.0, %v1773
  %v1775 = vpop.f32.mrf.mxu0
  %1776 = vdwg.mxu0
  %v1777 = vld [vmem:[#allocation2] sm:$0xff]
  %v1778 = vld [vmem:[#allocation2 + $0x8] sm:$0xff]
  %v1779 = vld [vmem:[#allocation2 + $0x10] sm:$0xff]
  %v1780 = vld [vmem:[#allocation2 + $0x18] sm:$0xff]
  %v1781 = vld [vmem:[#allocation2 + $0x20] sm:$0xff]
  %v1782 = vld [vmem:[#allocation2 + $0x28] sm:$0xff]
  %v1783 = vld [vmem:[#allocation2 + $0x30] sm:$0xff]
  %v1784 = vld [vmem:[#allocation2 + $0x38] sm:$0xff]
  %v1785 = vadd.f32 %v1777, %v1774
  %v1786 = vadd.f32 %v1778, %v1774
  %v1787 = vadd.f32 %v1779, %v1774
  %v1788 = vadd.f32 %v1780, %v1774
  %v1789 = vadd.f32 %v1781, %v1774
  %v1790 = vadd.f32 %v1782, %v1774
  %v1791 = vadd.f32 %v1783, %v1774
  %v1792 = vadd.f32 %v1784, %v1774
  %v1793 = vtanh.pop %v1785
  %v1794 = vtanh.pop %v1786
  %v1795 = vtanh.pop %v1787
  %v1796 = vtanh.pop %v1788
  %v1797 = vtanh.pop %v1789
  %v1798 = vtanh.pop %v1790
  %v1799 = vtanh.pop %v1791
  %v1800 = vtanh.pop %v1792
  %v1801 = vld [vmem:[%s7] sm:$0x1]
  %v1803 = vlaneseq
  %v1804 = vshrl.u32 %v1803, 7
  %v1805 = vsub.s32 0, %v1804
  %v1806 = vrot.slane %v1801, %v1805
  %v1808 = vmul.f32 %v1793, %v1806
  %v1809 = vmul.f32 %v1794, %v1806
  %v1810 = vmul.f32 %v1795, %v1806
  %v1811 = vmul.f32 %v1796, %v1806
  %v1812 = vmul.f32 %v1797, %v1806
  %v1813 = vmul.f32 %v1798, %v1806
  %v1814 = vmul.f32 %v1799, %v1806
  %v1815 = vmul.f32 %v1800, %v1806
  %v1816 = vsel %vm146, %v1808, 0.0
  %1817 = vadd.xlane.f32.xlu0 %v1816
  %v1818 = vpop.xlane.xlu0 %1817
  %v1819 = vsel %vm146, %v1809, 0.0
  %1820 = vadd.xlane.f32.xlu0 %v1819
  %v1821 = vpop.xlane.xlu0 %1820
  %v1822 = vsel %vm146, %v1810, 0.0
  %1823 = vadd.xlane.f32.xlu0 %v1822
  %v1824 = vpop.xlane.xlu0 %1823
  %v1825 = vsel %vm146, %v1811, 0.0
  %1826 = vadd.xlane.f32.xlu0 %v1825
  %v1827 = vpop.xlane.xlu0 %1826
  %v1828 = vsel %vm146, %v1812, 0.0
  %1829 = vadd.xlane.f32.xlu0 %v1828
  %v1830 = vpop.xlane.xlu0 %1829
  %v1831 = vsel %vm146, %v1813, 0.0
  %1832 = vadd.xlane.f32.xlu0 %v1831
  %v1833 = vpop.xlane.xlu0 %1832
  %v1834 = vsel %vm146, %v1814, 0.0
  %1835 = vadd.xlane.f32.xlu0 %v1834
  %v1836 = vpop.xlane.xlu0 %1835
  %v1837 = vsel %vm146, %v1815, 0.0
  %1838 = vadd.xlane.f32.xlu0 %v1837
  %v1839 = vpop.xlane.xlu0 %1838
  %v1840 = vmax.f32 %v1818, %v1830
  %v1841 = vmax.f32 %v1821, %v1833
  %v1842 = vmax.f32 %v1824, %v1836
  %v1843 = vmax.f32 %v1827, %v1839
  %v1844 = vmax.f32 %v1840, %v1841
  %v1845 = vmax.f32 %v1842, %v1843
  %v1846 = vmax.f32 %v1844, %v1845
  %v1847 = vsub.f32 %v1818, %v1846
  %v1848 = vsub.f32 %v1821, %v1846
  %v1849 = vsub.f32 %v1824, %v1846
  %v1850 = vsub.f32 %v1827, %v1846
  %v1851 = vsub.f32 %v1830, %v1846
  %v1852 = vsub.f32 %v1833, %v1846
  %v1853 = vsub.f32 %v1836, %v1846
  %v1854 = vsub.f32 %v1839, %v1846
  %v1855 = vmul.f32 %v1847, 1.442695
  %v1856 = vpow.pop %v1855
  %v1857 = vmul.f32 %v1848, 1.442695
  %v1858 = vpow.pop %v1857
  %v1859 = vmul.f32 %v1849, 1.442695
  %v1860 = vpow.pop %v1859
  %v1861 = vmul.f32 %v1850, 1.442695
  %v1862 = vpow.pop %v1861
  %v1863 = vmul.f32 %v1851, 1.442695
  %v1864 = vpow.pop %v1863
  %v1865 = vmul.f32 %v1852, 1.442695
  %v1866 = vpow.pop %v1865
  %v1867 = vmul.f32 %v1853, 1.442695
  %v1868 = vpow.pop %v1867
  %v1869 = vmul.f32 %v1854, 1.442695
  %v1870 = vpow.pop %v1869
  %v1871 = vadd.f32 %v1856, %v1858
  %v1872 = vadd.f32 %v1871, %v1860
  %v1873 = vadd.f32 %v1872, %v1862
  %v1874 = vadd.f32 %v1873, %v1864
  %v1875 = vadd.f32 %v1874, %v1866
  %v1876 = vadd.f32 %v1875, %v1868
  %v1877 = vadd.f32 %v1876, %v1870
  %v1878 = vrcp.pop %v1877
  %v1879 = vmul.f32 %v1856, %v1878
  %v1880 = vmul.f32 %v1858, %v1878
  %v1881 = vmul.f32 %v1860, %v1878
  %v1882 = vmul.f32 %v1862, %v1878
  %v1883 = vmul.f32 %v1864, %v1878
  %v1884 = vmul.f32 %v1866, %v1878
  %v1885 = vmul.f32 %v1868, %v1878
  %v1886 = vmul.f32 %v1870, %v1878
  %v1887 = vld [vmem:[%s2] sm:$0xff]
  %v1888 = vld [vmem:[%s2 + $0x8] sm:$0xff]
  %v1889 = vld [vmem:[%s2 + $0x10] sm:$0xff]
  %v1890 = vld [vmem:[%s2 + $0x18] sm:$0xff]
  %v1891 = vld [vmem:[%s2 + $0x20] sm:$0xff]
  %v1892 = vld [vmem:[%s2 + $0x28] sm:$0xff]
  %v1893 = vld [vmem:[%s2 + $0x30] sm:$0xff]
  %v1894 = vld [vmem:[%s2 + $0x38] sm:$0xff]
  %v1895 = vmul.f32 %v1879, %v1887
  %v1896 = vmul.f32 %v1880, %v1888
  %v1897 = vmul.f32 %v1881, %v1889
  %v1898 = vmul.f32 %v1882, %v1890
  %v1899 = vmul.f32 %v1883, %v1891
  %v1900 = vmul.f32 %v1884, %v1892
  %v1901 = vmul.f32 %v1885, %v1893
  %v1902 = vmul.f32 %v1886, %v1894
  %v1903 = vsel %vm72, %v1895, 0.0
  %v1904 = vsel %vm72, %v1896, 0.0
  %v1905 = vadd.f32 %v1903, %v1904
  %v1906 = vsel %vm72, %v1897, 0.0
  %v1907 = vadd.f32 %v1905, %v1906
  %v1908 = vsel %vm72, %v1898, 0.0
  %v1909 = vadd.f32 %v1907, %v1908
  %v1910 = vsel %vm72, %v1899, 0.0
  %v1911 = vadd.f32 %v1909, %v1910
  %v1912 = vsel %vm72, %v1900, 0.0
  %v1913 = vadd.f32 %v1911, %v1912
  %v1914 = vsel %vm72, %v1901, 0.0
  %v1915 = vadd.f32 %v1913, %v1914
  %v1916 = vsel %vm72, %v1902, 0.0
  %v1917 = vadd.f32 %v1915, %v1916
  %v1918 = vld [vmem:[%s8] sm:$0xff]
  %v1919 = vld [vmem:[%s8 + $0x8] sm:$0xff]
  %v1920 = vld [vmem:[%s8 + $0x10] sm:$0xff]
  %v1921 = vld [vmem:[%s8 + $0x18] sm:$0xff]
  %v1922 = vld [vmem:[%s9] sm:$0xff]
  %v1923 = vld [vmem:[%s9 + $0x8] sm:$0xff]
  %v1924 = vld [vmem:[%s9 + $0x10] sm:$0xff]
  %v1925 = vld [vmem:[%s9 + $0x18] sm:$0xff]
  %v1926 = vld [vmem:[%s9 + $0x20] sm:$0xff]
  %v1927 = vld [vmem:[%s9 + $0x28] sm:$0xff]
  %v1928 = vld [vmem:[%s9 + $0x30] sm:$0xff]
  %v1929 = vld [vmem:[%s9 + $0x38] sm:$0xff]
  %v1931 = vsel %vm72, %v1917, 0
  %1933 = vmatprep.subr.mxu0 0.0
  %1934 = vmatpush1.msra.mxu0 0.0
  %1935 = vmatprep.subr.mxu0 0.0
  %1936 = vmatpush1.msra.mxu0 0.0
  %1937 = vmatprep.subr.mxu0 0.0
  %1938 = vmatpush1.msra.mxu0 0.0
  %1939 = vmatprep.subr.mxu0 0.0
  %1940 = vmatpush1.msra.mxu0 0.0
  %1941 = vmatprep.subr.mxu0 0.0
  %1942 = vmatpush1.msra.mxu0 0.0
  %1943 = vmatprep.subr.mxu0 0.0
  %1944 = vmatpush1.msra.mxu0 0.0
  %1945 = vmatprep.subr.mxu0 0.0
  %1946 = vmatpush1.msra.mxu0 0.0
  %1947 = vmatprep.subr.mxu0 0.0
  %1948 = vmatpush1.msra.mxu0 0.0
  %1949 = vmatprep.subr.mxu0 0.0
  %1950 = vmatpush1.msra.mxu0 %v1929
  %1951 = vmatprep.subr.mxu0 0.0
  %1952 = vmatpush1.msra.mxu0 %v1928
  %1953 = vmatprep.subr.mxu0 0.0
  %1954 = vmatpush1.msra.mxu0 %v1927
  %1955 = vmatprep.subr.mxu0 0.0
  %1956 = vmatpush1.msra.mxu0 %v1926
  %1957 = vmatprep.subr.mxu0 0.0
  %1958 = vmatpush1.msra.mxu0 %v1925
  %1959 = vmatprep.subr.mxu0 0.0
  %1960 = vmatpush1.msra.mxu0 %v1924
  %1961 = vmatprep.subr.mxu0 0.0
  %1962 = vmatpush1.msra.mxu0 %v1923
  %1963 = vmatprep.subr.mxu0 0.0
  %1964 = vmatpush1.msra.mxu0 %v1922
  %1965 = vmatprep.subr.mxu0 0.0
  %1966 = vmatpush2.msra.mxu0 0.0
  %1967 = vmatprep.subr.mxu0 0.0
  %1968 = vmatpush2.msra.mxu0 0.0
  %1969 = vmatprep.subr.mxu0 0.0
  %1970 = vmatpush2.msra.mxu0 0.0
  %1971 = vmatprep.subr.mxu0 0.0
  %1972 = vmatpush2.msra.mxu0 0.0
  %1973 = vmatprep.subr.mxu0 0.0
  %1974 = vmatpush2.msra.mxu0 0.0
  %1975 = vmatprep.subr.mxu0 0.0
  %1976 = vmatpush2.msra.mxu0 0.0
  %1977 = vmatprep.subr.mxu0 0.0
  %1978 = vmatpush2.msra.mxu0 0.0
  %1979 = vmatprep.subr.mxu0 0.0
  %1980 = vmatpush2.msra.mxu0 0.0
  %1981 = vmatprep.subr.mxu0 0.0
  %1982 = vmatpush2.msra.mxu0 0.0
  %1983 = vmatprep.subr.mxu0 0.0
  %1984 = vmatpush2.msra.mxu0 0.0
  %1985 = vmatprep.subr.mxu0 0.0
  %1986 = vmatpush2.msra.mxu0 0.0
  %1987 = vmatprep.subr.mxu0 0.0
  %1988 = vmatpush2.msra.mxu0 0.0
  %1989 = vmatprep.subr.mxu0 0.0
  %1990 = vmatpush2.msra.mxu0 0.0
  %1991 = vmatprep.subr.mxu0 0.0
  %1992 = vmatpush2.msra.mxu0 0.0
  %1993 = vmatprep.subr.mxu0 0.0
  %1994 = vmatpush2.msra.mxu0 0.0
  %1995 = vmatprep.subr.mxu0 0.0
  %1996 = vmatpush2.msra.mxu0 0.0
  %1997 = vmatprep.mubr.f32.mxu0 0.0
  %1998 = vmatmul.mubr.f32.gmra.mxu0 %v1931
  %v1999 = vpop.f32.mrf.mxu0
  %v2000 = vadd.f32 0.0, %v1999
  %v2001 = vpop.f32.mrf.mxu0
  %2002 = vdwg.mxu0
  %v2004 = vsel %vm146, %v1700, 0
  %2006 = vmatprep.subr.mxu0 0.0
  %2007 = vmatpush1.msra.mxu0 0.0
  %2008 = vmatprep.subr.mxu0 0.0
  %2009 = vmatpush1.msra.mxu0 0.0
  %2010 = vmatprep.subr.mxu0 0.0
  %2011 = vmatpush1.msra.mxu0 0.0
  %2012 = vmatprep.subr.mxu0 0.0
  %2013 = vmatpush1.msra.mxu0 0.0
  %2014 = vmatprep.subr.mxu0 0.0
  %2015 = vmatpush1.msra.mxu0 0.0
  %2016 = vmatprep.subr.mxu0 0.0
  %2017 = vmatpush1.msra.mxu0 0.0
  %2018 = vmatprep.subr.mxu0 0.0
  %2019 = vmatpush1.msra.mxu0 0.0
  %2020 = vmatprep.subr.mxu0 0.0
  %2021 = vmatpush1.msra.mxu0 0.0
  %2022 = vmatprep.subr.mxu0 0.0
  %2023 = vmatpush1.msra.mxu0 0.0
  %2024 = vmatprep.subr.mxu0 0.0
  %2025 = vmatpush1.msra.mxu0 0.0
  %2026 = vmatprep.subr.mxu0 0.0
  %2027 = vmatpush1.msra.mxu0 0.0
  %2028 = vmatprep.subr.mxu0 0.0
  %2029 = vmatpush1.msra.mxu0 0.0
  %2030 = vmatprep.subr.mxu0 0.0
  %2031 = vmatpush1.msra.mxu0 %v1921
  %2032 = vmatprep.subr.mxu0 0.0
  %2033 = vmatpush1.msra.mxu0 %v1920
  %2034 = vmatprep.subr.mxu0 0.0
  %2035 = vmatpush1.msra.mxu0 %v1919
  %2036 = vmatprep.subr.mxu0 0.0
  %2037 = vmatpush1.msra.mxu0 %v1918
  %2038 = vmatprep.subr.mxu0 0.0
  %2039 = vmatpush2.msra.mxu0 0.0
  %2040 = vmatprep.subr.mxu0 0.0
  %2041 = vmatpush2.msra.mxu0 0.0
  %2042 = vmatprep.subr.mxu0 0.0
  %2043 = vmatpush2.msra.mxu0 0.0
  %2044 = vmatprep.subr.mxu0 0.0
  %2045 = vmatpush2.msra.mxu0 0.0
  %2046 = vmatprep.subr.mxu0 0.0
  %2047 = vmatpush2.msra.mxu0 0.0
  %2048 = vmatprep.subr.mxu0 0.0
  %2049 = vmatpush2.msra.mxu0 0.0
  %2050 = vmatprep.subr.mxu0 0.0
  %2051 = vmatpush2.msra.mxu0 0.0
  %2052 = vmatprep.subr.mxu0 0.0
  %2053 = vmatpush2.msra.mxu0 0.0
  %2054 = vmatprep.subr.mxu0 0.0
  %2055 = vmatpush2.msra.mxu0 0.0
  %2056 = vmatprep.subr.mxu0 0.0
  %2057 = vmatpush2.msra.mxu0 0.0
  %2058 = vmatprep.subr.mxu0 0.0
  %2059 = vmatpush2.msra.mxu0 0.0
  %2060 = vmatprep.subr.mxu0 0.0
  %2061 = vmatpush2.msra.mxu0 0.0
  %2062 = vmatprep.subr.mxu0 0.0
  %2063 = vmatpush2.msra.mxu0 0.0
  %2064 = vmatprep.subr.mxu0 0.0
  %2065 = vmatpush2.msra.mxu0 0.0
  %2066 = vmatprep.subr.mxu0 0.0
  %2067 = vmatpush2.msra.mxu0 0.0
  %2068 = vmatprep.subr.mxu0 0.0
  %2069 = vmatpush2.msra.mxu0 0.0
  %2070 = vmatprep.mubr.f32.mxu0 0.0
  %2071 = vmatmul.mubr.f32.gmra.mxu0 %v2004
  %v2072 = vpop.f32.mrf.mxu0
  %v2073 = vadd.f32 %v2000, %v2072
  %v2074 = vpop.f32.mrf.mxu0
  %2075 = vdwg.mxu0
  %v2076 = vld [vmem:[%s11] sm:$0x1]
  %v2078 = vlaneseq
  %v2079 = vshrl.u32 %v2078, 7
  %v2080 = vsub.s32 0, %v2079
  %v2081 = vrot.slane %v2076, %v2080
  %v2083 = vadd.f32 %v2073, %v2081
  %v2084 = vld [vmem:[%s10] sm:$0xff]
  %v2085 = vld [vmem:[%s10 + $0x8] sm:$0xff]
  %v2086 = vld [vmem:[%s10 + $0x10] sm:$0xff]
  %v2087 = vld [vmem:[%s10 + $0x18] sm:$0xff]
  %v2088 = vld [vmem:[%s12] sm:$0x1]
  %v2090 = vlaneseq
  %v2091 = vshrl.u32 %v2090, 7
  %v2092 = vsub.s32 0, %v2091
  %v2093 = vrot.slane %v2088, %v2092
  %2095 = vmatprep.subr.mxu0 0.0
  %2096 = vmatpush1.msra.mxu0 0.0
  %2097 = vmatprep.subr.mxu0 0.0
  %2098 = vmatpush1.msra.mxu0 0.0
  %2099 = vmatprep.subr.mxu0 0.0
  %2100 = vmatpush1.msra.mxu0 0.0
  %2101 = vmatprep.subr.mxu0 0.0
  %2102 = vmatpush1.msra.mxu0 0.0
  %2103 = vmatprep.subr.mxu0 0.0
  %2104 = vmatpush1.msra.mxu0 0.0
  %2105 = vmatprep.subr.mxu0 0.0
  %2106 = vmatpush1.msra.mxu0 0.0
  %2107 = vmatprep.subr.mxu0 0.0
  %2108 = vmatpush1.msra.mxu0 0.0
  %2109 = vmatprep.subr.mxu0 0.0
  %2110 = vmatpush1.msra.mxu0 0.0
  %2111 = vmatprep.subr.mxu0 0.0
  %2112 = vmatpush1.msra.mxu0 0.0
  %2113 = vmatprep.subr.mxu0 0.0
  %2114 = vmatpush1.msra.mxu0 0.0
  %2115 = vmatprep.subr.mxu0 0.0
  %2116 = vmatpush1.msra.mxu0 0.0
  %2117 = vmatprep.subr.mxu0 0.0
  %2118 = vmatpush1.msra.mxu0 0.0
  %2119 = vmatprep.subr.mxu0 0.0
  %2120 = vmatpush1.msra.mxu0 %v2087
  %2121 = vmatprep.subr.mxu0 0.0
  %2122 = vmatpush1.msra.mxu0 %v2086
  %2123 = vmatprep.subr.mxu0 0.0
  %2124 = vmatpush1.msra.mxu0 %v2085
  %2125 = vmatprep.subr.mxu0 0.0
  %2126 = vmatpush1.msra.mxu0 %v2084
  %2127 = vmatprep.subr.mxu0 0.0
  %2128 = vmatpush2.msra.mxu0 0.0
  %2129 = vmatprep.subr.mxu0 0.0
  %2130 = vmatpush2.msra.mxu0 0.0
  %2131 = vmatprep.subr.mxu0 0.0
  %2132 = vmatpush2.msra.mxu0 0.0
  %2133 = vmatprep.subr.mxu0 0.0
  %2134 = vmatpush2.msra.mxu0 0.0
  %2135 = vmatprep.subr.mxu0 0.0
  %2136 = vmatpush2.msra.mxu0 0.0
  %2137 = vmatprep.subr.mxu0 0.0
  %2138 = vmatpush2.msra.mxu0 0.0
  %2139 = vmatprep.subr.mxu0 0.0
  %2140 = vmatpush2.msra.mxu0 0.0
  %2141 = vmatprep.subr.mxu0 0.0
  %2142 = vmatpush2.msra.mxu0 0.0
  %2143 = vmatprep.subr.mxu0 0.0
  %2144 = vmatpush2.msra.mxu0 0.0
  %2145 = vmatprep.subr.mxu0 0.0
  %2146 = vmatpush2.msra.mxu0 0.0
  %2147 = vmatprep.subr.mxu0 0.0
  %2148 = vmatpush2.msra.mxu0 0.0
  %2149 = vmatprep.subr.mxu0 0.0
  %2150 = vmatpush2.msra.mxu0 0.0
  %2151 = vmatprep.subr.mxu0 0.0
  %2152 = vmatpush2.msra.mxu0 0.0
  %2153 = vmatprep.subr.mxu0 0.0
  %2154 = vmatpush2.msra.mxu0 0.0
  %2155 = vmatprep.subr.mxu0 0.0
  %2156 = vmatpush2.msra.mxu0 0.0
  %2157 = vmatprep.subr.mxu0 0.0
  %2158 = vmatpush2.msra.mxu0 0.0
  %2159 = vmatprep.mubr.f32.mxu0 0.0
  %2160 = vmatmul.mubr.f32.gmra.mxu0 %v1459
  %v2161 = vpop.f32.mrf.mxu0
  %v2162 = vadd.f32 %v2093, %v2161
  %v2163 = vpop.f32.mrf.mxu0
  %2164 = vdwg.mxu0
  %v2165 = vadd.f32 %v2083, %v2162
  %v2166 = vxor.u32 %v2165, 2147483648
  %v2167 = vmul.f32 %v2166, 1.442695
  %v2168 = vpow.pop %v2167
  %v2169 = vadd.f32 %v2168, 1.0
  %v2170 = vrcp.pop %v2169
  %v2171 = vmul.f32 1.0, %v2170
  %2173 = vrot.lane.b32.xlu0 %v2162, 64
  %v2174 = vpop.permute.xlu0 %2173
  %v2176 = vmul.f32 %v2171, %v2174
  %2178 = vrot.lane.b32.xlu0 %v2176, 64
  %v2179 = vpop.permute.xlu0 %2178
  %v2181 = vadd.f32 %v2083, %v2179
  %v2182 = vtanh.pop %v2181
  %v2183 = vsub.f32 1.0, %v2171
  %2185 = vrot.lane.b32.xlu0 %v2182, 96
  %v2186 = vpop.permute.xlu0 %2185
  %v2188 = vmul.f32 %v2183, %v2186
  %v2189 = vmul.f32 %v2171, %v1373
  %v2190 = vadd.f32 %v2188, %v2189
  %v2191 = vld [vmem:[%s13] sm:$0xff]
  %v2192 = vld [vmem:[%s13 + $0x8] sm:$0xff]
  %v2193 = vld [vmem:[%s13 + $0x10] sm:$0xff]
  %v2194 = vld [vmem:[%s13 + $0x18] sm:$0xff]
  %v2195 = vld [vmem:[%s14] sm:$0xff]
  %v2196 = vld [vmem:[%s14 + $0x8] sm:$0xff]
  %v2197 = vld [vmem:[%s14 + $0x10] sm:$0xff]
  %v2198 = vld [vmem:[%s14 + $0x18] sm:$0xff]
  %v2199 = vld [vmem:[%s14 + $0x20] sm:$0xff]
  %v2200 = vld [vmem:[%s14 + $0x28] sm:$0xff]
  %v2201 = vld [vmem:[%s14 + $0x30] sm:$0xff]
  %v2202 = vld [vmem:[%s14 + $0x38] sm:$0xff]
  %2203 = vmatprep.subr.mxu0 0.0
  %2204 = vmatpush1.msra.mxu0 0.0
  %2205 = vmatprep.subr.mxu0 0.0
  %2206 = vmatpush1.msra.mxu0 0.0
  %2207 = vmatprep.subr.mxu0 0.0
  %2208 = vmatpush1.msra.mxu0 0.0
  %2209 = vmatprep.subr.mxu0 0.0
  %2210 = vmatpush1.msra.mxu0 0.0
  %2211 = vmatprep.subr.mxu0 0.0
  %2212 = vmatpush1.msra.mxu0 0.0
  %2213 = vmatprep.subr.mxu0 0.0
  %2214 = vmatpush1.msra.mxu0 0.0
  %2215 = vmatprep.subr.mxu0 0.0
  %2216 = vmatpush1.msra.mxu0 0.0
  %2217 = vmatprep.subr.mxu0 0.0
  %2218 = vmatpush1.msra.mxu0 0.0
  %2219 = vmatprep.subr.mxu0 0.0
  %2220 = vmatpush1.msra.mxu0 %v2202
  %2221 = vmatprep.subr.mxu0 0.0
  %2222 = vmatpush1.msra.mxu0 %v2201
  %2223 = vmatprep.subr.mxu0 0.0
  %2224 = vmatpush1.msra.mxu0 %v2200
  %2225 = vmatprep.subr.mxu0 0.0
  %2226 = vmatpush1.msra.mxu0 %v2199
  %2227 = vmatprep.subr.mxu0 0.0
  %2228 = vmatpush1.msra.mxu0 %v2198
  %2229 = vmatprep.subr.mxu0 0.0
  %2230 = vmatpush1.msra.mxu0 %v2197
  %2231 = vmatprep.subr.mxu0 0.0
  %2232 = vmatpush1.msra.mxu0 %v2196
  %2233 = vmatprep.subr.mxu0 0.0
  %2234 = vmatpush1.msra.mxu0 %v2195
  %2235 = vmatprep.subr.mxu0 0.0
  %2236 = vmatpush2.msra.mxu0 0.0
  %2237 = vmatprep.subr.mxu0 0.0
  %2238 = vmatpush2.msra.mxu0 0.0
  %2239 = vmatprep.subr.mxu0 0.0
  %2240 = vmatpush2.msra.mxu0 0.0
  %2241 = vmatprep.subr.mxu0 0.0
  %2242 = vmatpush2.msra.mxu0 0.0
  %2243 = vmatprep.subr.mxu0 0.0
  %2244 = vmatpush2.msra.mxu0 0.0
  %2245 = vmatprep.subr.mxu0 0.0
  %2246 = vmatpush2.msra.mxu0 0.0
  %2247 = vmatprep.subr.mxu0 0.0
  %2248 = vmatpush2.msra.mxu0 0.0
  %2249 = vmatprep.subr.mxu0 0.0
  %2250 = vmatpush2.msra.mxu0 0.0
  %2251 = vmatprep.subr.mxu0 0.0
  %2252 = vmatpush2.msra.mxu0 0.0
  %2253 = vmatprep.subr.mxu0 0.0
  %2254 = vmatpush2.msra.mxu0 0.0
  %2255 = vmatprep.subr.mxu0 0.0
  %2256 = vmatpush2.msra.mxu0 0.0
  %2257 = vmatprep.subr.mxu0 0.0
  %2258 = vmatpush2.msra.mxu0 0.0
  %2259 = vmatprep.subr.mxu0 0.0
  %2260 = vmatpush2.msra.mxu0 0.0
  %2261 = vmatprep.subr.mxu0 0.0
  %2262 = vmatpush2.msra.mxu0 0.0
  %2263 = vmatprep.subr.mxu0 0.0
  %2264 = vmatpush2.msra.mxu0 0.0
  %2265 = vmatprep.subr.mxu0 0.0
  %2266 = vmatpush2.msra.mxu0 0.0
  %2267 = vmatprep.mubr.f32.mxu0 0.0
  %2268 = vmatmul.mubr.f32.gmra.mxu0 %v1931
  %v2269 = vpop.f32.mrf.mxu0
  %v2270 = vadd.f32 0.0, %v2269
  %v2271 = vpop.f32.mrf.mxu0
  %2272 = vdwg.mxu0
  %2274 = vrot.lane.b32.xlu0 %v2190, 96
  %v2275 = vpop.permute.xlu0 %2274
  %v2276 = vsel %vm146, %v2275, 0
  %2278 = vmatprep.subr.mxu0 0.0
  %2279 = vmatpush1.msra.mxu0 0.0
  %2280 = vmatprep.subr.mxu0 0.0
  %2281 = vmatpush1.msra.mxu0 0.0
  %2282 = vmatprep.subr.mxu0 0.0
  %2283 = vmatpush1.msra.mxu0 0.0
  %2284 = vmatprep.subr.mxu0 0.0
  %2285 = vmatpush1.msra.mxu0 0.0
  %2286 = vmatprep.subr.mxu0 0.0
  %2287 = vmatpush1.msra.mxu0 0.0
  %2288 = vmatprep.subr.mxu0 0.0
  %2289 = vmatpush1.msra.mxu0 0.0
  %2290 = vmatprep.subr.mxu0 0.0
  %2291 = vmatpush1.msra.mxu0 0.0
  %2292 = vmatprep.subr.mxu0 0.0
  %2293 = vmatpush1.msra.mxu0 0.0
  %2294 = vmatprep.subr.mxu0 0.0
  %2295 = vmatpush1.msra.mxu0 0.0
  %2296 = vmatprep.subr.mxu0 0.0
  %2297 = vmatpush1.msra.mxu0 0.0
  %2298 = vmatprep.subr.mxu0 0.0
  %2299 = vmatpush1.msra.mxu0 0.0
  %2300 = vmatprep.subr.mxu0 0.0
  %2301 = vmatpush1.msra.mxu0 0.0
  %2302 = vmatprep.subr.mxu0 0.0
  %2303 = vmatpush1.msra.mxu0 %v2194
  %2304 = vmatprep.subr.mxu0 0.0
  %2305 = vmatpush1.msra.mxu0 %v2193
  %2306 = vmatprep.subr.mxu0 0.0
  %2307 = vmatpush1.msra.mxu0 %v2192
  %2308 = vmatprep.subr.mxu0 0.0
  %2309 = vmatpush1.msra.mxu0 %v2191
  %2310 = vmatprep.subr.mxu0 0.0
  %2311 = vmatpush2.msra.mxu0 0.0
  %2312 = vmatprep.subr.mxu0 0.0
  %2313 = vmatpush2.msra.mxu0 0.0
  %2314 = vmatprep.subr.mxu0 0.0
  %2315 = vmatpush2.msra.mxu0 0.0
  %2316 = vmatprep.subr.mxu0 0.0
  %2317 = vmatpush2.msra.mxu0 0.0
  %2318 = vmatprep.subr.mxu0 0.0
  %2319 = vmatpush2.msra.mxu0 0.0
  %2320 = vmatprep.subr.mxu0 0.0
  %2321 = vmatpush2.msra.mxu0 0.0
  %2322 = vmatprep.subr.mxu0 0.0
  %2323 = vmatpush2.msra.mxu0 0.0
  %2324 = vmatprep.subr.mxu0 0.0
  %2325 = vmatpush2.msra.mxu0 0.0
  %2326 = vmatprep.subr.mxu0 0.0
  %2327 = vmatpush2.msra.mxu0 0.0
  %2328 = vmatprep.subr.mxu0 0.0
  %2329 = vmatpush2.msra.mxu0 0.0
  %2330 = vmatprep.subr.mxu0 0.0
  %2331 = vmatpush2.msra.mxu0 0.0
  %2332 = vmatprep.subr.mxu0 0.0
  %2333 = vmatpush2.msra.mxu0 0.0
  %2334 = vmatprep.subr.mxu0 0.0
  %2335 = vmatpush2.msra.mxu0 0.0
  %2336 = vmatprep.subr.mxu0 0.0
  %2337 = vmatpush2.msra.mxu0 0.0
  %2338 = vmatprep.subr.mxu0 0.0
  %2339 = vmatpush2.msra.mxu0 0.0
  %2340 = vmatprep.subr.mxu0 0.0
  %2341 = vmatpush2.msra.mxu0 0.0
  %2342 = vmatprep.mubr.f32.mxu0 0.0
  %2343 = vmatmul.mubr.f32.gmra.mxu0 %v2276
  %v2344 = vpop.f32.mrf.mxu0
  %v2345 = vadd.f32 %v2270, %v2344
  %v2346 = vpop.f32.mrf.mxu0
  %2347 = vdwg.mxu0
  %v2348 = vld [vmem:[%s15] sm:$0xff]
  %v2349 = vld [vmem:[%s15 + $0x8] sm:$0xff]
  %v2350 = vld [vmem:[%s15 + $0x10] sm:$0xff]
  %v2351 = vld [vmem:[%s15 + $0x18] sm:$0xff]
  %2352 = vmatprep.subr.mxu0 0.0
  %2353 = vmatpush1.msra.mxu0 0.0
  %2354 = vmatprep.subr.mxu0 0.0
  %2355 = vmatpush1.msra.mxu0 0.0
  %2356 = vmatprep.subr.mxu0 0.0
  %2357 = vmatpush1.msra.mxu0 0.0
  %2358 = vmatprep.subr.mxu0 0.0
  %2359 = vmatpush1.msra.mxu0 0.0
  %2360 = vmatprep.subr.mxu0 0.0
  %2361 = vmatpush1.msra.mxu0 0.0
  %2362 = vmatprep.subr.mxu0 0.0
  %2363 = vmatpush1.msra.mxu0 0.0
  %2364 = vmatprep.subr.mxu0 0.0
  %2365 = vmatpush1.msra.mxu0 0.0
  %2366 = vmatprep.subr.mxu0 0.0
  %2367 = vmatpush1.msra.mxu0 0.0
  %2368 = vmatprep.subr.mxu0 0.0
  %2369 = vmatpush1.msra.mxu0 0.0
  %2370 = vmatprep.subr.mxu0 0.0
  %2371 = vmatpush1.msra.mxu0 0.0
  %2372 = vmatprep.subr.mxu0 0.0
  %2373 = vmatpush1.msra.mxu0 0.0
  %2374 = vmatprep.subr.mxu0 0.0
  %2375 = vmatpush1.msra.mxu0 0.0
  %2376 = vmatprep.subr.mxu0 0.0
  %2377 = vmatpush1.msra.mxu0 %v2351
  %2378 = vmatprep.subr.mxu0 0.0
  %2379 = vmatpush1.msra.mxu0 %v2350
  %2380 = vmatprep.subr.mxu0 0.0
  %2381 = vmatpush1.msra.mxu0 %v2349
  %2382 = vmatprep.subr.mxu0 0.0
  %2383 = vmatpush1.msra.mxu0 %v2348
  %2384 = vmatprep.subr.mxu0 0.0
  %2385 = vmatpush2.msra.mxu0 0.0
  %2386 = vmatprep.subr.mxu0 0.0
  %2387 = vmatpush2.msra.mxu0 0.0
  %2388 = vmatprep.subr.mxu0 0.0
  %2389 = vmatpush2.msra.mxu0 0.0
  %2390 = vmatprep.subr.mxu0 0.0
  %2391 = vmatpush2.msra.mxu0 0.0
  %2392 = vmatprep.subr.mxu0 0.0
  %2393 = vmatpush2.msra.mxu0 0.0
  %2394 = vmatprep.subr.mxu0 0.0
  %2395 = vmatpush2.msra.mxu0 0.0
  %2396 = vmatprep.subr.mxu0 0.0
  %2397 = vmatpush2.msra.mxu0 0.0
  %2398 = vmatprep.subr.mxu0 0.0
  %2399 = vmatpush2.msra.mxu0 0.0
  %2400 = vmatprep.subr.mxu0 0.0
  %2401 = vmatpush2.msra.mxu0 0.0
  %2402 = vmatprep.subr.mxu0 0.0
  %2403 = vmatpush2.msra.mxu0 0.0
  %2404 = vmatprep.subr.mxu0 0.0
  %2405 = vmatpush2.msra.mxu0 0.0
  %2406 = vmatprep.subr.mxu0 0.0
  %2407 = vmatpush2.msra.mxu0 0.0
  %2408 = vmatprep.subr.mxu0 0.0
  %2409 = vmatpush2.msra.mxu0 0.0
  %2410 = vmatprep.subr.mxu0 0.0
  %2411 = vmatpush2.msra.mxu0 0.0
  %2412 = vmatprep.subr.mxu0 0.0
  %2413 = vmatpush2.msra.mxu0 0.0
  %2414 = vmatprep.subr.mxu0 0.0
  %2415 = vmatpush2.msra.mxu0 0.0
  %2416 = vmatprep.mubr.f32.mxu0 0.0
  %2417 = vmatmul.mubr.f32.gmra.mxu0 %v2004
  %v2418 = vpop.f32.mrf.mxu0
  %v2419 = vadd.f32 0.0, %v2418
  %v2420 = vpop.f32.mrf.mxu0
  %2421 = vdwg.mxu0
  %v2422 = vadd.f32 %v2345, %v2419
  %v2423 = vld [vmem:[%s16] sm:$0x1]
  %v2425 = vlaneseq
  %v2426 = vshrl.u32 %v2425, 7
  %v2427 = vsub.s32 0, %v2426
  %v2428 = vrot.slane %v2423, %v2427
  %v2430 = vadd.f32 %v2422, %v2428
  %s2431 = scalar_lea.vmem %s17, 16
  %2432 = vst.msk [vmem:[%s2431] sm:$0xff] %vm792, %v2430
  %v2433 = vsel %vm792, %v2430, -inf
  %2434 = vmax.xlane.f32.xlu0 %v2433
  %v2435 = vpop.xlane.xlu0 %2434
  %vm2436 = vcmp.eq.f32.partialorder %v2430, %v2435
  %v2437 = vsel %vm2436, %v796, 16.0
  %v2438 = vsel %vm792, %v2437, inf
  %2439 = vmin.xlane.f32.xlu0 %v2438
  %v2440 = vpop.xlane.xlu0 %2439
  %v2441 = vcvt.f32.s32.to.zero.pseudo %v2440
  %vm2442 = vcmp.eq.s32.totalorder %v795, %v2441
  %v2443 = vsel %vm2442, 1, 0
  %v2444 = vcvt.s32.f32 %v2443
  %v2445 = vld [vmem:[%s3] sm:$0xff]
  %v2446 = vld [vmem:[%s3 + $0x8] sm:$0xff]
  %v2448 = vsel %vm792, %v2444, 0
  %2450 = vmatprep.subr.mxu0 0.0
  %2451 = vmatpush1.msra.mxu0 0.0
  %2452 = vmatprep.subr.mxu0 0.0
  %2453 = vmatpush1.msra.mxu0 0.0
  %2454 = vmatprep.subr.mxu0 0.0
  %2455 = vmatpush1.msra.mxu0 0.0
  %2456 = vmatprep.subr.mxu0 0.0
  %2457 = vmatpush1.msra.mxu0 0.0
  %2458 = vmatprep.subr.mxu0 0.0
  %2459 = vmatpush1.msra.mxu0 0.0
  %2460 = vmatprep.subr.mxu0 0.0
  %2461 = vmatpush1.msra.mxu0 0.0
  %2462 = vmatprep.subr.mxu0 0.0
  %2463 = vmatpush1.msra.mxu0 0.0
  %2464 = vmatprep.subr.mxu0 0.0
  %2465 = vmatpush1.msra.mxu0 0.0
  %2466 = vmatprep.subr.mxu0 0.0
  %2467 = vmatpush1.msra.mxu0 0.0
  %2468 = vmatprep.subr.mxu0 0.0
  %2469 = vmatpush1.msra.mxu0 0.0
  %2470 = vmatprep.subr.mxu0 0.0
  %2471 = vmatpush1.msra.mxu0 0.0
  %2472 = vmatprep.subr.mxu0 0.0
  %2473 = vmatpush1.msra.mxu0 0.0
  %2474 = vmatprep.subr.mxu0 0.0
  %2475 = vmatpush1.msra.mxu0 0.0
  %2476 = vmatprep.subr.mxu0 0.0
  %2477 = vmatpush1.msra.mxu0 0.0
  %2478 = vmatprep.subr.mxu0 0.0
  %2479 = vmatpush1.msra.mxu0 %v2446
  %2480 = vmatprep.subr.mxu0 0.0
  %2481 = vmatpush1.msra.mxu0 %v2445
  %2482 = vmatprep.subr.mxu0 0.0
  %2483 = vmatpush2.msra.mxu0 0.0
  %2484 = vmatprep.subr.mxu0 0.0
  %2485 = vmatpush2.msra.mxu0 0.0
  %2486 = vmatprep.subr.mxu0 0.0
  %2487 = vmatpush2.msra.mxu0 0.0
  %2488 = vmatprep.subr.mxu0 0.0
  %2489 = vmatpush2.msra.mxu0 0.0
  %2490 = vmatprep.subr.mxu0 0.0
  %2491 = vmatpush2.msra.mxu0 0.0
  %2492 = vmatprep.subr.mxu0 0.0
  %2493 = vmatpush2.msra.mxu0 0.0
  %2494 = vmatprep.subr.mxu0 0.0
  %2495 = vmatpush2.msra.mxu0 0.0
  %2496 = vmatprep.subr.mxu0 0.0
  %2497 = vmatpush2.msra.mxu0 0.0
  %2498 = vmatprep.subr.mxu0 0.0
  %2499 = vmatpush2.msra.mxu0 0.0
  %2500 = vmatprep.subr.mxu0 0.0
  %2501 = vmatpush2.msra.mxu0 0.0
  %2502 = vmatprep.subr.mxu0 0.0
  %2503 = vmatpush2.msra.mxu0 0.0
  %2504 = vmatprep.subr.mxu0 0.0
  %2505 = vmatpush2.msra.mxu0 0.0
  %2506 = vmatprep.subr.mxu0 0.0
  %2507 = vmatpush2.msra.mxu0 0.0
  %2508 = vmatprep.subr.mxu0 0.0
  %2509 = vmatpush2.msra.mxu0 0.0
  %2510 = vmatprep.subr.mxu0 0.0
  %2511 = vmatpush2.msra.mxu0 0.0
  %2512 = vmatprep.subr.mxu0 0.0
  %2513 = vmatpush2.msra.mxu0 0.0
  %2514 = vmatprep.mubr.f32.mxu0 0.0
  %2515 = vmatmul.mubr.f32.gmra.mxu0 %v2448
  %v2516 = vpop.f32.mrf.mxu0
  %v2517 = vadd.f32 0.0, %v2516
  %v2518 = vpop.f32.mrf.mxu0
  %2519 = vdwg.mxu0
  %v2520 = vld [vmem:[%s4] sm:$0xff]
  %v2521 = vld [vmem:[%s4 + $0x8] sm:$0xff]
  %v2522 = vld [vmem:[%s4 + $0x10] sm:$0xff]
  %v2523 = vld [vmem:[%s4 + $0x18] sm:$0xff]
  %2524 = vmatprep.subr.mxu0 0.0
  %2525 = vmatpush1.msra.mxu0 0.0
  %2526 = vmatprep.subr.mxu0 0.0
  %2527 = vmatpush1.msra.mxu0 0.0
  %2528 = vmatprep.subr.mxu0 0.0
  %2529 = vmatpush1.msra.mxu0 0.0
  %2530 = vmatprep.subr.mxu0 0.0
  %2531 = vmatpush1.msra.mxu0 0.0
  %2532 = vmatprep.subr.mxu0 0.0
  %2533 = vmatpush1.msra.mxu0 0.0
  %2534 = vmatprep.subr.mxu0 0.0
  %2535 = vmatpush1.msra.mxu0 0.0
  %2536 = vmatprep.subr.mxu0 0.0
  %2537 = vmatpush1.msra.mxu0 0.0
  %2538 = vmatprep.subr.mxu0 0.0
  %2539 = vmatpush1.msra.mxu0 0.0
  %2540 = vmatprep.subr.mxu0 0.0
  %2541 = vmatpush1.msra.mxu0 0.0
  %2542 = vmatprep.subr.mxu0 0.0
  %2543 = vmatpush1.msra.mxu0 0.0
  %2544 = vmatprep.subr.mxu0 0.0
  %2545 = vmatpush1.msra.mxu0 0.0
  %2546 = vmatprep.subr.mxu0 0.0
  %2547 = vmatpush1.msra.mxu0 0.0
  %2548 = vmatprep.subr.mxu0 0.0
  %2549 = vmatpush1.msra.mxu0 %v2523
  %2550 = vmatprep.subr.mxu0 0.0
  %2551 = vmatpush1.msra.mxu0 %v2522
  %2552 = vmatprep.subr.mxu0 0.0
  %2553 = vmatpush1.msra.mxu0 %v2521
  %2554 = vmatprep.subr.mxu0 0.0
  %2555 = vmatpush1.msra.mxu0 %v2520
  %2556 = vmatprep.subr.mxu0 0.0
  %2557 = vmatpush2.msra.mxu0 0.0
  %2558 = vmatprep.subr.mxu0 0.0
  %2559 = vmatpush2.msra.mxu0 0.0
  %2560 = vmatprep.subr.mxu0 0.0
  %2561 = vmatpush2.msra.mxu0 0.0
  %2562 = vmatprep.subr.mxu0 0.0
  %2563 = vmatpush2.msra.mxu0 0.0
  %2564 = vmatprep.subr.mxu0 0.0
  %2565 = vmatpush2.msra.mxu0 0.0
  %2566 = vmatprep.subr.mxu0 0.0
  %2567 = vmatpush2.msra.mxu0 0.0
  %2568 = vmatprep.subr.mxu0 0.0
  %2569 = vmatpush2.msra.mxu0 0.0
  %2570 = vmatprep.subr.mxu0 0.0
  %2571 = vmatpush2.msra.mxu0 0.0
  %2572 = vmatprep.subr.mxu0 0.0
  %2573 = vmatpush2.msra.mxu0 0.0
  %2574 = vmatprep.subr.mxu0 0.0
  %2575 = vmatpush2.msra.mxu0 0.0
  %2576 = vmatprep.subr.mxu0 0.0
  %2577 = vmatpush2.msra.mxu0 0.0
  %2578 = vmatprep.subr.mxu0 0.0
  %2579 = vmatpush2.msra.mxu0 0.0
  %2580 = vmatprep.subr.mxu0 0.0
  %2581 = vmatpush2.msra.mxu0 0.0
  %2582 = vmatprep.subr.mxu0 0.0
  %2583 = vmatpush2.msra.mxu0 0.0
  %2584 = vmatprep.subr.mxu0 0.0
  %2585 = vmatpush2.msra.mxu0 0.0
  %2586 = vmatprep.subr.mxu0 0.0
  %2587 = vmatpush2.msra.mxu0 0.0
  %2588 = vmatprep.mubr.f32.mxu0 0.0
  %2589 = vmatmul.mubr.f32.gmra.mxu0 %v2276
  %v2590 = vpop.f32.mrf.mxu0
  %v2591 = vadd.f32 0.0, %v2590
  %v2592 = vpop.f32.mrf.mxu0
  %2593 = vdwg.mxu0
  %v2594 = vld [vmem:[#allocation2] sm:$0xff]
  %v2595 = vld [vmem:[#allocation2 + $0x8] sm:$0xff]
  %v2596 = vld [vmem:[#allocation2 + $0x10] sm:$0xff]
  %v2597 = vld [vmem:[#allocation2 + $0x18] sm:$0xff]
  %v2598 = vld [vmem:[#allocation2 + $0x20] sm:$0xff]
  %v2599 = vld [vmem:[#allocation2 + $0x28] sm:$0xff]
  %v2600 = vld [vmem:[#allocation2 + $0x30] sm:$0xff]
  %v2601 = vld [vmem:[#allocation2 + $0x38] sm:$0xff]
  %v2602 = vadd.f32 %v2594, %v2591
  %v2603 = vadd.f32 %v2595, %v2591
  %v2604 = vadd.f32 %v2596, %v2591
  %v2605 = vadd.f32 %v2597, %v2591
  %v2606 = vadd.f32 %v2598, %v2591
  %v2607 = vadd.f32 %v2599, %v2591
  %v2608 = vadd.f32 %v2600, %v2591
  %v2609 = vadd.f32 %v2601, %v2591
  %v2610 = vtanh.pop %v2602
  %v2611 = vtanh.pop %v2603
  %v2612 = vtanh.pop %v2604
  %v2613 = vtanh.pop %v2605
  %v2614 = vtanh.pop %v2606
  %v2615 = vtanh.pop %v2607
  %v2616 = vtanh.pop %v2608
  %v2617 = vtanh.pop %v2609
  %v2618 = vld [vmem:[%s7] sm:$0x1]
  %v2620 = vlaneseq
  %v2621 = vshrl.u32 %v2620, 7
  %v2622 = vsub.s32 0, %v2621
  %v2623 = vrot.slane %v2618, %v2622
  %v2625 = vmul.f32 %v2610, %v2623
  %v2626 = vmul.f32 %v2611, %v2623
  %v2627 = vmul.f32 %v2612, %v2623
  %v2628 = vmul.f32 %v2613, %v2623
  %v2629 = vmul.f32 %v2614, %v2623
  %v2630 = vmul.f32 %v2615, %v2623
  %v2631 = vmul.f32 %v2616, %v2623
  %v2632 = vmul.f32 %v2617, %v2623
  %v2633 = vsel %vm146, %v2625, 0.0
  %2634 = vadd.xlane.f32.xlu0 %v2633
  %v2635 = vpop.xlane.xlu0 %2634
  %v2636 = vsel %vm146, %v2626, 0.0
  %2637 = vadd.xlane.f32.xlu0 %v2636
  %v2638 = vpop.xlane.xlu0 %2637
  %v2639 = vsel %vm146, %v2627, 0.0
  %2640 = vadd.xlane.f32.xlu0 %v2639
  %v2641 = vpop.xlane.xlu0 %2640
  %v2642 = vsel %vm146, %v2628, 0.0
  %2643 = vadd.xlane.f32.xlu0 %v2642
  %v2644 = vpop.xlane.xlu0 %2643
  %v2645 = vsel %vm146, %v2629, 0.0
  %2646 = vadd.xlane.f32.xlu0 %v2645
  %v2647 = vpop.xlane.xlu0 %2646
  %v2648 = vsel %vm146, %v2630, 0.0
  %2649 = vadd.xlane.f32.xlu0 %v2648
  %v2650 = vpop.xlane.xlu0 %2649
  %v2651 = vsel %vm146, %v2631, 0.0
  %2652 = vadd.xlane.f32.xlu0 %v2651
  %v2653 = vpop.xlane.xlu0 %2652
  %v2654 = vsel %vm146, %v2632, 0.0
  %2655 = vadd.xlane.f32.xlu0 %v2654
  %v2656 = vpop.xlane.xlu0 %2655
  %v2657 = vmax.f32 %v2635, %v2647
  %v2658 = vmax.f32 %v2638, %v2650
  %v2659 = vmax.f32 %v2641, %v2653
  %v2660 = vmax.f32 %v2644, %v2656
  %v2661 = vmax.f32 %v2657, %v2658
  %v2662 = vmax.f32 %v2659, %v2660
  %v2663 = vmax.f32 %v2661, %v2662
  %v2664 = vsub.f32 %v2635, %v2663
  %v2665 = vsub.f32 %v2638, %v2663
  %v2666 = vsub.f32 %v2641, %v2663
  %v2667 = vsub.f32 %v2644, %v2663
  %v2668 = vsub.f32 %v2647, %v2663
  %v2669 = vsub.f32 %v2650, %v2663
  %v2670 = vsub.f32 %v2653, %v2663
  %v2671 = vsub.f32 %v2656, %v2663
  %v2672 = vmul.f32 %v2664, 1.442695
  %v2673 = vpow.pop %v2672
  %v2674 = vmul.f32 %v2665, 1.442695
  %v2675 = vpow.pop %v2674
  %v2676 = vmul.f32 %v2666, 1.442695
  %v2677 = vpow.pop %v2676
  %v2678 = vmul.f32 %v2667, 1.442695
  %v2679 = vpow.pop %v2678
  %v2680 = vmul.f32 %v2668, 1.442695
  %v2681 = vpow.pop %v2680
  %v2682 = vmul.f32 %v2669, 1.442695
  %v2683 = vpow.pop %v2682
  %v2684 = vmul.f32 %v2670, 1.442695
  %v2685 = vpow.pop %v2684
  %v2686 = vmul.f32 %v2671, 1.442695
  %v2687 = vpow.pop %v2686
  %v2688 = vadd.f32 %v2673, %v2675
  %v2689 = vadd.f32 %v2688, %v2677
  %v2690 = vadd.f32 %v2689, %v2679
  %v2691 = vadd.f32 %v2690, %v2681
  %v2692 = vadd.f32 %v2691, %v2683
  %v2693 = vadd.f32 %v2692, %v2685
  %v2694 = vadd.f32 %v2693, %v2687
  %v2695 = vrcp.pop %v2694
  %v2696 = vmul.f32 %v2673, %v2695
  %v2697 = vmul.f32 %v2675, %v2695
  %v2698 = vmul.f32 %v2677, %v2695
  %v2699 = vmul.f32 %v2679, %v2695
  %v2700 = vmul.f32 %v2681, %v2695
  %v2701 = vmul.f32 %v2683, %v2695
  %v2702 = vmul.f32 %v2685, %v2695
  %v2703 = vmul.f32 %v2687, %v2695
  %v2704 = vld [vmem:[%s2] sm:$0xff]
  %v2705 = vld [vmem:[%s2 + $0x8] sm:$0xff]
  %v2706 = vld [vmem:[%s2 + $0x10] sm:$0xff]
  %v2707 = vld [vmem:[%s2 + $0x18] sm:$0xff]
  %v2708 = vld [vmem:[%s2 + $0x20] sm:$0xff]
  %v2709 = vld [vmem:[%s2 + $0x28] sm:$0xff]
  %v2710 = vld [vmem:[%s2 + $0x30] sm:$0xff]
  %v2711 = vld [vmem:[%s2 + $0x38] sm:$0xff]
  %v2712 = vmul.f32 %v2696, %v2704
  %v2713 = vmul.f32 %v2697, %v2705
  %v2714 = vmul.f32 %v2698, %v2706
  %v2715 = vmul.f32 %v2699, %v2707
  %v2716 = vmul.f32 %v2700, %v2708
  %v2717 = vmul.f32 %v2701, %v2709
  %v2718 = vmul.f32 %v2702, %v2710
  %v2719 = vmul.f32 %v2703, %v2711
  %v2720 = vsel %vm72, %v2712, 0.0
  %v2721 = vsel %vm72, %v2713, 0.0
  %v2722 = vadd.f32 %v2720, %v2721
  %v2723 = vsel %vm72, %v2714, 0.0
  %v2724 = vadd.f32 %v2722, %v2723
  %v2725 = vsel %vm72, %v2715, 0.0
  %v2726 = vadd.f32 %v2724, %v2725
  %v2727 = vsel %vm72, %v2716, 0.0
  %v2728 = vadd.f32 %v2726, %v2727
  %v2729 = vsel %vm72, %v2717, 0.0
  %v2730 = vadd.f32 %v2728, %v2729
  %v2731 = vsel %vm72, %v2718, 0.0
  %v2732 = vadd.f32 %v2730, %v2731
  %v2733 = vsel %vm72, %v2719, 0.0
  %v2734 = vadd.f32 %v2732, %v2733
  %v2735 = vld [vmem:[%s8] sm:$0xff]
  %v2736 = vld [vmem:[%s8 + $0x8] sm:$0xff]
  %v2737 = vld [vmem:[%s8 + $0x10] sm:$0xff]
  %v2738 = vld [vmem:[%s8 + $0x18] sm:$0xff]
  %v2739 = vld [vmem:[%s9] sm:$0xff]
  %v2740 = vld [vmem:[%s9 + $0x8] sm:$0xff]
  %v2741 = vld [vmem:[%s9 + $0x10] sm:$0xff]
  %v2742 = vld [vmem:[%s9 + $0x18] sm:$0xff]
  %v2743 = vld [vmem:[%s9 + $0x20] sm:$0xff]
  %v2744 = vld [vmem:[%s9 + $0x28] sm:$0xff]
  %v2745 = vld [vmem:[%s9 + $0x30] sm:$0xff]
  %v2746 = vld [vmem:[%s9 + $0x38] sm:$0xff]
  %v2748 = vsel %vm72, %v2734, 0
  %2750 = vmatprep.subr.mxu0 0.0
  %2751 = vmatpush1.msra.mxu0 0.0
  %2752 = vmatprep.subr.mxu0 0.0
  %2753 = vmatpush1.msra.mxu0 0.0
  %2754 = vmatprep.subr.mxu0 0.0
  %2755 = vmatpush1.msra.mxu0 0.0
  %2756 = vmatprep.subr.mxu0 0.0
  %2757 = vmatpush1.msra.mxu0 0.0
  %2758 = vmatprep.subr.mxu0 0.0
  %2759 = vmatpush1.msra.mxu0 0.0
  %2760 = vmatprep.subr.mxu0 0.0
  %2761 = vmatpush1.msra.mxu0 0.0
  %2762 = vmatprep.subr.mxu0 0.0
  %2763 = vmatpush1.msra.mxu0 0.0
  %2764 = vmatprep.subr.mxu0 0.0
  %2765 = vmatpush1.msra.mxu0 0.0
  %2766 = vmatprep.subr.mxu0 0.0
  %2767 = vmatpush1.msra.mxu0 %v2746
  %2768 = vmatprep.subr.mxu0 0.0
  %2769 = vmatpush1.msra.mxu0 %v2745
  %2770 = vmatprep.subr.mxu0 0.0
  %2771 = vmatpush1.msra.mxu0 %v2744
  %2772 = vmatprep.subr.mxu0 0.0
  %2773 = vmatpush1.msra.mxu0 %v2743
  %2774 = vmatprep.subr.mxu0 0.0
  %2775 = vmatpush1.msra.mxu0 %v2742
  %2776 = vmatprep.subr.mxu0 0.0
  %2777 = vmatpush1.msra.mxu0 %v2741
  %2778 = vmatprep.subr.mxu0 0.0
  %2779 = vmatpush1.msra.mxu0 %v2740
  %2780 = vmatprep.subr.mxu0 0.0
  %2781 = vmatpush1.msra.mxu0 %v2739
  %2782 = vmatprep.subr.mxu0 0.0
  %2783 = vmatpush2.msra.mxu0 0.0
  %2784 = vmatprep.subr.mxu0 0.0
  %2785 = vmatpush2.msra.mxu0 0.0
  %2786 = vmatprep.subr.mxu0 0.0
  %2787 = vmatpush2.msra.mxu0 0.0
  %2788 = vmatprep.subr.mxu0 0.0
  %2789 = vmatpush2.msra.mxu0 0.0
  %2790 = vmatprep.subr.mxu0 0.0
  %2791 = vmatpush2.msra.mxu0 0.0
  %2792 = vmatprep.subr.mxu0 0.0
  %2793 = vmatpush2.msra.mxu0 0.0
  %2794 = vmatprep.subr.mxu0 0.0
  %2795 = vmatpush2.msra.mxu0 0.0
  %2796 = vmatprep.subr.mxu0 0.0
  %2797 = vmatpush2.msra.mxu0 0.0
  %2798 = vmatprep.subr.mxu0 0.0
  %2799 = vmatpush2.msra.mxu0 0.0
  %2800 = vmatprep.subr.mxu0 0.0
  %2801 = vmatpush2.msra.mxu0 0.0
  %2802 = vmatprep.subr.mxu0 0.0
  %2803 = vmatpush2.msra.mxu0 0.0
  %2804 = vmatprep.subr.mxu0 0.0
  %2805 = vmatpush2.msra.mxu0 0.0
  %2806 = vmatprep.subr.mxu0 0.0
  %2807 = vmatpush2.msra.mxu0 0.0
  %2808 = vmatprep.subr.mxu0 0.0
  %2809 = vmatpush2.msra.mxu0 0.0
  %2810 = vmatprep.subr.mxu0 0.0
  %2811 = vmatpush2.msra.mxu0 0.0
  %2812 = vmatprep.subr.mxu0 0.0
  %2813 = vmatpush2.msra.mxu0 0.0
  %2814 = vmatprep.mubr.f32.mxu0 0.0
  %2815 = vmatmul.mubr.f32.gmra.mxu0 %v2748
  %v2816 = vpop.f32.mrf.mxu0
  %v2817 = vadd.f32 0.0, %v2816
  %v2818 = vpop.f32.mrf.mxu0
  %2819 = vdwg.mxu0
  %v2821 = vsel %vm146, %v2517, 0
  %2823 = vmatprep.subr.mxu0 0.0
  %2824 = vmatpush1.msra.mxu0 0.0
  %2825 = vmatprep.subr.mxu0 0.0
  %2826 = vmatpush1.msra.mxu0 0.0
  %2827 = vmatprep.subr.mxu0 0.0
  %2828 = vmatpush1.msra.mxu0 0.0
  %2829 = vmatprep.subr.mxu0 0.0
  %2830 = vmatpush1.msra.mxu0 0.0
  %2831 = vmatprep.subr.mxu0 0.0
  %2832 = vmatpush1.msra.mxu0 0.0
  %2833 = vmatprep.subr.mxu0 0.0
  %2834 = vmatpush1.msra.mxu0 0.0
  %2835 = vmatprep.subr.mxu0 0.0
  %2836 = vmatpush1.msra.mxu0 0.0
  %2837 = vmatprep.subr.mxu0 0.0
  %2838 = vmatpush1.msra.mxu0 0.0
  %2839 = vmatprep.subr.mxu0 0.0
  %2840 = vmatpush1.msra.mxu0 0.0
  %2841 = vmatprep.subr.mxu0 0.0
  %2842 = vmatpush1.msra.mxu0 0.0
  %2843 = vmatprep.subr.mxu0 0.0
  %2844 = vmatpush1.msra.mxu0 0.0
  %2845 = vmatprep.subr.mxu0 0.0
  %2846 = vmatpush1.msra.mxu0 0.0
  %2847 = vmatprep.subr.mxu0 0.0
  %2848 = vmatpush1.msra.mxu0 %v2738
  %2849 = vmatprep.subr.mxu0 0.0
  %2850 = vmatpush1.msra.mxu0 %v2737
  %2851 = vmatprep.subr.mxu0 0.0
  %2852 = vmatpush1.msra.mxu0 %v2736
  %2853 = vmatprep.subr.mxu0 0.0
  %2854 = vmatpush1.msra.mxu0 %v2735
  %2855 = vmatprep.subr.mxu0 0.0
  %2856 = vmatpush2.msra.mxu0 0.0
  %2857 = vmatprep.subr.mxu0 0.0
  %2858 = vmatpush2.msra.mxu0 0.0
  %2859 = vmatprep.subr.mxu0 0.0
  %2860 = vmatpush2.msra.mxu0 0.0
  %2861 = vmatprep.subr.mxu0 0.0
  %2862 = vmatpush2.msra.mxu0 0.0
  %2863 = vmatprep.subr.mxu0 0.0
  %2864 = vmatpush2.msra.mxu0 0.0
  %2865 = vmatprep.subr.mxu0 0.0
  %2866 = vmatpush2.msra.mxu0 0.0
  %2867 = vmatprep.subr.mxu0 0.0
  %2868 = vmatpush2.msra.mxu0 0.0
  %2869 = vmatprep.subr.mxu0 0.0
  %2870 = vmatpush2.msra.mxu0 0.0
  %2871 = vmatprep.subr.mxu0 0.0
  %2872 = vmatpush2.msra.mxu0 0.0
  %2873 = vmatprep.subr.mxu0 0.0
  %2874 = vmatpush2.msra.mxu0 0.0
  %2875 = vmatprep.subr.mxu0 0.0
  %2876 = vmatpush2.msra.mxu0 0.0
  %2877 = vmatprep.subr.mxu0 0.0
  %2878 = vmatpush2.msra.mxu0 0.0
  %2879 = vmatprep.subr.mxu0 0.0
  %2880 = vmatpush2.msra.mxu0 0.0
  %2881 = vmatprep.subr.mxu0 0.0
  %2882 = vmatpush2.msra.mxu0 0.0
  %2883 = vmatprep.subr.mxu0 0.0
  %2884 = vmatpush2.msra.mxu0 0.0
  %2885 = vmatprep.subr.mxu0 0.0
  %2886 = vmatpush2.msra.mxu0 0.0
  %2887 = vmatprep.mubr.f32.mxu0 0.0
  %2888 = vmatmul.mubr.f32.gmra.mxu0 %v2821
  %v2889 = vpop.f32.mrf.mxu0
  %v2890 = vadd.f32 %v2817, %v2889
  %v2891 = vpop.f32.mrf.mxu0
  %2892 = vdwg.mxu0
  %v2893 = vld [vmem:[%s11] sm:$0x1]
  %v2895 = vlaneseq
  %v2896 = vshrl.u32 %v2895, 7
  %v2897 = vsub.s32 0, %v2896
  %v2898 = vrot.slane %v2893, %v2897
  %v2900 = vadd.f32 %v2890, %v2898
  %v2901 = vld [vmem:[%s10] sm:$0xff]
  %v2902 = vld [vmem:[%s10 + $0x8] sm:$0xff]
  %v2903 = vld [vmem:[%s10 + $0x10] sm:$0xff]
  %v2904 = vld [vmem:[%s10 + $0x18] sm:$0xff]
  %v2905 = vld [vmem:[%s12] sm:$0x1]
  %v2907 = vlaneseq
  %v2908 = vshrl.u32 %v2907, 7
  %v2909 = vsub.s32 0, %v2908
  %v2910 = vrot.slane %v2905, %v2909
  %2912 = vmatprep.subr.mxu0 0.0
  %2913 = vmatpush1.msra.mxu0 0.0
  %2914 = vmatprep.subr.mxu0 0.0
  %2915 = vmatpush1.msra.mxu0 0.0
  %2916 = vmatprep.subr.mxu0 0.0
  %2917 = vmatpush1.msra.mxu0 0.0
  %2918 = vmatprep.subr.mxu0 0.0
  %2919 = vmatpush1.msra.mxu0 0.0
  %2920 = vmatprep.subr.mxu0 0.0
  %2921 = vmatpush1.msra.mxu0 0.0
  %2922 = vmatprep.subr.mxu0 0.0
  %2923 = vmatpush1.msra.mxu0 0.0
  %2924 = vmatprep.subr.mxu0 0.0
  %2925 = vmatpush1.msra.mxu0 0.0
  %2926 = vmatprep.subr.mxu0 0.0
  %2927 = vmatpush1.msra.mxu0 0.0
  %2928 = vmatprep.subr.mxu0 0.0
  %2929 = vmatpush1.msra.mxu0 0.0
  %2930 = vmatprep.subr.mxu0 0.0
  %2931 = vmatpush1.msra.mxu0 0.0
  %2932 = vmatprep.subr.mxu0 0.0
  %2933 = vmatpush1.msra.mxu0 0.0
  %2934 = vmatprep.subr.mxu0 0.0
  %2935 = vmatpush1.msra.mxu0 0.0
  %2936 = vmatprep.subr.mxu0 0.0
  %2937 = vmatpush1.msra.mxu0 %v2904
  %2938 = vmatprep.subr.mxu0 0.0
  %2939 = vmatpush1.msra.mxu0 %v2903
  %2940 = vmatprep.subr.mxu0 0.0
  %2941 = vmatpush1.msra.mxu0 %v2902
  %2942 = vmatprep.subr.mxu0 0.0
  %2943 = vmatpush1.msra.mxu0 %v2901
  %2944 = vmatprep.subr.mxu0 0.0
  %2945 = vmatpush2.msra.mxu0 0.0
  %2946 = vmatprep.subr.mxu0 0.0
  %2947 = vmatpush2.msra.mxu0 0.0
  %2948 = vmatprep.subr.mxu0 0.0
  %2949 = vmatpush2.msra.mxu0 0.0
  %2950 = vmatprep.subr.mxu0 0.0
  %2951 = vmatpush2.msra.mxu0 0.0
  %2952 = vmatprep.subr.mxu0 0.0
  %2953 = vmatpush2.msra.mxu0 0.0
  %2954 = vmatprep.subr.mxu0 0.0
  %2955 = vmatpush2.msra.mxu0 0.0
  %2956 = vmatprep.subr.mxu0 0.0
  %2957 = vmatpush2.msra.mxu0 0.0
  %2958 = vmatprep.subr.mxu0 0.0
  %2959 = vmatpush2.msra.mxu0 0.0
  %2960 = vmatprep.subr.mxu0 0.0
  %2961 = vmatpush2.msra.mxu0 0.0
  %2962 = vmatprep.subr.mxu0 0.0
  %2963 = vmatpush2.msra.mxu0 0.0
  %2964 = vmatprep.subr.mxu0 0.0
  %2965 = vmatpush2.msra.mxu0 0.0
  %2966 = vmatprep.subr.mxu0 0.0
  %2967 = vmatpush2.msra.mxu0 0.0
  %2968 = vmatprep.subr.mxu0 0.0
  %2969 = vmatpush2.msra.mxu0 0.0
  %2970 = vmatprep.subr.mxu0 0.0
  %2971 = vmatpush2.msra.mxu0 0.0
  %2972 = vmatprep.subr.mxu0 0.0
  %2973 = vmatpush2.msra.mxu0 0.0
  %2974 = vmatprep.subr.mxu0 0.0
  %2975 = vmatpush2.msra.mxu0 0.0
  %2976 = vmatprep.mubr.f32.mxu0 0.0
  %2977 = vmatmul.mubr.f32.gmra.mxu0 %v2276
  %v2978 = vpop.f32.mrf.mxu0
  %v2979 = vadd.f32 %v2910, %v2978
  %v2980 = vpop.f32.mrf.mxu0
  %2981 = vdwg.mxu0
  %v2982 = vadd.f32 %v2900, %v2979
  %v2983 = vxor.u32 %v2982, 2147483648
  %v2984 = vmul.f32 %v2983, 1.442695
  %v2985 = vpow.pop %v2984
  %v2986 = vadd.f32 %v2985, 1.0
  %v2987 = vrcp.pop %v2986
  %v2988 = vmul.f32 1.0, %v2987
  %2990 = vrot.lane.b32.xlu0 %v2979, 64
  %v2991 = vpop.permute.xlu0 %2990
  %v2993 = vmul.f32 %v2988, %v2991
  %2995 = vrot.lane.b32.xlu0 %v2993, 64
  %v2996 = vpop.permute.xlu0 %2995
  %v2998 = vadd.f32 %v2900, %v2996
  %v2999 = vtanh.pop %v2998
  %v3000 = vsub.f32 1.0, %v2988
  %3002 = vrot.lane.b32.xlu0 %v2999, 96
  %v3003 = vpop.permute.xlu0 %3002
  %v3005 = vmul.f32 %v3000, %v3003
  %v3006 = vmul.f32 %v2988, %v2190
  %v3007 = vadd.f32 %v3005, %v3006
  %v3008 = vld [vmem:[%s13] sm:$0xff]
  %v3009 = vld [vmem:[%s13 + $0x8] sm:$0xff]
  %v3010 = vld [vmem:[%s13 + $0x10] sm:$0xff]
  %v3011 = vld [vmem:[%s13 + $0x18] sm:$0xff]
  %v3012 = vld [vmem:[%s14] sm:$0xff]
  %v3013 = vld [vmem:[%s14 + $0x8] sm:$0xff]
  %v3014 = vld [vmem:[%s14 + $0x10] sm:$0xff]
  %v3015 = vld [vmem:[%s14 + $0x18] sm:$0xff]
  %v3016 = vld [vmem:[%s14 + $0x20] sm:$0xff]
  %v3017 = vld [vmem:[%s14 + $0x28] sm:$0xff]
  %v3018 = vld [vmem:[%s14 + $0x30] sm:$0xff]
  %v3019 = vld [vmem:[%s14 + $0x38] sm:$0xff]
  %3020 = vmatprep.subr.mxu0 0.0
  %3021 = vmatpush1.msra.mxu0 0.0
  %3022 = vmatprep.subr.mxu0 0.0
  %3023 = vmatpush1.msra.mxu0 0.0
  %3024 = vmatprep.subr.mxu0 0.0
  %3025 = vmatpush1.msra.mxu0 0.0
  %3026 = vmatprep.subr.mxu0 0.0
  %3027 = vmatpush1.msra.mxu0 0.0
  %3028 = vmatprep.subr.mxu0 0.0
  %3029 = vmatpush1.msra.mxu0 0.0
  %3030 = vmatprep.subr.mxu0 0.0
  %3031 = vmatpush1.msra.mxu0 0.0
  %3032 = vmatprep.subr.mxu0 0.0
  %3033 = vmatpush1.msra.mxu0 0.0
  %3034 = vmatprep.subr.mxu0 0.0
  %3035 = vmatpush1.msra.mxu0 0.0
  %3036 = vmatprep.subr.mxu0 0.0
  %3037 = vmatpush1.msra.mxu0 %v3019
  %3038 = vmatprep.subr.mxu0 0.0
  %3039 = vmatpush1.msra.mxu0 %v3018
  %3040 = vmatprep.subr.mxu0 0.0
  %3041 = vmatpush1.msra.mxu0 %v3017
  %3042 = vmatprep.subr.mxu0 0.0
  %3043 = vmatpush1.msra.mxu0 %v3016
  %3044 = vmatprep.subr.mxu0 0.0
  %3045 = vmatpush1.msra.mxu0 %v3015
  %3046 = vmatprep.subr.mxu0 0.0
  %3047 = vmatpush1.msra.mxu0 %v3014
  %3048 = vmatprep.subr.mxu0 0.0
  %3049 = vmatpush1.msra.mxu0 %v3013
  %3050 = vmatprep.subr.mxu0 0.0
  %3051 = vmatpush1.msra.mxu0 %v3012
  %3052 = vmatprep.subr.mxu0 0.0
  %3053 = vmatpush2.msra.mxu0 0.0
  %3054 = vmatprep.subr.mxu0 0.0
  %3055 = vmatpush2.msra.mxu0 0.0
  %3056 = vmatprep.subr.mxu0 0.0
  %3057 = vmatpush2.msra.mxu0 0.0
  %3058 = vmatprep.subr.mxu0 0.0
  %3059 = vmatpush2.msra.mxu0 0.0
  %3060 = vmatprep.subr.mxu0 0.0
  %3061 = vmatpush2.msra.mxu0 0.0
  %3062 = vmatprep.subr.mxu0 0.0
  %3063 = vmatpush2.msra.mxu0 0.0
  %3064 = vmatprep.subr.mxu0 0.0
  %3065 = vmatpush2.msra.mxu0 0.0
  %3066 = vmatprep.subr.mxu0 0.0
  %3067 = vmatpush2.msra.mxu0 0.0
  %3068 = vmatprep.subr.mxu0 0.0
  %3069 = vmatpush2.msra.mxu0 0.0
  %3070 = vmatprep.subr.mxu0 0.0
  %3071 = vmatpush2.msra.mxu0 0.0
  %3072 = vmatprep.subr.mxu0 0.0
  %3073 = vmatpush2.msra.mxu0 0.0
  %3074 = vmatprep.subr.mxu0 0.0
  %3075 = vmatpush2.msra.mxu0 0.0
  %3076 = vmatprep.subr.mxu0 0.0
  %3077 = vmatpush2.msra.mxu0 0.0
  %3078 = vmatprep.subr.mxu0 0.0
  %3079 = vmatpush2.msra.mxu0 0.0
  %3080 = vmatprep.subr.mxu0 0.0
  %3081 = vmatpush2.msra.mxu0 0.0
  %3082 = vmatprep.subr.mxu0 0.0
  %3083 = vmatpush2.msra.mxu0 0.0
  %3084 = vmatprep.mubr.f32.mxu0 0.0
  %3085 = vmatmul.mubr.f32.gmra.mxu0 %v2748
  %v3086 = vpop.f32.mrf.mxu0
  %v3087 = vadd.f32 0.0, %v3086
  %v3088 = vpop.f32.mrf.mxu0
  %3089 = vdwg.mxu0
  %3091 = vrot.lane.b32.xlu0 %v3007, 96
  %v3092 = vpop.permute.xlu0 %3091
  %v3093 = vsel %vm146, %v3092, 0
  %3095 = vmatprep.subr.mxu0 0.0
  %3096 = vmatpush1.msra.mxu0 0.0
  %3097 = vmatprep.subr.mxu0 0.0
  %3098 = vmatpush1.msra.mxu0 0.0
  %3099 = vmatprep.subr.mxu0 0.0
  %3100 = vmatpush1.msra.mxu0 0.0
  %3101 = vmatprep.subr.mxu0 0.0
  %3102 = vmatpush1.msra.mxu0 0.0
  %3103 = vmatprep.subr.mxu0 0.0
  %3104 = vmatpush1.msra.mxu0 0.0
  %3105 = vmatprep.subr.mxu0 0.0
  %3106 = vmatpush1.msra.mxu0 0.0
  %3107 = vmatprep.subr.mxu0 0.0
  %3108 = vmatpush1.msra.mxu0 0.0
  %3109 = vmatprep.subr.mxu0 0.0
  %3110 = vmatpush1.msra.mxu0 0.0
  %3111 = vmatprep.subr.mxu0 0.0
  %3112 = vmatpush1.msra.mxu0 0.0
  %3113 = vmatprep.subr.mxu0 0.0
  %3114 = vmatpush1.msra.mxu0 0.0
  %3115 = vmatprep.subr.mxu0 0.0
  %3116 = vmatpush1.msra.mxu0 0.0
  %3117 = vmatprep.subr.mxu0 0.0
  %3118 = vmatpush1.msra.mxu0 0.0
  %3119 = vmatprep.subr.mxu0 0.0
  %3120 = vmatpush1.msra.mxu0 %v3011
  %3121 = vmatprep.subr.mxu0 0.0
  %3122 = vmatpush1.msra.mxu0 %v3010
  %3123 = vmatprep.subr.mxu0 0.0
  %3124 = vmatpush1.msra.mxu0 %v3009
  %3125 = vmatprep.subr.mxu0 0.0
  %3126 = vmatpush1.msra.mxu0 %v3008
  %3127 = vmatprep.subr.mxu0 0.0
  %3128 = vmatpush2.msra.mxu0 0.0
  %3129 = vmatprep.subr.mxu0 0.0
  %3130 = vmatpush2.msra.mxu0 0.0
  %3131 = vmatprep.subr.mxu0 0.0
  %3132 = vmatpush2.msra.mxu0 0.0
  %3133 = vmatprep.subr.mxu0 0.0
  %3134 = vmatpush2.msra.mxu0 0.0
  %3135 = vmatprep.subr.mxu0 0.0
  %3136 = vmatpush2.msra.mxu0 0.0
  %3137 = vmatprep.subr.mxu0 0.0
  %3138 = vmatpush2.msra.mxu0 0.0
  %3139 = vmatprep.subr.mxu0 0.0
  %3140 = vmatpush2.msra.mxu0 0.0
  %3141 = vmatprep.subr.mxu0 0.0
  %3142 = vmatpush2.msra.mxu0 0.0
  %3143 = vmatprep.subr.mxu0 0.0
  %3144 = vmatpush2.msra.mxu0 0.0
  %3145 = vmatprep.subr.mxu0 0.0
  %3146 = vmatpush2.msra.mxu0 0.0
  %3147 = vmatprep.subr.mxu0 0.0
  %3148 = vmatpush2.msra.mxu0 0.0
  %3149 = vmatprep.subr.mxu0 0.0
  %3150 = vmatpush2.msra.mxu0 0.0
  %3151 = vmatprep.subr.mxu0 0.0
  %3152 = vmatpush2.msra.mxu0 0.0
  %3153 = vmatprep.subr.mxu0 0.0
  %3154 = vmatpush2.msra.mxu0 0.0
  %3155 = vmatprep.subr.mxu0 0.0
  %3156 = vmatpush2.msra.mxu0 0.0
  %3157 = vmatprep.subr.mxu0 0.0
  %3158 = vmatpush2.msra.mxu0 0.0
  %3159 = vmatprep.mubr.f32.mxu0 0.0
  %3160 = vmatmul.mubr.f32.gmra.mxu0 %v3093
  %v3161 = vpop.f32.mrf.mxu0
  %v3162 = vadd.f32 %v3087, %v3161
  %v3163 = vpop.f32.mrf.mxu0
  %3164 = vdwg.mxu0
  %v3165 = vld [vmem:[%s15] sm:$0xff]
  %v3166 = vld [vmem:[%s15 + $0x8] sm:$0xff]
  %v3167 = vld [vmem:[%s15 + $0x10] sm:$0xff]
  %v3168 = vld [vmem:[%s15 + $0x18] sm:$0xff]
  %3169 = vmatprep.subr.mxu0 0.0
  %3170 = vmatpush1.msra.mxu0 0.0
  %3171 = vmatprep.subr.mxu0 0.0
  %3172 = vmatpush1.msra.mxu0 0.0
  %3173 = vmatprep.subr.mxu0 0.0
  %3174 = vmatpush1.msra.mxu0 0.0
  %3175 = vmatprep.subr.mxu0 0.0
  %3176 = vmatpush1.msra.mxu0 0.0
  %3177 = vmatprep.subr.mxu0 0.0
  %3178 = vmatpush1.msra.mxu0 0.0
  %3179 = vmatprep.subr.mxu0 0.0
  %3180 = vmatpush1.msra.mxu0 0.0
  %3181 = vmatprep.subr.mxu0 0.0
  %3182 = vmatpush1.msra.mxu0 0.0
  %3183 = vmatprep.subr.mxu0 0.0
  %3184 = vmatpush1.msra.mxu0 0.0
  %3185 = vmatprep.subr.mxu0 0.0
  %3186 = vmatpush1.msra.mxu0 0.0
  %3187 = vmatprep.subr.mxu0 0.0
  %3188 = vmatpush1.msra.mxu0 0.0
  %3189 = vmatprep.subr.mxu0 0.0
  %3190 = vmatpush1.msra.mxu0 0.0
  %3191 = vmatprep.subr.mxu0 0.0
  %3192 = vmatpush1.msra.mxu0 0.0
  %3193 = vmatprep.subr.mxu0 0.0
  %3194 = vmatpush1.msra.mxu0 %v3168
  %3195 = vmatprep.subr.mxu0 0.0
  %3196 = vmatpush1.msra.mxu0 %v3167
  %3197 = vmatprep.subr.mxu0 0.0
  %3198 = vmatpush1.msra.mxu0 %v3166
  %3199 = vmatprep.subr.mxu0 0.0
  %3200 = vmatpush1.msra.mxu0 %v3165
  %3201 = vmatprep.subr.mxu0 0.0
  %3202 = vmatpush2.msra.mxu0 0.0
  %3203 = vmatprep.subr.mxu0 0.0
  %3204 = vmatpush2.msra.mxu0 0.0
  %3205 = vmatprep.subr.mxu0 0.0
  %3206 = vmatpush2.msra.mxu0 0.0
  %3207 = vmatprep.subr.mxu0 0.0
  %3208 = vmatpush2.msra.mxu0 0.0
  %3209 = vmatprep.subr.mxu0 0.0
  %3210 = vmatpush2.msra.mxu0 0.0
  %3211 = vmatprep.subr.mxu0 0.0
  %3212 = vmatpush2.msra.mxu0 0.0
  %3213 = vmatprep.subr.mxu0 0.0
  %3214 = vmatpush2.msra.mxu0 0.0
  %3215 = vmatprep.subr.mxu0 0.0
  %3216 = vmatpush2.msra.mxu0 0.0
  %3217 = vmatprep.subr.mxu0 0.0
  %3218 = vmatpush2.msra.mxu0 0.0
  %3219 = vmatprep.subr.mxu0 0.0
  %3220 = vmatpush2.msra.mxu0 0.0
  %3221 = vmatprep.subr.mxu0 0.0
  %3222 = vmatpush2.msra.mxu0 0.0
  %3223 = vmatprep.subr.mxu0 0.0
  %3224 = vmatpush2.msra.mxu0 0.0
  %3225 = vmatprep.subr.mxu0 0.0
  %3226 = vmatpush2.msra.mxu0 0.0
  %3227 = vmatprep.subr.mxu0 0.0
  %3228 = vmatpush2.msra.mxu0 0.0
  %3229 = vmatprep.subr.mxu0 0.0
  %3230 = vmatpush2.msra.mxu0 0.0
  %3231 = vmatprep.subr.mxu0 0.0
  %3232 = vmatpush2.msra.mxu0 0.0
  %3233 = vmatprep.mubr.f32.mxu0 0.0
  %3234 = vmatmul.mubr.f32.gmra.mxu0 %v2821
  %v3235 = vpop.f32.mrf.mxu0
  %v3236 = vadd.f32 0.0, %v3235
  %v3237 = vpop.f32.mrf.mxu0
  %3238 = vdwg.mxu0
  %v3239 = vadd.f32 %v3162, %v3236
  %v3240 = vld [vmem:[%s16] sm:$0x1]
  %v3242 = vlaneseq
  %v3243 = vshrl.u32 %v3242, 7
  %v3244 = vsub.s32 0, %v3243
  %v3245 = vrot.slane %v3240, %v3244
  %v3247 = vadd.f32 %v3239, %v3245
  %s3248 = scalar_lea.vmem %s17, 24
  %3249 = vst.msk [vmem:[%s3248] sm:$0xff] %vm792, %v3247
  %v3250 = vsel %vm792, %v3247, -inf
  %3251 = vmax.xlane.f32.xlu0 %v3250
  %v3252 = vpop.xlane.xlu0 %3251
  %vm3253 = vcmp.eq.f32.partialorder %v3247, %v3252
  %v3254 = vsel %vm3253, %v796, 16.0
  %v3255 = vsel %vm792, %v3254, inf
  %3256 = vmin.xlane.f32.xlu0 %v3255
  %v3257 = vpop.xlane.xlu0 %3256
  %v3258 = vcvt.f32.s32.to.zero.pseudo %v3257
  %vm3259 = vcmp.eq.s32.totalorder %v795, %v3258
  %v3260 = vsel %vm3259, 1, 0
  %v3261 = vcvt.s32.f32 %v3260
  %v3262 = vld [vmem:[%s3] sm:$0xff]
  %v3263 = vld [vmem:[%s3 + $0x8] sm:$0xff]
  %v3265 = vsel %vm792, %v3261, 0
  %3267 = vmatprep.subr.mxu0 0.0
  %3268 = vmatpush1.msra.mxu0 0.0
  %3269 = vmatprep.subr.mxu0 0.0
  %3270 = vmatpush1.msra.mxu0 0.0
  %3271 = vmatprep.subr.mxu0 0.0
  %3272 = vmatpush1.msra.mxu0 0.0
  %3273 = vmatprep.subr.mxu0 0.0
  %3274 = vmatpush1.msra.mxu0 0.0
  %3275 = vmatprep.subr.mxu0 0.0
  %3276 = vmatpush1.msra.mxu0 0.0
  %3277 = vmatprep.subr.mxu0 0.0
  %3278 = vmatpush1.msra.mxu0 0.0
  %3279 = vmatprep.subr.mxu0 0.0
  %3280 = vmatpush1.msra.mxu0 0.0
  %3281 = vmatprep.subr.mxu0 0.0
  %3282 = vmatpush1.msra.mxu0 0.0
  %3283 = vmatprep.subr.mxu0 0.0
  %3284 = vmatpush1.msra.mxu0 0.0
  %3285 = vmatprep.subr.mxu0 0.0
  %3286 = vmatpush1.msra.mxu0 0.0
  %3287 = vmatprep.subr.mxu0 0.0
  %3288 = vmatpush1.msra.mxu0 0.0
  %3289 = vmatprep.subr.mxu0 0.0
  %3290 = vmatpush1.msra.mxu0 0.0
  %3291 = vmatprep.subr.mxu0 0.0
  %3292 = vmatpush1.msra.mxu0 0.0
  %3293 = vmatprep.subr.mxu0 0.0
  %3294 = vmatpush1.msra.mxu0 0.0
  %3295 = vmatprep.subr.mxu0 0.0
  %3296 = vmatpush1.msra.mxu0 %v3263
  %3297 = vmatprep.subr.mxu0 0.0
  %3298 = vmatpush1.msra.mxu0 %v3262
  %3299 = vmatprep.subr.mxu0 0.0
  %3300 = vmatpush2.msra.mxu0 0.0
  %3301 = vmatprep.subr.mxu0 0.0
  %3302 = vmatpush2.msra.mxu0 0.0
  %3303 = vmatprep.subr.mxu0 0.0
  %3304 = vmatpush2.msra.mxu0 0.0
  %3305 = vmatprep.subr.mxu0 0.0
  %3306 = vmatpush2.msra.mxu0 0.0
  %3307 = vmatprep.subr.mxu0 0.0
  %3308 = vmatpush2.msra.mxu0 0.0
  %3309 = vmatprep.subr.mxu0 0.0
  %3310 = vmatpush2.msra.mxu0 0.0
  %3311 = vmatprep.subr.mxu0 0.0
  %3312 = vmatpush2.msra.mxu0 0.0
  %3313 = vmatprep.subr.mxu0 0.0
  %3314 = vmatpush2.msra.mxu0 0.0
  %3315 = vmatprep.subr.mxu0 0.0
  %3316 = vmatpush2.msra.mxu0 0.0
  %3317 = vmatprep.subr.mxu0 0.0
  %3318 = vmatpush2.msra.mxu0 0.0
  %3319 = vmatprep.subr.mxu0 0.0
  %3320 = vmatpush2.msra.mxu0 0.0
  %3321 = vmatprep.subr.mxu0 0.0
  %3322 = vmatpush2.msra.mxu0 0.0
  %3323 = vmatprep.subr.mxu0 0.0
  %3324 = vmatpush2.msra.mxu0 0.0
  %3325 = vmatprep.subr.mxu0 0.0
  %3326 = vmatpush2.msra.mxu0 0.0
  %3327 = vmatprep.subr.mxu0 0.0
  %3328 = vmatpush2.msra.mxu0 0.0
  %3329 = vmatprep.subr.mxu0 0.0
  %3330 = vmatpush2.msra.mxu0 0.0
  %3331 = vmatprep.mubr.f32.mxu0 0.0
  %3332 = vmatmul.mubr.f32.gmra.mxu0 %v3265
  %v3333 = vpop.f32.mrf.mxu0
  %v3334 = vadd.f32 0.0, %v3333
  %v3335 = vpop.f32.mrf.mxu0
  %3336 = vdwg.mxu0
  %v3337 = vld [vmem:[%s4] sm:$0xff]
  %v3338 = vld [vmem:[%s4 + $0x8] sm:$0xff]
  %v3339 = vld [vmem:[%s4 + $0x10] sm:$0xff]
  %v3340 = vld [vmem:[%s4 + $0x18] sm:$0xff]
  %3341 = vmatprep.subr.mxu0 0.0
  %3342 = vmatpush1.msra.mxu0 0.0
  %3343 = vmatprep.subr.mxu0 0.0
  %3344 = vmatpush1.msra.mxu0 0.0
  %3345 = vmatprep.subr.mxu0 0.0
  %3346 = vmatpush1.msra.mxu0 0.0
  %3347 = vmatprep.subr.mxu0 0.0
  %3348 = vmatpush1.msra.mxu0 0.0
  %3349 = vmatprep.subr.mxu0 0.0
  %3350 = vmatpush1.msra.mxu0 0.0
  %3351 = vmatprep.subr.mxu0 0.0
  %3352 = vmatpush1.msra.mxu0 0.0
  %3353 = vmatprep.subr.mxu0 0.0
  %3354 = vmatpush1.msra.mxu0 0.0
  %3355 = vmatprep.subr.mxu0 0.0
  %3356 = vmatpush1.msra.mxu0 0.0
  %3357 = vmatprep.subr.mxu0 0.0
  %3358 = vmatpush1.msra.mxu0 0.0
  %3359 = vmatprep.subr.mxu0 0.0
  %3360 = vmatpush1.msra.mxu0 0.0
  %3361 = vmatprep.subr.mxu0 0.0
  %3362 = vmatpush1.msra.mxu0 0.0
  %3363 = vmatprep.subr.mxu0 0.0
  %3364 = vmatpush1.msra.mxu0 0.0
  %3365 = vmatprep.subr.mxu0 0.0
  %3366 = vmatpush1.msra.mxu0 %v3340
  %3367 = vmatprep.subr.mxu0 0.0
  %3368 = vmatpush1.msra.mxu0 %v3339
  %3369 = vmatprep.subr.mxu0 0.0
  %3370 = vmatpush1.msra.mxu0 %v3338
  %3371 = vmatprep.subr.mxu0 0.0
  %3372 = vmatpush1.msra.mxu0 %v3337
  %3373 = vmatprep.subr.mxu0 0.0
  %3374 = vmatpush2.msra.mxu0 0.0
  %3375 = vmatprep.subr.mxu0 0.0
  %3376 = vmatpush2.msra.mxu0 0.0
  %3377 = vmatprep.subr.mxu0 0.0
  %3378 = vmatpush2.msra.mxu0 0.0
  %3379 = vmatprep.subr.mxu0 0.0
  %3380 = vmatpush2.msra.mxu0 0.0
  %3381 = vmatprep.subr.mxu0 0.0
  %3382 = vmatpush2.msra.mxu0 0.0
  %3383 = vmatprep.subr.mxu0 0.0
  %3384 = vmatpush2.msra.mxu0 0.0
  %3385 = vmatprep.subr.mxu0 0.0
  %3386 = vmatpush2.msra.mxu0 0.0
  %3387 = vmatprep.subr.mxu0 0.0
  %3388 = vmatpush2.msra.mxu0 0.0
  %3389 = vmatprep.subr.mxu0 0.0
  %3390 = vmatpush2.msra.mxu0 0.0
  %3391 = vmatprep.subr.mxu0 0.0
  %3392 = vmatpush2.msra.mxu0 0.0
  %3393 = vmatprep.subr.mxu0 0.0
  %3394 = vmatpush2.msra.mxu0 0.0
  %3395 = vmatprep.subr.mxu0 0.0
  %3396 = vmatpush2.msra.mxu0 0.0
  %3397 = vmatprep.subr.mxu0 0.0
  %3398 = vmatpush2.msra.mxu0 0.0
  %3399 = vmatprep.subr.mxu0 0.0
  %3400 = vmatpush2.msra.mxu0 0.0
  %3401 = vmatprep.subr.mxu0 0.0
  %3402 = vmatpush2.msra.mxu0 0.0
  %3403 = vmatprep.subr.mxu0 0.0
  %3404 = vmatpush2.msra.mxu0 0.0
  %3405 = vmatprep.mubr.f32.mxu0 0.0
  %3406 = vmatmul.mubr.f32.gmra.mxu0 %v3093
  %v3407 = vpop.f32.mrf.mxu0
  %v3408 = vadd.f32 0.0, %v3407
  %v3409 = vpop.f32.mrf.mxu0
  %3410 = vdwg.mxu0
  %v3411 = vld [vmem:[#allocation2] sm:$0xff]
  %v3412 = vld [vmem:[#allocation2 + $0x8] sm:$0xff]
  %v3413 = vld [vmem:[#allocation2 + $0x10] sm:$0xff]
  %v3414 = vld [vmem:[#allocation2 + $0x18] sm:$0xff]
  %v3415 = vld [vmem:[#allocation2 + $0x20] sm:$0xff]
  %v3416 = vld [vmem:[#allocation2 + $0x28] sm:$0xff]
  %v3417 = vld [vmem:[#allocation2 + $0x30] sm:$0xff]
  %v3418 = vld [vmem:[#allocation2 + $0x38] sm:$0xff]
  %v3419 = vadd.f32 %v3411, %v3408
  %v3420 = vadd.f32 %v3412, %v3408
  %v3421 = vadd.f32 %v3413, %v3408
  %v3422 = vadd.f32 %v3414, %v3408
  %v3423 = vadd.f32 %v3415, %v3408
  %v3424 = vadd.f32 %v3416, %v3408
  %v3425 = vadd.f32 %v3417, %v3408
  %v3426 = vadd.f32 %v3418, %v3408
  %v3427 = vtanh.pop %v3419
  %v3428 = vtanh.pop %v3420
  %v3429 = vtanh.pop %v3421
  %v3430 = vtanh.pop %v3422
  %v3431 = vtanh.pop %v3423
  %v3432 = vtanh.pop %v3424
  %v3433 = vtanh.pop %v3425
  %v3434 = vtanh.pop %v3426
  %v3435 = vld [vmem:[%s7] sm:$0x1]
  %v3437 = vlaneseq
  %v3438 = vshrl.u32 %v3437, 7
  %v3439 = vsub.s32 0, %v3438
  %v3440 = vrot.slane %v3435, %v3439
  %v3442 = vmul.f32 %v3427, %v3440
  %v3443 = vmul.f32 %v3428, %v3440
  %v3444 = vmul.f32 %v3429, %v3440
  %v3445 = vmul.f32 %v3430, %v3440
  %v3446 = vmul.f32 %v3431, %v3440
  %v3447 = vmul.f32 %v3432, %v3440
  %v3448 = vmul.f32 %v3433, %v3440
  %v3449 = vmul.f32 %v3434, %v3440
  %v3450 = vsel %vm146, %v3442, 0.0
  %3451 = vadd.xlane.f32.xlu0 %v3450
  %v3452 = vpop.xlane.xlu0 %3451
  %v3453 = vsel %vm146, %v3443, 0.0
  %3454 = vadd.xlane.f32.xlu0 %v3453
  %v3455 = vpop.xlane.xlu0 %3454
  %v3456 = vsel %vm146, %v3444, 0.0
  %3457 = vadd.xlane.f32.xlu0 %v3456
  %v3458 = vpop.xlane.xlu0 %3457
  %v3459 = vsel %vm146, %v3445, 0.0
  %3460 = vadd.xlane.f32.xlu0 %v3459
  %v3461 = vpop.xlane.xlu0 %3460
  %v3462 = vsel %vm146, %v3446, 0.0
  %3463 = vadd.xlane.f32.xlu0 %v3462
  %v3464 = vpop.xlane.xlu0 %3463
  %v3465 = vsel %vm146, %v3447, 0.0
  %3466 = vadd.xlane.f32.xlu0 %v3465
  %v3467 = vpop.xlane.xlu0 %3466
  %v3468 = vsel %vm146, %v3448, 0.0
  %3469 = vadd.xlane.f32.xlu0 %v3468
  %v3470 = vpop.xlane.xlu0 %3469
  %v3471 = vsel %vm146, %v3449, 0.0
  %3472 = vadd.xlane.f32.xlu0 %v3471
  %v3473 = vpop.xlane.xlu0 %3472
  %v3474 = vmax.f32 %v3452, %v3464
  %v3475 = vmax.f32 %v3455, %v3467
  %v3476 = vmax.f32 %v3458, %v3470
  %v3477 = vmax.f32 %v3461, %v3473
  %v3478 = vmax.f32 %v3474, %v3475
  %v3479 = vmax.f32 %v3476, %v3477
  %v3480 = vmax.f32 %v3478, %v3479
  %v3481 = vsub.f32 %v3452, %v3480
  %v3482 = vsub.f32 %v3455, %v3480
  %v3483 = vsub.f32 %v3458, %v3480
  %v3484 = vsub.f32 %v3461, %v3480
  %v3485 = vsub.f32 %v3464, %v3480
  %v3486 = vsub.f32 %v3467, %v3480
  %v3487 = vsub.f32 %v3470, %v3480
  %v3488 = vsub.f32 %v3473, %v3480
  %v3489 = vmul.f32 %v3481, 1.442695
  %v3490 = vpow.pop %v3489
  %v3491 = vmul.f32 %v3482, 1.442695
  %v3492 = vpow.pop %v3491
  %v3493 = vmul.f32 %v3483, 1.442695
  %v3494 = vpow.pop %v3493
  %v3495 = vmul.f32 %v3484, 1.442695
  %v3496 = vpow.pop %v3495
  %v3497 = vmul.f32 %v3485, 1.442695
  %v3498 = vpow.pop %v3497
  %v3499 = vmul.f32 %v3486, 1.442695
  %v3500 = vpow.pop %v3499
  %v3501 = vmul.f32 %v3487, 1.442695
  %v3502 = vpow.pop %v3501
  %v3503 = vmul.f32 %v3488, 1.442695
  %v3504 = vpow.pop %v3503
  %v3505 = vadd.f32 %v3490, %v3492
  %v3506 = vadd.f32 %v3505, %v3494
  %v3507 = vadd.f32 %v3506, %v3496
  %v3508 = vadd.f32 %v3507, %v3498
  %v3509 = vadd.f32 %v3508, %v3500
  %v3510 = vadd.f32 %v3509, %v3502
  %v3511 = vadd.f32 %v3510, %v3504
  %v3512 = vrcp.pop %v3511
  %v3513 = vmul.f32 %v3490, %v3512
  %v3514 = vmul.f32 %v3492, %v3512
  %v3515 = vmul.f32 %v3494, %v3512
  %v3516 = vmul.f32 %v3496, %v3512
  %v3517 = vmul.f32 %v3498, %v3512
  %v3518 = vmul.f32 %v3500, %v3512
  %v3519 = vmul.f32 %v3502, %v3512
  %v3520 = vmul.f32 %v3504, %v3512
  %v3521 = vld [vmem:[%s2] sm:$0xff]
  %v3522 = vld [vmem:[%s2 + $0x8] sm:$0xff]
  %v3523 = vld [vmem:[%s2 + $0x10] sm:$0xff]
  %v3524 = vld [vmem:[%s2 + $0x18] sm:$0xff]
  %v3525 = vld [vmem:[%s2 + $0x20] sm:$0xff]
  %v3526 = vld [vmem:[%s2 + $0x28] sm:$0xff]
  %v3527 = vld [vmem:[%s2 + $0x30] sm:$0xff]
  %v3528 = vld [vmem:[%s2 + $0x38] sm:$0xff]
  %v3529 = vmul.f32 %v3513, %v3521
  %v3530 = vmul.f32 %v3514, %v3522
  %v3531 = vmul.f32 %v3515, %v3523
  %v3532 = vmul.f32 %v3516, %v3524
  %v3533 = vmul.f32 %v3517, %v3525
  %v3534 = vmul.f32 %v3518, %v3526
  %v3535 = vmul.f32 %v3519, %v3527
  %v3536 = vmul.f32 %v3520, %v3528
  %v3537 = vsel %vm72, %v3529, 0.0
  %v3538 = vsel %vm72, %v3530, 0.0
  %v3539 = vadd.f32 %v3537, %v3538
  %v3540 = vsel %vm72, %v3531, 0.0
  %v3541 = vadd.f32 %v3539, %v3540
  %v3542 = vsel %vm72, %v3532, 0.0
  %v3543 = vadd.f32 %v3541, %v3542
  %v3544 = vsel %vm72, %v3533, 0.0
  %v3545 = vadd.f32 %v3543, %v3544
  %v3546 = vsel %vm72, %v3534, 0.0
  %v3547 = vadd.f32 %v3545, %v3546
  %v3548 = vsel %vm72, %v3535, 0.0
  %v3549 = vadd.f32 %v3547, %v3548
  %v3550 = vsel %vm72, %v3536, 0.0
  %v3551 = vadd.f32 %v3549, %v3550
  %v3552 = vld [vmem:[%s8] sm:$0xff]
  %v3553 = vld [vmem:[%s8 + $0x8] sm:$0xff]
  %v3554 = vld [vmem:[%s8 + $0x10] sm:$0xff]
  %v3555 = vld [vmem:[%s8 + $0x18] sm:$0xff]
  %v3556 = vld [vmem:[%s9] sm:$0xff]
  %v3557 = vld [vmem:[%s9 + $0x8] sm:$0xff]
  %v3558 = vld [vmem:[%s9 + $0x10] sm:$0xff]
  %v3559 = vld [vmem:[%s9 + $0x18] sm:$0xff]
  %v3560 = vld [vmem:[%s9 + $0x20] sm:$0xff]
  %v3561 = vld [vmem:[%s9 + $0x28] sm:$0xff]
  %v3562 = vld [vmem:[%s9 + $0x30] sm:$0xff]
  %v3563 = vld [vmem:[%s9 + $0x38] sm:$0xff]
  %v3565 = vsel %vm72, %v3551, 0
  %3567 = vmatprep.subr.mxu0 0.0
  %3568 = vmatpush1.msra.mxu0 0.0
  %3569 = vmatprep.subr.mxu0 0.0
  %3570 = vmatpush1.msra.mxu0 0.0
  %3571 = vmatprep.subr.mxu0 0.0
  %3572 = vmatpush1.msra.mxu0 0.0
  %3573 = vmatprep.subr.mxu0 0.0
  %3574 = vmatpush1.msra.mxu0 0.0
  %3575 = vmatprep.subr.mxu0 0.0
  %3576 = vmatpush1.msra.mxu0 0.0
  %3577 = vmatprep.subr.mxu0 0.0
  %3578 = vmatpush1.msra.mxu0 0.0
  %3579 = vmatprep.subr.mxu0 0.0
  %3580 = vmatpush1.msra.mxu0 0.0
  %3581 = vmatprep.subr.mxu0 0.0
  %3582 = vmatpush1.msra.mxu0 0.0
  %3583 = vmatprep.subr.mxu0 0.0
  %3584 = vmatpush1.msra.mxu0 %v3563
  %3585 = vmatprep.subr.mxu0 0.0
  %3586 = vmatpush1.msra.mxu0 %v3562
  %3587 = vmatprep.subr.mxu0 0.0
  %3588 = vmatpush1.msra.mxu0 %v3561
  %3589 = vmatprep.subr.mxu0 0.0
  %3590 = vmatpush1.msra.mxu0 %v3560
  %3591 = vmatprep.subr.mxu0 0.0
  %3592 = vmatpush1.msra.mxu0 %v3559
  %3593 = vmatprep.subr.mxu0 0.0
  %3594 = vmatpush1.msra.mxu0 %v3558
  %3595 = vmatprep.subr.mxu0 0.0
  %3596 = vmatpush1.msra.mxu0 %v3557
  %3597 = vmatprep.subr.mxu0 0.0
  %3598 = vmatpush1.msra.mxu0 %v3556
  %3599 = vmatprep.subr.mxu0 0.0
  %3600 = vmatpush2.msra.mxu0 0.0
  %3601 = vmatprep.subr.mxu0 0.0
  %3602 = vmatpush2.msra.mxu0 0.0
  %3603 = vmatprep.subr.mxu0 0.0
  %3604 = vmatpush2.msra.mxu0 0.0
  %3605 = vmatprep.subr.mxu0 0.0
  %3606 = vmatpush2.msra.mxu0 0.0
  %3607 = vmatprep.subr.mxu0 0.0
  %3608 = vmatpush2.msra.mxu0 0.0
  %3609 = vmatprep.subr.mxu0 0.0
  %3610 = vmatpush2.msra.mxu0 0.0
  %3611 = vmatprep.subr.mxu0 0.0
  %3612 = vmatpush2.msra.mxu0 0.0
  %3613 = vmatprep.subr.mxu0 0.0
  %3614 = vmatpush2.msra.mxu0 0.0
  %3615 = vmatprep.subr.mxu0 0.0
  %3616 = vmatpush2.msra.mxu0 0.0
  %3617 = vmatprep.subr.mxu0 0.0
  %3618 = vmatpush2.msra.mxu0 0.0
  %3619 = vmatprep.subr.mxu0 0.0
  %3620 = vmatpush2.msra.mxu0 0.0
  %3621 = vmatprep.subr.mxu0 0.0
  %3622 = vmatpush2.msra.mxu0 0.0
  %3623 = vmatprep.subr.mxu0 0.0
  %3624 = vmatpush2.msra.mxu0 0.0
  %3625 = vmatprep.subr.mxu0 0.0
  %3626 = vmatpush2.msra.mxu0 0.0
  %3627 = vmatprep.subr.mxu0 0.0
  %3628 = vmatpush2.msra.mxu0 0.0
  %3629 = vmatprep.subr.mxu0 0.0
  %3630 = vmatpush2.msra.mxu0 0.0
  %3631 = vmatprep.mubr.f32.mxu0 0.0
  %3632 = vmatmul.mubr.f32.gmra.mxu0 %v3565
  %v3633 = vpop.f32.mrf.mxu0
  %v3634 = vadd.f32 0.0, %v3633
  %v3635 = vpop.f32.mrf.mxu0
  %3636 = vdwg.mxu0
  %v3638 = vsel %vm146, %v3334, 0
  %3640 = vmatprep.subr.mxu0 0.0
  %3641 = vmatpush1.msra.mxu0 0.0
  %3642 = vmatprep.subr.mxu0 0.0
  %3643 = vmatpush1.msra.mxu0 0.0
  %3644 = vmatprep.subr.mxu0 0.0
  %3645 = vmatpush1.msra.mxu0 0.0
  %3646 = vmatprep.subr.mxu0 0.0
  %3647 = vmatpush1.msra.mxu0 0.0
  %3648 = vmatprep.subr.mxu0 0.0
  %3649 = vmatpush1.msra.mxu0 0.0
  %3650 = vmatprep.subr.mxu0 0.0
  %3651 = vmatpush1.msra.mxu0 0.0
  %3652 = vmatprep.subr.mxu0 0.0
  %3653 = vmatpush1.msra.mxu0 0.0
  %3654 = vmatprep.subr.mxu0 0.0
  %3655 = vmatpush1.msra.mxu0 0.0
  %3656 = vmatprep.subr.mxu0 0.0
  %3657 = vmatpush1.msra.mxu0 0.0
  %3658 = vmatprep.subr.mxu0 0.0
  %3659 = vmatpush1.msra.mxu0 0.0
  %3660 = vmatprep.subr.mxu0 0.0
  %3661 = vmatpush1.msra.mxu0 0.0
  %3662 = vmatprep.subr.mxu0 0.0
  %3663 = vmatpush1.msra.mxu0 0.0
  %3664 = vmatprep.subr.mxu0 0.0
  %3665 = vmatpush1.msra.mxu0 %v3555
  %3666 = vmatprep.subr.mxu0 0.0
  %3667 = vmatpush1.msra.mxu0 %v3554
  %3668 = vmatprep.subr.mxu0 0.0
  %3669 = vmatpush1.msra.mxu0 %v3553
  %3670 = vmatprep.subr.mxu0 0.0
  %3671 = vmatpush1.msra.mxu0 %v3552
  %3672 = vmatprep.subr.mxu0 0.0
  %3673 = vmatpush2.msra.mxu0 0.0
  %3674 = vmatprep.subr.mxu0 0.0
  %3675 = vmatpush2.msra.mxu0 0.0
  %3676 = vmatprep.subr.mxu0 0.0
  %3677 = vmatpush2.msra.mxu0 0.0
  %3678 = vmatprep.subr.mxu0 0.0
  %3679 = vmatpush2.msra.mxu0 0.0
  %3680 = vmatprep.subr.mxu0 0.0
  %3681 = vmatpush2.msra.mxu0 0.0
  %3682 = vmatprep.subr.mxu0 0.0
  %3683 = vmatpush2.msra.mxu0 0.0
  %3684 = vmatprep.subr.mxu0 0.0
  %3685 = vmatpush2.msra.mxu0 0.0
  %3686 = vmatprep.subr.mxu0 0.0
  %3687 = vmatpush2.msra.mxu0 0.0
  %3688 = vmatprep.subr.mxu0 0.0
  %3689 = vmatpush2.msra.mxu0 0.0
  %3690 = vmatprep.subr.mxu0 0.0
  %3691 = vmatpush2.msra.mxu0 0.0
  %3692 = vmatprep.subr.mxu0 0.0
  %3693 = vmatpush2.msra.mxu0 0.0
  %3694 = vmatprep.subr.mxu0 0.0
  %3695 = vmatpush2.msra.mxu0 0.0
  %3696 = vmatprep.subr.mxu0 0.0
  %3697 = vmatpush2.msra.mxu0 0.0
  %3698 = vmatprep.subr.mxu0 0.0
  %3699 = vmatpush2.msra.mxu0 0.0
  %3700 = vmatprep.subr.mxu0 0.0
  %3701 = vmatpush2.msra.mxu0 0.0
  %3702 = vmatprep.subr.mxu0 0.0
  %3703 = vmatpush2.msra.mxu0 0.0
  %3704 = vmatprep.mubr.f32.mxu0 0.0
  %3705 = vmatmul.mubr.f32.gmra.mxu0 %v3638
  %v3706 = vpop.f32.mrf.mxu0
  %v3707 = vadd.f32 %v3634, %v3706
  %v3708 = vpop.f32.mrf.mxu0
  %3709 = vdwg.mxu0
  %v3710 = vld [vmem:[%s11] sm:$0x1]
  %v3712 = vlaneseq
  %v3713 = vshrl.u32 %v3712, 7
  %v3714 = vsub.s32 0, %v3713
  %v3715 = vrot.slane %v3710, %v3714
  %v3717 = vadd.f32 %v3707, %v3715
  %v3718 = vld [vmem:[%s10] sm:$0xff]
  %v3719 = vld [vmem:[%s10 + $0x8] sm:$0xff]
  %v3720 = vld [vmem:[%s10 + $0x10] sm:$0xff]
  %v3721 = vld [vmem:[%s10 + $0x18] sm:$0xff]
  %v3722 = vld [vmem:[%s12] sm:$0x1]
  %v3724 = vlaneseq
  %v3725 = vshrl.u32 %v3724, 7
  %v3726 = vsub.s32 0, %v3725
  %v3727 = vrot.slane %v3722, %v3726
  %3729 = vmatprep.subr.mxu0 0.0
  %3730 = vmatpush1.msra.mxu0 0.0
  %3731 = vmatprep.subr.mxu0 0.0
  %3732 = vmatpush1.msra.mxu0 0.0
  %3733 = vmatprep.subr.mxu0 0.0
  %3734 = vmatpush1.msra.mxu0 0.0
  %3735 = vmatprep.subr.mxu0 0.0
  %3736 = vmatpush1.msra.mxu0 0.0
  %3737 = vmatprep.subr.mxu0 0.0
  %3738 = vmatpush1.msra.mxu0 0.0
  %3739 = vmatprep.subr.mxu0 0.0
  %3740 = vmatpush1.msra.mxu0 0.0
  %3741 = vmatprep.subr.mxu0 0.0
  %3742 = vmatpush1.msra.mxu0 0.0
  %3743 = vmatprep.subr.mxu0 0.0
  %3744 = vmatpush1.msra.mxu0 0.0
  %3745 = vmatprep.subr.mxu0 0.0
  %3746 = vmatpush1.msra.mxu0 0.0
  %3747 = vmatprep.subr.mxu0 0.0
  %3748 = vmatpush1.msra.mxu0 0.0
  %3749 = vmatprep.subr.mxu0 0.0
  %3750 = vmatpush1.msra.mxu0 0.0
  %3751 = vmatprep.subr.mxu0 0.0
  %3752 = vmatpush1.msra.mxu0 0.0
  %3753 = vmatprep.subr.mxu0 0.0
  %3754 = vmatpush1.msra.mxu0 %v3721
  %3755 = vmatprep.subr.mxu0 0.0
  %3756 = vmatpush1.msra.mxu0 %v3720
  %3757 = vmatprep.subr.mxu0 0.0
  %3758 = vmatpush1.msra.mxu0 %v3719
  %3759 = vmatprep.subr.mxu0 0.0
  %3760 = vmatpush1.msra.mxu0 %v3718
  %3761 = vmatprep.subr.mxu0 0.0
  %3762 = vmatpush2.msra.mxu0 0.0
  %3763 = vmatprep.subr.mxu0 0.0
  %3764 = vmatpush2.msra.mxu0 0.0
  %3765 = vmatprep.subr.mxu0 0.0
  %3766 = vmatpush2.msra.mxu0 0.0
  %3767 = vmatprep.subr.mxu0 0.0
  %3768 = vmatpush2.msra.mxu0 0.0
  %3769 = vmatprep.subr.mxu0 0.0
  %3770 = vmatpush2.msra.mxu0 0.0
  %3771 = vmatprep.subr.mxu0 0.0
  %3772 = vmatpush2.msra.mxu0 0.0
  %3773 = vmatprep.subr.mxu0 0.0
  %3774 = vmatpush2.msra.mxu0 0.0
  %3775 = vmatprep.subr.mxu0 0.0
  %3776 = vmatpush2.msra.mxu0 0.0
  %3777 = vmatprep.subr.mxu0 0.0
  %3778 = vmatpush2.msra.mxu0 0.0
  %3779 = vmatprep.subr.mxu0 0.0
  %3780 = vmatpush2.msra.mxu0 0.0
  %3781 = vmatprep.subr.mxu0 0.0
  %3782 = vmatpush2.msra.mxu0 0.0
  %3783 = vmatprep.subr.mxu0 0.0
  %3784 = vmatpush2.msra.mxu0 0.0
  %3785 = vmatprep.subr.mxu0 0.0
  %3786 = vmatpush2.msra.mxu0 0.0
  %3787 = vmatprep.subr.mxu0 0.0
  %3788 = vmatpush2.msra.mxu0 0.0
  %3789 = vmatprep.subr.mxu0 0.0
  %3790 = vmatpush2.msra.mxu0 0.0
  %3791 = vmatprep.subr.mxu0 0.0
  %3792 = vmatpush2.msra.mxu0 0.0
  %3793 = vmatprep.mubr.f32.mxu0 0.0
  %3794 = vmatmul.mubr.f32.gmra.mxu0 %v3093
  %v3795 = vpop.f32.mrf.mxu0
  %v3796 = vadd.f32 %v3727, %v3795
  %v3797 = vpop.f32.mrf.mxu0
  %3798 = vdwg.mxu0
  %v3799 = vadd.f32 %v3717, %v3796
  %v3800 = vxor.u32 %v3799, 2147483648
  %v3801 = vmul.f32 %v3800, 1.442695
  %v3802 = vpow.pop %v3801
  %v3803 = vadd.f32 %v3802, 1.0
  %v3804 = vrcp.pop %v3803
  %v3805 = vmul.f32 1.0, %v3804
  %3807 = vrot.lane.b32.xlu0 %v3796, 64
  %v3808 = vpop.permute.xlu0 %3807
  %v3810 = vmul.f32 %v3805, %v3808
  %3812 = vrot.lane.b32.xlu0 %v3810, 64
  %v3813 = vpop.permute.xlu0 %3812
  %v3815 = vadd.f32 %v3717, %v3813
  %v3816 = vtanh.pop %v3815
  %v3817 = vsub.f32 1.0, %v3805
  %3819 = vrot.lane.b32.xlu0 %v3816, 96
  %v3820 = vpop.permute.xlu0 %3819
  %v3822 = vmul.f32 %v3817, %v3820
  %v3823 = vmul.f32 %v3805, %v3007
  %v3824 = vadd.f32 %v3822, %v3823
  %v3825 = vld [vmem:[%s13] sm:$0xff]
  %v3826 = vld [vmem:[%s13 + $0x8] sm:$0xff]
  %v3827 = vld [vmem:[%s13 + $0x10] sm:$0xff]
  %v3828 = vld [vmem:[%s13 + $0x18] sm:$0xff]
  %v3829 = vld [vmem:[%s14] sm:$0xff]
  %v3830 = vld [vmem:[%s14 + $0x8] sm:$0xff]
  %v3831 = vld [vmem:[%s14 + $0x10] sm:$0xff]
  %v3832 = vld [vmem:[%s14 + $0x18] sm:$0xff]
  %v3833 = vld [vmem:[%s14 + $0x20] sm:$0xff]
  %v3834 = vld [vmem:[%s14 + $0x28] sm:$0xff]
  %v3835 = vld [vmem:[%s14 + $0x30] sm:$0xff]
  %v3836 = vld [vmem:[%s14 + $0x38] sm:$0xff]
  %3837 = vmatprep.subr.mxu0 0.0
  %3838 = vmatpush1.msra.mxu0 0.0
  %3839 = vmatprep.subr.mxu0 0.0
  %3840 = vmatpush1.msra.mxu0 0.0
  %3841 = vmatprep.subr.mxu0 0.0
  %3842 = vmatpush1.msra.mxu0 0.0
  %3843 = vmatprep.subr.mxu0 0.0
  %3844 = vmatpush1.msra.mxu0 0.0
  %3845 = vmatprep.subr.mxu0 0.0
  %3846 = vmatpush1.msra.mxu0 0.0
  %3847 = vmatprep.subr.mxu0 0.0
  %3848 = vmatpush1.msra.mxu0 0.0
  %3849 = vmatprep.subr.mxu0 0.0
  %3850 = vmatpush1.msra.mxu0 0.0
  %3851 = vmatprep.subr.mxu0 0.0
  %3852 = vmatpush1.msra.mxu0 0.0
  %3853 = vmatprep.subr.mxu0 0.0
  %3854 = vmatpush1.msra.mxu0 %v3836
  %3855 = vmatprep.subr.mxu0 0.0
  %3856 = vmatpush1.msra.mxu0 %v3835
  %3857 = vmatprep.subr.mxu0 0.0
  %3858 = vmatpush1.msra.mxu0 %v3834
  %3859 = vmatprep.subr.mxu0 0.0
  %3860 = vmatpush1.msra.mxu0 %v3833
  %3861 = vmatprep.subr.mxu0 0.0
  %3862 = vmatpush1.msra.mxu0 %v3832
  %3863 = vmatprep.subr.mxu0 0.0
  %3864 = vmatpush1.msra.mxu0 %v3831
  %3865 = vmatprep.subr.mxu0 0.0
  %3866 = vmatpush1.msra.mxu0 %v3830
  %3867 = vmatprep.subr.mxu0 0.0
  %3868 = vmatpush1.msra.mxu0 %v3829
  %3869 = vmatprep.subr.mxu0 0.0
  %3870 = vmatpush2.msra.mxu0 0.0
  %3871 = vmatprep.subr.mxu0 0.0
  %3872 = vmatpush2.msra.mxu0 0.0
  %3873 = vmatprep.subr.mxu0 0.0
  %3874 = vmatpush2.msra.mxu0 0.0
  %3875 = vmatprep.subr.mxu0 0.0
  %3876 = vmatpush2.msra.mxu0 0.0
  %3877 = vmatprep.subr.mxu0 0.0
  %3878 = vmatpush2.msra.mxu0 0.0
  %3879 = vmatprep.subr.mxu0 0.0
  %3880 = vmatpush2.msra.mxu0 0.0
  %3881 = vmatprep.subr.mxu0 0.0
  %3882 = vmatpush2.msra.mxu0 0.0
  %3883 = vmatprep.subr.mxu0 0.0
  %3884 = vmatpush2.msra.mxu0 0.0
  %3885 = vmatprep.subr.mxu0 0.0
  %3886 = vmatpush2.msra.mxu0 0.0
  %3887 = vmatprep.subr.mxu0 0.0
  %3888 = vmatpush2.msra.mxu0 0.0
  %3889 = vmatprep.subr.mxu0 0.0
  %3890 = vmatpush2.msra.mxu0 0.0
  %3891 = vmatprep.subr.mxu0 0.0
  %3892 = vmatpush2.msra.mxu0 0.0
  %3893 = vmatprep.subr.mxu0 0.0
  %3894 = vmatpush2.msra.mxu0 0.0
  %3895 = vmatprep.subr.mxu0 0.0
  %3896 = vmatpush2.msra.mxu0 0.0
  %3897 = vmatprep.subr.mxu0 0.0
  %3898 = vmatpush2.msra.mxu0 0.0
  %3899 = vmatprep.subr.mxu0 0.0
  %3900 = vmatpush2.msra.mxu0 0.0
  %3901 = vmatprep.mubr.f32.mxu0 0.0
  %3902 = vmatmul.mubr.f32.gmra.mxu0 %v3565
  %v3903 = vpop.f32.mrf.mxu0
  %v3904 = vadd.f32 0.0, %v3903
  %v3905 = vpop.f32.mrf.mxu0
  %3906 = vdwg.mxu0
  %3908 = vrot.lane.b32.xlu0 %v3824, 96
  %v3909 = vpop.permute.xlu0 %3908
  %v3910 = vsel %vm146, %v3909, 0
  %3912 = vmatprep.subr.mxu0 0.0
  %3913 = vmatpush1.msra.mxu0 0.0
  %3914 = vmatprep.subr.mxu0 0.0
  %3915 = vmatpush1.msra.mxu0 0.0
  %3916 = vmatprep.subr.mxu0 0.0
  %3917 = vmatpush1.msra.mxu0 0.0
  %3918 = vmatprep.subr.mxu0 0.0
  %3919 = vmatpush1.msra.mxu0 0.0
  %3920 = vmatprep.subr.mxu0 0.0
  %3921 = vmatpush1.msra.mxu0 0.0
  %3922 = vmatprep.subr.mxu0 0.0
  %3923 = vmatpush1.msra.mxu0 0.0
  %3924 = vmatprep.subr.mxu0 0.0
  %3925 = vmatpush1.msra.mxu0 0.0
  %3926 = vmatprep.subr.mxu0 0.0
  %3927 = vmatpush1.msra.mxu0 0.0
  %3928 = vmatprep.subr.mxu0 0.0
  %3929 = vmatpush1.msra.mxu0 0.0
  %3930 = vmatprep.subr.mxu0 0.0
  %3931 = vmatpush1.msra.mxu0 0.0
  %3932 = vmatprep.subr.mxu0 0.0
  %3933 = vmatpush1.msra.mxu0 0.0
  %3934 = vmatprep.subr.mxu0 0.0
  %3935 = vmatpush1.msra.mxu0 0.0
  %3936 = vmatprep.subr.mxu0 0.0
  %3937 = vmatpush1.msra.mxu0 %v3828
  %3938 = vmatprep.subr.mxu0 0.0
  %3939 = vmatpush1.msra.mxu0 %v3827
  %3940 = vmatprep.subr.mxu0 0.0
  %3941 = vmatpush1.msra.mxu0 %v3826
  %3942 = vmatprep.subr.mxu0 0.0
  %3943 = vmatpush1.msra.mxu0 %v3825
  %3944 = vmatprep.subr.mxu0 0.0
  %3945 = vmatpush2.msra.mxu0 0.0
  %3946 = vmatprep.subr.mxu0 0.0
  %3947 = vmatpush2.msra.mxu0 0.0
  %3948 = vmatprep.subr.mxu0 0.0
  %3949 = vmatpush2.msra.mxu0 0.0
  %3950 = vmatprep.subr.mxu0 0.0
  %3951 = vmatpush2.msra.mxu0 0.0
  %3952 = vmatprep.subr.mxu0 0.0
  %3953 = vmatpush2.msra.mxu0 0.0
  %3954 = vmatprep.subr.mxu0 0.0
  %3955 = vmatpush2.msra.mxu0 0.0
  %3956 = vmatprep.subr.mxu0 0.0
  %3957 = vmatpush2.msra.mxu0 0.0
  %3958 = vmatprep.subr.mxu0 0.0
  %3959 = vmatpush2.msra.mxu0 0.0
  %3960 = vmatprep.subr.mxu0 0.0
  %3961 = vmatpush2.msra.mxu0 0.0
  %3962 = vmatprep.subr.mxu0 0.0
  %3963 = vmatpush2.msra.mxu0 0.0
  %3964 = vmatprep.subr.mxu0 0.0
  %3965 = vmatpush2.msra.mxu0 0.0
  %3966 = vmatprep.subr.mxu0 0.0
  %3967 = vmatpush2.msra.mxu0 0.0
  %3968 = vmatprep.subr.mxu0 0.0
  %3969 = vmatpush2.msra.mxu0 0.0
  %3970 = vmatprep.subr.mxu0 0.0
  %3971 = vmatpush2.msra.mxu0 0.0
  %3972 = vmatprep.subr.mxu0 0.0
  %3973 = vmatpush2.msra.mxu0 0.0
  %3974 = vmatprep.subr.mxu0 0.0
  %3975 = vmatpush2.msra.mxu0 0.0
  %3976 = vmatprep.mubr.f32.mxu0 0.0
  %3977 = vmatmul.mubr.f32.gmra.mxu0 %v3910
  %v3978 = vpop.f32.mrf.mxu0
  %v3979 = vadd.f32 %v3904, %v3978
  %v3980 = vpop.f32.mrf.mxu0
  %3981 = vdwg.mxu0
  %v3982 = vld [vmem:[%s15] sm:$0xff]
  %v3983 = vld [vmem:[%s15 + $0x8] sm:$0xff]
  %v3984 = vld [vmem:[%s15 + $0x10] sm:$0xff]
  %v3985 = vld [vmem:[%s15 + $0x18] sm:$0xff]
  %3986 = vmatprep.subr.mxu0 0.0
  %3987 = vmatpush1.msra.mxu0 0.0
  %3988 = vmatprep.subr.mxu0 0.0
  %3989 = vmatpush1.msra.mxu0 0.0
  %3990 = vmatprep.subr.mxu0 0.0
  %3991 = vmatpush1.msra.mxu0 0.0
  %3992 = vmatprep.subr.mxu0 0.0
  %3993 = vmatpush1.msra.mxu0 0.0
  %3994 = vmatprep.subr.mxu0 0.0
  %3995 = vmatpush1.msra.mxu0 0.0
  %3996 = vmatprep.subr.mxu0 0.0
  %3997 = vmatpush1.msra.mxu0 0.0
  %3998 = vmatprep.subr.mxu0 0.0
  %3999 = vmatpush1.msra.mxu0 0.0
  %4000 = vmatprep.subr.mxu0 0.0
  %4001 = vmatpush1.msra.mxu0 0.0
  %4002 = vmatprep.subr.mxu0 0.0
  %4003 = vmatpush1.msra.mxu0 0.0
  %4004 = vmatprep.subr.mxu0 0.0
  %4005 = vmatpush1.msra.mxu0 0.0
  %4006 = vmatprep.subr.mxu0 0.0
  %4007 = vmatpush1.msra.mxu0 0.0
  %4008 = vmatprep.subr.mxu0 0.0
  %4009 = vmatpush1.msra.mxu0 0.0
  %4010 = vmatprep.subr.mxu0 0.0
  %4011 = vmatpush1.msra.mxu0 %v3985
  %4012 = vmatprep.subr.mxu0 0.0
  %4013 = vmatpush1.msra.mxu0 %v3984
  %4014 = vmatprep.subr.mxu0 0.0
  %4015 = vmatpush1.msra.mxu0 %v3983
  %4016 = vmatprep.subr.mxu0 0.0
  %4017 = vmatpush1.msra.mxu0 %v3982
  %4018 = vmatprep.subr.mxu0 0.0
  %4019 = vmatpush2.msra.mxu0 0.0
  %4020 = vmatprep.subr.mxu0 0.0
  %4021 = vmatpush2.msra.mxu0 0.0
  %4022 = vmatprep.subr.mxu0 0.0
  %4023 = vmatpush2.msra.mxu0 0.0
  %4024 = vmatprep.subr.mxu0 0.0
  %4025 = vmatpush2.msra.mxu0 0.0
  %4026 = vmatprep.subr.mxu0 0.0
  %4027 = vmatpush2.msra.mxu0 0.0
  %4028 = vmatprep.subr.mxu0 0.0
  %4029 = vmatpush2.msra.mxu0 0.0
  %4030 = vmatprep.subr.mxu0 0.0
  %4031 = vmatpush2.msra.mxu0 0.0
  %4032 = vmatprep.subr.mxu0 0.0
  %4033 = vmatpush2.msra.mxu0 0.0
  %4034 = vmatprep.subr.mxu0 0.0
  %4035 = vmatpush2.msra.mxu0 0.0
  %4036 = vmatprep.subr.mxu0 0.0
  %4037 = vmatpush2.msra.mxu0 0.0
  %4038 = vmatprep.subr.mxu0 0.0
  %4039 = vmatpush2.msra.mxu0 0.0
  %4040 = vmatprep.subr.mxu0 0.0
  %4041 = vmatpush2.msra.mxu0 0.0
  %4042 = vmatprep.subr.mxu0 0.0
  %4043 = vmatpush2.msra.mxu0 0.0
  %4044 = vmatprep.subr.mxu0 0.0
  %4045 = vmatpush2.msra.mxu0 0.0
  %4046 = vmatprep.subr.mxu0 0.0
  %4047 = vmatpush2.msra.mxu0 0.0
  %4048 = vmatprep.subr.mxu0 0.0
  %4049 = vmatpush2.msra.mxu0 0.0
  %4050 = vmatprep.mubr.f32.mxu0 0.0
  %4051 = vmatmul.mubr.f32.gmra.mxu0 %v3638
  %v4052 = vpop.f32.mrf.mxu0
  %v4053 = vadd.f32 0.0, %v4052
  %v4054 = vpop.f32.mrf.mxu0
  %4055 = vdwg.mxu0
  %v4056 = vadd.f32 %v3979, %v4053
  %v4057 = vld [vmem:[%s16] sm:$0x1]
  %v4059 = vlaneseq
  %v4060 = vshrl.u32 %v4059, 7
  %v4061 = vsub.s32 0, %v4060
  %v4062 = vrot.slane %v4057, %v4061
  %v4064 = vadd.f32 %v4056, %v4062
  %s4065 = scalar_lea.vmem %s17, 32
  %4066 = vst.msk [vmem:[%s4065] sm:$0xff] %vm792, %v4064
  %v4067 = vsel %vm792, %v4064, -inf
  %4068 = vmax.xlane.f32.xlu0 %v4067
  %v4069 = vpop.xlane.xlu0 %4068
  %vm4070 = vcmp.eq.f32.partialorder %v4064, %v4069
  %v4071 = vsel %vm4070, %v796, 16.0
  %v4072 = vsel %vm792, %v4071, inf
  %4073 = vmin.xlane.f32.xlu0 %v4072
  %v4074 = vpop.xlane.xlu0 %4073
  %v4075 = vcvt.f32.s32.to.zero.pseudo %v4074
  %vm4076 = vcmp.eq.s32.totalorder %v795, %v4075
  %v4077 = vsel %vm4076, 1, 0
  %v4078 = vcvt.s32.f32 %v4077
  %v4079 = vld [vmem:[%s3] sm:$0xff]
  %v4080 = vld [vmem:[%s3 + $0x8] sm:$0xff]
  %v4082 = vsel %vm792, %v4078, 0
  %4084 = vmatprep.subr.mxu0 0.0
  %4085 = vmatpush1.msra.mxu0 0.0
  %4086 = vmatprep.subr.mxu0 0.0
  %4087 = vmatpush1.msra.mxu0 0.0
  %4088 = vmatprep.subr.mxu0 0.0
  %4089 = vmatpush1.msra.mxu0 0.0
  %4090 = vmatprep.subr.mxu0 0.0
  %4091 = vmatpush1.msra.mxu0 0.0
  %4092 = vmatprep.subr.mxu0 0.0
  %4093 = vmatpush1.msra.mxu0 0.0
  %4094 = vmatprep.subr.mxu0 0.0
  %4095 = vmatpush1.msra.mxu0 0.0
  %4096 = vmatprep.subr.mxu0 0.0
  %4097 = vmatpush1.msra.mxu0 0.0
  %4098 = vmatprep.subr.mxu0 0.0
  %4099 = vmatpush1.msra.mxu0 0.0
  %4100 = vmatprep.subr.mxu0 0.0
  %4101 = vmatpush1.msra.mxu0 0.0
  %4102 = vmatprep.subr.mxu0 0.0
  %4103 = vmatpush1.msra.mxu0 0.0
  %4104 = vmatprep.subr.mxu0 0.0
  %4105 = vmatpush1.msra.mxu0 0.0
  %4106 = vmatprep.subr.mxu0 0.0
  %4107 = vmatpush1.msra.mxu0 0.0
  %4108 = vmatprep.subr.mxu0 0.0
  %4109 = vmatpush1.msra.mxu0 0.0
  %4110 = vmatprep.subr.mxu0 0.0
  %4111 = vmatpush1.msra.mxu0 0.0
  %4112 = vmatprep.subr.mxu0 0.0
  %4113 = vmatpush1.msra.mxu0 %v4080
  %4114 = vmatprep.subr.mxu0 0.0
  %4115 = vmatpush1.msra.mxu0 %v4079
  %4116 = vmatprep.subr.mxu0 0.0
  %4117 = vmatpush2.msra.mxu0 0.0
  %4118 = vmatprep.subr.mxu0 0.0
  %4119 = vmatpush2.msra.mxu0 0.0
  %4120 = vmatprep.subr.mxu0 0.0
  %4121 = vmatpush2.msra.mxu0 0.0
  %4122 = vmatprep.subr.mxu0 0.0
  %4123 = vmatpush2.msra.mxu0 0.0
  %4124 = vmatprep.subr.mxu0 0.0
  %4125 = vmatpush2.msra.mxu0 0.0
  %4126 = vmatprep.subr.mxu0 0.0
  %4127 = vmatpush2.msra.mxu0 0.0
  %4128 = vmatprep.subr.mxu0 0.0
  %4129 = vmatpush2.msra.mxu0 0.0
  %4130 = vmatprep.subr.mxu0 0.0
  %4131 = vmatpush2.msra.mxu0 0.0
  %4132 = vmatprep.subr.mxu0 0.0
  %4133 = vmatpush2.msra.mxu0 0.0
  %4134 = vmatprep.subr.mxu0 0.0
  %4135 = vmatpush2.msra.mxu0 0.0
  %4136 = vmatprep.subr.mxu0 0.0
  %4137 = vmatpush2.msra.mxu0 0.0
  %4138 = vmatprep.subr.mxu0 0.0
  %4139 = vmatpush2.msra.mxu0 0.0
  %4140 = vmatprep.subr.mxu0 0.0
  %4141 = vmatpush2.msra.mxu0 0.0
  %4142 = vmatprep.subr.mxu0 0.0
  %4143 = vmatpush2.msra.mxu0 0.0
  %4144 = vmatprep.subr.mxu0 0.0
  %4145 = vmatpush2.msra.mxu0 0.0
  %4146 = vmatprep.subr.mxu0 0.0
  %4147 = vmatpush2.msra.mxu0 0.0
  %4148 = vmatprep.mubr.f32.mxu0 0.0
  %4149 = vmatmul.mubr.f32.gmra.mxu0 %v4082
  %v4150 = vpop.f32.mrf.mxu0
  %v4151 = vadd.f32 0.0, %v4150
  %v4152 = vpop.f32.mrf.mxu0
  %4153 = vdwg.mxu0
  %v4154 = vld [vmem:[%s4] sm:$0xff]
  %v4155 = vld [vmem:[%s4 + $0x8] sm:$0xff]
  %v4156 = vld [vmem:[%s4 + $0x10] sm:$0xff]
  %v4157 = vld [vmem:[%s4 + $0x18] sm:$0xff]
  %4158 = vmatprep.subr.mxu0 0.0
  %4159 = vmatpush1.msra.mxu0 0.0
  %4160 = vmatprep.subr.mxu0 0.0
  %4161 = vmatpush1.msra.mxu0 0.0
  %4162 = vmatprep.subr.mxu0 0.0
  %4163 = vmatpush1.msra.mxu0 0.0
  %4164 = vmatprep.subr.mxu0 0.0
  %4165 = vmatpush1.msra.mxu0 0.0
  %4166 = vmatprep.subr.mxu0 0.0
  %4167 = vmatpush1.msra.mxu0 0.0
  %4168 = vmatprep.subr.mxu0 0.0
  %4169 = vmatpush1.msra.mxu0 0.0
  %4170 = vmatprep.subr.mxu0 0.0
  %4171 = vmatpush1.msra.mxu0 0.0
  %4172 = vmatprep.subr.mxu0 0.0
  %4173 = vmatpush1.msra.mxu0 0.0
  %4174 = vmatprep.subr.mxu0 0.0
  %4175 = vmatpush1.msra.mxu0 0.0
  %4176 = vmatprep.subr.mxu0 0.0
  %4177 = vmatpush1.msra.mxu0 0.0
  %4178 = vmatprep.subr.mxu0 0.0
  %4179 = vmatpush1.msra.mxu0 0.0
  %4180 = vmatprep.subr.mxu0 0.0
  %4181 = vmatpush1.msra.mxu0 0.0
  %4182 = vmatprep.subr.mxu0 0.0
  %4183 = vmatpush1.msra.mxu0 %v4157
  %4184 = vmatprep.subr.mxu0 0.0
  %4185 = vmatpush1.msra.mxu0 %v4156
  %4186 = vmatprep.subr.mxu0 0.0
  %4187 = vmatpush1.msra.mxu0 %v4155
  %4188 = vmatprep.subr.mxu0 0.0
  %4189 = vmatpush1.msra.mxu0 %v4154
  %4190 = vmatprep.subr.mxu0 0.0
  %4191 = vmatpush2.msra.mxu0 0.0
  %4192 = vmatprep.subr.mxu0 0.0
  %4193 = vmatpush2.msra.mxu0 0.0
  %4194 = vmatprep.subr.mxu0 0.0
  %4195 = vmatpush2.msra.mxu0 0.0
  %4196 = vmatprep.subr.mxu0 0.0
  %4197 = vmatpush2.msra.mxu0 0.0
  %4198 = vmatprep.subr.mxu0 0.0
  %4199 = vmatpush2.msra.mxu0 0.0
  %4200 = vmatprep.subr.mxu0 0.0
  %4201 = vmatpush2.msra.mxu0 0.0
  %4202 = vmatprep.subr.mxu0 0.0
  %4203 = vmatpush2.msra.mxu0 0.0
  %4204 = vmatprep.subr.mxu0 0.0
  %4205 = vmatpush2.msra.mxu0 0.0
  %4206 = vmatprep.subr.mxu0 0.0
  %4207 = vmatpush2.msra.mxu0 0.0
  %4208 = vmatprep.subr.mxu0 0.0
  %4209 = vmatpush2.msra.mxu0 0.0
  %4210 = vmatprep.subr.mxu0 0.0
  %4211 = vmatpush2.msra.mxu0 0.0
  %4212 = vmatprep.subr.mxu0 0.0
  %4213 = vmatpush2.msra.mxu0 0.0
  %4214 = vmatprep.subr.mxu0 0.0
  %4215 = vmatpush2.msra.mxu0 0.0
  %4216 = vmatprep.subr.mxu0 0.0
  %4217 = vmatpush2.msra.mxu0 0.0
  %4218 = vmatprep.subr.mxu0 0.0
  %4219 = vmatpush2.msra.mxu0 0.0
  %4220 = vmatprep.subr.mxu0 0.0
  %4221 = vmatpush2.msra.mxu0 0.0
  %4222 = vmatprep.mubr.f32.mxu0 0.0
  %4223 = vmatmul.mubr.f32.gmra.mxu0 %v3910
  %v4224 = vpop.f32.mrf.mxu0
  %v4225 = vadd.f32 0.0, %v4224
  %v4226 = vpop.f32.mrf.mxu0
  %4227 = vdwg.mxu0
  %v4228 = vld [vmem:[#allocation2] sm:$0xff]
  %v4229 = vld [vmem:[#allocation2 + $0x8] sm:$0xff]
  %v4230 = vld [vmem:[#allocation2 + $0x10] sm:$0xff]
  %v4231 = vld [vmem:[#allocation2 + $0x18] sm:$0xff]
  %v4232 = vld [vmem:[#allocation2 + $0x20] sm:$0xff]
  %v4233 = vld [vmem:[#allocation2 + $0x28] sm:$0xff]
  %v4234 = vld [vmem:[#allocation2 + $0x30] sm:$0xff]
  %v4235 = vld [vmem:[#allocation2 + $0x38] sm:$0xff]
  %v4236 = vadd.f32 %v4228, %v4225
  %v4237 = vadd.f32 %v4229, %v4225
  %v4238 = vadd.f32 %v4230, %v4225
  %v4239 = vadd.f32 %v4231, %v4225
  %v4240 = vadd.f32 %v4232, %v4225
  %v4241 = vadd.f32 %v4233, %v4225
  %v4242 = vadd.f32 %v4234, %v4225
  %v4243 = vadd.f32 %v4235, %v4225
  %v4244 = vtanh.pop %v4236
  %v4245 = vtanh.pop %v4237
  %v4246 = vtanh.pop %v4238
  %v4247 = vtanh.pop %v4239
  %v4248 = vtanh.pop %v4240
  %v4249 = vtanh.pop %v4241
  %v4250 = vtanh.pop %v4242
  %v4251 = vtanh.pop %v4243
  %v4252 = vld [vmem:[%s7] sm:$0x1]
  %v4254 = vlaneseq
  %v4255 = vshrl.u32 %v4254, 7
  %v4256 = vsub.s32 0, %v4255
  %v4257 = vrot.slane %v4252, %v4256
  %v4259 = vmul.f32 %v4244, %v4257
  %v4260 = vmul.f32 %v4245, %v4257
  %v4261 = vmul.f32 %v4246, %v4257
  %v4262 = vmul.f32 %v4247, %v4257
  %v4263 = vmul.f32 %v4248, %v4257
  %v4264 = vmul.f32 %v4249, %v4257
  %v4265 = vmul.f32 %v4250, %v4257
  %v4266 = vmul.f32 %v4251, %v4257
  %v4267 = vsel %vm146, %v4259, 0.0
  %4268 = vadd.xlane.f32.xlu0 %v4267
  %v4269 = vpop.xlane.xlu0 %4268
  %v4270 = vsel %vm146, %v4260, 0.0
  %4271 = vadd.xlane.f32.xlu0 %v4270
  %v4272 = vpop.xlane.xlu0 %4271
  %v4273 = vsel %vm146, %v4261, 0.0
  %4274 = vadd.xlane.f32.xlu0 %v4273
  %v4275 = vpop.xlane.xlu0 %4274
  %v4276 = vsel %vm146, %v4262, 0.0
  %4277 = vadd.xlane.f32.xlu0 %v4276
  %v4278 = vpop.xlane.xlu0 %4277
  %v4279 = vsel %vm146, %v4263, 0.0
  %4280 = vadd.xlane.f32.xlu0 %v4279
  %v4281 = vpop.xlane.xlu0 %4280
  %v4282 = vsel %vm146, %v4264, 0.0
  %4283 = vadd.xlane.f32.xlu0 %v4282
  %v4284 = vpop.xlane.xlu0 %4283
  %v4285 = vsel %vm146, %v4265, 0.0
  %4286 = vadd.xlane.f32.xlu0 %v4285
  %v4287 = vpop.xlane.xlu0 %4286
  %v4288 = vsel %vm146, %v4266, 0.0
  %4289 = vadd.xlane.f32.xlu0 %v4288
  %v4290 = vpop.xlane.xlu0 %4289
  %v4291 = vmax.f32 %v4269, %v4281
  %v4292 = vmax.f32 %v4272, %v4284
  %v4293 = vmax.f32 %v4275, %v4287
  %v4294 = vmax.f32 %v4278, %v4290
  %v4295 = vmax.f32 %v4291, %v4292
  %v4296 = vmax.f32 %v4293, %v4294
  %v4297 = vmax.f32 %v4295, %v4296
  %v4298 = vsub.f32 %v4269, %v4297
  %v4299 = vsub.f32 %v4272, %v4297
  %v4300 = vsub.f32 %v4275, %v4297
  %v4301 = vsub.f32 %v4278, %v4297
  %v4302 = vsub.f32 %v4281, %v4297
  %v4303 = vsub.f32 %v4284, %v4297
  %v4304 = vsub.f32 %v4287, %v4297
  %v4305 = vsub.f32 %v4290, %v4297
  %v4306 = vmul.f32 %v4298, 1.442695
  %v4307 = vpow.pop %v4306
  %v4308 = vmul.f32 %v4299, 1.442695
  %v4309 = vpow.pop %v4308
  %v4310 = vmul.f32 %v4300, 1.442695
  %v4311 = vpow.pop %v4310
  %v4312 = vmul.f32 %v4301, 1.442695
  %v4313 = vpow.pop %v4312
  %v4314 = vmul.f32 %v4302, 1.442695
  %v4315 = vpow.pop %v4314
  %v4316 = vmul.f32 %v4303, 1.442695
  %v4317 = vpow.pop %v4316
  %v4318 = vmul.f32 %v4304, 1.442695
  %v4319 = vpow.pop %v4318
  %v4320 = vmul.f32 %v4305, 1.442695
  %v4321 = vpow.pop %v4320
  %v4322 = vadd.f32 %v4307, %v4309
  %v4323 = vadd.f32 %v4322, %v4311
  %v4324 = vadd.f32 %v4323, %v4313
  %v4325 = vadd.f32 %v4324, %v4315
  %v4326 = vadd.f32 %v4325, %v4317
  %v4327 = vadd.f32 %v4326, %v4319
  %v4328 = vadd.f32 %v4327, %v4321
  %v4329 = vrcp.pop %v4328
  %v4330 = vmul.f32 %v4307, %v4329
  %v4331 = vmul.f32 %v4309, %v4329
  %v4332 = vmul.f32 %v4311, %v4329
  %v4333 = vmul.f32 %v4313, %v4329
  %v4334 = vmul.f32 %v4315, %v4329
  %v4335 = vmul.f32 %v4317, %v4329
  %v4336 = vmul.f32 %v4319, %v4329
  %v4337 = vmul.f32 %v4321, %v4329
  %v4338 = vld [vmem:[%s2] sm:$0xff]
  %v4339 = vld [vmem:[%s2 + $0x8] sm:$0xff]
  %v4340 = vld [vmem:[%s2 + $0x10] sm:$0xff]
  %v4341 = vld [vmem:[%s2 + $0x18] sm:$0xff]
  %v4342 = vld [vmem:[%s2 + $0x20] sm:$0xff]
  %v4343 = vld [vmem:[%s2 + $0x28] sm:$0xff]
  %v4344 = vld [vmem:[%s2 + $0x30] sm:$0xff]
  %v4345 = vld [vmem:[%s2 + $0x38] sm:$0xff]
  %v4346 = vmul.f32 %v4330, %v4338
  %v4347 = vmul.f32 %v4331, %v4339
  %v4348 = vmul.f32 %v4332, %v4340
  %v4349 = vmul.f32 %v4333, %v4341
  %v4350 = vmul.f32 %v4334, %v4342
  %v4351 = vmul.f32 %v4335, %v4343
  %v4352 = vmul.f32 %v4336, %v4344
  %v4353 = vmul.f32 %v4337, %v4345
  %v4354 = vsel %vm72, %v4346, 0.0
  %v4355 = vsel %vm72, %v4347, 0.0
  %v4356 = vadd.f32 %v4354, %v4355
  %v4357 = vsel %vm72, %v4348, 0.0
  %v4358 = vadd.f32 %v4356, %v4357
  %v4359 = vsel %vm72, %v4349, 0.0
  %v4360 = vadd.f32 %v4358, %v4359
  %v4361 = vsel %vm72, %v4350, 0.0
  %v4362 = vadd.f32 %v4360, %v4361
  %v4363 = vsel %vm72, %v4351, 0.0
  %v4364 = vadd.f32 %v4362, %v4363
  %v4365 = vsel %vm72, %v4352, 0.0
  %v4366 = vadd.f32 %v4364, %v4365
  %v4367 = vsel %vm72, %v4353, 0.0
  %v4368 = vadd.f32 %v4366, %v4367
  %v4369 = vld [vmem:[%s8] sm:$0xff]
  %v4370 = vld [vmem:[%s8 + $0x8] sm:$0xff]
  %v4371 = vld [vmem:[%s8 + $0x10] sm:$0xff]
  %v4372 = vld [vmem:[%s8 + $0x18] sm:$0xff]
  %v4373 = vld [vmem:[%s9] sm:$0xff]
  %v4374 = vld [vmem:[%s9 + $0x8] sm:$0xff]
  %v4375 = vld [vmem:[%s9 + $0x10] sm:$0xff]
  %v4376 = vld [vmem:[%s9 + $0x18] sm:$0xff]
  %v4377 = vld [vmem:[%s9 + $0x20] sm:$0xff]
  %v4378 = vld [vmem:[%s9 + $0x28] sm:$0xff]
  %v4379 = vld [vmem:[%s9 + $0x30] sm:$0xff]
  %v4380 = vld [vmem:[%s9 + $0x38] sm:$0xff]
  %v4382 = vsel %vm72, %v4368, 0
  %4384 = vmatprep.subr.mxu0 0.0
  %4385 = vmatpush1.msra.mxu0 0.0
  %4386 = vmatprep.subr.mxu0 0.0
  %4387 = vmatpush1.msra.mxu0 0.0
  %4388 = vmatprep.subr.mxu0 0.0
  %4389 = vmatpush1.msra.mxu0 0.0
  %4390 = vmatprep.subr.mxu0 0.0
  %4391 = vmatpush1.msra.mxu0 0.0
  %4392 = vmatprep.subr.mxu0 0.0
  %4393 = vmatpush1.msra.mxu0 0.0
  %4394 = vmatprep.subr.mxu0 0.0
  %4395 = vmatpush1.msra.mxu0 0.0
  %4396 = vmatprep.subr.mxu0 0.0
  %4397 = vmatpush1.msra.mxu0 0.0
  %4398 = vmatprep.subr.mxu0 0.0
  %4399 = vmatpush1.msra.mxu0 0.0
  %4400 = vmatprep.subr.mxu0 0.0
  %4401 = vmatpush1.msra.mxu0 %v4380
  %4402 = vmatprep.subr.mxu0 0.0
  %4403 = vmatpush1.msra.mxu0 %v4379
  %4404 = vmatprep.subr.mxu0 0.0
  %4405 = vmatpush1.msra.mxu0 %v4378
  %4406 = vmatprep.subr.mxu0 0.0
  %4407 = vmatpush1.msra.mxu0 %v4377
  %4408 = vmatprep.subr.mxu0 0.0
  %4409 = vmatpush1.msra.mxu0 %v4376
  %4410 = vmatprep.subr.mxu0 0.0
  %4411 = vmatpush1.msra.mxu0 %v4375
  %4412 = vmatprep.subr.mxu0 0.0
  %4413 = vmatpush1.msra.mxu0 %v4374
  %4414 = vmatprep.subr.mxu0 0.0
  %4415 = vmatpush1.msra.mxu0 %v4373
  %4416 = vmatprep.subr.mxu0 0.0
  %4417 = vmatpush2.msra.mxu0 0.0
  %4418 = vmatprep.subr.mxu0 0.0
  %4419 = vmatpush2.msra.mxu0 0.0
  %4420 = vmatprep.subr.mxu0 0.0
  %4421 = vmatpush2.msra.mxu0 0.0
  %4422 = vmatprep.subr.mxu0 0.0
  %4423 = vmatpush2.msra.mxu0 0.0
  %4424 = vmatprep.subr.mxu0 0.0
  %4425 = vmatpush2.msra.mxu0 0.0
  %4426 = vmatprep.subr.mxu0 0.0
  %4427 = vmatpush2.msra.mxu0 0.0
  %4428 = vmatprep.subr.mxu0 0.0
  %4429 = vmatpush2.msra.mxu0 0.0
  %4430 = vmatprep.subr.mxu0 0.0
  %4431 = vmatpush2.msra.mxu0 0.0
  %4432 = vmatprep.subr.mxu0 0.0
  %4433 = vmatpush2.msra.mxu0 0.0
  %4434 = vmatprep.subr.mxu0 0.0
  %4435 = vmatpush2.msra.mxu0 0.0
  %4436 = vmatprep.subr.mxu0 0.0
  %4437 = vmatpush2.msra.mxu0 0.0
  %4438 = vmatprep.subr.mxu0 0.0
  %4439 = vmatpush2.msra.mxu0 0.0
  %4440 = vmatprep.subr.mxu0 0.0
  %4441 = vmatpush2.msra.mxu0 0.0
  %4442 = vmatprep.subr.mxu0 0.0
  %4443 = vmatpush2.msra.mxu0 0.0
  %4444 = vmatprep.subr.mxu0 0.0
  %4445 = vmatpush2.msra.mxu0 0.0
  %4446 = vmatprep.subr.mxu0 0.0
  %4447 = vmatpush2.msra.mxu0 0.0
  %4448 = vmatprep.mubr.f32.mxu0 0.0
  %4449 = vmatmul.mubr.f32.gmra.mxu0 %v4382
  %v4450 = vpop.f32.mrf.mxu0
  %v4451 = vadd.f32 0.0, %v4450
  %v4452 = vpop.f32.mrf.mxu0
  %4453 = vdwg.mxu0
  %v4455 = vsel %vm146, %v4151, 0
  %4457 = vmatprep.subr.mxu0 0.0
  %4458 = vmatpush1.msra.mxu0 0.0
  %4459 = vmatprep.subr.mxu0 0.0
  %4460 = vmatpush1.msra.mxu0 0.0
  %4461 = vmatprep.subr.mxu0 0.0
  %4462 = vmatpush1.msra.mxu0 0.0
  %4463 = vmatprep.subr.mxu0 0.0
  %4464 = vmatpush1.msra.mxu0 0.0
  %4465 = vmatprep.subr.mxu0 0.0
  %4466 = vmatpush1.msra.mxu0 0.0
  %4467 = vmatprep.subr.mxu0 0.0
  %4468 = vmatpush1.msra.mxu0 0.0
  %4469 = vmatprep.subr.mxu0 0.0
  %4470 = vmatpush1.msra.mxu0 0.0
  %4471 = vmatprep.subr.mxu0 0.0
  %4472 = vmatpush1.msra.mxu0 0.0
  %4473 = vmatprep.subr.mxu0 0.0
  %4474 = vmatpush1.msra.mxu0 0.0
  %4475 = vmatprep.subr.mxu0 0.0
  %4476 = vmatpush1.msra.mxu0 0.0
  %4477 = vmatprep.subr.mxu0 0.0
  %4478 = vmatpush1.msra.mxu0 0.0
  %4479 = vmatprep.subr.mxu0 0.0
  %4480 = vmatpush1.msra.mxu0 0.0
  %4481 = vmatprep.subr.mxu0 0.0
  %4482 = vmatpush1.msra.mxu0 %v4372
  %4483 = vmatprep.subr.mxu0 0.0
  %4484 = vmatpush1.msra.mxu0 %v4371
  %4485 = vmatprep.subr.mxu0 0.0
  %4486 = vmatpush1.msra.mxu0 %v4370
  %4487 = vmatprep.subr.mxu0 0.0
  %4488 = vmatpush1.msra.mxu0 %v4369
  %4489 = vmatprep.subr.mxu0 0.0
  %4490 = vmatpush2.msra.mxu0 0.0
  %4491 = vmatprep.subr.mxu0 0.0
  %4492 = vmatpush2.msra.mxu0 0.0
  %4493 = vmatprep.subr.mxu0 0.0
  %4494 = vmatpush2.msra.mxu0 0.0
  %4495 = vmatprep.subr.mxu0 0.0
  %4496 = vmatpush2.msra.mxu0 0.0
  %4497 = vmatprep.subr.mxu0 0.0
  %4498 = vmatpush2.msra.mxu0 0.0
  %4499 = vmatprep.subr.mxu0 0.0
  %4500 = vmatpush2.msra.mxu0 0.0
  %4501 = vmatprep.subr.mxu0 0.0
  %4502 = vmatpush2.msra.mxu0 0.0
  %4503 = vmatprep.subr.mxu0 0.0
  %4504 = vmatpush2.msra.mxu0 0.0
  %4505 = vmatprep.subr.mxu0 0.0
  %4506 = vmatpush2.msra.mxu0 0.0
  %4507 = vmatprep.subr.mxu0 0.0
  %4508 = vmatpush2.msra.mxu0 0.0
  %4509 = vmatprep.subr.mxu0 0.0
  %4510 = vmatpush2.msra.mxu0 0.0
  %4511 = vmatprep.subr.mxu0 0.0
  %4512 = vmatpush2.msra.mxu0 0.0
  %4513 = vmatprep.subr.mxu0 0.0
  %4514 = vmatpush2.msra.mxu0 0.0
  %4515 = vmatprep.subr.mxu0 0.0
  %4516 = vmatpush2.msra.mxu0 0.0
  %4517 = vmatprep.subr.mxu0 0.0
  %4518 = vmatpush2.msra.mxu0 0.0
  %4519 = vmatprep.subr.mxu0 0.0
  %4520 = vmatpush2.msra.mxu0 0.0
  %4521 = vmatprep.mubr.f32.mxu0 0.0
  %4522 = vmatmul.mubr.f32.gmra.mxu0 %v4455
  %v4523 = vpop.f32.mrf.mxu0
  %v4524 = vadd.f32 %v4451, %v4523
  %v4525 = vpop.f32.mrf.mxu0
  %4526 = vdwg.mxu0
  %v4527 = vld [vmem:[%s11] sm:$0x1]
  %v4529 = vlaneseq
  %v4530 = vshrl.u32 %v4529, 7
  %v4531 = vsub.s32 0, %v4530
  %v4532 = vrot.slane %v4527, %v4531
  %v4534 = vadd.f32 %v4524, %v4532
  %v4535 = vld [vmem:[%s10] sm:$0xff]
  %v4536 = vld [vmem:[%s10 + $0x8] sm:$0xff]
  %v4537 = vld [vmem:[%s10 + $0x10] sm:$0xff]
  %v4538 = vld [vmem:[%s10 + $0x18] sm:$0xff]
  %v4539 = vld [vmem:[%s12] sm:$0x1]
  %v4541 = vlaneseq
  %v4542 = vshrl.u32 %v4541, 7
  %v4543 = vsub.s32 0, %v4542
  %v4544 = vrot.slane %v4539, %v4543
  %4546 = vmatprep.subr.mxu0 0.0
  %4547 = vmatpush1.msra.mxu0 0.0
  %4548 = vmatprep.subr.mxu0 0.0
  %4549 = vmatpush1.msra.mxu0 0.0
  %4550 = vmatprep.subr.mxu0 0.0
  %4551 = vmatpush1.msra.mxu0 0.0
  %4552 = vmatprep.subr.mxu0 0.0
  %4553 = vmatpush1.msra.mxu0 0.0
  %4554 = vmatprep.subr.mxu0 0.0
  %4555 = vmatpush1.msra.mxu0 0.0
  %4556 = vmatprep.subr.mxu0 0.0
  %4557 = vmatpush1.msra.mxu0 0.0
  %4558 = vmatprep.subr.mxu0 0.0
  %4559 = vmatpush1.msra.mxu0 0.0
  %4560 = vmatprep.subr.mxu0 0.0
  %4561 = vmatpush1.msra.mxu0 0.0
  %4562 = vmatprep.subr.mxu0 0.0
  %4563 = vmatpush1.msra.mxu0 0.0
  %4564 = vmatprep.subr.mxu0 0.0
  %4565 = vmatpush1.msra.mxu0 0.0
  %4566 = vmatprep.subr.mxu0 0.0
  %4567 = vmatpush1.msra.mxu0 0.0
  %4568 = vmatprep.subr.mxu0 0.0
  %4569 = vmatpush1.msra.mxu0 0.0
  %4570 = vmatprep.subr.mxu0 0.0
  %4571 = vmatpush1.msra.mxu0 %v4538
  %4572 = vmatprep.subr.mxu0 0.0
  %4573 = vmatpush1.msra.mxu0 %v4537
  %4574 = vmatprep.subr.mxu0 0.0
  %4575 = vmatpush1.msra.mxu0 %v4536
  %4576 = vmatprep.subr.mxu0 0.0
  %4577 = vmatpush1.msra.mxu0 %v4535
  %4578 = vmatprep.subr.mxu0 0.0
  %4579 = vmatpush2.msra.mxu0 0.0
  %4580 = vmatprep.subr.mxu0 0.0
  %4581 = vmatpush2.msra.mxu0 0.0
  %4582 = vmatprep.subr.mxu0 0.0
  %4583 = vmatpush2.msra.mxu0 0.0
  %4584 = vmatprep.subr.mxu0 0.0
  %4585 = vmatpush2.msra.mxu0 0.0
  %4586 = vmatprep.subr.mxu0 0.0
  %4587 = vmatpush2.msra.mxu0 0.0
  %4588 = vmatprep.subr.mxu0 0.0
  %4589 = vmatpush2.msra.mxu0 0.0
  %4590 = vmatprep.subr.mxu0 0.0
  %4591 = vmatpush2.msra.mxu0 0.0
  %4592 = vmatprep.subr.mxu0 0.0
  %4593 = vmatpush2.msra.mxu0 0.0
  %4594 = vmatprep.subr.mxu0 0.0
  %4595 = vmatpush2.msra.mxu0 0.0
  %4596 = vmatprep.subr.mxu0 0.0
  %4597 = vmatpush2.msra.mxu0 0.0
  %4598 = vmatprep.subr.mxu0 0.0
  %4599 = vmatpush2.msra.mxu0 0.0
  %4600 = vmatprep.subr.mxu0 0.0
  %4601 = vmatpush2.msra.mxu0 0.0
  %4602 = vmatprep.subr.mxu0 0.0
  %4603 = vmatpush2.msra.mxu0 0.0
  %4604 = vmatprep.subr.mxu0 0.0
  %4605 = vmatpush2.msra.mxu0 0.0
  %4606 = vmatprep.subr.mxu0 0.0
  %4607 = vmatpush2.msra.mxu0 0.0
  %4608 = vmatprep.subr.mxu0 0.0
  %4609 = vmatpush2.msra.mxu0 0.0
  %4610 = vmatprep.mubr.f32.mxu0 0.0
  %4611 = vmatmul.mubr.f32.gmra.mxu0 %v3910
  %v4612 = vpop.f32.mrf.mxu0
  %v4613 = vadd.f32 %v4544, %v4612
  %v4614 = vpop.f32.mrf.mxu0
  %4615 = vdwg.mxu0
  %v4616 = vadd.f32 %v4534, %v4613
  %v4617 = vxor.u32 %v4616, 2147483648
  %v4618 = vmul.f32 %v4617, 1.442695
  %v4619 = vpow.pop %v4618
  %v4620 = vadd.f32 %v4619, 1.0
  %v4621 = vrcp.pop %v4620
  %v4622 = vmul.f32 1.0, %v4621
  %4624 = vrot.lane.b32.xlu0 %v4613, 64
  %v4625 = vpop.permute.xlu0 %4624
  %v4627 = vmul.f32 %v4622, %v4625
  %4629 = vrot.lane.b32.xlu0 %v4627, 64
  %v4630 = vpop.permute.xlu0 %4629
  %v4632 = vadd.f32 %v4534, %v4630
  %v4633 = vtanh.pop %v4632
  %v4634 = vsub.f32 1.0, %v4622
  %4636 = vrot.lane.b32.xlu0 %v4633, 96
  %v4637 = vpop.permute.xlu0 %4636
  %v4639 = vmul.f32 %v4634, %v4637
  %v4640 = vmul.f32 %v4622, %v3824
  %v4641 = vadd.f32 %v4639, %v4640
  %v4642 = vld [vmem:[%s13] sm:$0xff]
  %v4643 = vld [vmem:[%s13 + $0x8] sm:$0xff]
  %v4644 = vld [vmem:[%s13 + $0x10] sm:$0xff]
  %v4645 = vld [vmem:[%s13 + $0x18] sm:$0xff]
  %v4646 = vld [vmem:[%s14] sm:$0xff]
  %v4647 = vld [vmem:[%s14 + $0x8] sm:$0xff]
  %v4648 = vld [vmem:[%s14 + $0x10] sm:$0xff]
  %v4649 = vld [vmem:[%s14 + $0x18] sm:$0xff]
  %v4650 = vld [vmem:[%s14 + $0x20] sm:$0xff]
  %v4651 = vld [vmem:[%s14 + $0x28] sm:$0xff]
  %v4652 = vld [vmem:[%s14 + $0x30] sm:$0xff]
  %v4653 = vld [vmem:[%s14 + $0x38] sm:$0xff]
  %4654 = vmatprep.subr.mxu0 0.0
  %4655 = vmatpush1.msra.mxu0 0.0
  %4656 = vmatprep.subr.mxu0 0.0
  %4657 = vmatpush1.msra.mxu0 0.0
  %4658 = vmatprep.subr.mxu0 0.0
  %4659 = vmatpush1.msra.mxu0 0.0
  %4660 = vmatprep.subr.mxu0 0.0
  %4661 = vmatpush1.msra.mxu0 0.0
  %4662 = vmatprep.subr.mxu0 0.0
  %4663 = vmatpush1.msra.mxu0 0.0
  %4664 = vmatprep.subr.mxu0 0.0
  %4665 = vmatpush1.msra.mxu0 0.0
  %4666 = vmatprep.subr.mxu0 0.0
  %4667 = vmatpush1.msra.mxu0 0.0
  %4668 = vmatprep.subr.mxu0 0.0
  %4669 = vmatpush1.msra.mxu0 0.0
  %4670 = vmatprep.subr.mxu0 0.0
  %4671 = vmatpush1.msra.mxu0 %v4653
  %4672 = vmatprep.subr.mxu0 0.0
  %4673 = vmatpush1.msra.mxu0 %v4652
  %4674 = vmatprep.subr.mxu0 0.0
  %4675 = vmatpush1.msra.mxu0 %v4651
  %4676 = vmatprep.subr.mxu0 0.0
  %4677 = vmatpush1.msra.mxu0 %v4650
  %4678 = vmatprep.subr.mxu0 0.0
  %4679 = vmatpush1.msra.mxu0 %v4649
  %4680 = vmatprep.subr.mxu0 0.0
  %4681 = vmatpush1.msra.mxu0 %v4648
  %4682 = vmatprep.subr.mxu0 0.0
  %4683 = vmatpush1.msra.mxu0 %v4647
  %4684 = vmatprep.subr.mxu0 0.0
  %4685 = vmatpush1.msra.mxu0 %v4646
  %4686 = vmatprep.subr.mxu0 0.0
  %4687 = vmatpush2.msra.mxu0 0.0
  %4688 = vmatprep.subr.mxu0 0.0
  %4689 = vmatpush2.msra.mxu0 0.0
  %4690 = vmatprep.subr.mxu0 0.0
  %4691 = vmatpush2.msra.mxu0 0.0
  %4692 = vmatprep.subr.mxu0 0.0
  %4693 = vmatpush2.msra.mxu0 0.0
  %4694 = vmatprep.subr.mxu0 0.0
  %4695 = vmatpush2.msra.mxu0 0.0
  %4696 = vmatprep.subr.mxu0 0.0
  %4697 = vmatpush2.msra.mxu0 0.0
  %4698 = vmatprep.subr.mxu0 0.0
  %4699 = vmatpush2.msra.mxu0 0.0
  %4700 = vmatprep.subr.mxu0 0.0
  %4701 = vmatpush2.msra.mxu0 0.0
  %4702 = vmatprep.subr.mxu0 0.0
  %4703 = vmatpush2.msra.mxu0 0.0
  %4704 = vmatprep.subr.mxu0 0.0
  %4705 = vmatpush2.msra.mxu0 0.0
  %4706 = vmatprep.subr.mxu0 0.0
  %4707 = vmatpush2.msra.mxu0 0.0
  %4708 = vmatprep.subr.mxu0 0.0
  %4709 = vmatpush2.msra.mxu0 0.0
  %4710 = vmatprep.subr.mxu0 0.0
  %4711 = vmatpush2.msra.mxu0 0.0
  %4712 = vmatprep.subr.mxu0 0.0
  %4713 = vmatpush2.msra.mxu0 0.0
  %4714 = vmatprep.subr.mxu0 0.0
  %4715 = vmatpush2.msra.mxu0 0.0
  %4716 = vmatprep.subr.mxu0 0.0
  %4717 = vmatpush2.msra.mxu0 0.0
  %4718 = vmatprep.mubr.f32.mxu0 0.0
  %4719 = vmatmul.mubr.f32.gmra.mxu0 %v4382
  %v4720 = vpop.f32.mrf.mxu0
  %v4721 = vadd.f32 0.0, %v4720
  %v4722 = vpop.f32.mrf.mxu0
  %4723 = vdwg.mxu0
  %4725 = vrot.lane.b32.xlu0 %v4641, 96
  %v4726 = vpop.permute.xlu0 %4725
  %v4727 = vsel %vm146, %v4726, 0
  %4729 = vmatprep.subr.mxu0 0.0
  %4730 = vmatpush1.msra.mxu0 0.0
  %4731 = vmatprep.subr.mxu0 0.0
  %4732 = vmatpush1.msra.mxu0 0.0
  %4733 = vmatprep.subr.mxu0 0.0
  %4734 = vmatpush1.msra.mxu0 0.0
  %4735 = vmatprep.subr.mxu0 0.0
  %4736 = vmatpush1.msra.mxu0 0.0
  %4737 = vmatprep.subr.mxu0 0.0
  %4738 = vmatpush1.msra.mxu0 0.0
  %4739 = vmatprep.subr.mxu0 0.0
  %4740 = vmatpush1.msra.mxu0 0.0
  %4741 = vmatprep.subr.mxu0 0.0
  %4742 = vmatpush1.msra.mxu0 0.0
  %4743 = vmatprep.subr.mxu0 0.0
  %4744 = vmatpush1.msra.mxu0 0.0
  %4745 = vmatprep.subr.mxu0 0.0
  %4746 = vmatpush1.msra.mxu0 0.0
  %4747 = vmatprep.subr.mxu0 0.0
  %4748 = vmatpush1.msra.mxu0 0.0
  %4749 = vmatprep.subr.mxu0 0.0
  %4750 = vmatpush1.msra.mxu0 0.0
  %4751 = vmatprep.subr.mxu0 0.0
  %4752 = vmatpush1.msra.mxu0 0.0
  %4753 = vmatprep.subr.mxu0 0.0
  %4754 = vmatpush1.msra.mxu0 %v4645
  %4755 = vmatprep.subr.mxu0 0.0
  %4756 = vmatpush1.msra.mxu0 %v4644
  %4757 = vmatprep.subr.mxu0 0.0
  %4758 = vmatpush1.msra.mxu0 %v4643
  %4759 = vmatprep.subr.mxu0 0.0
  %4760 = vmatpush1.msra.mxu0 %v4642
  %4761 = vmatprep.subr.mxu0 0.0
  %4762 = vmatpush2.msra.mxu0 0.0
  %4763 = vmatprep.subr.mxu0 0.0
  %4764 = vmatpush2.msra.mxu0 0.0
  %4765 = vmatprep.subr.mxu0 0.0
  %4766 = vmatpush2.msra.mxu0 0.0
  %4767 = vmatprep.subr.mxu0 0.0
  %4768 = vmatpush2.msra.mxu0 0.0
  %4769 = vmatprep.subr.mxu0 0.0
  %4770 = vmatpush2.msra.mxu0 0.0
  %4771 = vmatprep.subr.mxu0 0.0
  %4772 = vmatpush2.msra.mxu0 0.0
  %4773 = vmatprep.subr.mxu0 0.0
  %4774 = vmatpush2.msra.mxu0 0.0
  %4775 = vmatprep.subr.mxu0 0.0
  %4776 = vmatpush2.msra.mxu0 0.0
  %4777 = vmatprep.subr.mxu0 0.0
  %4778 = vmatpush2.msra.mxu0 0.0
  %4779 = vmatprep.subr.mxu0 0.0
  %4780 = vmatpush2.msra.mxu0 0.0
  %4781 = vmatprep.subr.mxu0 0.0
  %4782 = vmatpush2.msra.mxu0 0.0
  %4783 = vmatprep.subr.mxu0 0.0
  %4784 = vmatpush2.msra.mxu0 0.0
  %4785 = vmatprep.subr.mxu0 0.0
  %4786 = vmatpush2.msra.mxu0 0.0
  %4787 = vmatprep.subr.mxu0 0.0
  %4788 = vmatpush2.msra.mxu0 0.0
  %4789 = vmatprep.subr.mxu0 0.0
  %4790 = vmatpush2.msra.mxu0 0.0
  %4791 = vmatprep.subr.mxu0 0.0
  %4792 = vmatpush2.msra.mxu0 0.0
  %4793 = vmatprep.mubr.f32.mxu0 0.0
  %4794 = vmatmul.mubr.f32.gmra.mxu0 %v4727
  %v4795 = vpop.f32.mrf.mxu0
  %v4796 = vadd.f32 %v4721, %v4795
  %v4797 = vpop.f32.mrf.mxu0
  %4798 = vdwg.mxu0
  %v4799 = vld [vmem:[%s15] sm:$0xff]
  %v4800 = vld [vmem:[%s15 + $0x8] sm:$0xff]
  %v4801 = vld [vmem:[%s15 + $0x10] sm:$0xff]
  %v4802 = vld [vmem:[%s15 + $0x18] sm:$0xff]
  %4803 = vmatprep.subr.mxu0 0.0
  %4804 = vmatpush1.msra.mxu0 0.0
  %4805 = vmatprep.subr.mxu0 0.0
  %4806 = vmatpush1.msra.mxu0 0.0
  %4807 = vmatprep.subr.mxu0 0.0
  %4808 = vmatpush1.msra.mxu0 0.0
  %4809 = vmatprep.subr.mxu0 0.0
  %4810 = vmatpush1.msra.mxu0 0.0
  %4811 = vmatprep.subr.mxu0 0.0
  %4812 = vmatpush1.msra.mxu0 0.0
  %4813 = vmatprep.subr.mxu0 0.0
  %4814 = vmatpush1.msra.mxu0 0.0
  %4815 = vmatprep.subr.mxu0 0.0
  %4816 = vmatpush1.msra.mxu0 0.0
  %4817 = vmatprep.subr.mxu0 0.0
  %4818 = vmatpush1.msra.mxu0 0.0
  %4819 = vmatprep.subr.mxu0 0.0
  %4820 = vmatpush1.msra.mxu0 0.0
  %4821 = vmatprep.subr.mxu0 0.0
  %4822 = vmatpush1.msra.mxu0 0.0
  %4823 = vmatprep.subr.mxu0 0.0
  %4824 = vmatpush1.msra.mxu0 0.0
  %4825 = vmatprep.subr.mxu0 0.0
  %4826 = vmatpush1.msra.mxu0 0.0
  %4827 = vmatprep.subr.mxu0 0.0
  %4828 = vmatpush1.msra.mxu0 %v4802
  %4829 = vmatprep.subr.mxu0 0.0
  %4830 = vmatpush1.msra.mxu0 %v4801
  %4831 = vmatprep.subr.mxu0 0.0
  %4832 = vmatpush1.msra.mxu0 %v4800
  %4833 = vmatprep.subr.mxu0 0.0
  %4834 = vmatpush1.msra.mxu0 %v4799
  %4835 = vmatprep.subr.mxu0 0.0
  %4836 = vmatpush2.msra.mxu0 0.0
  %4837 = vmatprep.subr.mxu0 0.0
  %4838 = vmatpush2.msra.mxu0 0.0
  %4839 = vmatprep.subr.mxu0 0.0
  %4840 = vmatpush2.msra.mxu0 0.0
  %4841 = vmatprep.subr.mxu0 0.0
  %4842 = vmatpush2.msra.mxu0 0.0
  %4843 = vmatprep.subr.mxu0 0.0
  %4844 = vmatpush2.msra.mxu0 0.0
  %4845 = vmatprep.subr.mxu0 0.0
  %4846 = vmatpush2.msra.mxu0 0.0
  %4847 = vmatprep.subr.mxu0 0.0
  %4848 = vmatpush2.msra.mxu0 0.0
  %4849 = vmatprep.subr.mxu0 0.0
  %4850 = vmatpush2.msra.mxu0 0.0
  %4851 = vmatprep.subr.mxu0 0.0
  %4852 = vmatpush2.msra.mxu0 0.0
  %4853 = vmatprep.subr.mxu0 0.0
  %4854 = vmatpush2.msra.mxu0 0.0
  %4855 = vmatprep.subr.mxu0 0.0
  %4856 = vmatpush2.msra.mxu0 0.0
  %4857 = vmatprep.subr.mxu0 0.0
  %4858 = vmatpush2.msra.mxu0 0.0
  %4859 = vmatprep.subr.mxu0 0.0
  %4860 = vmatpush2.msra.mxu0 0.0
  %4861 = vmatprep.subr.mxu0 0.0
  %4862 = vmatpush2.msra.mxu0 0.0
  %4863 = vmatprep.subr.mxu0 0.0
  %4864 = vmatpush2.msra.mxu0 0.0
  %4865 = vmatprep.subr.mxu0 0.0
  %4866 = vmatpush2.msra.mxu0 0.0
  %4867 = vmatprep.mubr.f32.mxu0 0.0
  %4868 = vmatmul.mubr.f32.gmra.mxu0 %v4455
  %v4869 = vpop.f32.mrf.mxu0
  %v4870 = vadd.f32 0.0, %v4869
  %v4871 = vpop.f32.mrf.mxu0
  %4872 = vdwg.mxu0
  %v4873 = vadd.f32 %v4796, %v4870
  %v4874 = vld [vmem:[%s16] sm:$0x1]
  %v4876 = vlaneseq
  %v4877 = vshrl.u32 %v4876, 7
  %v4878 = vsub.s32 0, %v4877
  %v4879 = vrot.slane %v4874, %v4878
  %v4881 = vadd.f32 %v4873, %v4879
  %s4882 = scalar_lea.vmem %s17, 40
  %4883 = vst.msk [vmem:[%s4882] sm:$0xff] %vm792, %v4881
  %v4884 = vsel %vm792, %v4881, -inf
  %4885 = vmax.xlane.f32.xlu0 %v4884
  %v4886 = vpop.xlane.xlu0 %4885
  %vm4887 = vcmp.eq.f32.partialorder %v4881, %v4886
  %v4888 = vsel %vm4887, %v796, 16.0
  %v4889 = vsel %vm792, %v4888, inf
  %4890 = vmin.xlane.f32.xlu0 %v4889
  %v4891 = vpop.xlane.xlu0 %4890
  %v4892 = vcvt.f32.s32.to.zero.pseudo %v4891
  %vm4893 = vcmp.eq.s32.totalorder %v795, %v4892
  %v4894 = vsel %vm4893, 1, 0
  %v4895 = vcvt.s32.f32 %v4894
  %v4896 = vld [vmem:[%s3] sm:$0xff]
  %v4897 = vld [vmem:[%s3 + $0x8] sm:$0xff]
  %v4899 = vsel %vm792, %v4895, 0
  %4901 = vmatprep.subr.mxu0 0.0
  %4902 = vmatpush1.msra.mxu0 0.0
  %4903 = vmatprep.subr.mxu0 0.0
  %4904 = vmatpush1.msra.mxu0 0.0
  %4905 = vmatprep.subr.mxu0 0.0
  %4906 = vmatpush1.msra.mxu0 0.0
  %4907 = vmatprep.subr.mxu0 0.0
  %4908 = vmatpush1.msra.mxu0 0.0
  %4909 = vmatprep.subr.mxu0 0.0
  %4910 = vmatpush1.msra.mxu0 0.0
  %4911 = vmatprep.subr.mxu0 0.0
  %4912 = vmatpush1.msra.mxu0 0.0
  %4913 = vmatprep.subr.mxu0 0.0
  %4914 = vmatpush1.msra.mxu0 0.0
  %4915 = vmatprep.subr.mxu0 0.0
  %4916 = vmatpush1.msra.mxu0 0.0
  %4917 = vmatprep.subr.mxu0 0.0
  %4918 = vmatpush1.msra.mxu0 0.0
  %4919 = vmatprep.subr.mxu0 0.0
  %4920 = vmatpush1.msra.mxu0 0.0
  %4921 = vmatprep.subr.mxu0 0.0
  %4922 = vmatpush1.msra.mxu0 0.0
  %4923 = vmatprep.subr.mxu0 0.0
  %4924 = vmatpush1.msra.mxu0 0.0
  %4925 = vmatprep.subr.mxu0 0.0
  %4926 = vmatpush1.msra.mxu0 0.0
  %4927 = vmatprep.subr.mxu0 0.0
  %4928 = vmatpush1.msra.mxu0 0.0
  %4929 = vmatprep.subr.mxu0 0.0
  %4930 = vmatpush1.msra.mxu0 %v4897
  %4931 = vmatprep.subr.mxu0 0.0
  %4932 = vmatpush1.msra.mxu0 %v4896
  %4933 = vmatprep.subr.mxu0 0.0
  %4934 = vmatpush2.msra.mxu0 0.0
  %4935 = vmatprep.subr.mxu0 0.0
  %4936 = vmatpush2.msra.mxu0 0.0
  %4937 = vmatprep.subr.mxu0 0.0
  %4938 = vmatpush2.msra.mxu0 0.0
  %4939 = vmatprep.subr.mxu0 0.0
  %4940 = vmatpush2.msra.mxu0 0.0
  %4941 = vmatprep.subr.mxu0 0.0
  %4942 = vmatpush2.msra.mxu0 0.0
  %4943 = vmatprep.subr.mxu0 0.0
  %4944 = vmatpush2.msra.mxu0 0.0
  %4945 = vmatprep.subr.mxu0 0.0
  %4946 = vmatpush2.msra.mxu0 0.0
  %4947 = vmatprep.subr.mxu0 0.0
  %4948 = vmatpush2.msra.mxu0 0.0
  %4949 = vmatprep.subr.mxu0 0.0
  %4950 = vmatpush2.msra.mxu0 0.0
  %4951 = vmatprep.subr.mxu0 0.0
  %4952 = vmatpush2.msra.mxu0 0.0
  %4953 = vmatprep.subr.mxu0 0.0
  %4954 = vmatpush2.msra.mxu0 0.0
  %4955 = vmatprep.subr.mxu0 0.0
  %4956 = vmatpush2.msra.mxu0 0.0
  %4957 = vmatprep.subr.mxu0 0.0
  %4958 = vmatpush2.msra.mxu0 0.0
  %4959 = vmatprep.subr.mxu0 0.0
  %4960 = vmatpush2.msra.mxu0 0.0
  %4961 = vmatprep.subr.mxu0 0.0
  %4962 = vmatpush2.msra.mxu0 0.0
  %4963 = vmatprep.subr.mxu0 0.0
  %4964 = vmatpush2.msra.mxu0 0.0
  %4965 = vmatprep.mubr.f32.mxu0 0.0
  %4966 = vmatmul.mubr.f32.gmra.mxu0 %v4899
  %v4967 = vpop.f32.mrf.mxu0
  %v4968 = vadd.f32 0.0, %v4967
  %v4969 = vpop.f32.mrf.mxu0
  %4970 = vdwg.mxu0
  %v4971 = vld [vmem:[%s4] sm:$0xff]
  %v4972 = vld [vmem:[%s4 + $0x8] sm:$0xff]
  %v4973 = vld [vmem:[%s4 + $0x10] sm:$0xff]
  %v4974 = vld [vmem:[%s4 + $0x18] sm:$0xff]
  %4975 = vmatprep.subr.mxu0 0.0
  %4976 = vmatpush1.msra.mxu0 0.0
  %4977 = vmatprep.subr.mxu0 0.0
  %4978 = vmatpush1.msra.mxu0 0.0
  %4979 = vmatprep.subr.mxu0 0.0
  %4980 = vmatpush1.msra.mxu0 0.0
  %4981 = vmatprep.subr.mxu0 0.0
  %4982 = vmatpush1.msra.mxu0 0.0
  %4983 = vmatprep.subr.mxu0 0.0
  %4984 = vmatpush1.msra.mxu0 0.0
  %4985 = vmatprep.subr.mxu0 0.0
  %4986 = vmatpush1.msra.mxu0 0.0
  %4987 = vmatprep.subr.mxu0 0.0
  %4988 = vmatpush1.msra.mxu0 0.0
  %4989 = vmatprep.subr.mxu0 0.0
  %4990 = vmatpush1.msra.mxu0 0.0
  %4991 = vmatprep.subr.mxu0 0.0
  %4992 = vmatpush1.msra.mxu0 0.0
  %4993 = vmatprep.subr.mxu0 0.0
  %4994 = vmatpush1.msra.mxu0 0.0
  %4995 = vmatprep.subr.mxu0 0.0
  %4996 = vmatpush1.msra.mxu0 0.0
  %4997 = vmatprep.subr.mxu0 0.0
  %4998 = vmatpush1.msra.mxu0 0.0
  %4999 = vmatprep.subr.mxu0 0.0
  %5000 = vmatpush1.msra.mxu0 %v4974
  %5001 = vmatprep.subr.mxu0 0.0
  %5002 = vmatpush1.msra.mxu0 %v4973
  %5003 = vmatprep.subr.mxu0 0.0
  %5004 = vmatpush1.msra.mxu0 %v4972
  %5005 = vmatprep.subr.mxu0 0.0
  %5006 = vmatpush1.msra.mxu0 %v4971
  %5007 = vmatprep.subr.mxu0 0.0
  %5008 = vmatpush2.msra.mxu0 0.0
  %5009 = vmatprep.subr.mxu0 0.0
  %5010 = vmatpush2.msra.mxu0 0.0
  %5011 = vmatprep.subr.mxu0 0.0
  %5012 = vmatpush2.msra.mxu0 0.0
  %5013 = vmatprep.subr.mxu0 0.0
  %5014 = vmatpush2.msra.mxu0 0.0
  %5015 = vmatprep.subr.mxu0 0.0
  %5016 = vmatpush2.msra.mxu0 0.0
  %5017 = vmatprep.subr.mxu0 0.0
  %5018 = vmatpush2.msra.mxu0 0.0
  %5019 = vmatprep.subr.mxu0 0.0
  %5020 = vmatpush2.msra.mxu0 0.0
  %5021 = vmatprep.subr.mxu0 0.0
  %5022 = vmatpush2.msra.mxu0 0.0
  %5023 = vmatprep.subr.mxu0 0.0
  %5024 = vmatpush2.msra.mxu0 0.0
  %5025 = vmatprep.subr.mxu0 0.0
  %5026 = vmatpush2.msra.mxu0 0.0
  %5027 = vmatprep.subr.mxu0 0.0
  %5028 = vmatpush2.msra.mxu0 0.0
  %5029 = vmatprep.subr.mxu0 0.0
  %5030 = vmatpush2.msra.mxu0 0.0
  %5031 = vmatprep.subr.mxu0 0.0
  %5032 = vmatpush2.msra.mxu0 0.0
  %5033 = vmatprep.subr.mxu0 0.0
  %5034 = vmatpush2.msra.mxu0 0.0
  %5035 = vmatprep.subr.mxu0 0.0
  %5036 = vmatpush2.msra.mxu0 0.0
  %5037 = vmatprep.subr.mxu0 0.0
  %5038 = vmatpush2.msra.mxu0 0.0
  %5039 = vmatprep.mubr.f32.mxu0 0.0
  %5040 = vmatmul.mubr.f32.gmra.mxu0 %v4727
  %v5041 = vpop.f32.mrf.mxu0
  %v5042 = vadd.f32 0.0, %v5041
  %v5043 = vpop.f32.mrf.mxu0
  %5044 = vdwg.mxu0
  %v5045 = vld [vmem:[#allocation2] sm:$0xff]
  %v5046 = vld [vmem:[#allocation2 + $0x8] sm:$0xff]
  %v5047 = vld [vmem:[#allocation2 + $0x10] sm:$0xff]
  %v5048 = vld [vmem:[#allocation2 + $0x18] sm:$0xff]
  %v5049 = vld [vmem:[#allocation2 + $0x20] sm:$0xff]
  %v5050 = vld [vmem:[#allocation2 + $0x28] sm:$0xff]
  %v5051 = vld [vmem:[#allocation2 + $0x30] sm:$0xff]
  %v5052 = vld [vmem:[#allocation2 + $0x38] sm:$0xff]
  %v5053 = vadd.f32 %v5045, %v5042
  %v5054 = vadd.f32 %v5046, %v5042
  %v5055 = vadd.f32 %v5047, %v5042
  %v5056 = vadd.f32 %v5048, %v5042
  %v5057 = vadd.f32 %v5049, %v5042
  %v5058 = vadd.f32 %v5050, %v5042
  %v5059 = vadd.f32 %v5051, %v5042
  %v5060 = vadd.f32 %v5052, %v5042
  %v5061 = vtanh.pop %v5053
  %v5062 = vtanh.pop %v5054
  %v5063 = vtanh.pop %v5055
  %v5064 = vtanh.pop %v5056
  %v5065 = vtanh.pop %v5057
  %v5066 = vtanh.pop %v5058
  %v5067 = vtanh.pop %v5059
  %v5068 = vtanh.pop %v5060
  %v5069 = vld [vmem:[%s7] sm:$0x1]
  %v5071 = vlaneseq
  %v5072 = vshrl.u32 %v5071, 7
  %v5073 = vsub.s32 0, %v5072
  %v5074 = vrot.slane %v5069, %v5073
  %v5076 = vmul.f32 %v5061, %v5074
  %v5077 = vmul.f32 %v5062, %v5074
  %v5078 = vmul.f32 %v5063, %v5074
  %v5079 = vmul.f32 %v5064, %v5074
  %v5080 = vmul.f32 %v5065, %v5074
  %v5081 = vmul.f32 %v5066, %v5074
  %v5082 = vmul.f32 %v5067, %v5074
  %v5083 = vmul.f32 %v5068, %v5074
  %v5084 = vsel %vm146, %v5076, 0.0
  %5085 = vadd.xlane.f32.xlu0 %v5084
  %v5086 = vpop.xlane.xlu0 %5085
  %v5087 = vsel %vm146, %v5077, 0.0
  %5088 = vadd.xlane.f32.xlu0 %v5087
  %v5089 = vpop.xlane.xlu0 %5088
  %v5090 = vsel %vm146, %v5078, 0.0
  %5091 = vadd.xlane.f32.xlu0 %v5090
  %v5092 = vpop.xlane.xlu0 %5091
  %v5093 = vsel %vm146, %v5079, 0.0
  %5094 = vadd.xlane.f32.xlu0 %v5093
  %v5095 = vpop.xlane.xlu0 %5094
  %v5096 = vsel %vm146, %v5080, 0.0
  %5097 = vadd.xlane.f32.xlu0 %v5096
  %v5098 = vpop.xlane.xlu0 %5097
  %v5099 = vsel %vm146, %v5081, 0.0
  %5100 = vadd.xlane.f32.xlu0 %v5099
  %v5101 = vpop.xlane.xlu0 %5100
  %v5102 = vsel %vm146, %v5082, 0.0
  %5103 = vadd.xlane.f32.xlu0 %v5102
  %v5104 = vpop.xlane.xlu0 %5103
  %v5105 = vsel %vm146, %v5083, 0.0
  %5106 = vadd.xlane.f32.xlu0 %v5105
  %v5107 = vpop.xlane.xlu0 %5106
  %v5108 = vmax.f32 %v5086, %v5098
  %v5109 = vmax.f32 %v5089, %v5101
  %v5110 = vmax.f32 %v5092, %v5104
  %v5111 = vmax.f32 %v5095, %v5107
  %v5112 = vmax.f32 %v5108, %v5109
  %v5113 = vmax.f32 %v5110, %v5111
  %v5114 = vmax.f32 %v5112, %v5113
  %v5115 = vsub.f32 %v5086, %v5114
  %v5116 = vsub.f32 %v5089, %v5114
  %v5117 = vsub.f32 %v5092, %v5114
  %v5118 = vsub.f32 %v5095, %v5114
  %v5119 = vsub.f32 %v5098, %v5114
  %v5120 = vsub.f32 %v5101, %v5114
  %v5121 = vsub.f32 %v5104, %v5114
  %v5122 = vsub.f32 %v5107, %v5114
  %v5123 = vmul.f32 %v5115, 1.442695
  %v5124 = vpow.pop %v5123
  %v5125 = vmul.f32 %v5116, 1.442695
  %v5126 = vpow.pop %v5125
  %v5127 = vmul.f32 %v5117, 1.442695
  %v5128 = vpow.pop %v5127
  %v5129 = vmul.f32 %v5118, 1.442695
  %v5130 = vpow.pop %v5129
  %v5131 = vmul.f32 %v5119, 1.442695
  %v5132 = vpow.pop %v5131
  %v5133 = vmul.f32 %v5120, 1.442695
  %v5134 = vpow.pop %v5133
  %v5135 = vmul.f32 %v5121, 1.442695
  %v5136 = vpow.pop %v5135
  %v5137 = vmul.f32 %v5122, 1.442695
  %v5138 = vpow.pop %v5137
  %v5139 = vadd.f32 %v5124, %v5126
  %v5140 = vadd.f32 %v5139, %v5128
  %v5141 = vadd.f32 %v5140, %v5130
  %v5142 = vadd.f32 %v5141, %v5132
  %v5143 = vadd.f32 %v5142, %v5134
  %v5144 = vadd.f32 %v5143, %v5136
  %v5145 = vadd.f32 %v5144, %v5138
  %v5146 = vrcp.pop %v5145
  %v5147 = vmul.f32 %v5124, %v5146
  %v5148 = vmul.f32 %v5126, %v5146
  %v5149 = vmul.f32 %v5128, %v5146
  %v5150 = vmul.f32 %v5130, %v5146
  %v5151 = vmul.f32 %v5132, %v5146
  %v5152 = vmul.f32 %v5134, %v5146
  %v5153 = vmul.f32 %v5136, %v5146
  %v5154 = vmul.f32 %v5138, %v5146
  %v5155 = vld [vmem:[%s2] sm:$0xff]
  %v5156 = vld [vmem:[%s2 + $0x8] sm:$0xff]
  %v5157 = vld [vmem:[%s2 + $0x10] sm:$0xff]
  %v5158 = vld [vmem:[%s2 + $0x18] sm:$0xff]
  %v5159 = vld [vmem:[%s2 + $0x20] sm:$0xff]
  %v5160 = vld [vmem:[%s2 + $0x28] sm:$0xff]
  %v5161 = vld [vmem:[%s2 + $0x30] sm:$0xff]
  %v5162 = vld [vmem:[%s2 + $0x38] sm:$0xff]
  %v5163 = vmul.f32 %v5147, %v5155
  %v5164 = vmul.f32 %v5148, %v5156
  %v5165 = vmul.f32 %v5149, %v5157
  %v5166 = vmul.f32 %v5150, %v5158
  %v5167 = vmul.f32 %v5151, %v5159
  %v5168 = vmul.f32 %v5152, %v5160
  %v5169 = vmul.f32 %v5153, %v5161
  %v5170 = vmul.f32 %v5154, %v5162
  %v5171 = vsel %vm72, %v5163, 0.0
  %v5172 = vsel %vm72, %v5164, 0.0
  %v5173 = vadd.f32 %v5171, %v5172
  %v5174 = vsel %vm72, %v5165, 0.0
  %v5175 = vadd.f32 %v5173, %v5174
  %v5176 = vsel %vm72, %v5166, 0.0
  %v5177 = vadd.f32 %v5175, %v5176
  %v5178 = vsel %vm72, %v5167, 0.0
  %v5179 = vadd.f32 %v5177, %v5178
  %v5180 = vsel %vm72, %v5168, 0.0
  %v5181 = vadd.f32 %v5179, %v5180
  %v5182 = vsel %vm72, %v5169, 0.0
  %v5183 = vadd.f32 %v5181, %v5182
  %v5184 = vsel %vm72, %v5170, 0.0
  %v5185 = vadd.f32 %v5183, %v5184
  %v5186 = vld [vmem:[%s8] sm:$0xff]
  %v5187 = vld [vmem:[%s8 + $0x8] sm:$0xff]
  %v5188 = vld [vmem:[%s8 + $0x10] sm:$0xff]
  %v5189 = vld [vmem:[%s8 + $0x18] sm:$0xff]
  %v5190 = vld [vmem:[%s9] sm:$0xff]
  %v5191 = vld [vmem:[%s9 + $0x8] sm:$0xff]
  %v5192 = vld [vmem:[%s9 + $0x10] sm:$0xff]
  %v5193 = vld [vmem:[%s9 + $0x18] sm:$0xff]
  %v5194 = vld [vmem:[%s9 + $0x20] sm:$0xff]
  %v5195 = vld [vmem:[%s9 + $0x28] sm:$0xff]
  %v5196 = vld [vmem:[%s9 + $0x30] sm:$0xff]
  %v5197 = vld [vmem:[%s9 + $0x38] sm:$0xff]
  %v5199 = vsel %vm72, %v5185, 0
  %5201 = vmatprep.subr.mxu0 0.0
  %5202 = vmatpush1.msra.mxu0 0.0
  %5203 = vmatprep.subr.mxu0 0.0
  %5204 = vmatpush1.msra.mxu0 0.0
  %5205 = vmatprep.subr.mxu0 0.0
  %5206 = vmatpush1.msra.mxu0 0.0
  %5207 = vmatprep.subr.mxu0 0.0
  %5208 = vmatpush1.msra.mxu0 0.0
  %5209 = vmatprep.subr.mxu0 0.0
  %5210 = vmatpush1.msra.mxu0 0.0
  %5211 = vmatprep.subr.mxu0 0.0
  %5212 = vmatpush1.msra.mxu0 0.0
  %5213 = vmatprep.subr.mxu0 0.0
  %5214 = vmatpush1.msra.mxu0 0.0
  %5215 = vmatprep.subr.mxu0 0.0
  %5216 = vmatpush1.msra.mxu0 0.0
  %5217 = vmatprep.subr.mxu0 0.0
  %5218 = vmatpush1.msra.mxu0 %v5197
  %5219 = vmatprep.subr.mxu0 0.0
  %5220 = vmatpush1.msra.mxu0 %v5196
  %5221 = vmatprep.subr.mxu0 0.0
  %5222 = vmatpush1.msra.mxu0 %v5195
  %5223 = vmatprep.subr.mxu0 0.0
  %5224 = vmatpush1.msra.mxu0 %v5194
  %5225 = vmatprep.subr.mxu0 0.0
  %5226 = vmatpush1.msra.mxu0 %v5193
  %5227 = vmatprep.subr.mxu0 0.0
  %5228 = vmatpush1.msra.mxu0 %v5192
  %5229 = vmatprep.subr.mxu0 0.0
  %5230 = vmatpush1.msra.mxu0 %v5191
  %5231 = vmatprep.subr.mxu0 0.0
  %5232 = vmatpush1.msra.mxu0 %v5190
  %5233 = vmatprep.subr.mxu0 0.0
  %5234 = vmatpush2.msra.mxu0 0.0
  %5235 = vmatprep.subr.mxu0 0.0
  %5236 = vmatpush2.msra.mxu0 0.0
  %5237 = vmatprep.subr.mxu0 0.0
  %5238 = vmatpush2.msra.mxu0 0.0
  %5239 = vmatprep.subr.mxu0 0.0
  %5240 = vmatpush2.msra.mxu0 0.0
  %5241 = vmatprep.subr.mxu0 0.0
  %5242 = vmatpush2.msra.mxu0 0.0
  %5243 = vmatprep.subr.mxu0 0.0
  %5244 = vmatpush2.msra.mxu0 0.0
  %5245 = vmatprep.subr.mxu0 0.0
  %5246 = vmatpush2.msra.mxu0 0.0
  %5247 = vmatprep.subr.mxu0 0.0
  %5248 = vmatpush2.msra.mxu0 0.0
  %5249 = vmatprep.subr.mxu0 0.0
  %5250 = vmatpush2.msra.mxu0 0.0
  %5251 = vmatprep.subr.mxu0 0.0
  %5252 = vmatpush2.msra.mxu0 0.0
  %5253 = vmatprep.subr.mxu0 0.0
  %5254 = vmatpush2.msra.mxu0 0.0
  %5255 = vmatprep.subr.mxu0 0.0
  %5256 = vmatpush2.msra.mxu0 0.0
  %5257 = vmatprep.subr.mxu0 0.0
  %5258 = vmatpush2.msra.mxu0 0.0
  %5259 = vmatprep.subr.mxu0 0.0
  %5260 = vmatpush2.msra.mxu0 0.0
  %5261 = vmatprep.subr.mxu0 0.0
  %5262 = vmatpush2.msra.mxu0 0.0
  %5263 = vmatprep.subr.mxu0 0.0
  %5264 = vmatpush2.msra.mxu0 0.0
  %5265 = vmatprep.mubr.f32.mxu0 0.0
  %5266 = vmatmul.mubr.f32.gmra.mxu0 %v5199
  %v5267 = vpop.f32.mrf.mxu0
  %v5268 = vadd.f32 0.0, %v5267
  %v5269 = vpop.f32.mrf.mxu0
  %5270 = vdwg.mxu0
  %v5272 = vsel %vm146, %v4968, 0
  %5274 = vmatprep.subr.mxu0 0.0
  %5275 = vmatpush1.msra.mxu0 0.0
  %5276 = vmatprep.subr.mxu0 0.0
  %5277 = vmatpush1.msra.mxu0 0.0
  %5278 = vmatprep.subr.mxu0 0.0
  %5279 = vmatpush1.msra.mxu0 0.0
  %5280 = vmatprep.subr.mxu0 0.0
  %5281 = vmatpush1.msra.mxu0 0.0
  %5282 = vmatprep.subr.mxu0 0.0
  %5283 = vmatpush1.msra.mxu0 0.0
  %5284 = vmatprep.subr.mxu0 0.0
  %5285 = vmatpush1.msra.mxu0 0.0
  %5286 = vmatprep.subr.mxu0 0.0
  %5287 = vmatpush1.msra.mxu0 0.0
  %5288 = vmatprep.subr.mxu0 0.0
  %5289 = vmatpush1.msra.mxu0 0.0
  %5290 = vmatprep.subr.mxu0 0.0
  %5291 = vmatpush1.msra.mxu0 0.0
  %5292 = vmatprep.subr.mxu0 0.0
  %5293 = vmatpush1.msra.mxu0 0.0
  %5294 = vmatprep.subr.mxu0 0.0
  %5295 = vmatpush1.msra.mxu0 0.0
  %5296 = vmatprep.subr.mxu0 0.0
  %5297 = vmatpush1.msra.mxu0 0.0
  %5298 = vmatprep.subr.mxu0 0.0
  %5299 = vmatpush1.msra.mxu0 %v5189
  %5300 = vmatprep.subr.mxu0 0.0
  %5301 = vmatpush1.msra.mxu0 %v5188
  %5302 = vmatprep.subr.mxu0 0.0
  %5303 = vmatpush1.msra.mxu0 %v5187
  %5304 = vmatprep.subr.mxu0 0.0
  %5305 = vmatpush1.msra.mxu0 %v5186
  %5306 = vmatprep.subr.mxu0 0.0
  %5307 = vmatpush2.msra.mxu0 0.0
  %5308 = vmatprep.subr.mxu0 0.0
  %5309 = vmatpush2.msra.mxu0 0.0
  %5310 = vmatprep.subr.mxu0 0.0
  %5311 = vmatpush2.msra.mxu0 0.0
  %5312 = vmatprep.subr.mxu0 0.0
  %5313 = vmatpush2.msra.mxu0 0.0
  %5314 = vmatprep.subr.mxu0 0.0
  %5315 = vmatpush2.msra.mxu0 0.0
  %5316 = vmatprep.subr.mxu0 0.0
  %5317 = vmatpush2.msra.mxu0 0.0
  %5318 = vmatprep.subr.mxu0 0.0
  %5319 = vmatpush2.msra.mxu0 0.0
  %5320 = vmatprep.subr.mxu0 0.0
  %5321 = vmatpush2.msra.mxu0 0.0
  %5322 = vmatprep.subr.mxu0 0.0
  %5323 = vmatpush2.msra.mxu0 0.0
  %5324 = vmatprep.subr.mxu0 0.0
  %5325 = vmatpush2.msra.mxu0 0.0
  %5326 = vmatprep.subr.mxu0 0.0
  %5327 = vmatpush2.msra.mxu0 0.0
  %5328 = vmatprep.subr.mxu0 0.0
  %5329 = vmatpush2.msra.mxu0 0.0
  %5330 = vmatprep.subr.mxu0 0.0
  %5331 = vmatpush2.msra.mxu0 0.0
  %5332 = vmatprep.subr.mxu0 0.0
  %5333 = vmatpush2.msra.mxu0 0.0
  %5334 = vmatprep.subr.mxu0 0.0
  %5335 = vmatpush2.msra.mxu0 0.0
  %5336 = vmatprep.subr.mxu0 0.0
  %5337 = vmatpush2.msra.mxu0 0.0
  %5338 = vmatprep.mubr.f32.mxu0 0.0
  %5339 = vmatmul.mubr.f32.gmra.mxu0 %v5272
  %v5340 = vpop.f32.mrf.mxu0
  %v5341 = vadd.f32 %v5268, %v5340
  %v5342 = vpop.f32.mrf.mxu0
  %5343 = vdwg.mxu0
  %v5344 = vld [vmem:[%s11] sm:$0x1]
  %v5346 = vlaneseq
  %v5347 = vshrl.u32 %v5346, 7
  %v5348 = vsub.s32 0, %v5347
  %v5349 = vrot.slane %v5344, %v5348
  %v5351 = vadd.f32 %v5341, %v5349
  %v5352 = vld [vmem:[%s10] sm:$0xff]
  %v5353 = vld [vmem:[%s10 + $0x8] sm:$0xff]
  %v5354 = vld [vmem:[%s10 + $0x10] sm:$0xff]
  %v5355 = vld [vmem:[%s10 + $0x18] sm:$0xff]
  %v5356 = vld [vmem:[%s12] sm:$0x1]
  %v5358 = vlaneseq
  %v5359 = vshrl.u32 %v5358, 7
  %v5360 = vsub.s32 0, %v5359
  %v5361 = vrot.slane %v5356, %v5360
  %5363 = vmatprep.subr.mxu0 0.0
  %5364 = vmatpush1.msra.mxu0 0.0
  %5365 = vmatprep.subr.mxu0 0.0
  %5366 = vmatpush1.msra.mxu0 0.0
  %5367 = vmatprep.subr.mxu0 0.0
  %5368 = vmatpush1.msra.mxu0 0.0
  %5369 = vmatprep.subr.mxu0 0.0
  %5370 = vmatpush1.msra.mxu0 0.0
  %5371 = vmatprep.subr.mxu0 0.0
  %5372 = vmatpush1.msra.mxu0 0.0
  %5373 = vmatprep.subr.mxu0 0.0
  %5374 = vmatpush1.msra.mxu0 0.0
  %5375 = vmatprep.subr.mxu0 0.0
  %5376 = vmatpush1.msra.mxu0 0.0
  %5377 = vmatprep.subr.mxu0 0.0
  %5378 = vmatpush1.msra.mxu0 0.0
  %5379 = vmatprep.subr.mxu0 0.0
  %5380 = vmatpush1.msra.mxu0 0.0
  %5381 = vmatprep.subr.mxu0 0.0
  %5382 = vmatpush1.msra.mxu0 0.0
  %5383 = vmatprep.subr.mxu0 0.0
  %5384 = vmatpush1.msra.mxu0 0.0
  %5385 = vmatprep.subr.mxu0 0.0
  %5386 = vmatpush1.msra.mxu0 0.0
  %5387 = vmatprep.subr.mxu0 0.0
  %5388 = vmatpush1.msra.mxu0 %v5355
  %5389 = vmatprep.subr.mxu0 0.0
  %5390 = vmatpush1.msra.mxu0 %v5354
  %5391 = vmatprep.subr.mxu0 0.0
  %5392 = vmatpush1.msra.mxu0 %v5353
  %5393 = vmatprep.subr.mxu0 0.0
  %5394 = vmatpush1.msra.mxu0 %v5352
  %5395 = vmatprep.subr.mxu0 0.0
  %5396 = vmatpush2.msra.mxu0 0.0
  %5397 = vmatprep.subr.mxu0 0.0
  %5398 = vmatpush2.msra.mxu0 0.0
  %5399 = vmatprep.subr.mxu0 0.0
  %5400 = vmatpush2.msra.mxu0 0.0
  %5401 = vmatprep.subr.mxu0 0.0
  %5402 = vmatpush2.msra.mxu0 0.0
  %5403 = vmatprep.subr.mxu0 0.0
  %5404 = vmatpush2.msra.mxu0 0.0
  %5405 = vmatprep.subr.mxu0 0.0
  %5406 = vmatpush2.msra.mxu0 0.0
  %5407 = vmatprep.subr.mxu0 0.0
  %5408 = vmatpush2.msra.mxu0 0.0
  %5409 = vmatprep.subr.mxu0 0.0
  %5410 = vmatpush2.msra.mxu0 0.0
  %5411 = vmatprep.subr.mxu0 0.0
  %5412 = vmatpush2.msra.mxu0 0.0
  %5413 = vmatprep.subr.mxu0 0.0
  %5414 = vmatpush2.msra.mxu0 0.0
  %5415 = vmatprep.subr.mxu0 0.0
  %5416 = vmatpush2.msra.mxu0 0.0
  %5417 = vmatprep.subr.mxu0 0.0
  %5418 = vmatpush2.msra.mxu0 0.0
  %5419 = vmatprep.subr.mxu0 0.0
  %5420 = vmatpush2.msra.mxu0 0.0
  %5421 = vmatprep.subr.mxu0 0.0
  %5422 = vmatpush2.msra.mxu0 0.0
  %5423 = vmatprep.subr.mxu0 0.0
  %5424 = vmatpush2.msra.mxu0 0.0
  %5425 = vmatprep.subr.mxu0 0.0
  %5426 = vmatpush2.msra.mxu0 0.0
  %5427 = vmatprep.mubr.f32.mxu0 0.0
  %5428 = vmatmul.mubr.f32.gmra.mxu0 %v4727
  %v5429 = vpop.f32.mrf.mxu0
  %v5430 = vadd.f32 %v5361, %v5429
  %v5431 = vpop.f32.mrf.mxu0
  %5432 = vdwg.mxu0
  %v5433 = vadd.f32 %v5351, %v5430
  %v5434 = vxor.u32 %v5433, 2147483648
  %v5435 = vmul.f32 %v5434, 1.442695
  %v5436 = vpow.pop %v5435
  %v5437 = vadd.f32 %v5436, 1.0
  %v5438 = vrcp.pop %v5437
  %v5439 = vmul.f32 1.0, %v5438
  %5441 = vrot.lane.b32.xlu0 %v5430, 64
  %v5442 = vpop.permute.xlu0 %5441
  %v5444 = vmul.f32 %v5439, %v5442
  %5446 = vrot.lane.b32.xlu0 %v5444, 64
  %v5447 = vpop.permute.xlu0 %5446
  %v5449 = vadd.f32 %v5351, %v5447
  %v5450 = vtanh.pop %v5449
  %v5451 = vsub.f32 1.0, %v5439
  %5453 = vrot.lane.b32.xlu0 %v5450, 96
  %v5454 = vpop.permute.xlu0 %5453
  %v5456 = vmul.f32 %v5451, %v5454
  %v5457 = vmul.f32 %v5439, %v4641
  %v5458 = vadd.f32 %v5456, %v5457
  %v5459 = vld [vmem:[%s13] sm:$0xff]
  %v5460 = vld [vmem:[%s13 + $0x8] sm:$0xff]
  %v5461 = vld [vmem:[%s13 + $0x10] sm:$0xff]
  %v5462 = vld [vmem:[%s13 + $0x18] sm:$0xff]
  %v5463 = vld [vmem:[%s14] sm:$0xff]
  %v5464 = vld [vmem:[%s14 + $0x8] sm:$0xff]
  %v5465 = vld [vmem:[%s14 + $0x10] sm:$0xff]
  %v5466 = vld [vmem:[%s14 + $0x18] sm:$0xff]
  %v5467 = vld [vmem:[%s14 + $0x20] sm:$0xff]
  %v5468 = vld [vmem:[%s14 + $0x28] sm:$0xff]
  %v5469 = vld [vmem:[%s14 + $0x30] sm:$0xff]
  %v5470 = vld [vmem:[%s14 + $0x38] sm:$0xff]
  %5471 = vmatprep.subr.mxu0 0.0
  %5472 = vmatpush1.msra.mxu0 0.0
  %5473 = vmatprep.subr.mxu0 0.0
  %5474 = vmatpush1.msra.mxu0 0.0
  %5475 = vmatprep.subr.mxu0 0.0
  %5476 = vmatpush1.msra.mxu0 0.0
  %5477 = vmatprep.subr.mxu0 0.0
  %5478 = vmatpush1.msra.mxu0 0.0
  %5479 = vmatprep.subr.mxu0 0.0
  %5480 = vmatpush1.msra.mxu0 0.0
  %5481 = vmatprep.subr.mxu0 0.0
  %5482 = vmatpush1.msra.mxu0 0.0
  %5483 = vmatprep.subr.mxu0 0.0
  %5484 = vmatpush1.msra.mxu0 0.0
  %5485 = vmatprep.subr.mxu0 0.0
  %5486 = vmatpush1.msra.mxu0 0.0
  %5487 = vmatprep.subr.mxu0 0.0
  %5488 = vmatpush1.msra.mxu0 %v5470
  %5489 = vmatprep.subr.mxu0 0.0
  %5490 = vmatpush1.msra.mxu0 %v5469
  %5491 = vmatprep.subr.mxu0 0.0
  %5492 = vmatpush1.msra.mxu0 %v5468
  %5493 = vmatprep.subr.mxu0 0.0
  %5494 = vmatpush1.msra.mxu0 %v5467
  %5495 = vmatprep.subr.mxu0 0.0
  %5496 = vmatpush1.msra.mxu0 %v5466
  %5497 = vmatprep.subr.mxu0 0.0
  %5498 = vmatpush1.msra.mxu0 %v5465
  %5499 = vmatprep.subr.mxu0 0.0
  %5500 = vmatpush1.msra.mxu0 %v5464
  %5501 = vmatprep.subr.mxu0 0.0
  %5502 = vmatpush1.msra.mxu0 %v5463
  %5503 = vmatprep.subr.mxu0 0.0
  %5504 = vmatpush2.msra.mxu0 0.0
  %5505 = vmatprep.subr.mxu0 0.0
  %5506 = vmatpush2.msra.mxu0 0.0
  %5507 = vmatprep.subr.mxu0 0.0
  %5508 = vmatpush2.msra.mxu0 0.0
  %5509 = vmatprep.subr.mxu0 0.0
  %5510 = vmatpush2.msra.mxu0 0.0
  %5511 = vmatprep.subr.mxu0 0.0
  %5512 = vmatpush2.msra.mxu0 0.0
  %5513 = vmatprep.subr.mxu0 0.0
  %5514 = vmatpush2.msra.mxu0 0.0
  %5515 = vmatprep.subr.mxu0 0.0
  %5516 = vmatpush2.msra.mxu0 0.0
  %5517 = vmatprep.subr.mxu0 0.0
  %5518 = vmatpush2.msra.mxu0 0.0
  %5519 = vmatprep.subr.mxu0 0.0
  %5520 = vmatpush2.msra.mxu0 0.0
  %5521 = vmatprep.subr.mxu0 0.0
  %5522 = vmatpush2.msra.mxu0 0.0
  %5523 = vmatprep.subr.mxu0 0.0
  %5524 = vmatpush2.msra.mxu0 0.0
  %5525 = vmatprep.subr.mxu0 0.0
  %5526 = vmatpush2.msra.mxu0 0.0
  %5527 = vmatprep.subr.mxu0 0.0
  %5528 = vmatpush2.msra.mxu0 0.0
  %5529 = vmatprep.subr.mxu0 0.0
  %5530 = vmatpush2.msra.mxu0 0.0
  %5531 = vmatprep.subr.mxu0 0.0
  %5532 = vmatpush2.msra.mxu0 0.0
  %5533 = vmatprep.subr.mxu0 0.0
  %5534 = vmatpush2.msra.mxu0 0.0
  %5535 = vmatprep.mubr.f32.mxu0 0.0
  %5536 = vmatmul.mubr.f32.gmra.mxu0 %v5199
  %v5537 = vpop.f32.mrf.mxu0
  %v5538 = vadd.f32 0.0, %v5537
  %v5539 = vpop.f32.mrf.mxu0
  %5540 = vdwg.mxu0
  %5542 = vrot.lane.b32.xlu0 %v5458, 96
  %v5543 = vpop.permute.xlu0 %5542
  %v5544 = vsel %vm146, %v5543, 0
  %5546 = vmatprep.subr.mxu0 0.0
  %5547 = vmatpush1.msra.mxu0 0.0
  %5548 = vmatprep.subr.mxu0 0.0
  %5549 = vmatpush1.msra.mxu0 0.0
  %5550 = vmatprep.subr.mxu0 0.0
  %5551 = vmatpush1.msra.mxu0 0.0
  %5552 = vmatprep.subr.mxu0 0.0
  %5553 = vmatpush1.msra.mxu0 0.0
  %5554 = vmatprep.subr.mxu0 0.0
  %5555 = vmatpush1.msra.mxu0 0.0
  %5556 = vmatprep.subr.mxu0 0.0
  %5557 = vmatpush1.msra.mxu0 0.0
  %5558 = vmatprep.subr.mxu0 0.0
  %5559 = vmatpush1.msra.mxu0 0.0
  %5560 = vmatprep.subr.mxu0 0.0
  %5561 = vmatpush1.msra.mxu0 0.0
  %5562 = vmatprep.subr.mxu0 0.0
  %5563 = vmatpush1.msra.mxu0 0.0
  %5564 = vmatprep.subr.mxu0 0.0
  %5565 = vmatpush1.msra.mxu0 0.0
  %5566 = vmatprep.subr.mxu0 0.0
  %5567 = vmatpush1.msra.mxu0 0.0
  %5568 = vmatprep.subr.mxu0 0.0
  %5569 = vmatpush1.msra.mxu0 0.0
  %5570 = vmatprep.subr.mxu0 0.0
  %5571 = vmatpush1.msra.mxu0 %v5462
  %5572 = vmatprep.subr.mxu0 0.0
  %5573 = vmatpush1.msra.mxu0 %v5461
  %5574 = vmatprep.subr.mxu0 0.0
  %5575 = vmatpush1.msra.mxu0 %v5460
  %5576 = vmatprep.subr.mxu0 0.0
  %5577 = vmatpush1.msra.mxu0 %v5459
  %5578 = vmatprep.subr.mxu0 0.0
  %5579 = vmatpush2.msra.mxu0 0.0
  %5580 = vmatprep.subr.mxu0 0.0
  %5581 = vmatpush2.msra.mxu0 0.0
  %5582 = vmatprep.subr.mxu0 0.0
  %5583 = vmatpush2.msra.mxu0 0.0
  %5584 = vmatprep.subr.mxu0 0.0
  %5585 = vmatpush2.msra.mxu0 0.0
  %5586 = vmatprep.subr.mxu0 0.0
  %5587 = vmatpush2.msra.mxu0 0.0
  %5588 = vmatprep.subr.mxu0 0.0
  %5589 = vmatpush2.msra.mxu0 0.0
  %5590 = vmatprep.subr.mxu0 0.0
  %5591 = vmatpush2.msra.mxu0 0.0
  %5592 = vmatprep.subr.mxu0 0.0
  %5593 = vmatpush2.msra.mxu0 0.0
  %5594 = vmatprep.subr.mxu0 0.0
  %5595 = vmatpush2.msra.mxu0 0.0
  %5596 = vmatprep.subr.mxu0 0.0
  %5597 = vmatpush2.msra.mxu0 0.0
  %5598 = vmatprep.subr.mxu0 0.0
  %5599 = vmatpush2.msra.mxu0 0.0
  %5600 = vmatprep.subr.mxu0 0.0
  %5601 = vmatpush2.msra.mxu0 0.0
  %5602 = vmatprep.subr.mxu0 0.0
  %5603 = vmatpush2.msra.mxu0 0.0
  %5604 = vmatprep.subr.mxu0 0.0
  %5605 = vmatpush2.msra.mxu0 0.0
  %5606 = vmatprep.subr.mxu0 0.0
  %5607 = vmatpush2.msra.mxu0 0.0
  %5608 = vmatprep.subr.mxu0 0.0
  %5609 = vmatpush2.msra.mxu0 0.0
  %5610 = vmatprep.mubr.f32.mxu0 0.0
  %5611 = vmatmul.mubr.f32.gmra.mxu0 %v5544
  %v5612 = vpop.f32.mrf.mxu0
  %v5613 = vadd.f32 %v5538, %v5612
  %v5614 = vpop.f32.mrf.mxu0
  %5615 = vdwg.mxu0
  %v5616 = vld [vmem:[%s15] sm:$0xff]
  %v5617 = vld [vmem:[%s15 + $0x8] sm:$0xff]
  %v5618 = vld [vmem:[%s15 + $0x10] sm:$0xff]
  %v5619 = vld [vmem:[%s15 + $0x18] sm:$0xff]
  %5620 = vmatprep.subr.mxu0 0.0
  %5621 = vmatpush1.msra.mxu0 0.0
  %5622 = vmatprep.subr.mxu0 0.0
  %5623 = vmatpush1.msra.mxu0 0.0
  %5624 = vmatprep.subr.mxu0 0.0
  %5625 = vmatpush1.msra.mxu0 0.0
  %5626 = vmatprep.subr.mxu0 0.0
  %5627 = vmatpush1.msra.mxu0 0.0
  %5628 = vmatprep.subr.mxu0 0.0
  %5629 = vmatpush1.msra.mxu0 0.0
  %5630 = vmatprep.subr.mxu0 0.0
  %5631 = vmatpush1.msra.mxu0 0.0
  %5632 = vmatprep.subr.mxu0 0.0
  %5633 = vmatpush1.msra.mxu0 0.0
  %5634 = vmatprep.subr.mxu0 0.0
  %5635 = vmatpush1.msra.mxu0 0.0
  %5636 = vmatprep.subr.mxu0 0.0
  %5637 = vmatpush1.msra.mxu0 0.0
  %5638 = vmatprep.subr.mxu0 0.0
  %5639 = vmatpush1.msra.mxu0 0.0
  %5640 = vmatprep.subr.mxu0 0.0
  %5641 = vmatpush1.msra.mxu0 0.0
  %5642 = vmatprep.subr.mxu0 0.0
  %5643 = vmatpush1.msra.mxu0 0.0
  %5644 = vmatprep.subr.mxu0 0.0
  %5645 = vmatpush1.msra.mxu0 %v5619
  %5646 = vmatprep.subr.mxu0 0.0
  %5647 = vmatpush1.msra.mxu0 %v5618
  %5648 = vmatprep.subr.mxu0 0.0
  %5649 = vmatpush1.msra.mxu0 %v5617
  %5650 = vmatprep.subr.mxu0 0.0
  %5651 = vmatpush1.msra.mxu0 %v5616
  %5652 = vmatprep.subr.mxu0 0.0
  %5653 = vmatpush2.msra.mxu0 0.0
  %5654 = vmatprep.subr.mxu0 0.0
  %5655 = vmatpush2.msra.mxu0 0.0
  %5656 = vmatprep.subr.mxu0 0.0
  %5657 = vmatpush2.msra.mxu0 0.0
  %5658 = vmatprep.subr.mxu0 0.0
  %5659 = vmatpush2.msra.mxu0 0.0
  %5660 = vmatprep.subr.mxu0 0.0
  %5661 = vmatpush2.msra.mxu0 0.0
  %5662 = vmatprep.subr.mxu0 0.0
  %5663 = vmatpush2.msra.mxu0 0.0
  %5664 = vmatprep.subr.mxu0 0.0
  %5665 = vmatpush2.msra.mxu0 0.0
  %5666 = vmatprep.subr.mxu0 0.0
  %5667 = vmatpush2.msra.mxu0 0.0
  %5668 = vmatprep.subr.mxu0 0.0
  %5669 = vmatpush2.msra.mxu0 0.0
  %5670 = vmatprep.subr.mxu0 0.0
  %5671 = vmatpush2.msra.mxu0 0.0
  %5672 = vmatprep.subr.mxu0 0.0
  %5673 = vmatpush2.msra.mxu0 0.0
  %5674 = vmatprep.subr.mxu0 0.0
  %5675 = vmatpush2.msra.mxu0 0.0
  %5676 = vmatprep.subr.mxu0 0.0
  %5677 = vmatpush2.msra.mxu0 0.0
  %5678 = vmatprep.subr.mxu0 0.0
  %5679 = vmatpush2.msra.mxu0 0.0
  %5680 = vmatprep.subr.mxu0 0.0
  %5681 = vmatpush2.msra.mxu0 0.0
  %5682 = vmatprep.subr.mxu0 0.0
  %5683 = vmatpush2.msra.mxu0 0.0
  %5684 = vmatprep.mubr.f32.mxu0 0.0
  %5685 = vmatmul.mubr.f32.gmra.mxu0 %v5272
  %v5686 = vpop.f32.mrf.mxu0
  %v5687 = vadd.f32 0.0, %v5686
  %v5688 = vpop.f32.mrf.mxu0
  %5689 = vdwg.mxu0
  %v5690 = vadd.f32 %v5613, %v5687
  %v5691 = vld [vmem:[%s16] sm:$0x1]
  %v5693 = vlaneseq
  %v5694 = vshrl.u32 %v5693, 7
  %v5695 = vsub.s32 0, %v5694
  %v5696 = vrot.slane %v5691, %v5695
  %v5698 = vadd.f32 %v5690, %v5696
  %s5699 = scalar_lea.vmem %s17, 48
  %5700 = vst.msk [vmem:[%s5699] sm:$0xff] %vm792, %v5698
  %v5701 = vsel %vm792, %v5698, -inf
  %5702 = vmax.xlane.f32.xlu0 %v5701
  %v5703 = vpop.xlane.xlu0 %5702
  %vm5704 = vcmp.eq.f32.partialorder %v5698, %v5703
  %v5705 = vsel %vm5704, %v796, 16.0
  %v5706 = vsel %vm792, %v5705, inf
  %5707 = vmin.xlane.f32.xlu0 %v5706
  %v5708 = vpop.xlane.xlu0 %5707
  %v5709 = vcvt.f32.s32.to.zero.pseudo %v5708
  %vm5710 = vcmp.eq.s32.totalorder %v795, %v5709
  %v5711 = vsel %vm5710, 1, 0
  %v5712 = vcvt.s32.f32 %v5711
  %v5713 = vld [vmem:[%s3] sm:$0xff]
  %v5714 = vld [vmem:[%s3 + $0x8] sm:$0xff]
  %v5716 = vsel %vm792, %v5712, 0
  %5718 = vmatprep.subr.mxu0 0.0
  %5719 = vmatpush1.msra.mxu0 0.0
  %5720 = vmatprep.subr.mxu0 0.0
  %5721 = vmatpush1.msra.mxu0 0.0
  %5722 = vmatprep.subr.mxu0 0.0
  %5723 = vmatpush1.msra.mxu0 0.0
  %5724 = vmatprep.subr.mxu0 0.0
  %5725 = vmatpush1.msra.mxu0 0.0
  %5726 = vmatprep.subr.mxu0 0.0
  %5727 = vmatpush1.msra.mxu0 0.0
  %5728 = vmatprep.subr.mxu0 0.0
  %5729 = vmatpush1.msra.mxu0 0.0
  %5730 = vmatprep.subr.mxu0 0.0
  %5731 = vmatpush1.msra.mxu0 0.0
  %5732 = vmatprep.subr.mxu0 0.0
  %5733 = vmatpush1.msra.mxu0 0.0
  %5734 = vmatprep.subr.mxu0 0.0
  %5735 = vmatpush1.msra.mxu0 0.0
  %5736 = vmatprep.subr.mxu0 0.0
  %5737 = vmatpush1.msra.mxu0 0.0
  %5738 = vmatprep.subr.mxu0 0.0
  %5739 = vmatpush1.msra.mxu0 0.0
  %5740 = vmatprep.subr.mxu0 0.0
  %5741 = vmatpush1.msra.mxu0 0.0
  %5742 = vmatprep.subr.mxu0 0.0
  %5743 = vmatpush1.msra.mxu0 0.0
  %5744 = vmatprep.subr.mxu0 0.0
  %5745 = vmatpush1.msra.mxu0 0.0
  %5746 = vmatprep.subr.mxu0 0.0
  %5747 = vmatpush1.msra.mxu0 %v5714
  %5748 = vmatprep.subr.mxu0 0.0
  %5749 = vmatpush1.msra.mxu0 %v5713
  %5750 = vmatprep.subr.mxu0 0.0
  %5751 = vmatpush2.msra.mxu0 0.0
  %5752 = vmatprep.subr.mxu0 0.0
  %5753 = vmatpush2.msra.mxu0 0.0
  %5754 = vmatprep.subr.mxu0 0.0
  %5755 = vmatpush2.msra.mxu0 0.0
  %5756 = vmatprep.subr.mxu0 0.0
  %5757 = vmatpush2.msra.mxu0 0.0
  %5758 = vmatprep.subr.mxu0 0.0
  %5759 = vmatpush2.msra.mxu0 0.0
  %5760 = vmatprep.subr.mxu0 0.0
  %5761 = vmatpush2.msra.mxu0 0.0
  %5762 = vmatprep.subr.mxu0 0.0
  %5763 = vmatpush2.msra.mxu0 0.0
  %5764 = vmatprep.subr.mxu0 0.0
  %5765 = vmatpush2.msra.mxu0 0.0
  %5766 = vmatprep.subr.mxu0 0.0
  %5767 = vmatpush2.msra.mxu0 0.0
  %5768 = vmatprep.subr.mxu0 0.0
  %5769 = vmatpush2.msra.mxu0 0.0
  %5770 = vmatprep.subr.mxu0 0.0
  %5771 = vmatpush2.msra.mxu0 0.0
  %5772 = vmatprep.subr.mxu0 0.0
  %5773 = vmatpush2.msra.mxu0 0.0
  %5774 = vmatprep.subr.mxu0 0.0
  %5775 = vmatpush2.msra.mxu0 0.0
  %5776 = vmatprep.subr.mxu0 0.0
  %5777 = vmatpush2.msra.mxu0 0.0
  %5778 = vmatprep.subr.mxu0 0.0
  %5779 = vmatpush2.msra.mxu0 0.0
  %5780 = vmatprep.subr.mxu0 0.0
  %5781 = vmatpush2.msra.mxu0 0.0
  %5782 = vmatprep.mubr.f32.mxu0 0.0
  %5783 = vmatmul.mubr.f32.gmra.mxu0 %v5716
  %v5784 = vpop.f32.mrf.mxu0
  %v5785 = vadd.f32 0.0, %v5784
  %v5786 = vpop.f32.mrf.mxu0
  %5787 = vdwg.mxu0
  %v5788 = vld [vmem:[%s4] sm:$0xff]
  %v5789 = vld [vmem:[%s4 + $0x8] sm:$0xff]
  %v5790 = vld [vmem:[%s4 + $0x10] sm:$0xff]
  %v5791 = vld [vmem:[%s4 + $0x18] sm:$0xff]
  %5792 = vmatprep.subr.mxu0 0.0
  %5793 = vmatpush1.msra.mxu0 0.0
  %5794 = vmatprep.subr.mxu0 0.0
  %5795 = vmatpush1.msra.mxu0 0.0
  %5796 = vmatprep.subr.mxu0 0.0
  %5797 = vmatpush1.msra.mxu0 0.0
  %5798 = vmatprep.subr.mxu0 0.0
  %5799 = vmatpush1.msra.mxu0 0.0
  %5800 = vmatprep.subr.mxu0 0.0
  %5801 = vmatpush1.msra.mxu0 0.0
  %5802 = vmatprep.subr.mxu0 0.0
  %5803 = vmatpush1.msra.mxu0 0.0
  %5804 = vmatprep.subr.mxu0 0.0
  %5805 = vmatpush1.msra.mxu0 0.0
  %5806 = vmatprep.subr.mxu0 0.0
  %5807 = vmatpush1.msra.mxu0 0.0
  %5808 = vmatprep.subr.mxu0 0.0
  %5809 = vmatpush1.msra.mxu0 0.0
  %5810 = vmatprep.subr.mxu0 0.0
  %5811 = vmatpush1.msra.mxu0 0.0
  %5812 = vmatprep.subr.mxu0 0.0
  %5813 = vmatpush1.msra.mxu0 0.0
  %5814 = vmatprep.subr.mxu0 0.0
  %5815 = vmatpush1.msra.mxu0 0.0
  %5816 = vmatprep.subr.mxu0 0.0
  %5817 = vmatpush1.msra.mxu0 %v5791
  %5818 = vmatprep.subr.mxu0 0.0
  %5819 = vmatpush1.msra.mxu0 %v5790
  %5820 = vmatprep.subr.mxu0 0.0
  %5821 = vmatpush1.msra.mxu0 %v5789
  %5822 = vmatprep.subr.mxu0 0.0
  %5823 = vmatpush1.msra.mxu0 %v5788
  %5824 = vmatprep.subr.mxu0 0.0
  %5825 = vmatpush2.msra.mxu0 0.0
  %5826 = vmatprep.subr.mxu0 0.0
  %5827 = vmatpush2.msra.mxu0 0.0
  %5828 = vmatprep.subr.mxu0 0.0
  %5829 = vmatpush2.msra.mxu0 0.0
  %5830 = vmatprep.subr.mxu0 0.0
  %5831 = vmatpush2.msra.mxu0 0.0
  %5832 = vmatprep.subr.mxu0 0.0
  %5833 = vmatpush2.msra.mxu0 0.0
  %5834 = vmatprep.subr.mxu0 0.0
  %5835 = vmatpush2.msra.mxu0 0.0
  %5836 = vmatprep.subr.mxu0 0.0
  %5837 = vmatpush2.msra.mxu0 0.0
  %5838 = vmatprep.subr.mxu0 0.0
  %5839 = vmatpush2.msra.mxu0 0.0
  %5840 = vmatprep.subr.mxu0 0.0
  %5841 = vmatpush2.msra.mxu0 0.0
  %5842 = vmatprep.subr.mxu0 0.0
  %5843 = vmatpush2.msra.mxu0 0.0
  %5844 = vmatprep.subr.mxu0 0.0
  %5845 = vmatpush2.msra.mxu0 0.0
  %5846 = vmatprep.subr.mxu0 0.0
  %5847 = vmatpush2.msra.mxu0 0.0
  %5848 = vmatprep.subr.mxu0 0.0
  %5849 = vmatpush2.msra.mxu0 0.0
  %5850 = vmatprep.subr.mxu0 0.0
  %5851 = vmatpush2.msra.mxu0 0.0
  %5852 = vmatprep.subr.mxu0 0.0
  %5853 = vmatpush2.msra.mxu0 0.0
  %5854 = vmatprep.subr.mxu0 0.0
  %5855 = vmatpush2.msra.mxu0 0.0
  %5856 = vmatprep.mubr.f32.mxu0 0.0
  %5857 = vmatmul.mubr.f32.gmra.mxu0 %v5544
  %v5858 = vpop.f32.mrf.mxu0
  %v5859 = vadd.f32 0.0, %v5858
  %v5860 = vpop.f32.mrf.mxu0
  %5861 = vdwg.mxu0
  %v5862 = vld [vmem:[#allocation2] sm:$0xff]
  %v5863 = vld [vmem:[#allocation2 + $0x8] sm:$0xff]
  %v5864 = vld [vmem:[#allocation2 + $0x10] sm:$0xff]
  %v5865 = vld [vmem:[#allocation2 + $0x18] sm:$0xff]
  %v5866 = vld [vmem:[#allocation2 + $0x20] sm:$0xff]
  %v5867 = vld [vmem:[#allocation2 + $0x28] sm:$0xff]
  %v5868 = vld [vmem:[#allocation2 + $0x30] sm:$0xff]
  %v5869 = vld [vmem:[#allocation2 + $0x38] sm:$0xff]
  %v5870 = vadd.f32 %v5862, %v5859
  %v5871 = vadd.f32 %v5863, %v5859
  %v5872 = vadd.f32 %v5864, %v5859
  %v5873 = vadd.f32 %v5865, %v5859
  %v5874 = vadd.f32 %v5866, %v5859
  %v5875 = vadd.f32 %v5867, %v5859
  %v5876 = vadd.f32 %v5868, %v5859
  %v5877 = vadd.f32 %v5869, %v5859
  %v5878 = vtanh.pop %v5870
  %v5879 = vtanh.pop %v5871
  %v5880 = vtanh.pop %v5872
  %v5881 = vtanh.pop %v5873
  %v5882 = vtanh.pop %v5874
  %v5883 = vtanh.pop %v5875
  %v5884 = vtanh.pop %v5876
  %v5885 = vtanh.pop %v5877
  %v5886 = vld [vmem:[%s7] sm:$0x1]
  %v5888 = vlaneseq
  %v5889 = vshrl.u32 %v5888, 7
  %v5890 = vsub.s32 0, %v5889
  %v5891 = vrot.slane %v5886, %v5890
  %v5893 = vmul.f32 %v5878, %v5891
  %v5894 = vmul.f32 %v5879, %v5891
  %v5895 = vmul.f32 %v5880, %v5891
  %v5896 = vmul.f32 %v5881, %v5891
  %v5897 = vmul.f32 %v5882, %v5891
  %v5898 = vmul.f32 %v5883, %v5891
  %v5899 = vmul.f32 %v5884, %v5891
  %v5900 = vmul.f32 %v5885, %v5891
  %v5901 = vsel %vm146, %v5893, 0.0
  %5902 = vadd.xlane.f32.xlu0 %v5901
  %v5903 = vpop.xlane.xlu0 %5902
  %v5904 = vsel %vm146, %v5894, 0.0
  %5905 = vadd.xlane.f32.xlu0 %v5904
  %v5906 = vpop.xlane.xlu0 %5905
  %v5907 = vsel %vm146, %v5895, 0.0
  %5908 = vadd.xlane.f32.xlu0 %v5907
  %v5909 = vpop.xlane.xlu0 %5908
  %v5910 = vsel %vm146, %v5896, 0.0
  %5911 = vadd.xlane.f32.xlu0 %v5910
  %v5912 = vpop.xlane.xlu0 %5911
  %v5913 = vsel %vm146, %v5897, 0.0
  %5914 = vadd.xlane.f32.xlu0 %v5913
  %v5915 = vpop.xlane.xlu0 %5914
  %v5916 = vsel %vm146, %v5898, 0.0
  %5917 = vadd.xlane.f32.xlu0 %v5916
  %v5918 = vpop.xlane.xlu0 %5917
  %v5919 = vsel %vm146, %v5899, 0.0
  %5920 = vadd.xlane.f32.xlu0 %v5919
  %v5921 = vpop.xlane.xlu0 %5920
  %v5922 = vsel %vm146, %v5900, 0.0
  %5923 = vadd.xlane.f32.xlu0 %v5922
  %v5924 = vpop.xlane.xlu0 %5923
  %v5925 = vmax.f32 %v5903, %v5915
  %v5926 = vmax.f32 %v5906, %v5918
  %v5927 = vmax.f32 %v5909, %v5921
  %v5928 = vmax.f32 %v5912, %v5924
  %v5929 = vmax.f32 %v5925, %v5926
  %v5930 = vmax.f32 %v5927, %v5928
  %v5931 = vmax.f32 %v5929, %v5930
  %v5932 = vsub.f32 %v5903, %v5931
  %v5933 = vsub.f32 %v5906, %v5931
  %v5934 = vsub.f32 %v5909, %v5931
  %v5935 = vsub.f32 %v5912, %v5931
  %v5936 = vsub.f32 %v5915, %v5931
  %v5937 = vsub.f32 %v5918, %v5931
  %v5938 = vsub.f32 %v5921, %v5931
  %v5939 = vsub.f32 %v5924, %v5931
  %v5940 = vmul.f32 %v5932, 1.442695
  %v5941 = vpow.pop %v5940
  %v5942 = vmul.f32 %v5933, 1.442695
  %v5943 = vpow.pop %v5942
  %v5944 = vmul.f32 %v5934, 1.442695
  %v5945 = vpow.pop %v5944
  %v5946 = vmul.f32 %v5935, 1.442695
  %v5947 = vpow.pop %v5946
  %v5948 = vmul.f32 %v5936, 1.442695
  %v5949 = vpow.pop %v5948
  %v5950 = vmul.f32 %v5937, 1.442695
  %v5951 = vpow.pop %v5950
  %v5952 = vmul.f32 %v5938, 1.442695
  %v5953 = vpow.pop %v5952
  %v5954 = vmul.f32 %v5939, 1.442695
  %v5955 = vpow.pop %v5954
  %v5956 = vadd.f32 %v5941, %v5943
  %v5957 = vadd.f32 %v5956, %v5945
  %v5958 = vadd.f32 %v5957, %v5947
  %v5959 = vadd.f32 %v5958, %v5949
  %v5960 = vadd.f32 %v5959, %v5951
  %v5961 = vadd.f32 %v5960, %v5953
  %v5962 = vadd.f32 %v5961, %v5955
  %v5963 = vrcp.pop %v5962
  %v5964 = vmul.f32 %v5941, %v5963
  %v5965 = vmul.f32 %v5943, %v5963
  %v5966 = vmul.f32 %v5945, %v5963
  %v5967 = vmul.f32 %v5947, %v5963
  %v5968 = vmul.f32 %v5949, %v5963
  %v5969 = vmul.f32 %v5951, %v5963
  %v5970 = vmul.f32 %v5953, %v5963
  %v5971 = vmul.f32 %v5955, %v5963
  %v5972 = vld [vmem:[%s2] sm:$0xff]
  %v5973 = vld [vmem:[%s2 + $0x8] sm:$0xff]
  %v5974 = vld [vmem:[%s2 + $0x10] sm:$0xff]
  %v5975 = vld [vmem:[%s2 + $0x18] sm:$0xff]
  %v5976 = vld [vmem:[%s2 + $0x20] sm:$0xff]
  %v5977 = vld [vmem:[%s2 + $0x28] sm:$0xff]
  %v5978 = vld [vmem:[%s2 + $0x30] sm:$0xff]
  %v5979 = vld [vmem:[%s2 + $0x38] sm:$0xff]
  %v5980 = vmul.f32 %v5964, %v5972
  %v5981 = vmul.f32 %v5965, %v5973
  %v5982 = vmul.f32 %v5966, %v5974
  %v5983 = vmul.f32 %v5967, %v5975
  %v5984 = vmul.f32 %v5968, %v5976
  %v5985 = vmul.f32 %v5969, %v5977
  %v5986 = vmul.f32 %v5970, %v5978
  %v5987 = vmul.f32 %v5971, %v5979
  %v5988 = vsel %vm72, %v5980, 0.0
  %v5989 = vsel %vm72, %v5981, 0.0
  %v5990 = vadd.f32 %v5988, %v5989
  %v5991 = vsel %vm72, %v5982, 0.0
  %v5992 = vadd.f32 %v5990, %v5991
  %v5993 = vsel %vm72, %v5983, 0.0
  %v5994 = vadd.f32 %v5992, %v5993
  %v5995 = vsel %vm72, %v5984, 0.0
  %v5996 = vadd.f32 %v5994, %v5995
  %v5997 = vsel %vm72, %v5985, 0.0
  %v5998 = vadd.f32 %v5996, %v5997
  %v5999 = vsel %vm72, %v5986, 0.0
  %v6000 = vadd.f32 %v5998, %v5999
  %v6001 = vsel %vm72, %v5987, 0.0
  %v6002 = vadd.f32 %v6000, %v6001
  %v6003 = vld [vmem:[%s8] sm:$0xff]
  %v6004 = vld [vmem:[%s8 + $0x8] sm:$0xff]
  %v6005 = vld [vmem:[%s8 + $0x10] sm:$0xff]
  %v6006 = vld [vmem:[%s8 + $0x18] sm:$0xff]
  %v6007 = vld [vmem:[%s9] sm:$0xff]
  %v6008 = vld [vmem:[%s9 + $0x8] sm:$0xff]
  %v6009 = vld [vmem:[%s9 + $0x10] sm:$0xff]
  %v6010 = vld [vmem:[%s9 + $0x18] sm:$0xff]
  %v6011 = vld [vmem:[%s9 + $0x20] sm:$0xff]
  %v6012 = vld [vmem:[%s9 + $0x28] sm:$0xff]
  %v6013 = vld [vmem:[%s9 + $0x30] sm:$0xff]
  %v6014 = vld [vmem:[%s9 + $0x38] sm:$0xff]
  %v6016 = vsel %vm72, %v6002, 0
  %6018 = vmatprep.subr.mxu0 0.0
  %6019 = vmatpush1.msra.mxu0 0.0
  %6020 = vmatprep.subr.mxu0 0.0
  %6021 = vmatpush1.msra.mxu0 0.0
  %6022 = vmatprep.subr.mxu0 0.0
  %6023 = vmatpush1.msra.mxu0 0.0
  %6024 = vmatprep.subr.mxu0 0.0
  %6025 = vmatpush1.msra.mxu0 0.0
  %6026 = vmatprep.subr.mxu0 0.0
  %6027 = vmatpush1.msra.mxu0 0.0
  %6028 = vmatprep.subr.mxu0 0.0
  %6029 = vmatpush1.msra.mxu0 0.0
  %6030 = vmatprep.subr.mxu0 0.0
  %6031 = vmatpush1.msra.mxu0 0.0
  %6032 = vmatprep.subr.mxu0 0.0
  %6033 = vmatpush1.msra.mxu0 0.0
  %6034 = vmatprep.subr.mxu0 0.0
  %6035 = vmatpush1.msra.mxu0 %v6014
  %6036 = vmatprep.subr.mxu0 0.0
  %6037 = vmatpush1.msra.mxu0 %v6013
  %6038 = vmatprep.subr.mxu0 0.0
  %6039 = vmatpush1.msra.mxu0 %v6012
  %6040 = vmatprep.subr.mxu0 0.0
  %6041 = vmatpush1.msra.mxu0 %v6011
  %6042 = vmatprep.subr.mxu0 0.0
  %6043 = vmatpush1.msra.mxu0 %v6010
  %6044 = vmatprep.subr.mxu0 0.0
  %6045 = vmatpush1.msra.mxu0 %v6009
  %6046 = vmatprep.subr.mxu0 0.0
  %6047 = vmatpush1.msra.mxu0 %v6008
  %6048 = vmatprep.subr.mxu0 0.0
  %6049 = vmatpush1.msra.mxu0 %v6007
  %6050 = vmatprep.subr.mxu0 0.0
  %6051 = vmatpush2.msra.mxu0 0.0
  %6052 = vmatprep.subr.mxu0 0.0
  %6053 = vmatpush2.msra.mxu0 0.0
  %6054 = vmatprep.subr.mxu0 0.0
  %6055 = vmatpush2.msra.mxu0 0.0
  %6056 = vmatprep.subr.mxu0 0.0
  %6057 = vmatpush2.msra.mxu0 0.0
  %6058 = vmatprep.subr.mxu0 0.0
  %6059 = vmatpush2.msra.mxu0 0.0
  %6060 = vmatprep.subr.mxu0 0.0
  %6061 = vmatpush2.msra.mxu0 0.0
  %6062 = vmatprep.subr.mxu0 0.0
  %6063 = vmatpush2.msra.mxu0 0.0
  %6064 = vmatprep.subr.mxu0 0.0
  %6065 = vmatpush2.msra.mxu0 0.0
  %6066 = vmatprep.subr.mxu0 0.0
  %6067 = vmatpush2.msra.mxu0 0.0
  %6068 = vmatprep.subr.mxu0 0.0
  %6069 = vmatpush2.msra.mxu0 0.0
  %6070 = vmatprep.subr.mxu0 0.0
  %6071 = vmatpush2.msra.mxu0 0.0
  %6072 = vmatprep.subr.mxu0 0.0
  %6073 = vmatpush2.msra.mxu0 0.0
  %6074 = vmatprep.subr.mxu0 0.0
  %6075 = vmatpush2.msra.mxu0 0.0
  %6076 = vmatprep.subr.mxu0 0.0
  %6077 = vmatpush2.msra.mxu0 0.0
  %6078 = vmatprep.subr.mxu0 0.0
  %6079 = vmatpush2.msra.mxu0 0.0
  %6080 = vmatprep.subr.mxu0 0.0
  %6081 = vmatpush2.msra.mxu0 0.0
  %6082 = vmatprep.mubr.f32.mxu0 0.0
  %6083 = vmatmul.mubr.f32.gmra.mxu0 %v6016
  %v6084 = vpop.f32.mrf.mxu0
  %v6085 = vadd.f32 0.0, %v6084
  %v6086 = vpop.f32.mrf.mxu0
  %6087 = vdwg.mxu0
  %v6089 = vsel %vm146, %v5785, 0
  %6091 = vmatprep.subr.mxu0 0.0
  %6092 = vmatpush1.msra.mxu0 0.0
  %6093 = vmatprep.subr.mxu0 0.0
  %6094 = vmatpush1.msra.mxu0 0.0
  %6095 = vmatprep.subr.mxu0 0.0
  %6096 = vmatpush1.msra.mxu0 0.0
  %6097 = vmatprep.subr.mxu0 0.0
  %6098 = vmatpush1.msra.mxu0 0.0
  %6099 = vmatprep.subr.mxu0 0.0
  %6100 = vmatpush1.msra.mxu0 0.0
  %6101 = vmatprep.subr.mxu0 0.0
  %6102 = vmatpush1.msra.mxu0 0.0
  %6103 = vmatprep.subr.mxu0 0.0
  %6104 = vmatpush1.msra.mxu0 0.0
  %6105 = vmatprep.subr.mxu0 0.0
  %6106 = vmatpush1.msra.mxu0 0.0
  %6107 = vmatprep.subr.mxu0 0.0
  %6108 = vmatpush1.msra.mxu0 0.0
  %6109 = vmatprep.subr.mxu0 0.0
  %6110 = vmatpush1.msra.mxu0 0.0
  %6111 = vmatprep.subr.mxu0 0.0
  %6112 = vmatpush1.msra.mxu0 0.0
  %6113 = vmatprep.subr.mxu0 0.0
  %6114 = vmatpush1.msra.mxu0 0.0
  %6115 = vmatprep.subr.mxu0 0.0
  %6116 = vmatpush1.msra.mxu0 %v6006
  %6117 = vmatprep.subr.mxu0 0.0
  %6118 = vmatpush1.msra.mxu0 %v6005
  %6119 = vmatprep.subr.mxu0 0.0
  %6120 = vmatpush1.msra.mxu0 %v6004
  %6121 = vmatprep.subr.mxu0 0.0
  %6122 = vmatpush1.msra.mxu0 %v6003
  %6123 = vmatprep.subr.mxu0 0.0
  %6124 = vmatpush2.msra.mxu0 0.0
  %6125 = vmatprep.subr.mxu0 0.0
  %6126 = vmatpush2.msra.mxu0 0.0
  %6127 = vmatprep.subr.mxu0 0.0
  %6128 = vmatpush2.msra.mxu0 0.0
  %6129 = vmatprep.subr.mxu0 0.0
  %6130 = vmatpush2.msra.mxu0 0.0
  %6131 = vmatprep.subr.mxu0 0.0
  %6132 = vmatpush2.msra.mxu0 0.0
  %6133 = vmatprep.subr.mxu0 0.0
  %6134 = vmatpush2.msra.mxu0 0.0
  %6135 = vmatprep.subr.mxu0 0.0
  %6136 = vmatpush2.msra.mxu0 0.0
  %6137 = vmatprep.subr.mxu0 0.0
  %6138 = vmatpush2.msra.mxu0 0.0
  %6139 = vmatprep.subr.mxu0 0.0
  %6140 = vmatpush2.msra.mxu0 0.0
  %6141 = vmatprep.subr.mxu0 0.0
  %6142 = vmatpush2.msra.mxu0 0.0
  %6143 = vmatprep.subr.mxu0 0.0
  %6144 = vmatpush2.msra.mxu0 0.0
  %6145 = vmatprep.subr.mxu0 0.0
  %6146 = vmatpush2.msra.mxu0 0.0
  %6147 = vmatprep.subr.mxu0 0.0
  %6148 = vmatpush2.msra.mxu0 0.0
  %6149 = vmatprep.subr.mxu0 0.0
  %6150 = vmatpush2.msra.mxu0 0.0
  %6151 = vmatprep.subr.mxu0 0.0
  %6152 = vmatpush2.msra.mxu0 0.0
  %6153 = vmatprep.subr.mxu0 0.0
  %6154 = vmatpush2.msra.mxu0 0.0
  %6155 = vmatprep.mubr.f32.mxu0 0.0
  %6156 = vmatmul.mubr.f32.gmra.mxu0 %v6089
  %v6157 = vpop.f32.mrf.mxu0
  %v6158 = vadd.f32 %v6085, %v6157
  %v6159 = vpop.f32.mrf.mxu0
  %6160 = vdwg.mxu0
  %v6161 = vld [vmem:[%s11] sm:$0x1]
  %v6163 = vlaneseq
  %v6164 = vshrl.u32 %v6163, 7
  %v6165 = vsub.s32 0, %v6164
  %v6166 = vrot.slane %v6161, %v6165
  %v6168 = vadd.f32 %v6158, %v6166
  %v6169 = vld [vmem:[%s10] sm:$0xff]
  %v6170 = vld [vmem:[%s10 + $0x8] sm:$0xff]
  %v6171 = vld [vmem:[%s10 + $0x10] sm:$0xff]
  %v6172 = vld [vmem:[%s10 + $0x18] sm:$0xff]
  %v6173 = vld [vmem:[%s12] sm:$0x1]
  %v6175 = vlaneseq
  %v6176 = vshrl.u32 %v6175, 7
  %v6177 = vsub.s32 0, %v6176
  %v6178 = vrot.slane %v6173, %v6177
  %6180 = vmatprep.subr.mxu0 0.0
  %6181 = vmatpush1.msra.mxu0 0.0
  %6182 = vmatprep.subr.mxu0 0.0
  %6183 = vmatpush1.msra.mxu0 0.0
  %6184 = vmatprep.subr.mxu0 0.0
  %6185 = vmatpush1.msra.mxu0 0.0
  %6186 = vmatprep.subr.mxu0 0.0
  %6187 = vmatpush1.msra.mxu0 0.0
  %6188 = vmatprep.subr.mxu0 0.0
  %6189 = vmatpush1.msra.mxu0 0.0
  %6190 = vmatprep.subr.mxu0 0.0
  %6191 = vmatpush1.msra.mxu0 0.0
  %6192 = vmatprep.subr.mxu0 0.0
  %6193 = vmatpush1.msra.mxu0 0.0
  %6194 = vmatprep.subr.mxu0 0.0
  %6195 = vmatpush1.msra.mxu0 0.0
  %6196 = vmatprep.subr.mxu0 0.0
  %6197 = vmatpush1.msra.mxu0 0.0
  %6198 = vmatprep.subr.mxu0 0.0
  %6199 = vmatpush1.msra.mxu0 0.0
  %6200 = vmatprep.subr.mxu0 0.0
  %6201 = vmatpush1.msra.mxu0 0.0
  %6202 = vmatprep.subr.mxu0 0.0
  %6203 = vmatpush1.msra.mxu0 0.0
  %6204 = vmatprep.subr.mxu0 0.0
  %6205 = vmatpush1.msra.mxu0 %v6172
  %6206 = vmatprep.subr.mxu0 0.0
  %6207 = vmatpush1.msra.mxu0 %v6171
  %6208 = vmatprep.subr.mxu0 0.0
  %6209 = vmatpush1.msra.mxu0 %v6170
  %6210 = vmatprep.subr.mxu0 0.0
  %6211 = vmatpush1.msra.mxu0 %v6169
  %6212 = vmatprep.subr.mxu0 0.0
  %6213 = vmatpush2.msra.mxu0 0.0
  %6214 = vmatprep.subr.mxu0 0.0
  %6215 = vmatpush2.msra.mxu0 0.0
  %6216 = vmatprep.subr.mxu0 0.0
  %6217 = vmatpush2.msra.mxu0 0.0
  %6218 = vmatprep.subr.mxu0 0.0
  %6219 = vmatpush2.msra.mxu0 0.0
  %6220 = vmatprep.subr.mxu0 0.0
  %6221 = vmatpush2.msra.mxu0 0.0
  %6222 = vmatprep.subr.mxu0 0.0
  %6223 = vmatpush2.msra.mxu0 0.0
  %6224 = vmatprep.subr.mxu0 0.0
  %6225 = vmatpush2.msra.mxu0 0.0
  %6226 = vmatprep.subr.mxu0 0.0
  %6227 = vmatpush2.msra.mxu0 0.0
  %6228 = vmatprep.subr.mxu0 0.0
  %6229 = vmatpush2.msra.mxu0 0.0
  %6230 = vmatprep.subr.mxu0 0.0
  %6231 = vmatpush2.msra.mxu0 0.0
  %6232 = vmatprep.subr.mxu0 0.0
  %6233 = vmatpush2.msra.mxu0 0.0
  %6234 = vmatprep.subr.mxu0 0.0
  %6235 = vmatpush2.msra.mxu0 0.0
  %6236 = vmatprep.subr.mxu0 0.0
  %6237 = vmatpush2.msra.mxu0 0.0
  %6238 = vmatprep.subr.mxu0 0.0
  %6239 = vmatpush2.msra.mxu0 0.0
  %6240 = vmatprep.subr.mxu0 0.0
  %6241 = vmatpush2.msra.mxu0 0.0
  %6242 = vmatprep.subr.mxu0 0.0
  %6243 = vmatpush2.msra.mxu0 0.0
  %6244 = vmatprep.mubr.f32.mxu0 0.0
  %6245 = vmatmul.mubr.f32.gmra.mxu0 %v5544
  %v6246 = vpop.f32.mrf.mxu0
  %v6247 = vadd.f32 %v6178, %v6246
  %v6248 = vpop.f32.mrf.mxu0
  %6249 = vdwg.mxu0
  %v6250 = vadd.f32 %v6168, %v6247
  %v6251 = vxor.u32 %v6250, 2147483648
  %v6252 = vmul.f32 %v6251, 1.442695
  %v6253 = vpow.pop %v6252
  %v6254 = vadd.f32 %v6253, 1.0
  %v6255 = vrcp.pop %v6254
  %v6256 = vmul.f32 1.0, %v6255
  %6258 = vrot.lane.b32.xlu0 %v6247, 64
  %v6259 = vpop.permute.xlu0 %6258
  %v6261 = vmul.f32 %v6256, %v6259
  %6263 = vrot.lane.b32.xlu0 %v6261, 64
  %v6264 = vpop.permute.xlu0 %6263
  %v6266 = vadd.f32 %v6168, %v6264
  %v6267 = vtanh.pop %v6266
  %v6268 = vsub.f32 1.0, %v6256
  %6270 = vrot.lane.b32.xlu0 %v6267, 96
  %v6271 = vpop.permute.xlu0 %6270
  %v6273 = vmul.f32 %v6268, %v6271
  %v6274 = vmul.f32 %v6256, %v5458
  %v6275 = vadd.f32 %v6273, %v6274
  %v6276 = vld [vmem:[%s13] sm:$0xff]
  %v6277 = vld [vmem:[%s13 + $0x8] sm:$0xff]
  %v6278 = vld [vmem:[%s13 + $0x10] sm:$0xff]
  %v6279 = vld [vmem:[%s13 + $0x18] sm:$0xff]
  %v6280 = vld [vmem:[%s14] sm:$0xff]
  %v6281 = vld [vmem:[%s14 + $0x8] sm:$0xff]
  %v6282 = vld [vmem:[%s14 + $0x10] sm:$0xff]
  %v6283 = vld [vmem:[%s14 + $0x18] sm:$0xff]
  %v6284 = vld [vmem:[%s14 + $0x20] sm:$0xff]
  %v6285 = vld [vmem:[%s14 + $0x28] sm:$0xff]
  %v6286 = vld [vmem:[%s14 + $0x30] sm:$0xff]
  %v6287 = vld [vmem:[%s14 + $0x38] sm:$0xff]
  %6288 = vmatprep.subr.mxu0 0.0
  %6289 = vmatpush1.msra.mxu0 0.0
  %6290 = vmatprep.subr.mxu0 0.0
  %6291 = vmatpush1.msra.mxu0 0.0
  %6292 = vmatprep.subr.mxu0 0.0
  %6293 = vmatpush1.msra.mxu0 0.0
  %6294 = vmatprep.subr.mxu0 0.0
  %6295 = vmatpush1.msra.mxu0 0.0
  %6296 = vmatprep.subr.mxu0 0.0
  %6297 = vmatpush1.msra.mxu0 0.0
  %6298 = vmatprep.subr.mxu0 0.0
  %6299 = vmatpush1.msra.mxu0 0.0
  %6300 = vmatprep.subr.mxu0 0.0
  %6301 = vmatpush1.msra.mxu0 0.0
  %6302 = vmatprep.subr.mxu0 0.0
  %6303 = vmatpush1.msra.mxu0 0.0
  %6304 = vmatprep.subr.mxu0 0.0
  %6305 = vmatpush1.msra.mxu0 %v6287
  %6306 = vmatprep.subr.mxu0 0.0
  %6307 = vmatpush1.msra.mxu0 %v6286
  %6308 = vmatprep.subr.mxu0 0.0
  %6309 = vmatpush1.msra.mxu0 %v6285
  %6310 = vmatprep.subr.mxu0 0.0
  %6311 = vmatpush1.msra.mxu0 %v6284
  %6312 = vmatprep.subr.mxu0 0.0
  %6313 = vmatpush1.msra.mxu0 %v6283
  %6314 = vmatprep.subr.mxu0 0.0
  %6315 = vmatpush1.msra.mxu0 %v6282
  %6316 = vmatprep.subr.mxu0 0.0
  %6317 = vmatpush1.msra.mxu0 %v6281
  %6318 = vmatprep.subr.mxu0 0.0
  %6319 = vmatpush1.msra.mxu0 %v6280
  %6320 = vmatprep.subr.mxu0 0.0
  %6321 = vmatpush2.msra.mxu0 0.0
  %6322 = vmatprep.subr.mxu0 0.0
  %6323 = vmatpush2.msra.mxu0 0.0
  %6324 = vmatprep.subr.mxu0 0.0
  %6325 = vmatpush2.msra.mxu0 0.0
  %6326 = vmatprep.subr.mxu0 0.0
  %6327 = vmatpush2.msra.mxu0 0.0
  %6328 = vmatprep.subr.mxu0 0.0
  %6329 = vmatpush2.msra.mxu0 0.0
  %6330 = vmatprep.subr.mxu0 0.0
  %6331 = vmatpush2.msra.mxu0 0.0
  %6332 = vmatprep.subr.mxu0 0.0
  %6333 = vmatpush2.msra.mxu0 0.0
  %6334 = vmatprep.subr.mxu0 0.0
  %6335 = vmatpush2.msra.mxu0 0.0
  %6336 = vmatprep.subr.mxu0 0.0
  %6337 = vmatpush2.msra.mxu0 0.0
  %6338 = vmatprep.subr.mxu0 0.0
  %6339 = vmatpush2.msra.mxu0 0.0
  %6340 = vmatprep.subr.mxu0 0.0
  %6341 = vmatpush2.msra.mxu0 0.0
  %6342 = vmatprep.subr.mxu0 0.0
  %6343 = vmatpush2.msra.mxu0 0.0
  %6344 = vmatprep.subr.mxu0 0.0
  %6345 = vmatpush2.msra.mxu0 0.0
  %6346 = vmatprep.subr.mxu0 0.0
  %6347 = vmatpush2.msra.mxu0 0.0
  %6348 = vmatprep.subr.mxu0 0.0
  %6349 = vmatpush2.msra.mxu0 0.0
  %6350 = vmatprep.subr.mxu0 0.0
  %6351 = vmatpush2.msra.mxu0 0.0
  %6352 = vmatprep.mubr.f32.mxu0 0.0
  %6353 = vmatmul.mubr.f32.gmra.mxu0 %v6016
  %v6354 = vpop.f32.mrf.mxu0
  %v6355 = vadd.f32 0.0, %v6354
  %v6356 = vpop.f32.mrf.mxu0
  %6357 = vdwg.mxu0
  %6359 = vrot.lane.b32.xlu0 %v6275, 96
  %v6360 = vpop.permute.xlu0 %6359
  %v6361 = vsel %vm146, %v6360, 0
  %6363 = vmatprep.subr.mxu0 0.0
  %6364 = vmatpush1.msra.mxu0 0.0
  %6365 = vmatprep.subr.mxu0 0.0
  %6366 = vmatpush1.msra.mxu0 0.0
  %6367 = vmatprep.subr.mxu0 0.0
  %6368 = vmatpush1.msra.mxu0 0.0
  %6369 = vmatprep.subr.mxu0 0.0
  %6370 = vmatpush1.msra.mxu0 0.0
  %6371 = vmatprep.subr.mxu0 0.0
  %6372 = vmatpush1.msra.mxu0 0.0
  %6373 = vmatprep.subr.mxu0 0.0
  %6374 = vmatpush1.msra.mxu0 0.0
  %6375 = vmatprep.subr.mxu0 0.0
  %6376 = vmatpush1.msra.mxu0 0.0
  %6377 = vmatprep.subr.mxu0 0.0
  %6378 = vmatpush1.msra.mxu0 0.0
  %6379 = vmatprep.subr.mxu0 0.0
  %6380 = vmatpush1.msra.mxu0 0.0
  %6381 = vmatprep.subr.mxu0 0.0
  %6382 = vmatpush1.msra.mxu0 0.0
  %6383 = vmatprep.subr.mxu0 0.0
  %6384 = vmatpush1.msra.mxu0 0.0
  %6385 = vmatprep.subr.mxu0 0.0
  %6386 = vmatpush1.msra.mxu0 0.0
  %6387 = vmatprep.subr.mxu0 0.0
  %6388 = vmatpush1.msra.mxu0 %v6279
  %6389 = vmatprep.subr.mxu0 0.0
  %6390 = vmatpush1.msra.mxu0 %v6278
  %6391 = vmatprep.subr.mxu0 0.0
  %6392 = vmatpush1.msra.mxu0 %v6277
  %6393 = vmatprep.subr.mxu0 0.0
  %6394 = vmatpush1.msra.mxu0 %v6276
  %6395 = vmatprep.subr.mxu0 0.0
  %6396 = vmatpush2.msra.mxu0 0.0
  %6397 = vmatprep.subr.mxu0 0.0
  %6398 = vmatpush2.msra.mxu0 0.0
  %6399 = vmatprep.subr.mxu0 0.0
  %6400 = vmatpush2.msra.mxu0 0.0
  %6401 = vmatprep.subr.mxu0 0.0
  %6402 = vmatpush2.msra.mxu0 0.0
  %6403 = vmatprep.subr.mxu0 0.0
  %6404 = vmatpush2.msra.mxu0 0.0
  %6405 = vmatprep.subr.mxu0 0.0
  %6406 = vmatpush2.msra.mxu0 0.0
  %6407 = vmatprep.subr.mxu0 0.0
  %6408 = vmatpush2.msra.mxu0 0.0
  %6409 = vmatprep.subr.mxu0 0.0
  %6410 = vmatpush2.msra.mxu0 0.0
  %6411 = vmatprep.subr.mxu0 0.0
  %6412 = vmatpush2.msra.mxu0 0.0
  %6413 = vmatprep.subr.mxu0 0.0
  %6414 = vmatpush2.msra.mxu0 0.0
  %6415 = vmatprep.subr.mxu0 0.0
  %6416 = vmatpush2.msra.mxu0 0.0
  %6417 = vmatprep.subr.mxu0 0.0
  %6418 = vmatpush2.msra.mxu0 0.0
  %6419 = vmatprep.subr.mxu0 0.0
  %6420 = vmatpush2.msra.mxu0 0.0
  %6421 = vmatprep.subr.mxu0 0.0
  %6422 = vmatpush2.msra.mxu0 0.0
  %6423 = vmatprep.subr.mxu0 0.0
  %6424 = vmatpush2.msra.mxu0 0.0
  %6425 = vmatprep.subr.mxu0 0.0
  %6426 = vmatpush2.msra.mxu0 0.0
  %6427 = vmatprep.mubr.f32.mxu0 0.0
  %6428 = vmatmul.mubr.f32.gmra.mxu0 %v6361
  %v6429 = vpop.f32.mrf.mxu0
  %v6430 = vadd.f32 %v6355, %v6429
  %v6431 = vpop.f32.mrf.mxu0
  %6432 = vdwg.mxu0
  %v6433 = vld [vmem:[%s15] sm:$0xff]
  %v6434 = vld [vmem:[%s15 + $0x8] sm:$0xff]
  %v6435 = vld [vmem:[%s15 + $0x10] sm:$0xff]
  %v6436 = vld [vmem:[%s15 + $0x18] sm:$0xff]
  %6437 = vmatprep.subr.mxu0 0.0
  %6438 = vmatpush1.msra.mxu0 0.0
  %6439 = vmatprep.subr.mxu0 0.0
  %6440 = vmatpush1.msra.mxu0 0.0
  %6441 = vmatprep.subr.mxu0 0.0
  %6442 = vmatpush1.msra.mxu0 0.0
  %6443 = vmatprep.subr.mxu0 0.0
  %6444 = vmatpush1.msra.mxu0 0.0
  %6445 = vmatprep.subr.mxu0 0.0
  %6446 = vmatpush1.msra.mxu0 0.0
  %6447 = vmatprep.subr.mxu0 0.0
  %6448 = vmatpush1.msra.mxu0 0.0
  %6449 = vmatprep.subr.mxu0 0.0
  %6450 = vmatpush1.msra.mxu0 0.0
  %6451 = vmatprep.subr.mxu0 0.0
  %6452 = vmatpush1.msra.mxu0 0.0
  %6453 = vmatprep.subr.mxu0 0.0
  %6454 = vmatpush1.msra.mxu0 0.0
  %6455 = vmatprep.subr.mxu0 0.0
  %6456 = vmatpush1.msra.mxu0 0.0
  %6457 = vmatprep.subr.mxu0 0.0
  %6458 = vmatpush1.msra.mxu0 0.0
  %6459 = vmatprep.subr.mxu0 0.0
  %6460 = vmatpush1.msra.mxu0 0.0
  %6461 = vmatprep.subr.mxu0 0.0
  %6462 = vmatpush1.msra.mxu0 %v6436
  %6463 = vmatprep.subr.mxu0 0.0
  %6464 = vmatpush1.msra.mxu0 %v6435
  %6465 = vmatprep.subr.mxu0 0.0
  %6466 = vmatpush1.msra.mxu0 %v6434
  %6467 = vmatprep.subr.mxu0 0.0
  %6468 = vmatpush1.msra.mxu0 %v6433
  %6469 = vmatprep.subr.mxu0 0.0
  %6470 = vmatpush2.msra.mxu0 0.0
  %6471 = vmatprep.subr.mxu0 0.0
  %6472 = vmatpush2.msra.mxu0 0.0
  %6473 = vmatprep.subr.mxu0 0.0
  %6474 = vmatpush2.msra.mxu0 0.0
  %6475 = vmatprep.subr.mxu0 0.0
  %6476 = vmatpush2.msra.mxu0 0.0
  %6477 = vmatprep.subr.mxu0 0.0
  %6478 = vmatpush2.msra.mxu0 0.0
  %6479 = vmatprep.subr.mxu0 0.0
  %6480 = vmatpush2.msra.mxu0 0.0
  %6481 = vmatprep.subr.mxu0 0.0
  %6482 = vmatpush2.msra.mxu0 0.0
  %6483 = vmatprep.subr.mxu0 0.0
  %6484 = vmatpush2.msra.mxu0 0.0
  %6485 = vmatprep.subr.mxu0 0.0
  %6486 = vmatpush2.msra.mxu0 0.0
  %6487 = vmatprep.subr.mxu0 0.0
  %6488 = vmatpush2.msra.mxu0 0.0
  %6489 = vmatprep.subr.mxu0 0.0
  %6490 = vmatpush2.msra.mxu0 0.0
  %6491 = vmatprep.subr.mxu0 0.0
  %6492 = vmatpush2.msra.mxu0 0.0
  %6493 = vmatprep.subr.mxu0 0.0
  %6494 = vmatpush2.msra.mxu0 0.0
  %6495 = vmatprep.subr.mxu0 0.0
  %6496 = vmatpush2.msra.mxu0 0.0
  %6497 = vmatprep.subr.mxu0 0.0
  %6498 = vmatpush2.msra.mxu0 0.0
  %6499 = vmatprep.subr.mxu0 0.0
  %6500 = vmatpush2.msra.mxu0 0.0
  %6501 = vmatprep.mubr.f32.mxu0 0.0
  %6502 = vmatmul.mubr.f32.gmra.mxu0 %v6089
  %v6503 = vpop.f32.mrf.mxu0
  %v6504 = vadd.f32 0.0, %v6503
  %v6505 = vpop.f32.mrf.mxu0
  %6506 = vdwg.mxu0
  %v6507 = vadd.f32 %v6430, %v6504
  %v6508 = vld [vmem:[%s16] sm:$0x1]
  %v6510 = vlaneseq
  %v6511 = vshrl.u32 %v6510, 7
  %v6512 = vsub.s32 0, %v6511
  %v6513 = vrot.slane %v6508, %v6512
  %v6515 = vadd.f32 %v6507, %v6513
  %s6516 = scalar_lea.vmem %s17, 56
  %6517 = vst.msk [vmem:[%s6516] sm:$0xff] %vm792, %v6515
  // Predicated region
  $region70: #{seq2seq_forward.3} parent=0 // pred_check
    _
  $region71: #{seq2seq_forward.3} parent=0 // pred_check_branch
    %6519 = sbr.rel (0) target = $region73
  $region72: #{seq2seq_forward.3} parent=0 // pred_region
    _
  $region73: #{seq2seq_forward.3} parent=0 // pred_fallthru
    _
  // Predicated region
  $region74: #{seq2seq_forward.3} parent=0 // pred_check
    _
  $region75: #{seq2seq_forward.3} parent=0 // pred_check_branch
    %6521 = sbr.rel (0) target = $region77
  $region76: #{seq2seq_forward.3} parent=0 // pred_region
    _
  $region77: #{seq2seq_forward.3} parent=0 // pred_fallthru
    _

</llo_original>
